<compile_context>
chip_gen: v7x
topology: tpu7x:2x2x1
jax: 0.10.0
libtpu: 0.0.40
codegen_flags: <defaults>
</compile_context>

<pallas_src>
import math

import jax
import jax.numpy as jnp
from jax.experimental import pallas as pl
from jax.experimental.pallas import tpu as pltpu

# ---------------------------------------------------------------------------
# Small "ViT-tiny" configuration consistent with the DINO forward semantics
# (ViT backbone -> CLS feature [B, DIM] -> Linear head [DIM -> OUT_DIM]).
# Hidden dims are padded to multiples of 128 for lane-dense TPU layout.
# ---------------------------------------------------------------------------
BATCH = 2
CH = 4
IMG = 16
PATCH = 4
CPP = CH * PATCH * PATCH          # 64   flattened patch
CPP_PAD = 128                     # patch pixels padded to a full 128-lane block
DIM = 128                         # hidden_dim (768 in the real ViT-B/16)
HEADS = 4
HEAD_DIM = DIM // HEADS           # 32
MLP = 256                         # MLP hidden (3072 in the real model)
LAYERS = 2
OUT_DIM = 128                     # projection head output (2048 in the real model)
N_PATCH = (IMG // PATCH) ** 2     # 16
TOKENS = N_PATCH + 1              # 17 (+1 class token)
T_PAD = 24                        # tokens padded to a multiple of 8 sublanes
BC = 2 * BATCH                    # x1 and x2 batched together
BCT = BC * T_PAD                  # rows of the resident activation matrix (96)
OUT_ROWS = 8                      # head output rows padded 4 -> 8 sublanes

LAYER_PARAM_ORDER = [
    "ln1_g", "ln1_b", "qkv_w", "qkv_b", "proj_w", "proj_b",
    "ln2_g", "ln2_b", "fc1_w", "fc1_b", "fc2_w", "fc2_b",
]
HEAD_PARAM_ORDER = ["lnf_g", "lnf_b", "head_w", "head_b"]


# ---------------------------------------------------------------------------
# The fused kernel: one grid step = one model (student / teacher).
# All layer weights for that model are resident in VMEM; the layer loop is
# statically unrolled (LAYERS=2) so there are no extra grid steps or loop ops.
# ---------------------------------------------------------------------------
def _dino_kernel(patches_ref, base_ref, patch_w_ref,
                 ln1_g_ref, ln1_b_ref, qkv_w_ref, qkv_b_ref,
                 proj_w_ref, proj_b_ref, ln2_g_ref, ln2_b_ref,
                 fc1_w_ref, fc1_b_ref, fc2_w_ref, fc2_b_ref,
                 lnf_g_ref, lnf_b_ref, head_w_ref, head_b_ref,
                 out_ref):
    scale = 1.0 / math.sqrt(HEAD_DIM)

    def layernorm(x, g, b):
        # torchvision ViT uses LayerNorm(eps=1e-6); stats in f32.
        mu = jnp.mean(x, axis=-1, keepdims=True)
        var = jnp.mean(jnp.square(x - mu), axis=-1, keepdims=True)
        return (x - mu) * jax.lax.rsqrt(var + 1e-6) * g + b

    def linear(x, w, b):
        # bf16 MXU inputs, f32 accumulation.
        y = jnp.dot(x.astype(jnp.bfloat16), w, preferred_element_type=jnp.float32)
        return y + b

    # ---- patch embedding: one lane-dense matmul + one broadcast add ----------
    # patches_ref rows already form the padded token grid (cls slot + pad rows
    # are zero); base_ref already folds cls+pos / pos+patch_b / zeros per row,
    # so no masked sub-slice stores are needed to assemble the sequence.
    tok = jnp.dot(patches_ref[...], patch_w_ref[...],
                  preferred_element_type=jnp.float32)                    # [BCT, DIM]
    x = (tok.reshape(BC, T_PAD, DIM) + base_ref[...][None, :, :]).reshape(BCT, DIM)

    # additive key mask for the padded tokens, built & broadcast-materialized ONCE
    key_idx = jax.lax.broadcasted_iota(jnp.int32, (1, 1, T_PAD), 2)
    kbias = jnp.broadcast_to(
        jnp.where(key_idx < TOKENS, 0.0, -1e30).astype(jnp.float32),
        (BC, T_PAD, T_PAD))

    # ---- encoder layers: statically unrolled in-kernel loop ------------------
    # (At ViT-B scale, move this back onto a grid axis / fori_loop so per-layer
    #  weights are pipelined instead of held resident.)
    for l in range(LAYERS):
        h = layernorm(x, ln1_g_ref[l], ln1_b_ref[l])
        qkv = linear(h, qkv_w_ref[l], qkv_b_ref[l]).astype(jnp.bfloat16)  # [BCT, 3D]

        # TODO(synk): a single batched 'bqhd,bkhd->bhqk' einsum would avoid the
        # per-head lane slices, but needs a two-batch-dim dot_general lowering in
        # Mosaic; single-batch-dim einsums below are the known-good path here.
        o_parts = []
        for hd in range(HEADS):
            qh = qkv[:, hd * HEAD_DIM:(hd + 1) * HEAD_DIM] \
                .reshape(BC, T_PAD, HEAD_DIM)
            kh = qkv[:, DIM + hd * HEAD_DIM: DIM + (hd + 1) * HEAD_DIM] \
                .reshape(BC, T_PAD, HEAD_DIM)
            vh = qkv[:, 2 * DIM + hd * HEAD_DIM: 2 * DIM + (hd + 1) * HEAD_DIM] \
                .reshape(BC, T_PAD, HEAD_DIM)
            s = jnp.einsum("bqd,bkd->bqk", qh, kh,
                           preferred_element_type=jnp.float32) * scale + kbias
            s = s - jnp.max(s, axis=-1, keepdims=True)
            p = jnp.exp(s)
            p = p * pl.reciprocal(jnp.sum(p, axis=-1, keepdims=True), approx=True)
            o = jnp.einsum("bqk,bkd->bqd", p.astype(jnp.bfloat16), vh,
                           preferred_element_type=jnp.float32)            # [BC,T,hd]
            o_parts.append(o.reshape(BCT, HEAD_DIM))
        o = jnp.concatenate(o_parts, axis=-1)                             # [BCT, DIM]

        x = x + linear(o, proj_w_ref[l], proj_b_ref[l])

        h2 = layernorm(x, ln2_g_ref[l], ln2_b_ref[l])
        m = linear(h2, fc1_w_ref[l], fc1_b_ref[l])
        # TODO(synk): PyTorch nn.GELU defaults to exact erf; tanh approximation is
        # used here (EUP-friendly on TPU), numerics differ slightly.
        m = jax.nn.gelu(m, approximate=True)
        m = linear(m, fc2_w_ref[l], fc2_b_ref[l])
        x = x + m

    # ---- final LN on CLS rows + projection head (8-sublane padded store) -----
    cls_tok = x.reshape(BC, T_PAD, DIM)[:, 0:1, :].reshape(BC, DIM)
    feat = layernorm(cls_tok, lnf_g_ref[...], lnf_b_ref[...])
    feat = jnp.concatenate(
        [feat, jnp.zeros((OUT_ROWS - BC, DIM), feat.dtype)], axis=0)      # [8, DIM]
    out_ref[...] = linear(feat, head_w_ref[...], head_b_ref[...]).astype(out_ref.dtype)


def _dino_pallas(patches_pad, base, patch_w, layer_params, head_params):
    """patches_pad: [BCT, CPP_PAD] bf16 (shared by both models);
    base/patch_w/head params: leading model axis [2, ...];
    layer params: [2, LAYERS, ...]."""
    in_specs = [
        pl.BlockSpec((BCT, CPP_PAD), lambda m: (0, 0)),                    # shared
        pl.BlockSpec((None, T_PAD, DIM), lambda m: (m, 0, 0)),             # base
        pl.BlockSpec((None, CPP_PAD, DIM), lambda m: (m, 0, 0)),           # patch_w
    ]
    inputs = [patches_pad, base, patch_w]
    for key in LAYER_PARAM_ORDER:                                          # [2,L,r,c]
        arr = layer_params[key]
        in_specs.append(pl.BlockSpec((None,) + arr.shape[1:], lambda m: (m, 0, 0, 0)))
        inputs.append(arr)
    for key in HEAD_PARAM_ORDER:                                           # [2,r,c]
        arr = head_params[key]
        in_specs.append(pl.BlockSpec((None,) + arr.shape[1:], lambda m: (m, 0, 0)))
        inputs.append(arr)

    grid_spec = pltpu.PrefetchScalarGridSpec(
        num_scalar_prefetch=0,
        grid=(2,),                                     # model axis: student / teacher
        in_specs=in_specs,
        out_specs=pl.BlockSpec((None, OUT_ROWS, OUT_DIM), lambda m: (m, 0, 0)),
    )
    return pl.pallas_call(
        _dino_kernel,
        out_shape=jax.ShapeDtypeStruct((2, OUT_ROWS, OUT_DIM), jnp.float32),
        grid_spec=grid_spec,
        compiler_params=pltpu.CompilerParams(
            # shards student/teacher across the two TensorCores on v7x;
            # harmless (single TC) on v5e/v6e.
            dimension_semantics=("parallel",)),
    )(*inputs)


# ---------------------------------------------------------------------------
# JAX-side glue (layout plumbing only)
# ---------------------------------------------------------------------------
def extract_patches(x):
    """NCHW -> [B, N_PATCH, C*P*P] with (c, dh, dw) flattening order
    (matches a Conv2d(kernel=P, stride=P) patch embedding)."""
    B, C, H, W = x.shape
    x = x.reshape(B, C, H // PATCH, PATCH, W // PATCH, PATCH)
    x = x.transpose(0, 2, 4, 1, 3, 5)
    return x.reshape(B, (H // PATCH) * (W // PATCH), C * PATCH * PATCH)


def _model_consts(p):
    """Per-model constants: per-row additive embedding base and padded patch weight."""
    base = jnp.zeros((T_PAD, DIM), jnp.float32)
    base = base.at[0].set(p["cls"][0] + p["pos"][0])                     # cls + pos
    base = base.at[1:TOKENS].set(p["pos"][1:TOKENS] + p["patch_b"][0])   # pos + bias
    # pad rows (TOKENS..T_PAD-1) stay exactly zero
    patch_w = jnp.pad(p["patch_w"], ((0, CPP_PAD - CPP), (0, 0)))        # [128, DIM] bf16
    return base, patch_w


def dino_forward(student, teacher, x1, x2):
    """Reproduces DINO.forward: (s1, s2, t1, t2), each [BATCH, OUT_DIM]."""
    x = jnp.concatenate([x1, x2], axis=0)                                # [BC, C, H, W]
    patches = extract_patches(x)                                         # [BC, 16, 64]
    # lay patches onto the padded token grid: row 0 (cls slot) and pad rows are zero
    tok_grid = jnp.zeros((BC, T_PAD, CPP_PAD), jnp.float32)
    tok_grid = tok_grid.at[:, 1:TOKENS, :CPP].set(patches)
    patches_pad = tok_grid.reshape(BCT, CPP_PAD).astype(jnp.bfloat16)

    sb, sw = _model_consts(student)
    tb, tw = _model_consts(teacher)
    base = jnp.stack([sb, tb], axis=0)                                   # [2, T_PAD, DIM]
    patch_w = jnp.stack([sw, tw], axis=0)                                # [2, 128, DIM]
    # weights stay SEPARATE per model (correct once EMA diverges teacher from student)
    layer_params = {k: jnp.stack([student[k], teacher[k]], axis=0)
                    for k in LAYER_PARAM_ORDER}
    head_params = {k: jnp.stack([student[k], teacher[k]], axis=0)
                   for k in HEAD_PARAM_ORDER}

    out = _dino_pallas(patches_pad, base, patch_w, layer_params, head_params)
    s1, s2 = out[0, :BATCH], out[0, BATCH:BC]
    t1, t2 = out[1, :BATCH], out[1, BATCH:BC]
    return s1, s2, t1, t2


# ---------------------------------------------------------------------------
# Deterministic parameter initialization (layer weights pre-stacked [LAYERS, ...])
# ---------------------------------------------------------------------------
def init_params(key):
    ks = jax.random.split(key, 8)

    def nrm(k, shape, dtype=jnp.float32):
        return (jax.random.normal(k, shape, jnp.float32) * 0.02).astype(dtype)

    return {
        # matmul weights stored in bf16 (MXU inputs); biases / LN / pos / cls in f32
        "patch_w": nrm(ks[0], (CPP, DIM), jnp.bfloat16),
        "patch_b": jnp.zeros((1, DIM), jnp.float32),
        "cls":     nrm(ks[1], (1, DIM)),
        "pos":     nrm(ks[2], (TOKENS, DIM)),
        "ln1_g":   jnp.ones((LAYERS, 1, DIM), jnp.float32),
        "ln1_b":   jnp.zeros((LAYERS, 1, DIM), jnp.float32),
        "qkv_w":   nrm(ks[3], (LAYERS, DIM, 3 * DIM), jnp.bfloat16),
        "qkv_b":   jnp.zeros((LAYERS, 1, 3 * DIM), jnp.float32),
        "proj_w":  nrm(ks[4], (LAYERS, DIM, DIM), jnp.bfloat16),
        "proj_b":  jnp.zeros((LAYERS, 1, DIM), jnp.float32),
        "ln2_g":   jnp.ones((LAYERS, 1, DIM), jnp.float32),
        "ln2_b":   jnp.zeros((LAYERS, 1, DIM), jnp.float32),
        "fc1_w":   nrm(ks[5], (LAYERS, DIM, MLP), jnp.bfloat16),
        "fc1_b":   jnp.zeros((LAYERS, 1, MLP), jnp.float32),
        "fc2_w":   nrm(ks[6], (LAYERS, MLP, DIM), jnp.bfloat16),
        "fc2_b":   jnp.zeros((LAYERS, 1, DIM), jnp.float32),
        "lnf_g":   jnp.ones((1, DIM), jnp.float32),
        "lnf_b":   jnp.zeros((1, DIM), jnp.float32),
        "head_w":  nrm(ks[7], (DIM, OUT_DIM), jnp.bfloat16),
        "head_b":  jnp.zeros((1, OUT_DIM), jnp.float32),
    }


# ---------------------------------------------------------------------------
# main
# ---------------------------------------------------------------------------
if __name__ == "__main__":
    key = jax.random.PRNGKey(0)
    k1, k2, kp = jax.random.split(key, 3)
    x1 = jax.random.normal(k1, (BATCH, CH, IMG, IMG), jnp.float32)
    x2 = jax.random.normal(k2, (BATCH, CH, IMG, IMG), jnp.float32)

    student = init_params(kp)
    # _init_teacher(): teacher weights copied from student (freezing is a training
    # concern; forward math is identical).
    teacher = jax.tree_util.tree_map(lambda p: p, student)

    fwd = jax.jit(dino_forward)
    s1, s2, t1, t2 = fwd(student, teacher, x1, x2)
    jax.block_until_ready((s1, s2, t1, t2))

    assert s1.shape == (BATCH, OUT_DIM) and s2.shape == (BATCH, OUT_DIM)
    assert t1.shape == (BATCH, OUT_DIM) and t2.shape == (BATCH, OUT_DIM)
    # teacher == student at init => identical forward outputs
    assert bool(jnp.allclose(s1, t1)) and bool(jnp.allclose(s2, t2))
    assert bool(jnp.all(jnp.isfinite(s1))) and bool(jnp.all(jnp.isfinite(s2)))
    print("KERNEL_OK")
</pallas_src>

<mosaic_0001>
module attributes {stable_mosaic.version = 11 : i64} {
  func.func @_dino_kernel(%arg0: i32, %arg1: memref<96x128xbf16, #tpu.memory_space<vmem>>, %arg2: memref<1x24x128xf32, #tpu.memory_space<vmem>>, %arg3: memref<1x128x128xbf16, #tpu.memory_space<vmem>>, %arg4: memref<1x2x1x128xf32, #tpu.memory_space<vmem>>, %arg5: memref<1x2x1x128xf32, #tpu.memory_space<vmem>>, %arg6: memref<1x2x128x384xbf16, #tpu.memory_space<vmem>>, %arg7: memref<1x2x1x384xf32, #tpu.memory_space<vmem>>, %arg8: memref<1x2x128x128xbf16, #tpu.memory_space<vmem>>, %arg9: memref<1x2x1x128xf32, #tpu.memory_space<vmem>>, %arg10: memref<1x2x1x128xf32, #tpu.memory_space<vmem>>, %arg11: memref<1x2x1x128xf32, #tpu.memory_space<vmem>>, %arg12: memref<1x2x128x256xbf16, #tpu.memory_space<vmem>>, %arg13: memref<1x2x1x256xf32, #tpu.memory_space<vmem>>, %arg14: memref<1x2x256x128xbf16, #tpu.memory_space<vmem>>, %arg15: memref<1x2x1x128xf32, #tpu.memory_space<vmem>>, %arg16: memref<1x1x128xf32, #tpu.memory_space<vmem>>, %arg17: memref<1x1x128xf32, #tpu.memory_space<vmem>>, %arg18: memref<1x128x128xbf16, #tpu.memory_space<vmem>>, %arg19: memref<1x1x128xf32, #tpu.memory_space<vmem>>, %arg20: memref<1x8x128xf32, #tpu.memory_space<vmem>>) attributes {dimension_semantics = [#tpu.dimension_semantics<parallel>], iteration_bounds = array<i64: 2>, scalar_prefetch = 0 : i64, scratch_operands = 0 : i64, tpu.core_type = #tpu.core_type<tc>, window_params = [{pipeline_mode = #tpu.pipeline_mode<synchronous>, transform_indices = @transform_0, window_bounds = array<i64: 96, 128>}, {transform_indices = @transform_1, window_bounds = array<i64: 1, 24, 128>}, {transform_indices = @transform_2, window_bounds = array<i64: 1, 128, 128>}, {transform_indices = @transform_3, window_bounds = array<i64: 1, 2, 1, 128>}, {transform_indices = @transform_4, window_bounds = array<i64: 1, 2, 1, 128>}, {transform_indices = @transform_5, window_bounds = array<i64: 1, 2, 128, 384>}, {transform_indices = @transform_6, window_bounds = array<i64: 1, 2, 1, 384>}, {transform_indices = @transform_7, window_bounds = array<i64: 1, 2, 128, 128>}, {transform_indices = @transform_8, window_bounds = array<i64: 1, 2, 1, 128>}, {transform_indices = @transform_9, window_bounds = array<i64: 1, 2, 1, 128>}, {transform_indices = @transform_10, window_bounds = array<i64: 1, 2, 1, 128>}, {transform_indices = @transform_11, window_bounds = array<i64: 1, 2, 128, 256>}, {transform_indices = @transform_12, window_bounds = array<i64: 1, 2, 1, 256>}, {transform_indices = @transform_13, window_bounds = array<i64: 1, 2, 256, 128>}, {transform_indices = @transform_14, window_bounds = array<i64: 1, 2, 1, 128>}, {transform_indices = @transform_15, window_bounds = array<i64: 1, 1, 128>}, {transform_indices = @transform_16, window_bounds = array<i64: 1, 1, 128>}, {transform_indices = @transform_17, window_bounds = array<i64: 1, 128, 128>}, {transform_indices = @transform_18, window_bounds = array<i64: 1, 1, 128>}, {transform_indices = @transform_19, window_bounds = array<i64: 1, 8, 128>}]} {
    %c0 = arith.constant 0 : index
    %c0_0 = arith.constant 0 : index
    %0 = vector.load %arg1[%c0, %c0_0] : memref<96x128xbf16, #tpu.memory_space<vmem>>, vector<96x128xbf16>
    %c0_1 = arith.constant 0 : index
    %c0_2 = arith.constant 0 : index
    %c0_3 = arith.constant 0 : index
    %1 = vector.load %arg3[%c0_1, %c0_2, %c0_3] : memref<1x128x128xbf16, #tpu.memory_space<vmem>>, vector<1x128x128xbf16>
    %2 = vector.shape_cast %1 : vector<1x128x128xbf16> to vector<128x128xbf16>
    %cst = arith.constant dense<0.000000e+00> : vector<96x128xf32>
    %3 = tpu.matmul %0, %2, %cst {dimension_numbers = #tpu.dot_dimension_numbers<[1], [0], [0], [1], [0, 0, 1, 1], [], []>} : vector<96x128xbf16>, vector<128x128xbf16>, vector<96x128xf32> -> vector<96x128xf32>
    %4 = vector.shape_cast %3 : vector<96x128xf32> to vector<4x24x128xf32>
    %c0_4 = arith.constant 0 : index
    %c0_5 = arith.constant 0 : index
    %c0_6 = arith.constant 0 : index
    %5 = vector.load %arg2[%c0_4, %c0_5, %c0_6] : memref<1x24x128xf32, #tpu.memory_space<vmem>>, vector<1x24x128xf32>
    %6 = vector.shape_cast %5 : vector<1x24x128xf32> to vector<24x128xf32>
    %7 = vector.shape_cast %6 : vector<24x128xf32> to vector<1x24x128xf32>
    %8 = vector.broadcast %7 : vector<1x24x128xf32> to vector<4x24x128xf32>
    %9 = arith.addf %4, %8 : vector<4x24x128xf32>
    %10 = vector.shape_cast %9 : vector<4x24x128xf32> to vector<96x128xf32>
    %11 = tpu.iota {dimensions = array<i32: 2>} : vector<1x1x24xi32>
    %c17_i32 = arith.constant 17 : i32
    %12 = vector.broadcast %c17_i32 : i32 to vector<1x1x24xi32>
    %13 = arith.cmpi slt, %11, %12 : vector<1x1x24xi32>
    %cst_7 = arith.constant 0.000000e+00 : f32
    %cst_8 = arith.constant -1.000000e+30 : f32
    %14 = vector.broadcast %cst_7 : f32 to vector<1x1x24xf32>
    %15 = vector.broadcast %cst_8 : f32 to vector<1x1x24xf32>
    %16 = arith.select %13, %14, %15 : vector<1x1x24xi1>, vector<1x1x24xf32>
    %17 = vector.shape_cast %16 : vector<1x1x24xf32> to vector<1x1x24xf32>
    %18 = vector.broadcast %17 : vector<1x1x24xf32> to vector<4x24x24xf32>
    %c0_9 = arith.constant 0 : index
    %c0_10 = arith.constant 0 : index
    %c0_11 = arith.constant 0 : index
    %c0_12 = arith.constant 0 : index
    %19 = vector.load %arg4[%c0_9, %c0_10, %c0_11, %c0_12] : memref<1x2x1x128xf32, #tpu.memory_space<vmem>>, vector<1x1x1x128xf32>
    %20 = vector.shape_cast %19 : vector<1x1x1x128xf32> to vector<1x128xf32>
    %c0_13 = arith.constant 0 : index
    %c0_14 = arith.constant 0 : index
    %c0_15 = arith.constant 0 : index
    %c0_16 = arith.constant 0 : index
    %21 = vector.load %arg5[%c0_13, %c0_14, %c0_15, %c0_16] : memref<1x2x1x128xf32, #tpu.memory_space<vmem>>, vector<1x1x1x128xf32>
    %22 = vector.shape_cast %21 : vector<1x1x1x128xf32> to vector<1x128xf32>
    %cst_17 = arith.constant dense<0.000000e+00> : vector<96xf32>
    %23 = vector.multi_reduction <add>, %10, %cst_17 [1] : vector<96x128xf32> to vector<96xf32>
    %24 = vector.shape_cast %23 : vector<96xf32> to vector<96x1xf32>
    %cst_18 = arith.constant 1.280000e+02 : f32
    %25 = vector.broadcast %cst_18 : f32 to vector<96x1xf32>
    %26 = arith.divf %24, %25 : vector<96x1xf32>
    %27 = vector.broadcast %26 : vector<96x1xf32> to vector<96x128xf32>
    %28 = arith.subf %10, %27 : vector<96x128xf32>
    %29 = arith.mulf %28, %28 : vector<96x128xf32>
    %cst_19 = arith.constant dense<0.000000e+00> : vector<96xf32>
    %30 = vector.multi_reduction <add>, %29, %cst_19 [1] : vector<96x128xf32> to vector<96xf32>
    %31 = vector.shape_cast %30 : vector<96xf32> to vector<96x1xf32>
    %cst_20 = arith.constant 1.280000e+02 : f32
    %32 = vector.broadcast %cst_20 : f32 to vector<96x1xf32>
    %33 = arith.divf %31, %32 : vector<96x1xf32>
    %34 = vector.broadcast %26 : vector<96x1xf32> to vector<96x128xf32>
    %35 = arith.subf %10, %34 : vector<96x128xf32>
    %cst_21 = arith.constant 9.99999997E-7 : f32
    %36 = vector.broadcast %cst_21 : f32 to vector<96x1xf32>
    %37 = arith.addf %33, %36 : vector<96x1xf32>
    %38 = math.rsqrt %37 : vector<96x1xf32>
    %39 = vector.broadcast %38 : vector<96x1xf32> to vector<96x128xf32>
    %40 = arith.mulf %35, %39 : vector<96x128xf32>
    %41 = vector.broadcast %20 : vector<1x128xf32> to vector<96x128xf32>
    %42 = arith.mulf %40, %41 : vector<96x128xf32>
    %43 = vector.broadcast %22 : vector<1x128xf32> to vector<96x128xf32>
    %44 = arith.addf %42, %43 : vector<96x128xf32>
    %c0_22 = arith.constant 0 : index
    %c0_23 = arith.constant 0 : index
    %c0_24 = arith.constant 0 : index
    %c0_25 = arith.constant 0 : index
    %45 = vector.load %arg6[%c0_22, %c0_23, %c0_24, %c0_25] : memref<1x2x128x384xbf16, #tpu.memory_space<vmem>>, vector<1x1x128x384xbf16>
    %46 = vector.shape_cast %45 : vector<1x1x128x384xbf16> to vector<128x384xbf16>
    %c0_26 = arith.constant 0 : index
    %c0_27 = arith.constant 0 : index
    %c0_28 = arith.constant 0 : index
    %c0_29 = arith.constant 0 : index
    %47 = vector.load %arg7[%c0_26, %c0_27, %c0_28, %c0_29] : memref<1x2x1x384xf32, #tpu.memory_space<vmem>>, vector<1x1x1x384xf32>
    %48 = vector.shape_cast %47 : vector<1x1x1x384xf32> to vector<1x384xf32>
    %49 = arith.truncf %44 : vector<96x128xf32> to vector<96x128xbf16>
    %cst_30 = arith.constant dense<0.000000e+00> : vector<96x384xf32>
    %50 = tpu.matmul %49, %46, %cst_30 {dimension_numbers = #tpu.dot_dimension_numbers<[1], [0], [0], [1], [0, 0, 1, 1], [], []>} : vector<96x128xbf16>, vector<128x384xbf16>, vector<96x384xf32> -> vector<96x384xf32>
    %51 = vector.broadcast %48 : vector<1x384xf32> to vector<96x384xf32>
    %52 = arith.addf %50, %51 : vector<96x384xf32>
    %53 = arith.truncf %52 : vector<96x384xf32> to vector<96x384xbf16>
    %54 = vector.extract_strided_slice %53 {offsets = [0, 0], sizes = [96, 32], strides = [1, 1]} : vector<96x384xbf16> to vector<96x32xbf16>
    %55 = vector.shape_cast %54 : vector<96x32xbf16> to vector<4x24x32xbf16>
    %56 = vector.extract_strided_slice %53 {offsets = [0, 128], sizes = [96, 32], strides = [1, 1]} : vector<96x384xbf16> to vector<96x32xbf16>
    %57 = vector.shape_cast %56 : vector<96x32xbf16> to vector<4x24x32xbf16>
    %58 = vector.extract_strided_slice %53 {offsets = [0, 256], sizes = [96, 32], strides = [1, 1]} : vector<96x384xbf16> to vector<96x32xbf16>
    %59 = vector.shape_cast %58 : vector<96x32xbf16> to vector<4x24x32xbf16>
    "tpu.trace_start"() <{level = 10 : i32, message = "bqd,bkd->bqk"}> : () -> ()
    %cst_31 = arith.constant dense<0.000000e+00> : vector<4x24x24xf32>
    %60 = tpu.matmul %55, %57, %cst_31 {dimension_numbers = #tpu.dot_dimension_numbers<[2], [2], [1], [1], [0, 0, 0, 1, 1, 1], [0], [0]>} : vector<4x24x32xbf16>, vector<4x24x32xbf16>, vector<4x24x24xf32> -> vector<4x24x24xf32>
    "tpu.trace_stop"() : () -> ()
    %cst_32 = arith.constant 0.176776692 : f32
    %61 = vector.broadcast %cst_32 : f32 to vector<4x24x24xf32>
    %62 = arith.mulf %60, %61 : vector<4x24x24xf32>
    %63 = arith.addf %62, %18 : vector<4x24x24xf32>
    %cst_33 = arith.constant dense<0xFF800000> : vector<4x24xf32>
    %64 = vector.multi_reduction <maximumf>, %63, %cst_33 [2] : vector<4x24x24xf32> to vector<4x24xf32>
    %65 = vector.shape_cast %64 : vector<4x24xf32> to vector<4x24x1xf32>
    %66 = vector.broadcast %65 : vector<4x24x1xf32> to vector<4x24x24xf32>
    %67 = arith.subf %63, %66 : vector<4x24x24xf32>
    %68 = math.exp %67 : vector<4x24x24xf32>
    %cst_34 = arith.constant dense<0.000000e+00> : vector<4x24xf32>
    %69 = vector.multi_reduction <add>, %68, %cst_34 [2] : vector<4x24x24xf32> to vector<4x24xf32>
    %70 = vector.shape_cast %69 : vector<4x24xf32> to vector<4x24x1xf32>
    %71 = tpu.reciprocal %70 {approx = true} : vector<4x24x1xf32> -> vector<4x24x1xf32>
    %72 = vector.broadcast %71 : vector<4x24x1xf32> to vector<4x24x24xf32>
    %73 = arith.mulf %68, %72 : vector<4x24x24xf32>
    %74 = arith.truncf %73 : vector<4x24x24xf32> to vector<4x24x24xbf16>
    "tpu.trace_start"() <{level = 10 : i32, message = "bqk,bkd->bqd"}> : () -> ()
    %cst_35 = arith.constant dense<0.000000e+00> : vector<4x24x32xf32>
    %75 = tpu.matmul %74, %59, %cst_35 {dimension_numbers = #tpu.dot_dimension_numbers<[2], [1], [1], [2], [0, 0, 0, 1, 1, 2], [0], [0]>} : vector<4x24x24xbf16>, vector<4x24x32xbf16>, vector<4x24x32xf32> -> vector<4x24x32xf32>
    "tpu.trace_stop"() : () -> ()
    %76 = vector.shape_cast %75 : vector<4x24x32xf32> to vector<96x32xf32>
    %77 = vector.extract_strided_slice %53 {offsets = [0, 32], sizes = [96, 32], strides = [1, 1]} : vector<96x384xbf16> to vector<96x32xbf16>
    %78 = vector.shape_cast %77 : vector<96x32xbf16> to vector<4x24x32xbf16>
    %79 = vector.extract_strided_slice %53 {offsets = [0, 160], sizes = [96, 32], strides = [1, 1]} : vector<96x384xbf16> to vector<96x32xbf16>
    %80 = vector.shape_cast %79 : vector<96x32xbf16> to vector<4x24x32xbf16>
    %81 = vector.extract_strided_slice %53 {offsets = [0, 288], sizes = [96, 32], strides = [1, 1]} : vector<96x384xbf16> to vector<96x32xbf16>
    %82 = vector.shape_cast %81 : vector<96x32xbf16> to vector<4x24x32xbf16>
    "tpu.trace_start"() <{level = 10 : i32, message = "bqd,bkd->bqk"}> : () -> ()
    %cst_36 = arith.constant dense<0.000000e+00> : vector<4x24x24xf32>
    %83 = tpu.matmul %78, %80, %cst_36 {dimension_numbers = #tpu.dot_dimension_numbers<[2], [2], [1], [1], [0, 0, 0, 1, 1, 1], [0], [0]>} : vector<4x24x32xbf16>, vector<4x24x32xbf16>, vector<4x24x24xf32> -> vector<4x24x24xf32>
    "tpu.trace_stop"() : () -> ()
    %cst_37 = arith.constant 0.176776692 : f32
    %84 = vector.broadcast %cst_37 : f32 to vector<4x24x24xf32>
    %85 = arith.mulf %83, %84 : vector<4x24x24xf32>
    %86 = arith.addf %85, %18 : vector<4x24x24xf32>
    %cst_38 = arith.constant dense<0xFF800000> : vector<4x24xf32>
    %87 = vector.multi_reduction <maximumf>, %86, %cst_38 [2] : vector<4x24x24xf32> to vector<4x24xf32>
    %88 = vector.shape_cast %87 : vector<4x24xf32> to vector<4x24x1xf32>
    %89 = vector.broadcast %88 : vector<4x24x1xf32> to vector<4x24x24xf32>
    %90 = arith.subf %86, %89 : vector<4x24x24xf32>
    %91 = math.exp %90 : vector<4x24x24xf32>
    %cst_39 = arith.constant dense<0.000000e+00> : vector<4x24xf32>
    %92 = vector.multi_reduction <add>, %91, %cst_39 [2] : vector<4x24x24xf32> to vector<4x24xf32>
    %93 = vector.shape_cast %92 : vector<4x24xf32> to vector<4x24x1xf32>
    %94 = tpu.reciprocal %93 {approx = true} : vector<4x24x1xf32> -> vector<4x24x1xf32>
    %95 = vector.broadcast %94 : vector<4x24x1xf32> to vector<4x24x24xf32>
    %96 = arith.mulf %91, %95 : vector<4x24x24xf32>
    %97 = arith.truncf %96 : vector<4x24x24xf32> to vector<4x24x24xbf16>
    "tpu.trace_start"() <{level = 10 : i32, message = "bqk,bkd->bqd"}> : () -> ()
    %cst_40 = arith.constant dense<0.000000e+00> : vector<4x24x32xf32>
    %98 = tpu.matmul %97, %82, %cst_40 {dimension_numbers = #tpu.dot_dimension_numbers<[2], [1], [1], [2], [0, 0, 0, 1, 1, 2], [0], [0]>} : vector<4x24x24xbf16>, vector<4x24x32xbf16>, vector<4x24x32xf32> -> vector<4x24x32xf32>
    "tpu.trace_stop"() : () -> ()
    %99 = vector.shape_cast %98 : vector<4x24x32xf32> to vector<96x32xf32>
    %100 = vector.extract_strided_slice %53 {offsets = [0, 64], sizes = [96, 32], strides = [1, 1]} : vector<96x384xbf16> to vector<96x32xbf16>
    %101 = vector.shape_cast %100 : vector<96x32xbf16> to vector<4x24x32xbf16>
    %102 = vector.extract_strided_slice %53 {offsets = [0, 192], sizes = [96, 32], strides = [1, 1]} : vector<96x384xbf16> to vector<96x32xbf16>
    %103 = vector.shape_cast %102 : vector<96x32xbf16> to vector<4x24x32xbf16>
    %104 = vector.extract_strided_slice %53 {offsets = [0, 320], sizes = [96, 32], strides = [1, 1]} : vector<96x384xbf16> to vector<96x32xbf16>
    %105 = vector.shape_cast %104 : vector<96x32xbf16> to vector<4x24x32xbf16>
    "tpu.trace_start"() <{level = 10 : i32, message = "bqd,bkd->bqk"}> : () -> ()
    %cst_41 = arith.constant dense<0.000000e+00> : vector<4x24x24xf32>
    %106 = tpu.matmul %101, %103, %cst_41 {dimension_numbers = #tpu.dot_dimension_numbers<[2], [2], [1], [1], [0, 0, 0, 1, 1, 1], [0], [0]>} : vector<4x24x32xbf16>, vector<4x24x32xbf16>, vector<4x24x24xf32> -> vector<4x24x24xf32>
    "tpu.trace_stop"() : () -> ()
    %cst_42 = arith.constant 0.176776692 : f32
    %107 = vector.broadcast %cst_42 : f32 to vector<4x24x24xf32>
    %108 = arith.mulf %106, %107 : vector<4x24x24xf32>
    %109 = arith.addf %108, %18 : vector<4x24x24xf32>
    %cst_43 = arith.constant dense<0xFF800000> : vector<4x24xf32>
    %110 = vector.multi_reduction <maximumf>, %109, %cst_43 [2] : vector<4x24x24xf32> to vector<4x24xf32>
    %111 = vector.shape_cast %110 : vector<4x24xf32> to vector<4x24x1xf32>
    %112 = vector.broadcast %111 : vector<4x24x1xf32> to vector<4x24x24xf32>
    %113 = arith.subf %109, %112 : vector<4x24x24xf32>
    %114 = math.exp %113 : vector<4x24x24xf32>
    %cst_44 = arith.constant dense<0.000000e+00> : vector<4x24xf32>
    %115 = vector.multi_reduction <add>, %114, %cst_44 [2] : vector<4x24x24xf32> to vector<4x24xf32>
    %116 = vector.shape_cast %115 : vector<4x24xf32> to vector<4x24x1xf32>
    %117 = tpu.reciprocal %116 {approx = true} : vector<4x24x1xf32> -> vector<4x24x1xf32>
    %118 = vector.broadcast %117 : vector<4x24x1xf32> to vector<4x24x24xf32>
    %119 = arith.mulf %114, %118 : vector<4x24x24xf32>
    %120 = arith.truncf %119 : vector<4x24x24xf32> to vector<4x24x24xbf16>
    "tpu.trace_start"() <{level = 10 : i32, message = "bqk,bkd->bqd"}> : () -> ()
    %cst_45 = arith.constant dense<0.000000e+00> : vector<4x24x32xf32>
    %121 = tpu.matmul %120, %105, %cst_45 {dimension_numbers = #tpu.dot_dimension_numbers<[2], [1], [1], [2], [0, 0, 0, 1, 1, 2], [0], [0]>} : vector<4x24x24xbf16>, vector<4x24x32xbf16>, vector<4x24x32xf32> -> vector<4x24x32xf32>
    "tpu.trace_stop"() : () -> ()
    %122 = vector.shape_cast %121 : vector<4x24x32xf32> to vector<96x32xf32>
    %123 = vector.extract_strided_slice %53 {offsets = [0, 96], sizes = [96, 32], strides = [1, 1]} : vector<96x384xbf16> to vector<96x32xbf16>
    %124 = vector.shape_cast %123 : vector<96x32xbf16> to vector<4x24x32xbf16>
    %125 = vector.extract_strided_slice %53 {offsets = [0, 224], sizes = [96, 32], strides = [1, 1]} : vector<96x384xbf16> to vector<96x32xbf16>
    %126 = vector.shape_cast %125 : vector<96x32xbf16> to vector<4x24x32xbf16>
    %127 = vector.extract_strided_slice %53 {offsets = [0, 352], sizes = [96, 32], strides = [1, 1]} : vector<96x384xbf16> to vector<96x32xbf16>
    %128 = vector.shape_cast %127 : vector<96x32xbf16> to vector<4x24x32xbf16>
    "tpu.trace_start"() <{level = 10 : i32, message = "bqd,bkd->bqk"}> : () -> ()
    %cst_46 = arith.constant dense<0.000000e+00> : vector<4x24x24xf32>
    %129 = tpu.matmul %124, %126, %cst_46 {dimension_numbers = #tpu.dot_dimension_numbers<[2], [2], [1], [1], [0, 0, 0, 1, 1, 1], [0], [0]>} : vector<4x24x32xbf16>, vector<4x24x32xbf16>, vector<4x24x24xf32> -> vector<4x24x24xf32>
    "tpu.trace_stop"() : () -> ()
    %cst_47 = arith.constant 0.176776692 : f32
    %130 = vector.broadcast %cst_47 : f32 to vector<4x24x24xf32>
    %131 = arith.mulf %129, %130 : vector<4x24x24xf32>
    %132 = arith.addf %131, %18 : vector<4x24x24xf32>
    %cst_48 = arith.constant dense<0xFF800000> : vector<4x24xf32>
    %133 = vector.multi_reduction <maximumf>, %132, %cst_48 [2] : vector<4x24x24xf32> to vector<4x24xf32>
    %134 = vector.shape_cast %133 : vector<4x24xf32> to vector<4x24x1xf32>
    %135 = vector.broadcast %134 : vector<4x24x1xf32> to vector<4x24x24xf32>
    %136 = arith.subf %132, %135 : vector<4x24x24xf32>
    %137 = math.exp %136 : vector<4x24x24xf32>
    %cst_49 = arith.constant dense<0.000000e+00> : vector<4x24xf32>
    %138 = vector.multi_reduction <add>, %137, %cst_49 [2] : vector<4x24x24xf32> to vector<4x24xf32>
    %139 = vector.shape_cast %138 : vector<4x24xf32> to vector<4x24x1xf32>
    %140 = tpu.reciprocal %139 {approx = true} : vector<4x24x1xf32> -> vector<4x24x1xf32>
    %141 = vector.broadcast %140 : vector<4x24x1xf32> to vector<4x24x24xf32>
    %142 = arith.mulf %137, %141 : vector<4x24x24xf32>
    %143 = arith.truncf %142 : vector<4x24x24xf32> to vector<4x24x24xbf16>
    "tpu.trace_start"() <{level = 10 : i32, message = "bqk,bkd->bqd"}> : () -> ()
    %cst_50 = arith.constant dense<0.000000e+00> : vector<4x24x32xf32>
    %144 = tpu.matmul %143, %128, %cst_50 {dimension_numbers = #tpu.dot_dimension_numbers<[2], [1], [1], [2], [0, 0, 0, 1, 1, 2], [0], [0]>} : vector<4x24x24xbf16>, vector<4x24x32xbf16>, vector<4x24x32xf32> -> vector<4x24x32xf32>
    "tpu.trace_stop"() : () -> ()
    %145 = vector.shape_cast %144 : vector<4x24x32xf32> to vector<96x32xf32>
    %146 = tpu.concatenate %76, %99, %122, %145 in 1 : vector<96x32xf32>, vector<96x32xf32>, vector<96x32xf32>, vector<96x32xf32> -> vector<96x128xf32>
    %c0_51 = arith.constant 0 : index
    %c0_52 = arith.constant 0 : index
    %c0_53 = arith.constant 0 : index
    %c0_54 = arith.constant 0 : index
    %147 = vector.load %arg8[%c0_51, %c0_52, %c0_53, %c0_54] : memref<1x2x128x128xbf16, #tpu.memory_space<vmem>>, vector<1x1x128x128xbf16>
    %148 = vector.shape_cast %147 : vector<1x1x128x128xbf16> to vector<128x128xbf16>
    %c0_55 = arith.constant 0 : index
    %c0_56 = arith.constant 0 : index
    %c0_57 = arith.constant 0 : index
    %c0_58 = arith.constant 0 : index
    %149 = vector.load %arg9[%c0_55, %c0_56, %c0_57, %c0_58] : memref<1x2x1x128xf32, #tpu.memory_space<vmem>>, vector<1x1x1x128xf32>
    %150 = vector.shape_cast %149 : vector<1x1x1x128xf32> to vector<1x128xf32>
    %151 = arith.truncf %146 : vector<96x128xf32> to vector<96x128xbf16>
    %cst_59 = arith.constant dense<0.000000e+00> : vector<96x128xf32>
    %152 = tpu.matmul %151, %148, %cst_59 {dimension_numbers = #tpu.dot_dimension_numbers<[1], [0], [0], [1], [0, 0, 1, 1], [], []>} : vector<96x128xbf16>, vector<128x128xbf16>, vector<96x128xf32> -> vector<96x128xf32>
    %153 = vector.broadcast %150 : vector<1x128xf32> to vector<96x128xf32>
    %154 = arith.addf %152, %153 : vector<96x128xf32>
    %155 = arith.addf %10, %154 : vector<96x128xf32>
    %c0_60 = arith.constant 0 : index
    %c0_61 = arith.constant 0 : index
    %c0_62 = arith.constant 0 : index
    %c0_63 = arith.constant 0 : index
    %156 = vector.load %arg10[%c0_60, %c0_61, %c0_62, %c0_63] : memref<1x2x1x128xf32, #tpu.memory_space<vmem>>, vector<1x1x1x128xf32>
    %157 = vector.shape_cast %156 : vector<1x1x1x128xf32> to vector<1x128xf32>
    %c0_64 = arith.constant 0 : index
    %c0_65 = arith.constant 0 : index
    %c0_66 = arith.constant 0 : index
    %c0_67 = arith.constant 0 : index
    %158 = vector.load %arg11[%c0_64, %c0_65, %c0_66, %c0_67] : memref<1x2x1x128xf32, #tpu.memory_space<vmem>>, vector<1x1x1x128xf32>
    %159 = vector.shape_cast %158 : vector<1x1x1x128xf32> to vector<1x128xf32>
    %cst_68 = arith.constant dense<0.000000e+00> : vector<96xf32>
    %160 = vector.multi_reduction <add>, %155, %cst_68 [1] : vector<96x128xf32> to vector<96xf32>
    %161 = vector.shape_cast %160 : vector<96xf32> to vector<96x1xf32>
    %cst_69 = arith.constant 1.280000e+02 : f32
    %162 = vector.broadcast %cst_69 : f32 to vector<96x1xf32>
    %163 = arith.divf %161, %162 : vector<96x1xf32>
    %164 = vector.broadcast %163 : vector<96x1xf32> to vector<96x128xf32>
    %165 = arith.subf %155, %164 : vector<96x128xf32>
    %166 = arith.mulf %165, %165 : vector<96x128xf32>
    %cst_70 = arith.constant dense<0.000000e+00> : vector<96xf32>
    %167 = vector.multi_reduction <add>, %166, %cst_70 [1] : vector<96x128xf32> to vector<96xf32>
    %168 = vector.shape_cast %167 : vector<96xf32> to vector<96x1xf32>
    %cst_71 = arith.constant 1.280000e+02 : f32
    %169 = vector.broadcast %cst_71 : f32 to vector<96x1xf32>
    %170 = arith.divf %168, %169 : vector<96x1xf32>
    %171 = vector.broadcast %163 : vector<96x1xf32> to vector<96x128xf32>
    %172 = arith.subf %155, %171 : vector<96x128xf32>
    %cst_72 = arith.constant 9.99999997E-7 : f32
    %173 = vector.broadcast %cst_72 : f32 to vector<96x1xf32>
    %174 = arith.addf %170, %173 : vector<96x1xf32>
    %175 = math.rsqrt %174 : vector<96x1xf32>
    %176 = vector.broadcast %175 : vector<96x1xf32> to vector<96x128xf32>
    %177 = arith.mulf %172, %176 : vector<96x128xf32>
    %178 = vector.broadcast %157 : vector<1x128xf32> to vector<96x128xf32>
    %179 = arith.mulf %177, %178 : vector<96x128xf32>
    %180 = vector.broadcast %159 : vector<1x128xf32> to vector<96x128xf32>
    %181 = arith.addf %179, %180 : vector<96x128xf32>
    %c0_73 = arith.constant 0 : index
    %c0_74 = arith.constant 0 : index
    %c0_75 = arith.constant 0 : index
    %c0_76 = arith.constant 0 : index
    %182 = vector.load %arg12[%c0_73, %c0_74, %c0_75, %c0_76] : memref<1x2x128x256xbf16, #tpu.memory_space<vmem>>, vector<1x1x128x256xbf16>
    %183 = vector.shape_cast %182 : vector<1x1x128x256xbf16> to vector<128x256xbf16>
    %c0_77 = arith.constant 0 : index
    %c0_78 = arith.constant 0 : index
    %c0_79 = arith.constant 0 : index
    %c0_80 = arith.constant 0 : index
    %184 = vector.load %arg13[%c0_77, %c0_78, %c0_79, %c0_80] : memref<1x2x1x256xf32, #tpu.memory_space<vmem>>, vector<1x1x1x256xf32>
    %185 = vector.shape_cast %184 : vector<1x1x1x256xf32> to vector<1x256xf32>
    %186 = arith.truncf %181 : vector<96x128xf32> to vector<96x128xbf16>
    %cst_81 = arith.constant dense<0.000000e+00> : vector<96x256xf32>
    %187 = tpu.matmul %186, %183, %cst_81 {dimension_numbers = #tpu.dot_dimension_numbers<[1], [0], [0], [1], [0, 0, 1, 1], [], []>} : vector<96x128xbf16>, vector<128x256xbf16>, vector<96x256xf32> -> vector<96x256xf32>
    %188 = vector.broadcast %185 : vector<1x256xf32> to vector<96x256xf32>
    %189 = arith.addf %187, %188 : vector<96x256xf32>
    %190 = arith.mulf %189, %189 : vector<96x256xf32>
    %191 = arith.mulf %189, %190 : vector<96x256xf32>
    %cst_82 = arith.constant 4.471500e-02 : f32
    %192 = vector.broadcast %cst_82 : f32 to vector<96x256xf32>
    %193 = arith.mulf %192, %191 : vector<96x256xf32>
    %194 = arith.addf %189, %193 : vector<96x256xf32>
    %cst_83 = arith.constant 0.797884583 : f32
    %195 = vector.broadcast %cst_83 : f32 to vector<96x256xf32>
    %196 = arith.mulf %195, %194 : vector<96x256xf32>
    %197 = math.tanh %196 : vector<96x256xf32>
    %cst_84 = arith.constant 1.000000e+00 : f32
    %198 = vector.broadcast %cst_84 : f32 to vector<96x256xf32>
    %199 = arith.addf %198, %197 : vector<96x256xf32>
    %cst_85 = arith.constant 5.000000e-01 : f32
    %200 = vector.broadcast %cst_85 : f32 to vector<96x256xf32>
    %201 = arith.mulf %200, %199 : vector<96x256xf32>
    %202 = arith.mulf %189, %201 : vector<96x256xf32>
    %c0_86 = arith.constant 0 : index
    %c0_87 = arith.constant 0 : index
    %c0_88 = arith.constant 0 : index
    %c0_89 = arith.constant 0 : index
    %203 = vector.load %arg14[%c0_86, %c0_87, %c0_88, %c0_89] : memref<1x2x256x128xbf16, #tpu.memory_space<vmem>>, vector<1x1x256x128xbf16>
    %204 = vector.shape_cast %203 : vector<1x1x256x128xbf16> to vector<256x128xbf16>
    %c0_90 = arith.constant 0 : index
    %c0_91 = arith.constant 0 : index
    %c0_92 = arith.constant 0 : index
    %c0_93 = arith.constant 0 : index
    %205 = vector.load %arg15[%c0_90, %c0_91, %c0_92, %c0_93] : memref<1x2x1x128xf32, #tpu.memory_space<vmem>>, vector<1x1x1x128xf32>
    %206 = vector.shape_cast %205 : vector<1x1x1x128xf32> to vector<1x128xf32>
    %207 = arith.truncf %202 : vector<96x256xf32> to vector<96x256xbf16>
    %cst_94 = arith.constant dense<0.000000e+00> : vector<96x128xf32>
    %208 = tpu.matmul %207, %204, %cst_94 {dimension_numbers = #tpu.dot_dimension_numbers<[1], [0], [0], [1], [0, 0, 1, 1], [], []>} : vector<96x256xbf16>, vector<256x128xbf16>, vector<96x128xf32> -> vector<96x128xf32>
    %209 = vector.broadcast %206 : vector<1x128xf32> to vector<96x128xf32>
    %210 = arith.addf %208, %209 : vector<96x128xf32>
    %211 = arith.addf %155, %210 : vector<96x128xf32>
    %c0_95 = arith.constant 0 : index
    %c1 = arith.constant 1 : index
    %c0_96 = arith.constant 0 : index
    %c0_97 = arith.constant 0 : index
    %212 = vector.load %arg4[%c0_95, %c1, %c0_96, %c0_97] : memref<1x2x1x128xf32, #tpu.memory_space<vmem>>, vector<1x1x1x128xf32>
    %213 = vector.shape_cast %212 : vector<1x1x1x128xf32> to vector<1x128xf32>
    %c0_98 = arith.constant 0 : index
    %c1_99 = arith.constant 1 : index
    %c0_100 = arith.constant 0 : index
    %c0_101 = arith.constant 0 : index
    %214 = vector.load %arg5[%c0_98, %c1_99, %c0_100, %c0_101] : memref<1x2x1x128xf32, #tpu.memory_space<vmem>>, vector<1x1x1x128xf32>
    %215 = vector.shape_cast %214 : vector<1x1x1x128xf32> to vector<1x128xf32>
    %cst_102 = arith.constant dense<0.000000e+00> : vector<96xf32>
    %216 = vector.multi_reduction <add>, %211, %cst_102 [1] : vector<96x128xf32> to vector<96xf32>
    %217 = vector.shape_cast %216 : vector<96xf32> to vector<96x1xf32>
    %cst_103 = arith.constant 1.280000e+02 : f32
    %218 = vector.broadcast %cst_103 : f32 to vector<96x1xf32>
    %219 = arith.divf %217, %218 : vector<96x1xf32>
    %220 = vector.broadcast %219 : vector<96x1xf32> to vector<96x128xf32>
    %221 = arith.subf %211, %220 : vector<96x128xf32>
    %222 = arith.mulf %221, %221 : vector<96x128xf32>
    %cst_104 = arith.constant dense<0.000000e+00> : vector<96xf32>
    %223 = vector.multi_reduction <add>, %222, %cst_104 [1] : vector<96x128xf32> to vector<96xf32>
    %224 = vector.shape_cast %223 : vector<96xf32> to vector<96x1xf32>
    %cst_105 = arith.constant 1.280000e+02 : f32
    %225 = vector.broadcast %cst_105 : f32 to vector<96x1xf32>
    %226 = arith.divf %224, %225 : vector<96x1xf32>
    %227 = vector.broadcast %219 : vector<96x1xf32> to vector<96x128xf32>
    %228 = arith.subf %211, %227 : vector<96x128xf32>
    %cst_106 = arith.constant 9.99999997E-7 : f32
    %229 = vector.broadcast %cst_106 : f32 to vector<96x1xf32>
    %230 = arith.addf %226, %229 : vector<96x1xf32>
    %231 = math.rsqrt %230 : vector<96x1xf32>
    %232 = vector.broadcast %231 : vector<96x1xf32> to vector<96x128xf32>
    %233 = arith.mulf %228, %232 : vector<96x128xf32>
    %234 = vector.broadcast %213 : vector<1x128xf32> to vector<96x128xf32>
    %235 = arith.mulf %233, %234 : vector<96x128xf32>
    %236 = vector.broadcast %215 : vector<1x128xf32> to vector<96x128xf32>
    %237 = arith.addf %235, %236 : vector<96x128xf32>
    %c0_107 = arith.constant 0 : index
    %c1_108 = arith.constant 1 : index
    %c0_109 = arith.constant 0 : index
    %c0_110 = arith.constant 0 : index
    %238 = vector.load %arg6[%c0_107, %c1_108, %c0_109, %c0_110] : memref<1x2x128x384xbf16, #tpu.memory_space<vmem>>, vector<1x1x128x384xbf16>
    %239 = vector.shape_cast %238 : vector<1x1x128x384xbf16> to vector<128x384xbf16>
    %c0_111 = arith.constant 0 : index
    %c1_112 = arith.constant 1 : index
    %c0_113 = arith.constant 0 : index
    %c0_114 = arith.constant 0 : index
    %240 = vector.load %arg7[%c0_111, %c1_112, %c0_113, %c0_114] : memref<1x2x1x384xf32, #tpu.memory_space<vmem>>, vector<1x1x1x384xf32>
    %241 = vector.shape_cast %240 : vector<1x1x1x384xf32> to vector<1x384xf32>
    %242 = arith.truncf %237 : vector<96x128xf32> to vector<96x128xbf16>
    %cst_115 = arith.constant dense<0.000000e+00> : vector<96x384xf32>
    %243 = tpu.matmul %242, %239, %cst_115 {dimension_numbers = #tpu.dot_dimension_numbers<[1], [0], [0], [1], [0, 0, 1, 1], [], []>} : vector<96x128xbf16>, vector<128x384xbf16>, vector<96x384xf32> -> vector<96x384xf32>
    %244 = vector.broadcast %241 : vector<1x384xf32> to vector<96x384xf32>
    %245 = arith.addf %243, %244 : vector<96x384xf32>
    %246 = arith.truncf %245 : vector<96x384xf32> to vector<96x384xbf16>
    %247 = vector.extract_strided_slice %246 {offsets = [0, 0], sizes = [96, 32], strides = [1, 1]} : vector<96x384xbf16> to vector<96x32xbf16>
    %248 = vector.shape_cast %247 : vector<96x32xbf16> to vector<4x24x32xbf16>
    %249 = vector.extract_strided_slice %246 {offsets = [0, 128], sizes = [96, 32], strides = [1, 1]} : vector<96x384xbf16> to vector<96x32xbf16>
    %250 = vector.shape_cast %249 : vector<96x32xbf16> to vector<4x24x32xbf16>
    %251 = vector.extract_strided_slice %246 {offsets = [0, 256], sizes = [96, 32], strides = [1, 1]} : vector<96x384xbf16> to vector<96x32xbf16>
    %252 = vector.shape_cast %251 : vector<96x32xbf16> to vector<4x24x32xbf16>
    "tpu.trace_start"() <{level = 10 : i32, message = "bqd,bkd->bqk"}> : () -> ()
    %cst_116 = arith.constant dense<0.000000e+00> : vector<4x24x24xf32>
    %253 = tpu.matmul %248, %250, %cst_116 {dimension_numbers = #tpu.dot_dimension_numbers<[2], [2], [1], [1], [0, 0, 0, 1, 1, 1], [0], [0]>} : vector<4x24x32xbf16>, vector<4x24x32xbf16>, vector<4x24x24xf32> -> vector<4x24x24xf32>
    "tpu.trace_stop"() : () -> ()
    %cst_117 = arith.constant 0.176776692 : f32
    %254 = vector.broadcast %cst_117 : f32 to vector<4x24x24xf32>
    %255 = arith.mulf %253, %254 : vector<4x24x24xf32>
    %256 = arith.addf %255, %18 : vector<4x24x24xf32>
    %cst_118 = arith.constant dense<0xFF800000> : vector<4x24xf32>
    %257 = vector.multi_reduction <maximumf>, %256, %cst_118 [2] : vector<4x24x24xf32> to vector<4x24xf32>
    %258 = vector.shape_cast %257 : vector<4x24xf32> to vector<4x24x1xf32>
    %259 = vector.broadcast %258 : vector<4x24x1xf32> to vector<4x24x24xf32>
    %260 = arith.subf %256, %259 : vector<4x24x24xf32>
    %261 = math.exp %260 : vector<4x24x24xf32>
    %cst_119 = arith.constant dense<0.000000e+00> : vector<4x24xf32>
    %262 = vector.multi_reduction <add>, %261, %cst_119 [2] : vector<4x24x24xf32> to vector<4x24xf32>
    %263 = vector.shape_cast %262 : vector<4x24xf32> to vector<4x24x1xf32>
    %264 = tpu.reciprocal %263 {approx = true} : vector<4x24x1xf32> -> vector<4x24x1xf32>
    %265 = vector.broadcast %264 : vector<4x24x1xf32> to vector<4x24x24xf32>
    %266 = arith.mulf %261, %265 : vector<4x24x24xf32>
    %267 = arith.truncf %266 : vector<4x24x24xf32> to vector<4x24x24xbf16>
    "tpu.trace_start"() <{level = 10 : i32, message = "bqk,bkd->bqd"}> : () -> ()
    %cst_120 = arith.constant dense<0.000000e+00> : vector<4x24x32xf32>
    %268 = tpu.matmul %267, %252, %cst_120 {dimension_numbers = #tpu.dot_dimension_numbers<[2], [1], [1], [2], [0, 0, 0, 1, 1, 2], [0], [0]>} : vector<4x24x24xbf16>, vector<4x24x32xbf16>, vector<4x24x32xf32> -> vector<4x24x32xf32>
    "tpu.trace_stop"() : () -> ()
    %269 = vector.shape_cast %268 : vector<4x24x32xf32> to vector<96x32xf32>
    %270 = vector.extract_strided_slice %246 {offsets = [0, 32], sizes = [96, 32], strides = [1, 1]} : vector<96x384xbf16> to vector<96x32xbf16>
    %271 = vector.shape_cast %270 : vector<96x32xbf16> to vector<4x24x32xbf16>
    %272 = vector.extract_strided_slice %246 {offsets = [0, 160], sizes = [96, 32], strides = [1, 1]} : vector<96x384xbf16> to vector<96x32xbf16>
    %273 = vector.shape_cast %272 : vector<96x32xbf16> to vector<4x24x32xbf16>
    %274 = vector.extract_strided_slice %246 {offsets = [0, 288], sizes = [96, 32], strides = [1, 1]} : vector<96x384xbf16> to vector<96x32xbf16>
    %275 = vector.shape_cast %274 : vector<96x32xbf16> to vector<4x24x32xbf16>
    "tpu.trace_start"() <{level = 10 : i32, message = "bqd,bkd->bqk"}> : () -> ()
    %cst_121 = arith.constant dense<0.000000e+00> : vector<4x24x24xf32>
    %276 = tpu.matmul %271, %273, %cst_121 {dimension_numbers = #tpu.dot_dimension_numbers<[2], [2], [1], [1], [0, 0, 0, 1, 1, 1], [0], [0]>} : vector<4x24x32xbf16>, vector<4x24x32xbf16>, vector<4x24x24xf32> -> vector<4x24x24xf32>
    "tpu.trace_stop"() : () -> ()
    %cst_122 = arith.constant 0.176776692 : f32
    %277 = vector.broadcast %cst_122 : f32 to vector<4x24x24xf32>
    %278 = arith.mulf %276, %277 : vector<4x24x24xf32>
    %279 = arith.addf %278, %18 : vector<4x24x24xf32>
    %cst_123 = arith.constant dense<0xFF800000> : vector<4x24xf32>
    %280 = vector.multi_reduction <maximumf>, %279, %cst_123 [2] : vector<4x24x24xf32> to vector<4x24xf32>
    %281 = vector.shape_cast %280 : vector<4x24xf32> to vector<4x24x1xf32>
    %282 = vector.broadcast %281 : vector<4x24x1xf32> to vector<4x24x24xf32>
    %283 = arith.subf %279, %282 : vector<4x24x24xf32>
    %284 = math.exp %283 : vector<4x24x24xf32>
    %cst_124 = arith.constant dense<0.000000e+00> : vector<4x24xf32>
    %285 = vector.multi_reduction <add>, %284, %cst_124 [2] : vector<4x24x24xf32> to vector<4x24xf32>
    %286 = vector.shape_cast %285 : vector<4x24xf32> to vector<4x24x1xf32>
    %287 = tpu.reciprocal %286 {approx = true} : vector<4x24x1xf32> -> vector<4x24x1xf32>
    %288 = vector.broadcast %287 : vector<4x24x1xf32> to vector<4x24x24xf32>
    %289 = arith.mulf %284, %288 : vector<4x24x24xf32>
    %290 = arith.truncf %289 : vector<4x24x24xf32> to vector<4x24x24xbf16>
    "tpu.trace_start"() <{level = 10 : i32, message = "bqk,bkd->bqd"}> : () -> ()
    %cst_125 = arith.constant dense<0.000000e+00> : vector<4x24x32xf32>
    %291 = tpu.matmul %290, %275, %cst_125 {dimension_numbers = #tpu.dot_dimension_numbers<[2], [1], [1], [2], [0, 0, 0, 1, 1, 2], [0], [0]>} : vector<4x24x24xbf16>, vector<4x24x32xbf16>, vector<4x24x32xf32> -> vector<4x24x32xf32>
    "tpu.trace_stop"() : () -> ()
    %292 = vector.shape_cast %291 : vector<4x24x32xf32> to vector<96x32xf32>
    %293 = vector.extract_strided_slice %246 {offsets = [0, 64], sizes = [96, 32], strides = [1, 1]} : vector<96x384xbf16> to vector<96x32xbf16>
    %294 = vector.shape_cast %293 : vector<96x32xbf16> to vector<4x24x32xbf16>
    %295 = vector.extract_strided_slice %246 {offsets = [0, 192], sizes = [96, 32], strides = [1, 1]} : vector<96x384xbf16> to vector<96x32xbf16>
    %296 = vector.shape_cast %295 : vector<96x32xbf16> to vector<4x24x32xbf16>
    %297 = vector.extract_strided_slice %246 {offsets = [0, 320], sizes = [96, 32], strides = [1, 1]} : vector<96x384xbf16> to vector<96x32xbf16>
    %298 = vector.shape_cast %297 : vector<96x32xbf16> to vector<4x24x32xbf16>
    "tpu.trace_start"() <{level = 10 : i32, message = "bqd,bkd->bqk"}> : () -> ()
    %cst_126 = arith.constant dense<0.000000e+00> : vector<4x24x24xf32>
    %299 = tpu.matmul %294, %296, %cst_126 {dimension_numbers = #tpu.dot_dimension_numbers<[2], [2], [1], [1], [0, 0, 0, 1, 1, 1], [0], [0]>} : vector<4x24x32xbf16>, vector<4x24x32xbf16>, vector<4x24x24xf32> -> vector<4x24x24xf32>
    "tpu.trace_stop"() : () -> ()
    %cst_127 = arith.constant 0.176776692 : f32
    %300 = vector.broadcast %cst_127 : f32 to vector<4x24x24xf32>
    %301 = arith.mulf %299, %300 : vector<4x24x24xf32>
    %302 = arith.addf %301, %18 : vector<4x24x24xf32>
    %cst_128 = arith.constant dense<0xFF800000> : vector<4x24xf32>
    %303 = vector.multi_reduction <maximumf>, %302, %cst_128 [2] : vector<4x24x24xf32> to vector<4x24xf32>
    %304 = vector.shape_cast %303 : vector<4x24xf32> to vector<4x24x1xf32>
    %305 = vector.broadcast %304 : vector<4x24x1xf32> to vector<4x24x24xf32>
    %306 = arith.subf %302, %305 : vector<4x24x24xf32>
    %307 = math.exp %306 : vector<4x24x24xf32>
    %cst_129 = arith.constant dense<0.000000e+00> : vector<4x24xf32>
    %308 = vector.multi_reduction <add>, %307, %cst_129 [2] : vector<4x24x24xf32> to vector<4x24xf32>
    %309 = vector.shape_cast %308 : vector<4x24xf32> to vector<4x24x1xf32>
    %310 = tpu.reciprocal %309 {approx = true} : vector<4x24x1xf32> -> vector<4x24x1xf32>
    %311 = vector.broadcast %310 : vector<4x24x1xf32> to vector<4x24x24xf32>
    %312 = arith.mulf %307, %311 : vector<4x24x24xf32>
    %313 = arith.truncf %312 : vector<4x24x24xf32> to vector<4x24x24xbf16>
    "tpu.trace_start"() <{level = 10 : i32, message = "bqk,bkd->bqd"}> : () -> ()
    %cst_130 = arith.constant dense<0.000000e+00> : vector<4x24x32xf32>
    %314 = tpu.matmul %313, %298, %cst_130 {dimension_numbers = #tpu.dot_dimension_numbers<[2], [1], [1], [2], [0, 0, 0, 1, 1, 2], [0], [0]>} : vector<4x24x24xbf16>, vector<4x24x32xbf16>, vector<4x24x32xf32> -> vector<4x24x32xf32>
    "tpu.trace_stop"() : () -> ()
    %315 = vector.shape_cast %314 : vector<4x24x32xf32> to vector<96x32xf32>
    %316 = vector.extract_strided_slice %246 {offsets = [0, 96], sizes = [96, 32], strides = [1, 1]} : vector<96x384xbf16> to vector<96x32xbf16>
    %317 = vector.shape_cast %316 : vector<96x32xbf16> to vector<4x24x32xbf16>
    %318 = vector.extract_strided_slice %246 {offsets = [0, 224], sizes = [96, 32], strides = [1, 1]} : vector<96x384xbf16> to vector<96x32xbf16>
    %319 = vector.shape_cast %318 : vector<96x32xbf16> to vector<4x24x32xbf16>
    %320 = vector.extract_strided_slice %246 {offsets = [0, 352], sizes = [96, 32], strides = [1, 1]} : vector<96x384xbf16> to vector<96x32xbf16>
    %321 = vector.shape_cast %320 : vector<96x32xbf16> to vector<4x24x32xbf16>
    "tpu.trace_start"() <{level = 10 : i32, message = "bqd,bkd->bqk"}> : () -> ()
    %cst_131 = arith.constant dense<0.000000e+00> : vector<4x24x24xf32>
    %322 = tpu.matmul %317, %319, %cst_131 {dimension_numbers = #tpu.dot_dimension_numbers<[2], [2], [1], [1], [0, 0, 0, 1, 1, 1], [0], [0]>} : vector<4x24x32xbf16>, vector<4x24x32xbf16>, vector<4x24x24xf32> -> vector<4x24x24xf32>
    "tpu.trace_stop"() : () -> ()
    %cst_132 = arith.constant 0.176776692 : f32
    %323 = vector.broadcast %cst_132 : f32 to vector<4x24x24xf32>
    %324 = arith.mulf %322, %323 : vector<4x24x24xf32>
    %325 = arith.addf %324, %18 : vector<4x24x24xf32>
    %cst_133 = arith.constant dense<0xFF800000> : vector<4x24xf32>
    %326 = vector.multi_reduction <maximumf>, %325, %cst_133 [2] : vector<4x24x24xf32> to vector<4x24xf32>
    %327 = vector.shape_cast %326 : vector<4x24xf32> to vector<4x24x1xf32>
    %328 = vector.broadcast %327 : vector<4x24x1xf32> to vector<4x24x24xf32>
    %329 = arith.subf %325, %328 : vector<4x24x24xf32>
    %330 = math.exp %329 : vector<4x24x24xf32>
    %cst_134 = arith.constant dense<0.000000e+00> : vector<4x24xf32>
    %331 = vector.multi_reduction <add>, %330, %cst_134 [2] : vector<4x24x24xf32> to vector<4x24xf32>
    %332 = vector.shape_cast %331 : vector<4x24xf32> to vector<4x24x1xf32>
    %333 = tpu.reciprocal %332 {approx = true} : vector<4x24x1xf32> -> vector<4x24x1xf32>
    %334 = vector.broadcast %333 : vector<4x24x1xf32> to vector<4x24x24xf32>
    %335 = arith.mulf %330, %334 : vector<4x24x24xf32>
    %336 = arith.truncf %335 : vector<4x24x24xf32> to vector<4x24x24xbf16>
    "tpu.trace_start"() <{level = 10 : i32, message = "bqk,bkd->bqd"}> : () -> ()
    %cst_135 = arith.constant dense<0.000000e+00> : vector<4x24x32xf32>
    %337 = tpu.matmul %336, %321, %cst_135 {dimension_numbers = #tpu.dot_dimension_numbers<[2], [1], [1], [2], [0, 0, 0, 1, 1, 2], [0], [0]>} : vector<4x24x24xbf16>, vector<4x24x32xbf16>, vector<4x24x32xf32> -> vector<4x24x32xf32>
    "tpu.trace_stop"() : () -> ()
    %338 = vector.shape_cast %337 : vector<4x24x32xf32> to vector<96x32xf32>
    %339 = tpu.concatenate %269, %292, %315, %338 in 1 : vector<96x32xf32>, vector<96x32xf32>, vector<96x32xf32>, vector<96x32xf32> -> vector<96x128xf32>
    %c0_136 = arith.constant 0 : index
    %c1_137 = arith.constant 1 : index
    %c0_138 = arith.constant 0 : index
    %c0_139 = arith.constant 0 : index
    %340 = vector.load %arg8[%c0_136, %c1_137, %c0_138, %c0_139] : memref<1x2x128x128xbf16, #tpu.memory_space<vmem>>, vector<1x1x128x128xbf16>
    %341 = vector.shape_cast %340 : vector<1x1x128x128xbf16> to vector<128x128xbf16>
    %c0_140 = arith.constant 0 : index
    %c1_141 = arith.constant 1 : index
    %c0_142 = arith.constant 0 : index
    %c0_143 = arith.constant 0 : index
    %342 = vector.load %arg9[%c0_140, %c1_141, %c0_142, %c0_143] : memref<1x2x1x128xf32, #tpu.memory_space<vmem>>, vector<1x1x1x128xf32>
    %343 = vector.shape_cast %342 : vector<1x1x1x128xf32> to vector<1x128xf32>
    %344 = arith.truncf %339 : vector<96x128xf32> to vector<96x128xbf16>
    %cst_144 = arith.constant dense<0.000000e+00> : vector<96x128xf32>
    %345 = tpu.matmul %344, %341, %cst_144 {dimension_numbers = #tpu.dot_dimension_numbers<[1], [0], [0], [1], [0, 0, 1, 1], [], []>} : vector<96x128xbf16>, vector<128x128xbf16>, vector<96x128xf32> -> vector<96x128xf32>
    %346 = vector.broadcast %343 : vector<1x128xf32> to vector<96x128xf32>
    %347 = arith.addf %345, %346 : vector<96x128xf32>
    %348 = arith.addf %211, %347 : vector<96x128xf32>
    %c0_145 = arith.constant 0 : index
    %c1_146 = arith.constant 1 : index
    %c0_147 = arith.constant 0 : index
    %c0_148 = arith.constant 0 : index
    %349 = vector.load %arg10[%c0_145, %c1_146, %c0_147, %c0_148] : memref<1x2x1x128xf32, #tpu.memory_space<vmem>>, vector<1x1x1x128xf32>
    %350 = vector.shape_cast %349 : vector<1x1x1x128xf32> to vector<1x128xf32>
    %c0_149 = arith.constant 0 : index
    %c1_150 = arith.constant 1 : index
    %c0_151 = arith.constant 0 : index
    %c0_152 = arith.constant 0 : index
    %351 = vector.load %arg11[%c0_149, %c1_150, %c0_151, %c0_152] : memref<1x2x1x128xf32, #tpu.memory_space<vmem>>, vector<1x1x1x128xf32>
    %352 = vector.shape_cast %351 : vector<1x1x1x128xf32> to vector<1x128xf32>
    %cst_153 = arith.constant dense<0.000000e+00> : vector<96xf32>
    %353 = vector.multi_reduction <add>, %348, %cst_153 [1] : vector<96x128xf32> to vector<96xf32>
    %354 = vector.shape_cast %353 : vector<96xf32> to vector<96x1xf32>
    %cst_154 = arith.constant 1.280000e+02 : f32
    %355 = vector.broadcast %cst_154 : f32 to vector<96x1xf32>
    %356 = arith.divf %354, %355 : vector<96x1xf32>
    %357 = vector.broadcast %356 : vector<96x1xf32> to vector<96x128xf32>
    %358 = arith.subf %348, %357 : vector<96x128xf32>
    %359 = arith.mulf %358, %358 : vector<96x128xf32>
    %cst_155 = arith.constant dense<0.000000e+00> : vector<96xf32>
    %360 = vector.multi_reduction <add>, %359, %cst_155 [1] : vector<96x128xf32> to vector<96xf32>
    %361 = vector.shape_cast %360 : vector<96xf32> to vector<96x1xf32>
    %cst_156 = arith.constant 1.280000e+02 : f32
    %362 = vector.broadcast %cst_156 : f32 to vector<96x1xf32>
    %363 = arith.divf %361, %362 : vector<96x1xf32>
    %364 = vector.broadcast %356 : vector<96x1xf32> to vector<96x128xf32>
    %365 = arith.subf %348, %364 : vector<96x128xf32>
    %cst_157 = arith.constant 9.99999997E-7 : f32
    %366 = vector.broadcast %cst_157 : f32 to vector<96x1xf32>
    %367 = arith.addf %363, %366 : vector<96x1xf32>
    %368 = math.rsqrt %367 : vector<96x1xf32>
    %369 = vector.broadcast %368 : vector<96x1xf32> to vector<96x128xf32>
    %370 = arith.mulf %365, %369 : vector<96x128xf32>
    %371 = vector.broadcast %350 : vector<1x128xf32> to vector<96x128xf32>
    %372 = arith.mulf %370, %371 : vector<96x128xf32>
    %373 = vector.broadcast %352 : vector<1x128xf32> to vector<96x128xf32>
    %374 = arith.addf %372, %373 : vector<96x128xf32>
    %c0_158 = arith.constant 0 : index
    %c1_159 = arith.constant 1 : index
    %c0_160 = arith.constant 0 : index
    %c0_161 = arith.constant 0 : index
    %375 = vector.load %arg12[%c0_158, %c1_159, %c0_160, %c0_161] : memref<1x2x128x256xbf16, #tpu.memory_space<vmem>>, vector<1x1x128x256xbf16>
    %376 = vector.shape_cast %375 : vector<1x1x128x256xbf16> to vector<128x256xbf16>
    %c0_162 = arith.constant 0 : index
    %c1_163 = arith.constant 1 : index
    %c0_164 = arith.constant 0 : index
    %c0_165 = arith.constant 0 : index
    %377 = vector.load %arg13[%c0_162, %c1_163, %c0_164, %c0_165] : memref<1x2x1x256xf32, #tpu.memory_space<vmem>>, vector<1x1x1x256xf32>
    %378 = vector.shape_cast %377 : vector<1x1x1x256xf32> to vector<1x256xf32>
    %379 = arith.truncf %374 : vector<96x128xf32> to vector<96x128xbf16>
    %cst_166 = arith.constant dense<0.000000e+00> : vector<96x256xf32>
    %380 = tpu.matmul %379, %376, %cst_166 {dimension_numbers = #tpu.dot_dimension_numbers<[1], [0], [0], [1], [0, 0, 1, 1], [], []>} : vector<96x128xbf16>, vector<128x256xbf16>, vector<96x256xf32> -> vector<96x256xf32>
    %381 = vector.broadcast %378 : vector<1x256xf32> to vector<96x256xf32>
    %382 = arith.addf %380, %381 : vector<96x256xf32>
    %383 = arith.mulf %382, %382 : vector<96x256xf32>
    %384 = arith.mulf %382, %383 : vector<96x256xf32>
    %cst_167 = arith.constant 4.471500e-02 : f32
    %385 = vector.broadcast %cst_167 : f32 to vector<96x256xf32>
    %386 = arith.mulf %385, %384 : vector<96x256xf32>
    %387 = arith.addf %382, %386 : vector<96x256xf32>
    %cst_168 = arith.constant 0.797884583 : f32
    %388 = vector.broadcast %cst_168 : f32 to vector<96x256xf32>
    %389 = arith.mulf %388, %387 : vector<96x256xf32>
    %390 = math.tanh %389 : vector<96x256xf32>
    %cst_169 = arith.constant 1.000000e+00 : f32
    %391 = vector.broadcast %cst_169 : f32 to vector<96x256xf32>
    %392 = arith.addf %391, %390 : vector<96x256xf32>
    %cst_170 = arith.constant 5.000000e-01 : f32
    %393 = vector.broadcast %cst_170 : f32 to vector<96x256xf32>
    %394 = arith.mulf %393, %392 : vector<96x256xf32>
    %395 = arith.mulf %382, %394 : vector<96x256xf32>
    %c0_171 = arith.constant 0 : index
    %c1_172 = arith.constant 1 : index
    %c0_173 = arith.constant 0 : index
    %c0_174 = arith.constant 0 : index
    %396 = vector.load %arg14[%c0_171, %c1_172, %c0_173, %c0_174] : memref<1x2x256x128xbf16, #tpu.memory_space<vmem>>, vector<1x1x256x128xbf16>
    %397 = vector.shape_cast %396 : vector<1x1x256x128xbf16> to vector<256x128xbf16>
    %c0_175 = arith.constant 0 : index
    %c1_176 = arith.constant 1 : index
    %c0_177 = arith.constant 0 : index
    %c0_178 = arith.constant 0 : index
    %398 = vector.load %arg15[%c0_175, %c1_176, %c0_177, %c0_178] : memref<1x2x1x128xf32, #tpu.memory_space<vmem>>, vector<1x1x1x128xf32>
    %399 = vector.shape_cast %398 : vector<1x1x1x128xf32> to vector<1x128xf32>
    %400 = arith.truncf %395 : vector<96x256xf32> to vector<96x256xbf16>
    %cst_179 = arith.constant dense<0.000000e+00> : vector<96x128xf32>
    %401 = tpu.matmul %400, %397, %cst_179 {dimension_numbers = #tpu.dot_dimension_numbers<[1], [0], [0], [1], [0, 0, 1, 1], [], []>} : vector<96x256xbf16>, vector<256x128xbf16>, vector<96x128xf32> -> vector<96x128xf32>
    %402 = vector.broadcast %399 : vector<1x128xf32> to vector<96x128xf32>
    %403 = arith.addf %401, %402 : vector<96x128xf32>
    %404 = arith.addf %348, %403 : vector<96x128xf32>
    %405 = vector.shape_cast %404 : vector<96x128xf32> to vector<4x24x128xf32>
    %406 = vector.extract_strided_slice %405 {offsets = [0, 0, 0], sizes = [4, 1, 128], strides = [1, 1, 1]} : vector<4x24x128xf32> to vector<4x1x128xf32>
    %407 = vector.shape_cast %406 : vector<4x1x128xf32> to vector<4x128xf32>
    %c0_180 = arith.constant 0 : index
    %c0_181 = arith.constant 0 : index
    %c0_182 = arith.constant 0 : index
    %408 = vector.load %arg16[%c0_180, %c0_181, %c0_182] : memref<1x1x128xf32, #tpu.memory_space<vmem>>, vector<1x1x128xf32>
    %409 = vector.shape_cast %408 : vector<1x1x128xf32> to vector<1x128xf32>
    %c0_183 = arith.constant 0 : index
    %c0_184 = arith.constant 0 : index
    %c0_185 = arith.constant 0 : index
    %410 = vector.load %arg17[%c0_183, %c0_184, %c0_185] : memref<1x1x128xf32, #tpu.memory_space<vmem>>, vector<1x1x128xf32>
    %411 = vector.shape_cast %410 : vector<1x1x128xf32> to vector<1x128xf32>
    %cst_186 = arith.constant dense<0.000000e+00> : vector<4xf32>
    %412 = vector.multi_reduction <add>, %407, %cst_186 [1] : vector<4x128xf32> to vector<4xf32>
    %413 = vector.shape_cast %412 : vector<4xf32> to vector<4x1xf32>
    %cst_187 = arith.constant 1.280000e+02 : f32
    %414 = vector.broadcast %cst_187 : f32 to vector<4x1xf32>
    %415 = arith.divf %413, %414 : vector<4x1xf32>
    %416 = vector.broadcast %415 : vector<4x1xf32> to vector<4x128xf32>
    %417 = arith.subf %407, %416 : vector<4x128xf32>
    %418 = arith.mulf %417, %417 : vector<4x128xf32>
    %cst_188 = arith.constant dense<0.000000e+00> : vector<4xf32>
    %419 = vector.multi_reduction <add>, %418, %cst_188 [1] : vector<4x128xf32> to vector<4xf32>
    %420 = vector.shape_cast %419 : vector<4xf32> to vector<4x1xf32>
    %cst_189 = arith.constant 1.280000e+02 : f32
    %421 = vector.broadcast %cst_189 : f32 to vector<4x1xf32>
    %422 = arith.divf %420, %421 : vector<4x1xf32>
    %423 = vector.broadcast %415 : vector<4x1xf32> to vector<4x128xf32>
    %424 = arith.subf %407, %423 : vector<4x128xf32>
    %cst_190 = arith.constant 9.99999997E-7 : f32
    %425 = vector.broadcast %cst_190 : f32 to vector<4x1xf32>
    %426 = arith.addf %422, %425 : vector<4x1xf32>
    %427 = math.rsqrt %426 : vector<4x1xf32>
    %428 = vector.broadcast %427 : vector<4x1xf32> to vector<4x128xf32>
    %429 = arith.mulf %424, %428 : vector<4x128xf32>
    %430 = vector.broadcast %409 : vector<1x128xf32> to vector<4x128xf32>
    %431 = arith.mulf %429, %430 : vector<4x128xf32>
    %432 = vector.broadcast %411 : vector<1x128xf32> to vector<4x128xf32>
    %433 = arith.addf %431, %432 : vector<4x128xf32>
    %cst_191 = arith.constant 0.000000e+00 : f32
    %434 = vector.broadcast %cst_191 : f32 to vector<4x128xf32>
    %435 = tpu.concatenate %433, %434 in 0 : vector<4x128xf32>, vector<4x128xf32> -> vector<8x128xf32>
    %c0_192 = arith.constant 0 : index
    %c0_193 = arith.constant 0 : index
    %c0_194 = arith.constant 0 : index
    %436 = vector.load %arg18[%c0_192, %c0_193, %c0_194] : memref<1x128x128xbf16, #tpu.memory_space<vmem>>, vector<1x128x128xbf16>
    %437 = vector.shape_cast %436 : vector<1x128x128xbf16> to vector<128x128xbf16>
    %c0_195 = arith.constant 0 : index
    %c0_196 = arith.constant 0 : index
    %c0_197 = arith.constant 0 : index
    %438 = vector.load %arg19[%c0_195, %c0_196, %c0_197] : memref<1x1x128xf32, #tpu.memory_space<vmem>>, vector<1x1x128xf32>
    %439 = vector.shape_cast %438 : vector<1x1x128xf32> to vector<1x128xf32>
    %440 = arith.truncf %435 : vector<8x128xf32> to vector<8x128xbf16>
    %cst_198 = arith.constant dense<0.000000e+00> : vector<8x128xf32>
    %441 = tpu.matmul %440, %437, %cst_198 {dimension_numbers = #tpu.dot_dimension_numbers<[1], [0], [0], [1], [0, 0, 1, 1], [], []>} : vector<8x128xbf16>, vector<128x128xbf16>, vector<8x128xf32> -> vector<8x128xf32>
    %442 = vector.broadcast %439 : vector<1x128xf32> to vector<8x128xf32>
    %443 = arith.addf %441, %442 : vector<8x128xf32>
    %c0_199 = arith.constant 0 : index
    %c0_200 = arith.constant 0 : index
    %c0_201 = arith.constant 0 : index
    %444 = vector.load %arg20[%c0_199, %c0_200, %c0_201] : memref<1x8x128xf32, #tpu.memory_space<vmem>>, vector<1x8x128xf32>
    %445 = vector.shape_cast %444 : vector<1x8x128xf32> to vector<8x128xf32>
    %446 = vector.shape_cast %443 : vector<8x128xf32> to vector<1x8x128xf32>
    tpu.vector_store %arg20[%c0_199, %c0_200, %c0_201], %446 {strides = array<i32>} : memref<1x8x128xf32, #tpu.memory_space<vmem>>, vector<1x8x128xf32>,
    return
  }
  func.func @transform_0(%arg0: i32) -> (i32, i32) {
    %c0_i32 = arith.constant 0 : i32
    %c0_i32_0 = arith.constant 0 : i32
    %c0_i32_1 = arith.constant 0 : i32
    return %c0_i32, %c0_i32_0 : i32, i32
  }
  func.func @transform_1(%arg0: i32) -> (i32, i32, i32) {
    %c0_i32 = arith.constant 0 : i32
    %c0_i32_0 = arith.constant 0 : i32
    %c0_i32_1 = arith.constant 0 : i32
    return %arg0, %c0_i32, %c0_i32_0 : i32, i32, i32
  }
  func.func @transform_2(%arg0: i32) -> (i32, i32, i32) {
    %c0_i32 = arith.constant 0 : i32
    %c0_i32_0 = arith.constant 0 : i32
    %c0_i32_1 = arith.constant 0 : i32
    return %arg0, %c0_i32, %c0_i32_0 : i32, i32, i32
  }
  func.func @transform_3(%arg0: i32) -> (i32, i32, i32, i32) {
    %c0_i32 = arith.constant 0 : i32
    %c0_i32_0 = arith.constant 0 : i32
    %c0_i32_1 = arith.constant 0 : i32
    %c0_i32_2 = arith.constant 0 : i32
    return %arg0, %c0_i32, %c0_i32_0, %c0_i32_1 : i32, i32, i32, i32
  }
  func.func @transform_4(%arg0: i32) -> (i32, i32, i32, i32) {
    %c0_i32 = arith.constant 0 : i32
    %c0_i32_0 = arith.constant 0 : i32
    %c0_i32_1 = arith.constant 0 : i32
    %c0_i32_2 = arith.constant 0 : i32
    return %arg0, %c0_i32, %c0_i32_0, %c0_i32_1 : i32, i32, i32, i32
  }
  func.func @transform_5(%arg0: i32) -> (i32, i32, i32, i32) {
    %c0_i32 = arith.constant 0 : i32
    %c0_i32_0 = arith.constant 0 : i32
    %c0_i32_1 = arith.constant 0 : i32
    %c0_i32_2 = arith.constant 0 : i32
    return %arg0, %c0_i32, %c0_i32_0, %c0_i32_1 : i32, i32, i32, i32
  }
  func.func @transform_6(%arg0: i32) -> (i32, i32, i32, i32) {
    %c0_i32 = arith.constant 0 : i32
    %c0_i32_0 = arith.constant 0 : i32
    %c0_i32_1 = arith.constant 0 : i32
    %c0_i32_2 = arith.constant 0 : i32
    return %arg0, %c0_i32, %c0_i32_0, %c0_i32_1 : i32, i32, i32, i32
  }
  func.func @transform_7(%arg0: i32) -> (i32, i32, i32, i32) {
    %c0_i32 = arith.constant 0 : i32
    %c0_i32_0 = arith.constant 0 : i32
    %c0_i32_1 = arith.constant 0 : i32
    %c0_i32_2 = arith.constant 0 : i32
    return %arg0, %c0_i32, %c0_i32_0, %c0_i32_1 : i32, i32, i32, i32
  }
  func.func @transform_8(%arg0: i32) -> (i32, i32, i32, i32) {
    %c0_i32 = arith.constant 0 : i32
    %c0_i32_0 = arith.constant 0 : i32
    %c0_i32_1 = arith.constant 0 : i32
    %c0_i32_2 = arith.constant 0 : i32
    return %arg0, %c0_i32, %c0_i32_0, %c0_i32_1 : i32, i32, i32, i32
  }
  func.func @transform_9(%arg0: i32) -> (i32, i32, i32, i32) {
    %c0_i32 = arith.constant 0 : i32
    %c0_i32_0 = arith.constant 0 : i32
    %c0_i32_1 = arith.constant 0 : i32
    %c0_i32_2 = arith.constant 0 : i32
    return %arg0, %c0_i32, %c0_i32_0, %c0_i32_1 : i32, i32, i32, i32
  }
  func.func @transform_10(%arg0: i32) -> (i32, i32, i32, i32) {
    %c0_i32 = arith.constant 0 : i32
    %c0_i32_0 = arith.constant 0 : i32
    %c0_i32_1 = arith.constant 0 : i32
    %c0_i32_2 = arith.constant 0 : i32
    return %arg0, %c0_i32, %c0_i32_0, %c0_i32_1 : i32, i32, i32, i32
  }
  func.func @transform_11(%arg0: i32) -> (i32, i32, i32, i32) {
    %c0_i32 = arith.constant 0 : i32
    %c0_i32_0 = arith.constant 0 : i32
    %c0_i32_1 = arith.constant 0 : i32
    %c0_i32_2 = arith.constant 0 : i32
    return %arg0, %c0_i32, %c0_i32_0, %c0_i32_1 : i32, i32, i32, i32
  }
  func.func @transform_12(%arg0: i32) -> (i32, i32, i32, i32) {
    %c0_i32 = arith.constant 0 : i32
    %c0_i32_0 = arith.constant 0 : i32
    %c0_i32_1 = arith.constant 0 : i32
    %c0_i32_2 = arith.constant 0 : i32
    return %arg0, %c0_i32, %c0_i32_0, %c0_i32_1 : i32, i32, i32, i32
  }
  func.func @transform_13(%arg0: i32) -> (i32, i32, i32, i32) {
    %c0_i32 = arith.constant 0 : i32
    %c0_i32_0 = arith.constant 0 : i32
    %c0_i32_1 = arith.constant 0 : i32
    %c0_i32_2 = arith.constant 0 : i32
    return %arg0, %c0_i32, %c0_i32_0, %c0_i32_1 : i32, i32, i32, i32
  }
  func.func @transform_14(%arg0: i32) -> (i32, i32, i32, i32) {
    %c0_i32 = arith.constant 0 : i32
    %c0_i32_0 = arith.constant 0 : i32
    %c0_i32_1 = arith.constant 0 : i32
    %c0_i32_2 = arith.constant 0 : i32
    return %arg0, %c0_i32, %c0_i32_0, %c0_i32_1 : i32, i32, i32, i32
  }
  func.func @transform_15(%arg0: i32) -> (i32, i32, i32) {
    %c0_i32 = arith.constant 0 : i32
    %c0_i32_0 = arith.constant 0 : i32
    %c0_i32_1 = arith.constant 0 : i32
    return %arg0, %c0_i32, %c0_i32_0 : i32, i32, i32
  }
  func.func @transform_16(%arg0: i32) -> (i32, i32, i32) {
    %c0_i32 = arith.constant 0 : i32
    %c0_i32_0 = arith.constant 0 : i32
    %c0_i32_1 = arith.constant 0 : i32
    return %arg0, %c0_i32, %c0_i32_0 : i32, i32, i32
  }
  func.func @transform_17(%arg0: i32) -> (i32, i32, i32) {
    %c0_i32 = arith.constant 0 : i32
    %c0_i32_0 = arith.constant 0 : i32
    %c0_i32_1 = arith.constant 0 : i32
    return %arg0, %c0_i32, %c0_i32_0 : i32, i32, i32
  }
  func.func @transform_18(%arg0: i32) -> (i32, i32, i32) {
    %c0_i32 = arith.constant 0 : i32
    %c0_i32_0 = arith.constant 0 : i32
    %c0_i32_1 = arith.constant 0 : i32
    return %arg0, %c0_i32, %c0_i32_0 : i32, i32, i32
  }
  func.func @transform_19(%arg0: i32) -> (i32, i32, i32) {
    %c0_i32 = arith.constant 0 : i32
    %c0_i32_0 = arith.constant 0 : i32
    %c0_i32_1 = arith.constant 0 : i32
    return %arg0, %c0_i32, %c0_i32_0 : i32, i32, i32
  }
}

</mosaic_0001>

<llo_original>
// kernel: dino_forward.1
$region0: #{dino_forward.1}
  #allocation0 [shape = 'u32[]', space=smem, size = 0x4, offset = 0x4, fixed_abs, tag = 'smem constant byte address 0x4 - core index']
  #allocation1 [shape = 'u32[144,128]{1,0:T(1,128)}', space=vmem, size = 0x12000, scoped, tag = 'internal scratch']
  %s0 = inlined_call_operand.vmem [shape: bf16[96,128], index: 0, kind: input, shape index: {}]
  %s1 = inlined_call_operand.vmem [shape: f32[2,24,128], index: 1, kind: input, shape index: {}]
  %s2 = inlined_call_operand.vmem [shape: bf16[2,128,128], index: 2, kind: input, shape index: {}]
  %s3 = inlined_call_operand.vmem [shape: f32[2,2,1,128], index: 3, kind: input, shape index: {}]
  %s4 = inlined_call_operand.vmem [shape: f32[2,2,1,128], index: 4, kind: input, shape index: {}]
  %s5 = inlined_call_operand.vmem [shape: bf16[2,2,128,384], index: 5, kind: input, shape index: {}]
  %s6 = inlined_call_operand.vmem [shape: f32[2,2,1,384], index: 6, kind: input, shape index: {}]
  %s7 = inlined_call_operand.vmem [shape: bf16[2,2,128,128], index: 7, kind: input, shape index: {}]
  %s8 = inlined_call_operand.vmem [shape: f32[2,2,1,128], index: 8, kind: input, shape index: {}]
  %s9 = inlined_call_operand.vmem [shape: f32[2,2,1,128], index: 9, kind: input, shape index: {}]
  %s10 = inlined_call_operand.vmem [shape: f32[2,2,1,128], index: 10, kind: input, shape index: {}]
  %s11 = inlined_call_operand.vmem [shape: bf16[2,2,128,256], index: 11, kind: input, shape index: {}]
  %s12 = inlined_call_operand.vmem [shape: f32[2,2,1,256], index: 12, kind: input, shape index: {}]
  %s13 = inlined_call_operand.vmem [shape: bf16[2,2,256,128], index: 13, kind: input, shape index: {}]
  %s14 = inlined_call_operand.vmem [shape: f32[2,2,1,128], index: 14, kind: input, shape index: {}]
  %s15 = inlined_call_operand.vmem [shape: f32[2,1,128], index: 15, kind: input, shape index: {}]
  %s16 = inlined_call_operand.vmem [shape: f32[2,1,128], index: 16, kind: input, shape index: {}]
  %s17 = inlined_call_operand.vmem [shape: bf16[2,128,128], index: 17, kind: input, shape index: {}]
  %s18 = inlined_call_operand.vmem [shape: f32[2,1,128], index: 18, kind: input, shape index: {}]
  %s19 = inlined_call_operand.vmem [shape: f32[2,8,128], index: 19, kind: output, shape index: {}]
  %s20 = sld [smem:[#allocation0]]
  $region109: #{dino_forward.1} parent=0
    _
  %s22 = ssub.s32 1, %s20
  %s23 = scalar_select 0, %s22, %s20
  loop: start=0, step=1, limit=4
  $region2: #{dino_forward.1} parent=0 // loop_pre_header
    _
  $region3: #{dino_forward.1} parent=0 // loop_header
    %s25 = sphi 0, %s29
    %p26 = scmp.ge.s32.totalorder %s25, 4
    %s33 = sphi 0, %s33
    %s35 = sphi 0, %s33
    %s36 = sphi 0, %s35
    %s50 = sphi 0, %s36
    %s56 = sphi 0, %s58
    %s59 = sphi 0, %s56
    %s60 = sphi 0, %s59
    %s76 = sphi 0, %s60
    %s82 = sphi 0, %s84
    %s85 = sphi 0, %s82
    %s86 = sphi 0, %s85
    %s102 = sphi 0, %s86
    %s108 = sphi 0, %s110
    %s111 = sphi 0, %s108
    %s112 = sphi 0, %s111
    %s128 = sphi 0, %s112
    %s134 = sphi 0, %s136
    %s137 = sphi 0, %s134
    %s138 = sphi 0, %s137
    %s154 = sphi 0, %s138
    %s160 = sphi 0, %s162
    %s163 = sphi 0, %s160
    %s164 = sphi 0, %s163
    %s180 = sphi 0, %s164
    %s186 = sphi 0, %s188
    %s189 = sphi 0, %s186
    %s190 = sphi 0, %s189
    %s206 = sphi 0, %s190
    %s212 = sphi 0, %s214
    %s215 = sphi 0, %s212
    %s216 = sphi 0, %s215
    %s232 = sphi 0, %s216
    %s238 = sphi 0, %s240
    %s241 = sphi 0, %s238
    %s242 = sphi 0, %s241
    %s258 = sphi 0, %s242
    %s264 = sphi 0, %s266
    %s267 = sphi 0, %s264
    %s268 = sphi 0, %s267
    %s284 = sphi 0, %s268
    %s290 = sphi 0, %s292
    %s293 = sphi 0, %s290
    %s294 = sphi 0, %s293
    %s310 = sphi 0, %s294
    %s316 = sphi 0, %s318
    %s319 = sphi 0, %s316
    %s320 = sphi 0, %s319
    %s336 = sphi 0, %s320
    %s342 = sphi 0, %s344
    %s345 = sphi 0, %s342
    %s346 = sphi 0, %s345
    %s362 = sphi 0, %s346
    %s368 = sphi 0, %s370
    %s371 = sphi 0, %s368
    %s372 = sphi 0, %s371
    %s388 = sphi 0, %s372
    %s394 = sphi 0, %s396
    %s397 = sphi 0, %s394
    %s398 = sphi 0, %s397
    %s414 = sphi 0, %s398
    %s420 = sphi 0, %s422
    %s423 = sphi 0, %s420
    %s424 = sphi 0, %s423
    %s440 = sphi 0, %s424
    %s446 = sphi 0, %s448
    %s449 = sphi 0, %s446
    %s450 = sphi 0, %s449
    %s466 = sphi 0, %s450
    %s472 = sphi 0, %s474
    %s475 = sphi 0, %s472
    %s476 = sphi 0, %s475
    %s492 = sphi 0, %s476
    %s498 = sphi 0, %s500
    %s501 = sphi 0, %s498
    %s502 = sphi 0, %s501
    %s518 = sphi 0, %s502
    %s524 = sphi 0, %s526
    %s527 = sphi 0, %s524
    %s528 = sphi 0, %s527
    %s544 = sphi 0, %s528
  $region4: #{dino_forward.1} parent=0 // loop_header_branch
    %28 = sbr.rel (%p26) target = $region8
  $region5: #{dino_forward.1} parent=0 // loop_body
    %s30 = ssub.s32 %s25, 1
    %s31 = ssub.s32 %s25, 2
    %s32 = sadd.s32 %s25, 1
    %s34 = sadd.s32 %s33, 1
    %p37 = scmp.eq.s32.totalorder %s25, 1
    %p38 = scmp.ne.s32.totalorder %s33, %s35
    %p39 = scmp.eq.s32.totalorder %s25, 0
    %p40 = por %p38, %p39
    %p41 = scmp.ne.s32.totalorder %s33, %s35
    %p42 = scmp.eq.s32.totalorder %s30, 1
    %p43 = por %p41, %p42
    %p44 = scmp.ne.s32.totalorder %s35, %s36
    %p45 = scmp.eq.s32.totalorder %s30, 0
    %p46 = por %p44, %p45
    %p47 = scmp.ne.s32.totalorder %s35, %s36
    %p48 = scmp.eq.s32.totalorder %s31, 1
    %p49 = por %p47, %p48
    %p51 = scmp.ne.s32.totalorder %s36, %s50
    %p52 = scmp.eq.s32.totalorder %s31, 0
    %p53 = por %p51, %p52
    %s54 = ssub.s32 %s25, %s32
    %p55 = scmp.eq.s32.totalorder %s54, 0
    %s57 = sadd.s32 %s56, 1
    %s58 = scalar_select %p55, %s56, %s57
    %p61 = pneg %p55
    %p62 = scmp.eq.s32.totalorder %s25, 1
    %p63 = por %p61, %p62
    %p64 = scmp.ne.s32.totalorder %s56, %s59
    %p65 = scmp.eq.s32.totalorder %s25, 0
    %p66 = por %p64, %p65
    %p67 = scmp.ne.s32.totalorder %s56, %s59
    %p68 = scmp.eq.s32.totalorder %s30, 1
    %p69 = por %p67, %p68
    %p70 = scmp.ne.s32.totalorder %s59, %s60
    %p71 = scmp.eq.s32.totalorder %s30, 0
    %p72 = por %p70, %p71
    %p73 = scmp.ne.s32.totalorder %s59, %s60
    %p74 = scmp.eq.s32.totalorder %s31, 1
    %p75 = por %p73, %p74
    %p77 = scmp.ne.s32.totalorder %s60, %s76
    %p78 = scmp.eq.s32.totalorder %s31, 0
    %p79 = por %p77, %p78
    %s80 = ssub.s32 %s25, %s32
    %p81 = scmp.eq.s32.totalorder %s80, 0
    %s83 = sadd.s32 %s82, 1
    %s84 = scalar_select %p81, %s82, %s83
    %p87 = pneg %p81
    %p88 = scmp.eq.s32.totalorder %s25, 1
    %p89 = por %p87, %p88
    %p90 = scmp.ne.s32.totalorder %s82, %s85
    %p91 = scmp.eq.s32.totalorder %s25, 0
    %p92 = por %p90, %p91
    %p93 = scmp.ne.s32.totalorder %s82, %s85
    %p94 = scmp.eq.s32.totalorder %s30, 1
    %p95 = por %p93, %p94
    %p96 = scmp.ne.s32.totalorder %s85, %s86
    %p97 = scmp.eq.s32.totalorder %s30, 0
    %p98 = por %p96, %p97
    %p99 = scmp.ne.s32.totalorder %s85, %s86
    %p100 = scmp.eq.s32.totalorder %s31, 1
    %p101 = por %p99, %p100
    %p103 = scmp.ne.s32.totalorder %s86, %s102
    %p104 = scmp.eq.s32.totalorder %s31, 0
    %p105 = por %p103, %p104
    %s106 = ssub.s32 %s25, %s32
    %p107 = scmp.eq.s32.totalorder %s106, 0
    %s109 = sadd.s32 %s108, 1
    %s110 = scalar_select %p107, %s108, %s109
    %p113 = pneg %p107
    %p114 = scmp.eq.s32.totalorder %s25, 1
    %p115 = por %p113, %p114
    %p116 = scmp.ne.s32.totalorder %s108, %s111
    %p117 = scmp.eq.s32.totalorder %s25, 0
    %p118 = por %p116, %p117
    %p119 = scmp.ne.s32.totalorder %s108, %s111
    %p120 = scmp.eq.s32.totalorder %s30, 1
    %p121 = por %p119, %p120
    %p122 = scmp.ne.s32.totalorder %s111, %s112
    %p123 = scmp.eq.s32.totalorder %s30, 0
    %p124 = por %p122, %p123
    %p125 = scmp.ne.s32.totalorder %s111, %s112
    %p126 = scmp.eq.s32.totalorder %s31, 1
    %p127 = por %p125, %p126
    %p129 = scmp.ne.s32.totalorder %s112, %s128
    %p130 = scmp.eq.s32.totalorder %s31, 0
    %p131 = por %p129, %p130
    %s132 = ssub.s32 %s25, %s32
    %p133 = scmp.eq.s32.totalorder %s132, 0
    %s135 = sadd.s32 %s134, 1
    %s136 = scalar_select %p133, %s134, %s135
    %p139 = pneg %p133
    %p140 = scmp.eq.s32.totalorder %s25, 1
    %p141 = por %p139, %p140
    %p142 = scmp.ne.s32.totalorder %s134, %s137
    %p143 = scmp.eq.s32.totalorder %s25, 0
    %p144 = por %p142, %p143
    %p145 = scmp.ne.s32.totalorder %s134, %s137
    %p146 = scmp.eq.s32.totalorder %s30, 1
    %p147 = por %p145, %p146
    %p148 = scmp.ne.s32.totalorder %s137, %s138
    %p149 = scmp.eq.s32.totalorder %s30, 0
    %p150 = por %p148, %p149
    %p151 = scmp.ne.s32.totalorder %s137, %s138
    %p152 = scmp.eq.s32.totalorder %s31, 1
    %p153 = por %p151, %p152
    %p155 = scmp.ne.s32.totalorder %s138, %s154
    %p156 = scmp.eq.s32.totalorder %s31, 0
    %p157 = por %p155, %p156
    %s158 = ssub.s32 %s25, %s32
    %p159 = scmp.eq.s32.totalorder %s158, 0
    %s161 = sadd.s32 %s160, 1
    %s162 = scalar_select %p159, %s160, %s161
    %p165 = pneg %p159
    %p166 = scmp.eq.s32.totalorder %s25, 1
    %p167 = por %p165, %p166
    %p168 = scmp.ne.s32.totalorder %s160, %s163
    %p169 = scmp.eq.s32.totalorder %s25, 0
    %p170 = por %p168, %p169
    %p171 = scmp.ne.s32.totalorder %s160, %s163
    %p172 = scmp.eq.s32.totalorder %s30, 1
    %p173 = por %p171, %p172
    %p174 = scmp.ne.s32.totalorder %s163, %s164
    %p175 = scmp.eq.s32.totalorder %s30, 0
    %p176 = por %p174, %p175
    %p177 = scmp.ne.s32.totalorder %s163, %s164
    %p178 = scmp.eq.s32.totalorder %s31, 1
    %p179 = por %p177, %p178
    %p181 = scmp.ne.s32.totalorder %s164, %s180
    %p182 = scmp.eq.s32.totalorder %s31, 0
    %p183 = por %p181, %p182
    %s184 = ssub.s32 %s25, %s32
    %p185 = scmp.eq.s32.totalorder %s184, 0
    %s187 = sadd.s32 %s186, 1
    %s188 = scalar_select %p185, %s186, %s187
    %p191 = pneg %p185
    %p192 = scmp.eq.s32.totalorder %s25, 1
    %p193 = por %p191, %p192
    %p194 = scmp.ne.s32.totalorder %s186, %s189
    %p195 = scmp.eq.s32.totalorder %s25, 0
    %p196 = por %p194, %p195
    %p197 = scmp.ne.s32.totalorder %s186, %s189
    %p198 = scmp.eq.s32.totalorder %s30, 1
    %p199 = por %p197, %p198
    %p200 = scmp.ne.s32.totalorder %s189, %s190
    %p201 = scmp.eq.s32.totalorder %s30, 0
    %p202 = por %p200, %p201
    %p203 = scmp.ne.s32.totalorder %s189, %s190
    %p204 = scmp.eq.s32.totalorder %s31, 1
    %p205 = por %p203, %p204
    %p207 = scmp.ne.s32.totalorder %s190, %s206
    %p208 = scmp.eq.s32.totalorder %s31, 0
    %p209 = por %p207, %p208
    %s210 = ssub.s32 %s25, %s32
    %p211 = scmp.eq.s32.totalorder %s210, 0
    %s213 = sadd.s32 %s212, 1
    %s214 = scalar_select %p211, %s212, %s213
    %p217 = pneg %p211
    %p218 = scmp.eq.s32.totalorder %s25, 1
    %p219 = por %p217, %p218
    %p220 = scmp.ne.s32.totalorder %s212, %s215
    %p221 = scmp.eq.s32.totalorder %s25, 0
    %p222 = por %p220, %p221
    %p223 = scmp.ne.s32.totalorder %s212, %s215
    %p224 = scmp.eq.s32.totalorder %s30, 1
    %p225 = por %p223, %p224
    %p226 = scmp.ne.s32.totalorder %s215, %s216
    %p227 = scmp.eq.s32.totalorder %s30, 0
    %p228 = por %p226, %p227
    %p229 = scmp.ne.s32.totalorder %s215, %s216
    %p230 = scmp.eq.s32.totalorder %s31, 1
    %p231 = por %p229, %p230
    %p233 = scmp.ne.s32.totalorder %s216, %s232
    %p234 = scmp.eq.s32.totalorder %s31, 0
    %p235 = por %p233, %p234
    %s236 = ssub.s32 %s25, %s32
    %p237 = scmp.eq.s32.totalorder %s236, 0
    %s239 = sadd.s32 %s238, 1
    %s240 = scalar_select %p237, %s238, %s239
    %p243 = pneg %p237
    %p244 = scmp.eq.s32.totalorder %s25, 1
    %p245 = por %p243, %p244
    %p246 = scmp.ne.s32.totalorder %s238, %s241
    %p247 = scmp.eq.s32.totalorder %s25, 0
    %p248 = por %p246, %p247
    %p249 = scmp.ne.s32.totalorder %s238, %s241
    %p250 = scmp.eq.s32.totalorder %s30, 1
    %p251 = por %p249, %p250
    %p252 = scmp.ne.s32.totalorder %s241, %s242
    %p253 = scmp.eq.s32.totalorder %s30, 0
    %p254 = por %p252, %p253
    %p255 = scmp.ne.s32.totalorder %s241, %s242
    %p256 = scmp.eq.s32.totalorder %s31, 1
    %p257 = por %p255, %p256
    %p259 = scmp.ne.s32.totalorder %s242, %s258
    %p260 = scmp.eq.s32.totalorder %s31, 0
    %p261 = por %p259, %p260
    %s262 = ssub.s32 %s25, %s32
    %p263 = scmp.eq.s32.totalorder %s262, 0
    %s265 = sadd.s32 %s264, 1
    %s266 = scalar_select %p263, %s264, %s265
    %p269 = pneg %p263
    %p270 = scmp.eq.s32.totalorder %s25, 1
    %p271 = por %p269, %p270
    %p272 = scmp.ne.s32.totalorder %s264, %s267
    %p273 = scmp.eq.s32.totalorder %s25, 0
    %p274 = por %p272, %p273
    %p275 = scmp.ne.s32.totalorder %s264, %s267
    %p276 = scmp.eq.s32.totalorder %s30, 1
    %p277 = por %p275, %p276
    %p278 = scmp.ne.s32.totalorder %s267, %s268
    %p279 = scmp.eq.s32.totalorder %s30, 0
    %p280 = por %p278, %p279
    %p281 = scmp.ne.s32.totalorder %s267, %s268
    %p282 = scmp.eq.s32.totalorder %s31, 1
    %p283 = por %p281, %p282
    %p285 = scmp.ne.s32.totalorder %s268, %s284
    %p286 = scmp.eq.s32.totalorder %s31, 0
    %p287 = por %p285, %p286
    %s288 = ssub.s32 %s25, %s32
    %p289 = scmp.eq.s32.totalorder %s288, 0
    %s291 = sadd.s32 %s290, 1
    %s292 = scalar_select %p289, %s290, %s291
    %p295 = pneg %p289
    %p296 = scmp.eq.s32.totalorder %s25, 1
    %p297 = por %p295, %p296
    %p298 = scmp.ne.s32.totalorder %s290, %s293
    %p299 = scmp.eq.s32.totalorder %s25, 0
    %p300 = por %p298, %p299
    %p301 = scmp.ne.s32.totalorder %s290, %s293
    %p302 = scmp.eq.s32.totalorder %s30, 1
    %p303 = por %p301, %p302
    %p304 = scmp.ne.s32.totalorder %s293, %s294
    %p305 = scmp.eq.s32.totalorder %s30, 0
    %p306 = por %p304, %p305
    %p307 = scmp.ne.s32.totalorder %s293, %s294
    %p308 = scmp.eq.s32.totalorder %s31, 1
    %p309 = por %p307, %p308
    %p311 = scmp.ne.s32.totalorder %s294, %s310
    %p312 = scmp.eq.s32.totalorder %s31, 0
    %p313 = por %p311, %p312
    %s314 = ssub.s32 %s25, %s32
    %p315 = scmp.eq.s32.totalorder %s314, 0
    %s317 = sadd.s32 %s316, 1
    %s318 = scalar_select %p315, %s316, %s317
    %p321 = pneg %p315
    %p322 = scmp.eq.s32.totalorder %s25, 1
    %p323 = por %p321, %p322
    %p324 = scmp.ne.s32.totalorder %s316, %s319
    %p325 = scmp.eq.s32.totalorder %s25, 0
    %p326 = por %p324, %p325
    %p327 = scmp.ne.s32.totalorder %s316, %s319
    %p328 = scmp.eq.s32.totalorder %s30, 1
    %p329 = por %p327, %p328
    %p330 = scmp.ne.s32.totalorder %s319, %s320
    %p331 = scmp.eq.s32.totalorder %s30, 0
    %p332 = por %p330, %p331
    %p333 = scmp.ne.s32.totalorder %s319, %s320
    %p334 = scmp.eq.s32.totalorder %s31, 1
    %p335 = por %p333, %p334
    %p337 = scmp.ne.s32.totalorder %s320, %s336
    %p338 = scmp.eq.s32.totalorder %s31, 0
    %p339 = por %p337, %p338
    %s340 = ssub.s32 %s25, %s32
    %p341 = scmp.eq.s32.totalorder %s340, 0
    %s343 = sadd.s32 %s342, 1
    %s344 = scalar_select %p341, %s342, %s343
    %p347 = pneg %p341
    %p348 = scmp.eq.s32.totalorder %s25, 1
    %p349 = por %p347, %p348
    %p350 = scmp.ne.s32.totalorder %s342, %s345
    %p351 = scmp.eq.s32.totalorder %s25, 0
    %p352 = por %p350, %p351
    %p353 = scmp.ne.s32.totalorder %s342, %s345
    %p354 = scmp.eq.s32.totalorder %s30, 1
    %p355 = por %p353, %p354
    %p356 = scmp.ne.s32.totalorder %s345, %s346
    %p357 = scmp.eq.s32.totalorder %s30, 0
    %p358 = por %p356, %p357
    %p359 = scmp.ne.s32.totalorder %s345, %s346
    %p360 = scmp.eq.s32.totalorder %s31, 1
    %p361 = por %p359, %p360
    %p363 = scmp.ne.s32.totalorder %s346, %s362
    %p364 = scmp.eq.s32.totalorder %s31, 0
    %p365 = por %p363, %p364
    %s366 = ssub.s32 %s25, %s32
    %p367 = scmp.eq.s32.totalorder %s366, 0
    %s369 = sadd.s32 %s368, 1
    %s370 = scalar_select %p367, %s368, %s369
    %p373 = pneg %p367
    %p374 = scmp.eq.s32.totalorder %s25, 1
    %p375 = por %p373, %p374
    %p376 = scmp.ne.s32.totalorder %s368, %s371
    %p377 = scmp.eq.s32.totalorder %s25, 0
    %p378 = por %p376, %p377
    %p379 = scmp.ne.s32.totalorder %s368, %s371
    %p380 = scmp.eq.s32.totalorder %s30, 1
    %p381 = por %p379, %p380
    %p382 = scmp.ne.s32.totalorder %s371, %s372
    %p383 = scmp.eq.s32.totalorder %s30, 0
    %p384 = por %p382, %p383
    %p385 = scmp.ne.s32.totalorder %s371, %s372
    %p386 = scmp.eq.s32.totalorder %s31, 1
    %p387 = por %p385, %p386
    %p389 = scmp.ne.s32.totalorder %s372, %s388
    %p390 = scmp.eq.s32.totalorder %s31, 0
    %p391 = por %p389, %p390
    %s392 = ssub.s32 %s25, %s32
    %p393 = scmp.eq.s32.totalorder %s392, 0
    %s395 = sadd.s32 %s394, 1
    %s396 = scalar_select %p393, %s394, %s395
    %p399 = pneg %p393
    %p400 = scmp.eq.s32.totalorder %s25, 1
    %p401 = por %p399, %p400
    %p402 = scmp.ne.s32.totalorder %s394, %s397
    %p403 = scmp.eq.s32.totalorder %s25, 0
    %p404 = por %p402, %p403
    %p405 = scmp.ne.s32.totalorder %s394, %s397
    %p406 = scmp.eq.s32.totalorder %s30, 1
    %p407 = por %p405, %p406
    %p408 = scmp.ne.s32.totalorder %s397, %s398
    %p409 = scmp.eq.s32.totalorder %s30, 0
    %p410 = por %p408, %p409
    %p411 = scmp.ne.s32.totalorder %s397, %s398
    %p412 = scmp.eq.s32.totalorder %s31, 1
    %p413 = por %p411, %p412
    %p415 = scmp.ne.s32.totalorder %s398, %s414
    %p416 = scmp.eq.s32.totalorder %s31, 0
    %p417 = por %p415, %p416
    %s418 = ssub.s32 %s25, %s32
    %p419 = scmp.eq.s32.totalorder %s418, 0
    %s421 = sadd.s32 %s420, 1
    %s422 = scalar_select %p419, %s420, %s421
    %p425 = pneg %p419
    %p426 = scmp.eq.s32.totalorder %s25, 1
    %p427 = por %p425, %p426
    %p428 = scmp.ne.s32.totalorder %s420, %s423
    %p429 = scmp.eq.s32.totalorder %s25, 0
    %p430 = por %p428, %p429
    %p431 = scmp.ne.s32.totalorder %s420, %s423
    %p432 = scmp.eq.s32.totalorder %s30, 1
    %p433 = por %p431, %p432
    %p434 = scmp.ne.s32.totalorder %s423, %s424
    %p435 = scmp.eq.s32.totalorder %s30, 0
    %p436 = por %p434, %p435
    %p437 = scmp.ne.s32.totalorder %s423, %s424
    %p438 = scmp.eq.s32.totalorder %s31, 1
    %p439 = por %p437, %p438
    %p441 = scmp.ne.s32.totalorder %s424, %s440
    %p442 = scmp.eq.s32.totalorder %s31, 0
    %p443 = por %p441, %p442
    %s444 = ssub.s32 %s25, %s32
    %p445 = scmp.eq.s32.totalorder %s444, 0
    %s447 = sadd.s32 %s446, 1
    %s448 = scalar_select %p445, %s446, %s447
    %p451 = pneg %p445
    %p452 = scmp.eq.s32.totalorder %s25, 1
    %p453 = por %p451, %p452
    %p454 = scmp.ne.s32.totalorder %s446, %s449
    %p455 = scmp.eq.s32.totalorder %s25, 0
    %p456 = por %p454, %p455
    %p457 = scmp.ne.s32.totalorder %s446, %s449
    %p458 = scmp.eq.s32.totalorder %s30, 1
    %p459 = por %p457, %p458
    %p460 = scmp.ne.s32.totalorder %s449, %s450
    %p461 = scmp.eq.s32.totalorder %s30, 0
    %p462 = por %p460, %p461
    %p463 = scmp.ne.s32.totalorder %s449, %s450
    %p464 = scmp.eq.s32.totalorder %s31, 1
    %p465 = por %p463, %p464
    %p467 = scmp.ne.s32.totalorder %s450, %s466
    %p468 = scmp.eq.s32.totalorder %s31, 0
    %p469 = por %p467, %p468
    %s470 = ssub.s32 %s25, %s32
    %p471 = scmp.eq.s32.totalorder %s470, 0
    %s473 = sadd.s32 %s472, 1
    %s474 = scalar_select %p471, %s472, %s473
    %p477 = pneg %p471
    %p478 = scmp.eq.s32.totalorder %s25, 1
    %p479 = por %p477, %p478
    %p480 = scmp.ne.s32.totalorder %s472, %s475
    %p481 = scmp.eq.s32.totalorder %s25, 0
    %p482 = por %p480, %p481
    %p483 = scmp.ne.s32.totalorder %s472, %s475
    %p484 = scmp.eq.s32.totalorder %s30, 1
    %p485 = por %p483, %p484
    %p486 = scmp.ne.s32.totalorder %s475, %s476
    %p487 = scmp.eq.s32.totalorder %s30, 0
    %p488 = por %p486, %p487
    %p489 = scmp.ne.s32.totalorder %s475, %s476
    %p490 = scmp.eq.s32.totalorder %s31, 1
    %p491 = por %p489, %p490
    %p493 = scmp.ne.s32.totalorder %s476, %s492
    %p494 = scmp.eq.s32.totalorder %s31, 0
    %p495 = por %p493, %p494
    %s496 = ssub.s32 %s25, %s32
    %p497 = scmp.eq.s32.totalorder %s496, 0
    %s499 = sadd.s32 %s498, 1
    %s500 = scalar_select %p497, %s498, %s499
    %p503 = pneg %p497
    %p504 = scmp.eq.s32.totalorder %s25, 1
    %p505 = por %p503, %p504
    %p506 = scmp.ne.s32.totalorder %s498, %s501
    %p507 = scmp.eq.s32.totalorder %s25, 0
    %p508 = por %p506, %p507
    %p509 = scmp.ne.s32.totalorder %s498, %s501
    %p510 = scmp.eq.s32.totalorder %s30, 1
    %p511 = por %p509, %p510
    %p512 = scmp.ne.s32.totalorder %s501, %s502
    %p513 = scmp.eq.s32.totalorder %s30, 0
    %p514 = por %p512, %p513
    %p515 = scmp.ne.s32.totalorder %s501, %s502
    %p516 = scmp.eq.s32.totalorder %s31, 1
    %p517 = por %p515, %p516
    %p519 = scmp.ne.s32.totalorder %s502, %s518
    %p520 = scmp.eq.s32.totalorder %s31, 0
    %p521 = por %p519, %p520
    %s522 = ssub.s32 %s25, %s32
    %p523 = scmp.eq.s32.totalorder %s522, 0
    %s525 = sadd.s32 %s524, 1
    %s526 = scalar_select %p523, %s524, %s525
    %p529 = pneg %p523
    %p530 = scmp.eq.s32.totalorder %s25, 1
    %p531 = por %p529, %p530
    %p532 = scmp.ne.s32.totalorder %s524, %s527
    %p533 = scmp.eq.s32.totalorder %s25, 0
    %p534 = por %p532, %p533
    %p535 = scmp.ne.s32.totalorder %s524, %s527
    %p536 = scmp.eq.s32.totalorder %s30, 1
    %p537 = por %p535, %p536
    %p538 = scmp.ne.s32.totalorder %s527, %s528
    %p539 = scmp.eq.s32.totalorder %s30, 0
    %p540 = por %p538, %p539
    %p541 = scmp.ne.s32.totalorder %s527, %s528
    %p542 = scmp.eq.s32.totalorder %s31, 1
    %p543 = por %p541, %p542
    %p545 = scmp.ne.s32.totalorder %s528, %s544
    %p546 = scmp.eq.s32.totalorder %s31, 0
    %p547 = por %p545, %p546
    %p548 = scmp.le.s32.totalorder 1, %s25
    %p549 = scmp.lt.s32.totalorder %s25, 3
    %p550 = pnand %p548, %p549
    %p551 = pneg %p550
    // Predicated region
    $region9: #{dino_forward.1} parent=5 // pred_check
      _
    $region10: #{dino_forward.1} parent=5 // pred_check_branch
      %553 = sbr.rel (%p550) target = $region12
    $region11: #{dino_forward.1} parent=5 // pred_region
      %s554 = ssub.s32 %s25, 1
      // Predicated region
      $region13: #{dino_forward.1} parent=11 // pred_check
        %p555 = pneg %p46
      $region14: #{dino_forward.1} parent=11 // pred_check_branch
        %557 = sbr.rel (%p555) target = $region16
      $region15: #{dino_forward.1} parent=11 // pred_region
        _
      $region16: #{dino_forward.1} parent=11 // pred_fallthru
        _
    $region12: #{dino_forward.1} parent=5 // pred_fallthru
      _
    %p558 = scmp.lt.s32.totalorder %s25, 2
    // Predicated region
    $region17: #{dino_forward.1} parent=5 // pred_check
      %p559 = pneg %p558
    $region18: #{dino_forward.1} parent=5 // pred_check_branch
      %561 = sbr.rel (%p559) target = $region20
    $region19: #{dino_forward.1} parent=5 // pred_region
      // Predicated region
      $region21: #{dino_forward.1} parent=19 // pred_check
        %p562 = pneg %p66
      $region22: #{dino_forward.1} parent=19 // pred_check_branch
        %564 = sbr.rel (%p562) target = $region24
      $region23: #{dino_forward.1} parent=19 // pred_region
        %p565 = scmp.lt.s32.totalorder %s25, 1
        %s566 = scalar_select %p565, %s25, 1
        %s567 = smul.addr %s566, 3
        %s568 = smul.addr %s567, 8
        %s569 = scalar_lea.vmem %s1, %s568
      $region24: #{dino_forward.1} parent=19 // pred_fallthru
        _
      // Predicated region
      $region25: #{dino_forward.1} parent=19 // pred_check
        %p570 = pneg %p92
      $region26: #{dino_forward.1} parent=19 // pred_check_branch
        %572 = sbr.rel (%p570) target = $region28
      $region27: #{dino_forward.1} parent=19 // pred_region
        %p573 = scmp.lt.s32.totalorder %s25, 1
        %s574 = scalar_select %p573, %s25, 1
        %s575 = smul.addr %s574, 16
        %s576 = smul.addr %s575, 4
        %s577 = scalar_lea.vmem %s2, %s576
      $region28: #{dino_forward.1} parent=19 // pred_fallthru
        _
      // Predicated region
      $region29: #{dino_forward.1} parent=19 // pred_check
        %p578 = pneg %p118
      $region30: #{dino_forward.1} parent=19 // pred_check_branch
        %580 = sbr.rel (%p578) target = $region32
      $region31: #{dino_forward.1} parent=19 // pred_region
        %p581 = scmp.lt.s32.totalorder %s25, 1
        %s582 = scalar_select %p581, %s25, 1
        %s583 = smul.addr %s582, 2
        %s584 = scalar_lea.vmem %s3, %s583
      $region32: #{dino_forward.1} parent=19 // pred_fallthru
        _
      // Predicated region
      $region33: #{dino_forward.1} parent=19 // pred_check
        %p585 = pneg %p144
      $region34: #{dino_forward.1} parent=19 // pred_check_branch
        %587 = sbr.rel (%p585) target = $region36
      $region35: #{dino_forward.1} parent=19 // pred_region
        %p588 = scmp.lt.s32.totalorder %s25, 1
        %s589 = scalar_select %p588, %s25, 1
        %s590 = smul.addr %s589, 2
        %s591 = scalar_lea.vmem %s4, %s590
      $region36: #{dino_forward.1} parent=19 // pred_fallthru
        _
      // Predicated region
      $region37: #{dino_forward.1} parent=19 // pred_check
        %p592 = pneg %p170
      $region38: #{dino_forward.1} parent=19 // pred_check_branch
        %594 = sbr.rel (%p592) target = $region40
      $region39: #{dino_forward.1} parent=19 // pred_region
        %p595 = scmp.lt.s32.totalorder %s25, 1
        %s596 = scalar_select %p595, %s25, 1
        %s597 = smul.addr %s596, 96
        %s598 = smul.addr %s597, 4
        %s599 = scalar_lea.vmem %s5, %s598
      $region40: #{dino_forward.1} parent=19 // pred_fallthru
        _
      // Predicated region
      $region41: #{dino_forward.1} parent=19 // pred_check
        %p600 = pneg %p196
      $region42: #{dino_forward.1} parent=19 // pred_check_branch
        %602 = sbr.rel (%p600) target = $region44
      $region43: #{dino_forward.1} parent=19 // pred_region
        %p603 = scmp.lt.s32.totalorder %s25, 1
        %s604 = scalar_select %p603, %s25, 1
        %s605 = smul.addr %s604, 6
        %s606 = scalar_lea.vmem %s6, %s605
      $region44: #{dino_forward.1} parent=19 // pred_fallthru
        _
      // Predicated region
      $region45: #{dino_forward.1} parent=19 // pred_check
        %p607 = pneg %p222
      $region46: #{dino_forward.1} parent=19 // pred_check_branch
        %609 = sbr.rel (%p607) target = $region48
      $region47: #{dino_forward.1} parent=19 // pred_region
        %p610 = scmp.lt.s32.totalorder %s25, 1
        %s611 = scalar_select %p610, %s25, 1
        %s612 = smul.addr %s611, 32
        %s613 = smul.addr %s612, 4
        %s614 = scalar_lea.vmem %s7, %s613
      $region48: #{dino_forward.1} parent=19 // pred_fallthru
        _
      // Predicated region
      $region49: #{dino_forward.1} parent=19 // pred_check
        %p615 = pneg %p248
      $region50: #{dino_forward.1} parent=19 // pred_check_branch
        %617 = sbr.rel (%p615) target = $region52
      $region51: #{dino_forward.1} parent=19 // pred_region
        %p618 = scmp.lt.s32.totalorder %s25, 1
        %s619 = scalar_select %p618, %s25, 1
        %s620 = smul.addr %s619, 2
        %s621 = scalar_lea.vmem %s8, %s620
      $region52: #{dino_forward.1} parent=19 // pred_fallthru
        _
      // Predicated region
      $region53: #{dino_forward.1} parent=19 // pred_check
        %p622 = pneg %p274
      $region54: #{dino_forward.1} parent=19 // pred_check_branch
        %624 = sbr.rel (%p622) target = $region56
      $region55: #{dino_forward.1} parent=19 // pred_region
        %p625 = scmp.lt.s32.totalorder %s25, 1
        %s626 = scalar_select %p625, %s25, 1
        %s627 = smul.addr %s626, 2
        %s628 = scalar_lea.vmem %s9, %s627
      $region56: #{dino_forward.1} parent=19 // pred_fallthru
        _
      // Predicated region
      $region57: #{dino_forward.1} parent=19 // pred_check
        %p629 = pneg %p300
      $region58: #{dino_forward.1} parent=19 // pred_check_branch
        %631 = sbr.rel (%p629) target = $region60
      $region59: #{dino_forward.1} parent=19 // pred_region
        %p632 = scmp.lt.s32.totalorder %s25, 1
        %s633 = scalar_select %p632, %s25, 1
        %s634 = smul.addr %s633, 2
        %s635 = scalar_lea.vmem %s10, %s634
      $region60: #{dino_forward.1} parent=19 // pred_fallthru
        _
      // Predicated region
      $region61: #{dino_forward.1} parent=19 // pred_check
        %p636 = pneg %p326
      $region62: #{dino_forward.1} parent=19 // pred_check_branch
        %638 = sbr.rel (%p636) target = $region64
      $region63: #{dino_forward.1} parent=19 // pred_region
        %p639 = scmp.lt.s32.totalorder %s25, 1
        %s640 = scalar_select %p639, %s25, 1
        %s641 = smul.addr %s640, 64
        %s642 = smul.addr %s641, 4
        %s643 = scalar_lea.vmem %s11, %s642
      $region64: #{dino_forward.1} parent=19 // pred_fallthru
        _
      // Predicated region
      $region65: #{dino_forward.1} parent=19 // pred_check
        %p644 = pneg %p352
      $region66: #{dino_forward.1} parent=19 // pred_check_branch
        %646 = sbr.rel (%p644) target = $region68
      $region67: #{dino_forward.1} parent=19 // pred_region
        %p647 = scmp.lt.s32.totalorder %s25, 1
        %s648 = scalar_select %p647, %s25, 1
        %s649 = smul.addr %s648, 4
        %s650 = scalar_lea.vmem %s12, %s649
      $region68: #{dino_forward.1} parent=19 // pred_fallthru
        _
      // Predicated region
      $region69: #{dino_forward.1} parent=19 // pred_check
        %p651 = pneg %p378
      $region70: #{dino_forward.1} parent=19 // pred_check_branch
        %653 = sbr.rel (%p651) target = $region72
      $region71: #{dino_forward.1} parent=19 // pred_region
        %p654 = scmp.lt.s32.totalorder %s25, 1
        %s655 = scalar_select %p654, %s25, 1
        %s656 = smul.addr %s655, 64
        %s657 = smul.addr %s656, 4
        %s658 = scalar_lea.vmem %s13, %s657
      $region72: #{dino_forward.1} parent=19 // pred_fallthru
        _
      // Predicated region
      $region73: #{dino_forward.1} parent=19 // pred_check
        %p659 = pneg %p404
      $region74: #{dino_forward.1} parent=19 // pred_check_branch
        %661 = sbr.rel (%p659) target = $region76
      $region75: #{dino_forward.1} parent=19 // pred_region
        %p662 = scmp.lt.s32.totalorder %s25, 1
        %s663 = scalar_select %p662, %s25, 1
        %s664 = smul.addr %s663, 2
        %s665 = scalar_lea.vmem %s14, %s664
      $region76: #{dino_forward.1} parent=19 // pred_fallthru
        _
      // Predicated region
      $region77: #{dino_forward.1} parent=19 // pred_check
        %p666 = pneg %p430
      $region78: #{dino_forward.1} parent=19 // pred_check_branch
        %668 = sbr.rel (%p666) target = $region80
      $region79: #{dino_forward.1} parent=19 // pred_region
        %p669 = scmp.lt.s32.totalorder %s25, 1
        %s670 = scalar_select %p669, %s25, 1
        %s671 = scalar_lea.vmem %s15, %s670
      $region80: #{dino_forward.1} parent=19 // pred_fallthru
        _
      // Predicated region
      $region81: #{dino_forward.1} parent=19 // pred_check
        %p672 = pneg %p456
      $region82: #{dino_forward.1} parent=19 // pred_check_branch
        %674 = sbr.rel (%p672) target = $region84
      $region83: #{dino_forward.1} parent=19 // pred_region
        %p675 = scmp.lt.s32.totalorder %s25, 1
        %s676 = scalar_select %p675, %s25, 1
        %s677 = scalar_lea.vmem %s16, %s676
      $region84: #{dino_forward.1} parent=19 // pred_fallthru
        _
      // Predicated region
      $region85: #{dino_forward.1} parent=19 // pred_check
        %p678 = pneg %p482
      $region86: #{dino_forward.1} parent=19 // pred_check_branch
        %680 = sbr.rel (%p678) target = $region88
      $region87: #{dino_forward.1} parent=19 // pred_region
        %p681 = scmp.lt.s32.totalorder %s25, 1
        %s682 = scalar_select %p681, %s25, 1
        %s683 = smul.addr %s682, 16
        %s684 = smul.addr %s683, 4
        %s685 = scalar_lea.vmem %s17, %s684
      $region88: #{dino_forward.1} parent=19 // pred_fallthru
        _
      // Predicated region
      $region89: #{dino_forward.1} parent=19 // pred_check
        %p686 = pneg %p508
      $region90: #{dino_forward.1} parent=19 // pred_check_branch
        %688 = sbr.rel (%p686) target = $region92
      $region91: #{dino_forward.1} parent=19 // pred_region
        %p689 = scmp.lt.s32.totalorder %s25, 1
        %s690 = scalar_select %p689, %s25, 1
        %s691 = scalar_lea.vmem %s18, %s690
      $region92: #{dino_forward.1} parent=19 // pred_fallthru
        _
    $region20: #{dino_forward.1} parent=5 // pred_fallthru
      _
    %p692 = scmp.le.s32.totalorder 1, %s25
    %p693 = scmp.lt.s32.totalorder %s25, 3
    %p694 = pnand %p692, %p693
    %p695 = pneg %p694
    // Predicated region
    $region93: #{dino_forward.1} parent=5 // pred_check
      _
    $region94: #{dino_forward.1} parent=5 // pred_check_branch
      %697 = sbr.rel (%p694) target = $region96
    $region95: #{dino_forward.1} parent=5 // pred_region
      %s698 = ssub.s32 %s25, 1
      %p699 = pneg %p46
      %p700 = pneg %p43
      %p701 = scmp.lt.s32.totalorder %s30, 1
      %s702 = scalar_select %p701, %s30, 1
      %s703 = smul.addr %s702, 3
      %s704 = smul.addr %s703, 8
      %s705 = scalar_lea.vmem %s1, %s704
      %p706 = pneg %p72
      %p707 = pneg %p69
      %p708 = scmp.lt.s32.totalorder %s30, 1
      %s709 = scalar_select %p708, %s30, 1
      %s710 = smul.addr %s709, 16
      %s711 = smul.addr %s710, 4
      %s712 = scalar_lea.vmem %s2, %s711
      %p713 = pneg %p98
      %p714 = pneg %p95
      %p715 = scmp.lt.s32.totalorder %s30, 1
      %s716 = scalar_select %p715, %s30, 1
      %s717 = smul.addr %s716, 2
      %s718 = scalar_lea.vmem %s3, %s717
      %p719 = pneg %p124
      %p720 = pneg %p121
      %p721 = scmp.lt.s32.totalorder %s30, 1
      %s722 = scalar_select %p721, %s30, 1
      %s723 = smul.addr %s722, 2
      %s724 = scalar_lea.vmem %s4, %s723
      %p725 = pneg %p150
      %p726 = pneg %p147
      %p727 = scmp.lt.s32.totalorder %s30, 1
      %s728 = scalar_select %p727, %s30, 1
      %s729 = smul.addr %s728, 96
      %s730 = smul.addr %s729, 4
      %s731 = scalar_lea.vmem %s5, %s730
      %p732 = pneg %p176
      %p733 = pneg %p173
      %p734 = scmp.lt.s32.totalorder %s30, 1
      %s735 = scalar_select %p734, %s30, 1
      %s736 = smul.addr %s735, 6
      %s737 = scalar_lea.vmem %s6, %s736
      %p738 = pneg %p202
      %p739 = pneg %p199
      %p740 = scmp.lt.s32.totalorder %s30, 1
      %s741 = scalar_select %p740, %s30, 1
      %s742 = smul.addr %s741, 32
      %s743 = smul.addr %s742, 4
      %s744 = scalar_lea.vmem %s7, %s743
      %p745 = pneg %p228
      %p746 = pneg %p225
      %p747 = scmp.lt.s32.totalorder %s30, 1
      %s748 = scalar_select %p747, %s30, 1
      %s749 = smul.addr %s748, 2
      %s750 = scalar_lea.vmem %s8, %s749
      %p751 = pneg %p254
      %p752 = pneg %p251
      %p753 = scmp.lt.s32.totalorder %s30, 1
      %s754 = scalar_select %p753, %s30, 1
      %s755 = smul.addr %s754, 2
      %s756 = scalar_lea.vmem %s9, %s755
      %p757 = pneg %p280
      %p758 = pneg %p277
      %p759 = scmp.lt.s32.totalorder %s30, 1
      %s760 = scalar_select %p759, %s30, 1
      %s761 = smul.addr %s760, 2
      %s762 = scalar_lea.vmem %s10, %s761
      %p763 = pneg %p306
      %p764 = pneg %p303
      %p765 = scmp.lt.s32.totalorder %s30, 1
      %s766 = scalar_select %p765, %s30, 1
      %s767 = smul.addr %s766, 64
      %s768 = smul.addr %s767, 4
      %s769 = scalar_lea.vmem %s11, %s768
      %p770 = pneg %p332
      %p771 = pneg %p329
      %p772 = scmp.lt.s32.totalorder %s30, 1
      %s773 = scalar_select %p772, %s30, 1
      %s774 = smul.addr %s773, 4
      %s775 = scalar_lea.vmem %s12, %s774
      %p776 = pneg %p358
      %p777 = pneg %p355
      %p778 = scmp.lt.s32.totalorder %s30, 1
      %s779 = scalar_select %p778, %s30, 1
      %s780 = smul.addr %s779, 64
      %s781 = smul.addr %s780, 4
      %s782 = scalar_lea.vmem %s13, %s781
      %p783 = pneg %p384
      %p784 = pneg %p381
      %p785 = scmp.lt.s32.totalorder %s30, 1
      %s786 = scalar_select %p785, %s30, 1
      %s787 = smul.addr %s786, 2
      %s788 = scalar_lea.vmem %s14, %s787
      %p789 = pneg %p410
      %p790 = pneg %p407
      %p791 = scmp.lt.s32.totalorder %s30, 1
      %s792 = scalar_select %p791, %s30, 1
      %s793 = scalar_lea.vmem %s15, %s792
      %p794 = pneg %p436
      %p795 = pneg %p433
      %p796 = scmp.lt.s32.totalorder %s30, 1
      %s797 = scalar_select %p796, %s30, 1
      %s798 = scalar_lea.vmem %s16, %s797
      %p799 = pneg %p462
      %p800 = pneg %p459
      %p801 = scmp.lt.s32.totalorder %s30, 1
      %s802 = scalar_select %p801, %s30, 1
      %s803 = smul.addr %s802, 16
      %s804 = smul.addr %s803, 4
      %s805 = scalar_lea.vmem %s17, %s804
      %p806 = pneg %p488
      %p807 = pneg %p485
      %p808 = scmp.lt.s32.totalorder %s30, 1
      %s809 = scalar_select %p808, %s30, 1
      %s810 = scalar_lea.vmem %s18, %s809
      %p811 = pneg %p514
      %p812 = pneg %p511
      %p813 = pneg %p540
      %p814 = pneg %p537
      %p815 = scmp.lt.s32.totalorder %s30, 1
      %s816 = scalar_select %p815, %s30, 1
      %s817 = smul.addr %s816, 8
      %s818 = scalar_lea.vmem %s19, %s817
      %p819 = scmp.lt.s32.totalorder %s30, 1
      %s820 = scalar_select %p819, %s30, 1
      %s821 = smul.addr %s820, 3
      %s822 = smul.addr %s821, 8
      %s823 = scalar_lea.vmem %s1, %s822
      %p824 = scmp.lt.s32.totalorder %s30, 1
      %s825 = scalar_select %p824, %s30, 1
      %s826 = smul.addr %s825, 16
      %s827 = smul.addr %s826, 4
      %s828 = scalar_lea.vmem %s2, %s827
      %p829 = scmp.lt.s32.totalorder %s30, 1
      %s830 = scalar_select %p829, %s30, 1
      %s831 = smul.addr %s830, 2
      %s832 = scalar_lea.vmem %s3, %s831
      %p833 = scmp.lt.s32.totalorder %s30, 1
      %s834 = scalar_select %p833, %s30, 1
      %s835 = smul.addr %s834, 2
      %s836 = scalar_lea.vmem %s4, %s835
      %p837 = scmp.lt.s32.totalorder %s30, 1
      %s838 = scalar_select %p837, %s30, 1
      %s839 = smul.addr %s838, 96
      %s840 = smul.addr %s839, 4
      %s841 = scalar_lea.vmem %s5, %s840
      %p842 = scmp.lt.s32.totalorder %s30, 1
      %s843 = scalar_select %p842, %s30, 1
      %s844 = smul.addr %s843, 6
      %s845 = scalar_lea.vmem %s6, %s844
      %p846 = scmp.lt.s32.totalorder %s30, 1
      %s847 = scalar_select %p846, %s30, 1
      %s848 = smul.addr %s847, 32
      %s849 = smul.addr %s848, 4
      %s850 = scalar_lea.vmem %s7, %s849
      %p851 = scmp.lt.s32.totalorder %s30, 1
      %s852 = scalar_select %p851, %s30, 1
      %s853 = smul.addr %s852, 2
      %s854 = scalar_lea.vmem %s8, %s853
      %p855 = scmp.lt.s32.totalorder %s30, 1
      %s856 = scalar_select %p855, %s30, 1
      %s857 = smul.addr %s856, 2
      %s858 = scalar_lea.vmem %s9, %s857
      %p859 = scmp.lt.s32.totalorder %s30, 1
      %s860 = scalar_select %p859, %s30, 1
      %s861 = smul.addr %s860, 2
      %s862 = scalar_lea.vmem %s10, %s861
      %p863 = scmp.lt.s32.totalorder %s30, 1
      %s864 = scalar_select %p863, %s30, 1
      %s865 = smul.addr %s864, 64
      %s866 = smul.addr %s865, 4
      %s867 = scalar_lea.vmem %s11, %s866
      %p868 = scmp.lt.s32.totalorder %s30, 1
      %s869 = scalar_select %p868, %s30, 1
      %s870 = smul.addr %s869, 4
      %s871 = scalar_lea.vmem %s12, %s870
      %p872 = scmp.lt.s32.totalorder %s30, 1
      %s873 = scalar_select %p872, %s30, 1
      %s874 = smul.addr %s873, 64
      %s875 = smul.addr %s874, 4
      %s876 = scalar_lea.vmem %s13, %s875
      %p877 = scmp.lt.s32.totalorder %s30, 1
      %s878 = scalar_select %p877, %s30, 1
      %s879 = smul.addr %s878, 2
      %s880 = scalar_lea.vmem %s14, %s879
      %p881 = scmp.lt.s32.totalorder %s30, 1
      %s882 = scalar_select %p881, %s30, 1
      %s883 = scalar_lea.vmem %s15, %s882
      %p884 = scmp.lt.s32.totalorder %s30, 1
      %s885 = scalar_select %p884, %s30, 1
      %s886 = scalar_lea.vmem %s16, %s885
      %p887 = scmp.lt.s32.totalorder %s30, 1
      %s888 = scalar_select %p887, %s30, 1
      %s889 = smul.addr %s888, 16
      %s890 = smul.addr %s889, 4
      %s891 = scalar_lea.vmem %s17, %s890
      %p892 = scmp.lt.s32.totalorder %s30, 1
      %s893 = scalar_select %p892, %s30, 1
      %s894 = scalar_lea.vmem %s18, %s893
      %p895 = scmp.lt.s32.totalorder %s30, 1
      %s896 = scalar_select %p895, %s30, 1
      %s897 = smul.addr %s896, 8
      %s898 = scalar_lea.vmem %s19, %s897
      %v900 = vld [vmem:[%s0] sm:$0xf]
      %v901 = vld [vmem:[%s0 + $0x4] sm:$0xf]
      %v902 = vld [vmem:[%s0 + $0x8] sm:$0xf]
      %v903 = vld [vmem:[%s0 + $0xc] sm:$0xf]
      %v904 = vld [vmem:[%s0 + $0x10] sm:$0xf]
      %v905 = vld [vmem:[%s0 + $0x14] sm:$0xf]
      %v906 = vld [vmem:[%s0 + $0x18] sm:$0xf]
      %v907 = vld [vmem:[%s0 + $0x1c] sm:$0xf]
      %v908 = vld [vmem:[%s0 + $0x20] sm:$0xf]
      %v909 = vld [vmem:[%s0 + $0x24] sm:$0xf]
      %v910 = vld [vmem:[%s0 + $0x28] sm:$0xf]
      %v911 = vld [vmem:[%s0 + $0x2c] sm:$0xf]
      %v912 = vld [vmem:[%s828] sm:$0xf]
      %v913 = vld [vmem:[%s828 + $0x4] sm:$0xf]
      %v914 = vld [vmem:[%s828 + $0x8] sm:$0xf]
      %v915 = vld [vmem:[%s828 + $0xc] sm:$0xf]
      %v916 = vld [vmem:[%s828 + $0x10] sm:$0xf]
      %v917 = vld [vmem:[%s828 + $0x14] sm:$0xf]
      %v918 = vld [vmem:[%s828 + $0x18] sm:$0xf]
      %v919 = vld [vmem:[%s828 + $0x1c] sm:$0xf]
      %v920 = vld [vmem:[%s828 + $0x20] sm:$0xf]
      %v921 = vld [vmem:[%s828 + $0x24] sm:$0xf]
      %v922 = vld [vmem:[%s828 + $0x28] sm:$0xf]
      %v923 = vld [vmem:[%s828 + $0x2c] sm:$0xf]
      %v924 = vld [vmem:[%s828 + $0x30] sm:$0xf]
      %v925 = vld [vmem:[%s828 + $0x34] sm:$0xf]
      %v926 = vld [vmem:[%s828 + $0x38] sm:$0xf]
      %v927 = vld [vmem:[%s828 + $0x3c] sm:$0xf]
      %v940 = vunpack.c.l.b16 %v900
      %v941 = vunpack.c.l.b16 %v901
      %v942 = vunpack.c.l.b16 %v902
      %v943 = vunpack.c.l.b16 %v903
      %v944 = vunpack.c.l.b16 %v904
      %v945 = vunpack.c.l.b16 %v905
      %v946 = vunpack.c.l.b16 %v906
      %v947 = vunpack.c.l.b16 %v907
      %v948 = vunpack.c.l.b16 %v908
      %v949 = vunpack.c.l.b16 %v909
      %v950 = vunpack.c.l.b16 %v910
      %v951 = vunpack.c.l.b16 %v911
      %v952 = vpack.c.b16 %v941, %v940
      %v953 = vpack.c.b16 %v943, %v942
      %v954 = vpack.c.b16 %v945, %v944
      %v955 = vpack.c.b16 %v947, %v946
      %v956 = vpack.c.b16 %v949, %v948
      %v957 = vpack.c.b16 %v951, %v950
      %v980 = vunpack.c.l.b16 %v912
      %v981 = vunpack.c.l.b16 %v913
      %v982 = vunpack.c.l.b16 %v914
      %v983 = vunpack.c.l.b16 %v915
      %v984 = vunpack.c.l.b16 %v916
      %v985 = vunpack.c.l.b16 %v917
      %v986 = vunpack.c.l.b16 %v918
      %v987 = vunpack.c.l.b16 %v919
      %v988 = vunpack.c.l.b16 %v920
      %v989 = vunpack.c.l.b16 %v921
      %v990 = vunpack.c.l.b16 %v922
      %v991 = vunpack.c.l.b16 %v923
      %v992 = vunpack.c.l.b16 %v924
      %v993 = vunpack.c.l.b16 %v925
      %v994 = vunpack.c.l.b16 %v926
      %v995 = vunpack.c.l.b16 %v927
      %v996 = vpack.c.b16 %v981, %v980
      %v997 = vpack.c.b16 %v983, %v982
      %v998 = vpack.c.b16 %v985, %v984
      %v999 = vpack.c.b16 %v987, %v986
      %v1000 = vpack.c.b16 %v989, %v988
      %v1001 = vpack.c.b16 %v991, %v990
      %v1002 = vpack.c.b16 %v993, %v992
      %v1003 = vpack.c.b16 %v995, %v994
      %1012 = vmatprep.subr.bf16.mxu0 0
      %1013 = vmatpush1.bf16.msra.mxu0 %v996
      %1014 = vmatprep.subr.bf16.mxu0 0
      %1015 = vmatpush1.bf16.msra.mxu0 %v997
      %1016 = vmatprep.subr.bf16.mxu0 0
      %1017 = vmatpush1.bf16.msra.mxu0 %v998
      %1018 = vmatprep.subr.bf16.mxu0 0
      %1019 = vmatpush1.bf16.msra.mxu0 %v999
      %1020 = vmatprep.subr.bf16.mxu0 0
      %1021 = vmatpush1.bf16.msra.mxu0 %v1000
      %1022 = vmatprep.subr.bf16.mxu0 0
      %1023 = vmatpush1.bf16.msra.mxu0 %v1001
      %1024 = vmatprep.subr.bf16.mxu0 0
      %1025 = vmatpush1.bf16.msra.mxu0 %v1002
      %1026 = vmatprep.subr.bf16.mxu0 0
      %1027 = vmatpush1.bf16.msra.mxu0 %v1003
      %1028 = vmatprep.subr.bf16.mxu0 0
      %1029 = vmatpush1.bf16.msra.mxu0 0
      %1030 = vmatprep.subr.bf16.mxu0 0
      %1031 = vmatpush1.bf16.msra.mxu0 0
      %1032 = vmatprep.subr.bf16.mxu0 0
      %1033 = vmatpush1.bf16.msra.mxu0 0
      %1034 = vmatprep.subr.bf16.mxu0 0
      %1035 = vmatpush1.bf16.msra.mxu0 0
      %1036 = vmatprep.subr.bf16.mxu0 0
      %1037 = vmatpush1.bf16.msra.mxu0 0
      %1038 = vmatprep.subr.bf16.mxu0 0
      %1039 = vmatpush1.bf16.msra.mxu0 0
      %1040 = vmatprep.subr.bf16.mxu0 0
      %1041 = vmatpush1.bf16.msra.mxu0 0
      %1042 = vmatprep.subr.bf16.mxu0 0
      %1043 = vmatpush1.bf16.msra.mxu0 0
      %1044 = vmatprep.mubr.bf16.mxu0 0
      %1045 = vmatmul.mubr.bf16.gmra.mrb[0].mxu0 %v952
      %v1046 = vpop.f32.mrb[0].mxu0
      %v1047 = vadd.f32 0.0, %v1046
      %v1048 = vpop.f32.mrb[0].mxu0
      %v1049 = vpop.f32.mrb[0].mxu0
      %v1050 = vadd.f32 0.0, %v1049
      %v1051 = vpop.f32.mrb[0].mxu0
      %1052 = vmatprep.mubr.bf16.mxu0 0
      %1053 = vmatmul.mubr.bf16.gmra.mrb[0].mxu0 %v953
      %v1054 = vpop.f32.mrb[0].mxu0
      %v1055 = vadd.f32 0.0, %v1054
      %v1056 = vpop.f32.mrb[0].mxu0
      %v1057 = vpop.f32.mrb[0].mxu0
      %v1058 = vadd.f32 0.0, %v1057
      %v1059 = vpop.f32.mrb[0].mxu0
      %1060 = vmatprep.mubr.bf16.mxu0 0
      %1061 = vmatmul.mubr.bf16.gmra.mrb[0].mxu0 %v954
      %v1062 = vpop.f32.mrb[0].mxu0
      %v1063 = vadd.f32 0.0, %v1062
      %v1064 = vpop.f32.mrb[0].mxu0
      %v1065 = vpop.f32.mrb[0].mxu0
      %v1066 = vadd.f32 0.0, %v1065
      %v1067 = vpop.f32.mrb[0].mxu0
      %1068 = vmatprep.mubr.bf16.mxu0 0
      %1069 = vmatmul.mubr.bf16.gmra.mrb[0].mxu0 %v955
      %v1070 = vpop.f32.mrb[0].mxu0
      %v1071 = vadd.f32 0.0, %v1070
      %v1072 = vpop.f32.mrb[0].mxu0
      %v1073 = vpop.f32.mrb[0].mxu0
      %v1074 = vadd.f32 0.0, %v1073
      %v1075 = vpop.f32.mrb[0].mxu0
      %1076 = vmatprep.mubr.bf16.mxu0 0
      %1077 = vmatmul.mubr.bf16.gmra.mrb[0].mxu0 %v956
      %v1078 = vpop.f32.mrb[0].mxu0
      %v1079 = vadd.f32 0.0, %v1078
      %v1080 = vpop.f32.mrb[0].mxu0
      %v1081 = vpop.f32.mrb[0].mxu0
      %v1082 = vadd.f32 0.0, %v1081
      %v1083 = vpop.f32.mrb[0].mxu0
      %1084 = vmatprep.mubr.bf16.mxu0 0
      %1085 = vmatmul.mubr.bf16.gmra.mrb[0].mxu0 %v957
      %v1086 = vpop.f32.mrb[0].mxu0
      %v1087 = vadd.f32 0.0, %v1086
      %v1088 = vpop.f32.mrb[0].mxu0
      %v1089 = vpop.f32.mrb[0].mxu0
      %v1090 = vadd.f32 0.0, %v1089
      %v1091 = vpop.f32.mrb[0].mxu0
      %1092 = vdwg.mxu0
      %v1093 = vld [vmem:[%s823] sm:$0xff]
      %v1094 = vld [vmem:[%s823 + $0x8] sm:$0xff]
      %v1095 = vld [vmem:[%s823 + $0x10] sm:$0xff]
      %v1096 = vadd.f32 %v1047, %v1093
      %v1097 = vadd.f32 %v1050, %v1094
      %v1098 = vadd.f32 %v1055, %v1095
      %v1099 = vadd.f32 %v1058, %v1093
      %v1100 = vadd.f32 %v1063, %v1094
      %v1101 = vadd.f32 %v1066, %v1095
      %v1102 = vadd.f32 %v1071, %v1093
      %v1103 = vadd.f32 %v1074, %v1094
      %v1104 = vadd.f32 %v1079, %v1095
      %v1105 = vadd.f32 %v1082, %v1093
      %v1106 = vadd.f32 %v1087, %v1094
      %v1107 = vadd.f32 %v1090, %v1095
      %v1108 = vlaneseq
      %v1109 = vand.u32 %v1108, 127
      %vm1110 = vcmp.lt.s32.totalorder %v1109, 17
      %v1111 = vsel %vm1110, 0.0, -1e+30
      %v1112 = vld [vmem:[%s832] sm:$0x1]
      %v1113 = vld [vmem:[%s836] sm:$0x1]
      %1114 = vadd.xlane.f32.xlu0 %v1096
      %v1115 = vpop.xlane.xlu0 %1114
      %1116 = vadd.xlane.f32.xlu0 %v1097
      %v1117 = vpop.xlane.xlu0 %1116
      %1118 = vadd.xlane.f32.xlu0 %v1098
      %v1119 = vpop.xlane.xlu0 %1118
      %1120 = vadd.xlane.f32.xlu0 %v1099
      %v1121 = vpop.xlane.xlu0 %1120
      %1122 = vadd.xlane.f32.xlu0 %v1100
      %v1123 = vpop.xlane.xlu0 %1122
      %1124 = vadd.xlane.f32.xlu0 %v1101
      %v1125 = vpop.xlane.xlu0 %1124
      %1126 = vadd.xlane.f32.xlu0 %v1102
      %v1127 = vpop.xlane.xlu0 %1126
      %1128 = vadd.xlane.f32.xlu0 %v1103
      %v1129 = vpop.xlane.xlu0 %1128
      %1130 = vadd.xlane.f32.xlu0 %v1104
      %v1131 = vpop.xlane.xlu0 %1130
      %1132 = vadd.xlane.f32.xlu0 %v1105
      %v1133 = vpop.xlane.xlu0 %1132
      %1134 = vadd.xlane.f32.xlu0 %v1106
      %v1135 = vpop.xlane.xlu0 %1134
      %1136 = vadd.xlane.f32.xlu0 %v1107
      %v1137 = vpop.xlane.xlu0 %1136
      %v1138 = vrcp.pop 128.0
      %v1139 = vmul.f32 %v1115, %v1138
      %v1140 = vmul.f32 %v1117, %v1138
      %v1141 = vmul.f32 %v1119, %v1138
      %v1142 = vmul.f32 %v1121, %v1138
      %v1143 = vmul.f32 %v1123, %v1138
      %v1144 = vmul.f32 %v1125, %v1138
      %v1145 = vmul.f32 %v1127, %v1138
      %v1146 = vmul.f32 %v1129, %v1138
      %v1147 = vmul.f32 %v1131, %v1138
      %v1148 = vmul.f32 %v1133, %v1138
      %v1149 = vmul.f32 %v1135, %v1138
      %v1150 = vmul.f32 %v1137, %v1138
      %v1151 = vsub.f32 %v1096, %v1139
      %v1152 = vsub.f32 %v1097, %v1140
      %v1153 = vsub.f32 %v1098, %v1141
      %v1154 = vsub.f32 %v1099, %v1142
      %v1155 = vsub.f32 %v1100, %v1143
      %v1156 = vsub.f32 %v1101, %v1144
      %v1157 = vsub.f32 %v1102, %v1145
      %v1158 = vsub.f32 %v1103, %v1146
      %v1159 = vsub.f32 %v1104, %v1147
      %v1160 = vsub.f32 %v1105, %v1148
      %v1161 = vsub.f32 %v1106, %v1149
      %v1162 = vsub.f32 %v1107, %v1150
      %v1163 = vmul.f32 %v1151, %v1151
      %v1164 = vmul.f32 %v1152, %v1152
      %v1165 = vmul.f32 %v1153, %v1153
      %v1166 = vmul.f32 %v1154, %v1154
      %v1167 = vmul.f32 %v1155, %v1155
      %v1168 = vmul.f32 %v1156, %v1156
      %v1169 = vmul.f32 %v1157, %v1157
      %v1170 = vmul.f32 %v1158, %v1158
      %v1171 = vmul.f32 %v1159, %v1159
      %v1172 = vmul.f32 %v1160, %v1160
      %v1173 = vmul.f32 %v1161, %v1161
      %v1174 = vmul.f32 %v1162, %v1162
      %1175 = vadd.xlane.f32.xlu0 %v1163
      %v1176 = vpop.xlane.xlu0 %1175
      %1177 = vadd.xlane.f32.xlu0 %v1164
      %v1178 = vpop.xlane.xlu0 %1177
      %1179 = vadd.xlane.f32.xlu0 %v1165
      %v1180 = vpop.xlane.xlu0 %1179
      %1181 = vadd.xlane.f32.xlu0 %v1166
      %v1182 = vpop.xlane.xlu0 %1181
      %1183 = vadd.xlane.f32.xlu0 %v1167
      %v1184 = vpop.xlane.xlu0 %1183
      %1185 = vadd.xlane.f32.xlu0 %v1168
      %v1186 = vpop.xlane.xlu0 %1185
      %1187 = vadd.xlane.f32.xlu0 %v1169
      %v1188 = vpop.xlane.xlu0 %1187
      %1189 = vadd.xlane.f32.xlu0 %v1170
      %v1190 = vpop.xlane.xlu0 %1189
      %1191 = vadd.xlane.f32.xlu0 %v1171
      %v1192 = vpop.xlane.xlu0 %1191
      %1193 = vadd.xlane.f32.xlu0 %v1172
      %v1194 = vpop.xlane.xlu0 %1193
      %1195 = vadd.xlane.f32.xlu0 %v1173
      %v1196 = vpop.xlane.xlu0 %1195
      %1197 = vadd.xlane.f32.xlu0 %v1174
      %v1198 = vpop.xlane.xlu0 %1197
      %v1199 = vmul.f32 %v1176, %v1138
      %v1200 = vmul.f32 %v1178, %v1138
      %v1201 = vmul.f32 %v1180, %v1138
      %v1202 = vmul.f32 %v1182, %v1138
      %v1203 = vmul.f32 %v1184, %v1138
      %v1204 = vmul.f32 %v1186, %v1138
      %v1205 = vmul.f32 %v1188, %v1138
      %v1206 = vmul.f32 %v1190, %v1138
      %v1207 = vmul.f32 %v1192, %v1138
      %v1208 = vmul.f32 %v1194, %v1138
      %v1209 = vmul.f32 %v1196, %v1138
      %v1210 = vmul.f32 %v1198, %v1138
      %v1211 = vadd.f32 %v1199, 1e-06
      %v1212 = vadd.f32 %v1200, 1e-06
      %v1213 = vadd.f32 %v1201, 1e-06
      %v1214 = vadd.f32 %v1202, 1e-06
      %v1215 = vadd.f32 %v1203, 1e-06
      %v1216 = vadd.f32 %v1204, 1e-06
      %v1217 = vadd.f32 %v1205, 1e-06
      %v1218 = vadd.f32 %v1206, 1e-06
      %v1219 = vadd.f32 %v1207, 1e-06
      %v1220 = vadd.f32 %v1208, 1e-06
      %v1221 = vadd.f32 %v1209, 1e-06
      %v1222 = vadd.f32 %v1210, 1e-06
      %v1223 = vrsqrt.pop %v1211
      %v1224 = vrsqrt.pop %v1212
      %v1225 = vrsqrt.pop %v1213
      %v1226 = vrsqrt.pop %v1214
      %v1227 = vrsqrt.pop %v1215
      %v1228 = vrsqrt.pop %v1216
      %v1229 = vrsqrt.pop %v1217
      %v1230 = vrsqrt.pop %v1218
      %v1231 = vrsqrt.pop %v1219
      %v1232 = vrsqrt.pop %v1220
      %v1233 = vrsqrt.pop %v1221
      %v1234 = vrsqrt.pop %v1222
      %v1235 = vmul.f32 %v1151, %v1223
      %v1236 = vmul.f32 %v1152, %v1224
      %v1237 = vmul.f32 %v1153, %v1225
      %v1238 = vmul.f32 %v1154, %v1226
      %v1239 = vmul.f32 %v1155, %v1227
      %v1240 = vmul.f32 %v1156, %v1228
      %v1241 = vmul.f32 %v1157, %v1229
      %v1242 = vmul.f32 %v1158, %v1230
      %v1243 = vmul.f32 %v1159, %v1231
      %v1244 = vmul.f32 %v1160, %v1232
      %v1245 = vmul.f32 %v1161, %v1233
      %v1246 = vmul.f32 %v1162, %v1234
      %v1248 = vlaneseq
      %v1249 = vshrl.u32 %v1248, 7
      %v1250 = vsub.s32 0, %v1249
      %v1251 = vrot.slane %v1112, %v1250
      %v1253 = vmul.f32 %v1235, %v1251
      %v1254 = vmul.f32 %v1236, %v1251
      %v1255 = vmul.f32 %v1237, %v1251
      %v1256 = vmul.f32 %v1238, %v1251
      %v1257 = vmul.f32 %v1239, %v1251
      %v1258 = vmul.f32 %v1240, %v1251
      %v1259 = vmul.f32 %v1241, %v1251
      %v1260 = vmul.f32 %v1242, %v1251
      %v1261 = vmul.f32 %v1243, %v1251
      %v1262 = vmul.f32 %v1244, %v1251
      %v1263 = vmul.f32 %v1245, %v1251
      %v1264 = vmul.f32 %v1246, %v1251
      %v1266 = vlaneseq
      %v1267 = vshrl.u32 %v1266, 7
      %v1268 = vsub.s32 0, %v1267
      %v1269 = vrot.slane %v1113, %v1268
      %v1271 = vadd.f32 %v1253, %v1269
      %v1272 = vadd.f32 %v1254, %v1269
      %v1273 = vadd.f32 %v1255, %v1269
      %v1274 = vadd.f32 %v1256, %v1269
      %v1275 = vadd.f32 %v1257, %v1269
      %v1276 = vadd.f32 %v1258, %v1269
      %v1277 = vadd.f32 %v1259, %v1269
      %v1278 = vadd.f32 %v1260, %v1269
      %v1279 = vadd.f32 %v1261, %v1269
      %v1280 = vadd.f32 %v1262, %v1269
      %v1281 = vadd.f32 %v1263, %v1269
      %v1282 = vadd.f32 %v1264, %v1269
      %v1283 = vld [vmem:[%s841] sm:$0xff]
      %v1284 = vld [vmem:[%s841 + $0x8] sm:$0xf]
      %v1285 = vld [vmem:[%s841 + $0xc] sm:$0xff]
      %v1286 = vld [vmem:[%s841 + $0x14] sm:$0xf]
      %v1287 = vld [vmem:[%s841 + $0x18] sm:$0xff]
      %v1288 = vld [vmem:[%s841 + $0x20] sm:$0xf]
      %v1289 = vld [vmem:[%s841 + $0x24] sm:$0xff]
      %v1290 = vld [vmem:[%s841 + $0x2c] sm:$0xf]
      %v1291 = vld [vmem:[%s841 + $0x30] sm:$0xff]
      %v1292 = vld [vmem:[%s841 + $0x38] sm:$0xf]
      %v1293 = vld [vmem:[%s841 + $0x3c] sm:$0xff]
      %v1294 = vld [vmem:[%s841 + $0x44] sm:$0xf]
      %v1295 = vld [vmem:[%s841 + $0x48] sm:$0xff]
      %v1296 = vld [vmem:[%s841 + $0x50] sm:$0xf]
      %v1297 = vld [vmem:[%s841 + $0x54] sm:$0xff]
      %v1298 = vld [vmem:[%s841 + $0x5c] sm:$0xf]
      %v1299 = vld [vmem:[%s841 + $0x60] sm:$0xff]
      %v1300 = vld [vmem:[%s841 + $0x68] sm:$0xf]
      %v1301 = vld [vmem:[%s841 + $0x6c] sm:$0xff]
      %v1302 = vld [vmem:[%s841 + $0x74] sm:$0xf]
      %v1303 = vld [vmem:[%s841 + $0x78] sm:$0xff]
      %v1304 = vld [vmem:[%s841 + $0x80] sm:$0xf]
      %v1305 = vld [vmem:[%s841 + $0x84] sm:$0xff]
      %v1306 = vld [vmem:[%s841 + $0x8c] sm:$0xf]
      %v1307 = vld [vmem:[%s841 + $0x90] sm:$0xff]
      %v1308 = vld [vmem:[%s841 + $0x98] sm:$0xf]
      %v1309 = vld [vmem:[%s841 + $0x9c] sm:$0xff]
      %v1310 = vld [vmem:[%s841 + $0xa4] sm:$0xf]
      %v1311 = vld [vmem:[%s841 + $0xa8] sm:$0xff]
      %v1312 = vld [vmem:[%s841 + $0xb0] sm:$0xf]
      %v1313 = vld [vmem:[%s841 + $0xb4] sm:$0xff]
      %v1314 = vld [vmem:[%s841 + $0xbc] sm:$0xf]
      %v1315 = vld [vmem:[%s845] sm:$0x7]
      %v1316 = vpack.c.bf16 %v1272, %v1271
      %v1317 = vpack.c.bf16 %v1274, %v1273
      %v1318 = vpack.c.bf16 %v1276, %v1275
      %v1319 = vpack.c.bf16 %v1278, %v1277
      %v1320 = vpack.c.bf16 %v1280, %v1279
      %v1321 = vpack.c.bf16 %v1282, %v1281
      %v1323 = vlaneseq
      %v1324 = vshrl.u32 %v1323, 7
      %v1325 = vsub.s32 0, %v1324
      %v1326 = vrot.slane %v1315, %v1325
      %v1327 = vlaneseq
      %v1328 = vshrl.u32 %v1327, 7
      %v1329 = vsub.s32 1, %v1328
      %v1330 = vrot.slane %v1315, %v1329
      %v1331 = vlaneseq
      %v1332 = vshrl.u32 %v1331, 7
      %v1333 = vsub.s32 2, %v1332
      %v1334 = vrot.slane %v1315, %v1333
      %v1370 = vunpack.c.l.b16 %v1283
      %v1371 = vunpack.c.h.b16 %v1283
      %v1372 = vunpack.c.l.b16 %v1284
      %v1373 = vunpack.c.l.b16 %v1285
      %v1374 = vunpack.c.h.b16 %v1285
      %v1375 = vunpack.c.l.b16 %v1286
      %v1376 = vunpack.c.l.b16 %v1287
      %v1377 = vunpack.c.h.b16 %v1287
      %v1378 = vunpack.c.l.b16 %v1288
      %v1379 = vunpack.c.l.b16 %v1289
      %v1380 = vunpack.c.h.b16 %v1289
      %v1381 = vunpack.c.l.b16 %v1290
      %v1382 = vunpack.c.l.b16 %v1291
      %v1383 = vunpack.c.h.b16 %v1291
      %v1384 = vunpack.c.l.b16 %v1292
      %v1385 = vunpack.c.l.b16 %v1293
      %v1386 = vunpack.c.h.b16 %v1293
      %v1387 = vunpack.c.l.b16 %v1294
      %v1388 = vunpack.c.l.b16 %v1295
      %v1389 = vunpack.c.h.b16 %v1295
      %v1390 = vunpack.c.l.b16 %v1296
      %v1391 = vunpack.c.l.b16 %v1297
      %v1392 = vunpack.c.h.b16 %v1297
      %v1393 = vunpack.c.l.b16 %v1298
      %v1394 = vunpack.c.l.b16 %v1299
      %v1395 = vunpack.c.h.b16 %v1299
      %v1396 = vunpack.c.l.b16 %v1300
      %v1397 = vunpack.c.l.b16 %v1301
      %v1398 = vunpack.c.h.b16 %v1301
      %v1399 = vunpack.c.l.b16 %v1302
      %v1400 = vunpack.c.l.b16 %v1303
      %v1401 = vunpack.c.h.b16 %v1303
      %v1402 = vunpack.c.l.b16 %v1304
      %v1403 = vunpack.c.l.b16 %v1305
      %v1404 = vunpack.c.h.b16 %v1305
      %v1405 = vunpack.c.l.b16 %v1306
      %v1406 = vunpack.c.l.b16 %v1307
      %v1407 = vunpack.c.h.b16 %v1307
      %v1408 = vunpack.c.l.b16 %v1308
      %v1409 = vunpack.c.l.b16 %v1309
      %v1410 = vunpack.c.h.b16 %v1309
      %v1411 = vunpack.c.l.b16 %v1310
      %v1412 = vunpack.c.l.b16 %v1311
      %v1413 = vunpack.c.h.b16 %v1311
      %v1414 = vunpack.c.l.b16 %v1312
      %v1415 = vunpack.c.l.b16 %v1313
      %v1416 = vunpack.c.h.b16 %v1313
      %v1417 = vunpack.c.l.b16 %v1314
      %v1418 = vpack.c.b16 %v1373, %v1370
      %v1419 = vpack.c.b16 %v1374, %v1371
      %v1420 = vpack.c.b16 %v1375, %v1372
      %v1421 = vpack.c.b16 %v1379, %v1376
      %v1422 = vpack.c.b16 %v1380, %v1377
      %v1423 = vpack.c.b16 %v1381, %v1378
      %v1424 = vpack.c.b16 %v1385, %v1382
      %v1425 = vpack.c.b16 %v1386, %v1383
      %v1426 = vpack.c.b16 %v1387, %v1384
      %v1427 = vpack.c.b16 %v1391, %v1388
      %v1428 = vpack.c.b16 %v1392, %v1389
      %v1429 = vpack.c.b16 %v1393, %v1390
      %v1430 = vpack.c.b16 %v1397, %v1394
      %v1431 = vpack.c.b16 %v1398, %v1395
      %v1432 = vpack.c.b16 %v1399, %v1396
      %v1433 = vpack.c.b16 %v1403, %v1400
      %v1434 = vpack.c.b16 %v1404, %v1401
      %v1435 = vpack.c.b16 %v1405, %v1402
      %v1436 = vpack.c.b16 %v1409, %v1406
      %v1437 = vpack.c.b16 %v1410, %v1407
      %v1438 = vpack.c.b16 %v1411, %v1408
      %v1439 = vpack.c.b16 %v1415, %v1412
      %v1440 = vpack.c.b16 %v1416, %v1413
      %v1441 = vpack.c.b16 %v1417, %v1414
      %1466 = vmatprep.subr.bf16.mxu0 %v1419
      %1467 = vmatpush1.bf16.msra.mxu0 %v1418
      %1468 = vmatprep.subr.bf16.mxu0 %v1422
      %1469 = vmatpush1.bf16.msra.mxu0 %v1421
      %1470 = vmatprep.subr.bf16.mxu0 %v1425
      %1471 = vmatpush1.bf16.msra.mxu0 %v1424
      %1472 = vmatprep.subr.bf16.mxu0 %v1428
      %1473 = vmatpush1.bf16.msra.mxu0 %v1427
      %1474 = vmatprep.subr.bf16.mxu0 %v1431
      %1475 = vmatpush1.bf16.msra.mxu0 %v1430
      %1476 = vmatprep.subr.bf16.mxu0 %v1434
      %1477 = vmatpush1.bf16.msra.mxu0 %v1433
      %1478 = vmatprep.subr.bf16.mxu0 %v1437
      %1479 = vmatpush1.bf16.msra.mxu0 %v1436
      %1480 = vmatprep.subr.bf16.mxu0 %v1440
      %1481 = vmatpush1.bf16.msra.mxu0 %v1439
      %1482 = vmatprep.subr.bf16.mxu0 0
      %1483 = vmatpush1.bf16.msra.mxu0 0
      %1484 = vmatprep.subr.bf16.mxu0 0
      %1485 = vmatpush1.bf16.msra.mxu0 0
      %1486 = vmatprep.subr.bf16.mxu0 0
      %1487 = vmatpush1.bf16.msra.mxu0 0
      %1488 = vmatprep.subr.bf16.mxu0 0
      %1489 = vmatpush1.bf16.msra.mxu0 0
      %1490 = vmatprep.subr.bf16.mxu0 0
      %1491 = vmatpush1.bf16.msra.mxu0 0
      %1492 = vmatprep.subr.bf16.mxu0 0
      %1493 = vmatpush1.bf16.msra.mxu0 0
      %1494 = vmatprep.subr.bf16.mxu0 0
      %1495 = vmatpush1.bf16.msra.mxu0 0
      %1496 = vmatprep.subr.bf16.mxu0 0
      %1497 = vmatpush1.bf16.msra.mxu0 0
      %1498 = vmatprep.mubr.bf16.mxu0 0
      %1499 = vmatmul.mubr.bf16.gmra.mrb[0].mxu0 %v1316
      %v1500 = vpop.f32.mrb[0].mxu0
      %v1501 = vadd.f32 %v1326, %v1500
      %v1502 = vpop.f32.mrb[0].mxu0
      %v1503 = vadd.f32 %v1330, %v1502
      %v1504 = vpop.f32.mrb[0].mxu0
      %v1505 = vadd.f32 %v1326, %v1504
      %v1506 = vpop.f32.mrb[0].mxu0
      %v1507 = vadd.f32 %v1330, %v1506
      %1508 = vmatprep.mubr.bf16.mxu0 0
      %1509 = vmatmul.mubr.bf16.gmra.mrb[0].mxu0 %v1317
      %v1510 = vpop.f32.mrb[0].mxu0
      %v1511 = vadd.f32 %v1326, %v1510
      %v1512 = vpop.f32.mrb[0].mxu0
      %v1513 = vadd.f32 %v1330, %v1512
      %v1514 = vpop.f32.mrb[0].mxu0
      %v1515 = vadd.f32 %v1326, %v1514
      %v1516 = vpop.f32.mrb[0].mxu0
      %v1517 = vadd.f32 %v1330, %v1516
      %1518 = vmatprep.mubr.bf16.mxu0 0
      %1519 = vmatmul.mubr.bf16.gmra.mrb[0].mxu0 %v1318
      %v1520 = vpop.f32.mrb[0].mxu0
      %v1521 = vadd.f32 %v1326, %v1520
      %v1522 = vpop.f32.mrb[0].mxu0
      %v1523 = vadd.f32 %v1330, %v1522
      %v1524 = vpop.f32.mrb[0].mxu0
      %v1525 = vadd.f32 %v1326, %v1524
      %v1526 = vpop.f32.mrb[0].mxu0
      %v1527 = vadd.f32 %v1330, %v1526
      %1528 = vmatprep.mubr.bf16.mxu0 0
      %1529 = vmatmul.mubr.bf16.gmra.mrb[0].mxu0 %v1319
      %v1530 = vpop.f32.mrb[0].mxu0
      %v1531 = vadd.f32 %v1326, %v1530
      %v1532 = vpop.f32.mrb[0].mxu0
      %v1533 = vadd.f32 %v1330, %v1532
      %v1534 = vpop.f32.mrb[0].mxu0
      %v1535 = vadd.f32 %v1326, %v1534
      %v1536 = vpop.f32.mrb[0].mxu0
      %v1537 = vadd.f32 %v1330, %v1536
      %1538 = vmatprep.mubr.bf16.mxu0 0
      %1539 = vmatmul.mubr.bf16.gmra.mrb[0].mxu0 %v1320
      %v1540 = vpop.f32.mrb[0].mxu0
      %v1541 = vadd.f32 %v1326, %v1540
      %v1542 = vpop.f32.mrb[0].mxu0
      %v1543 = vadd.f32 %v1330, %v1542
      %v1544 = vpop.f32.mrb[0].mxu0
      %v1545 = vadd.f32 %v1326, %v1544
      %v1546 = vpop.f32.mrb[0].mxu0
      %v1547 = vadd.f32 %v1330, %v1546
      %1548 = vmatprep.mubr.bf16.mxu0 0
      %1549 = vmatmul.mubr.bf16.gmra.mrb[0].mxu0 %v1321
      %v1550 = vpop.f32.mrb[0].mxu0
      %v1551 = vadd.f32 %v1326, %v1550
      %v1552 = vpop.f32.mrb[0].mxu0
      %v1553 = vadd.f32 %v1330, %v1552
      %v1554 = vpop.f32.mrb[0].mxu0
      %v1555 = vadd.f32 %v1326, %v1554
      %v1556 = vpop.f32.mrb[0].mxu0
      %v1557 = vadd.f32 %v1330, %v1556
      %1558 = vdwg.mxu0
      %1559 = vmatprep.subr.bf16.mxu0 0
      %1560 = vmatpush1.bf16.msra.mxu0 %v1420
      %1561 = vmatprep.subr.bf16.mxu0 0
      %1562 = vmatpush1.bf16.msra.mxu0 %v1423
      %1563 = vmatprep.subr.bf16.mxu0 0
      %1564 = vmatpush1.bf16.msra.mxu0 %v1426
      %1565 = vmatprep.subr.bf16.mxu0 0
      %1566 = vmatpush1.bf16.msra.mxu0 %v1429
      %1567 = vmatprep.subr.bf16.mxu0 0
      %1568 = vmatpush1.bf16.msra.mxu0 %v1432
      %1569 = vmatprep.subr.bf16.mxu0 0
      %1570 = vmatpush1.bf16.msra.mxu0 %v1435
      %1571 = vmatprep.subr.bf16.mxu0 0
      %1572 = vmatpush1.bf16.msra.mxu0 %v1438
      %1573 = vmatprep.subr.bf16.mxu0 0
      %1574 = vmatpush1.bf16.msra.mxu0 %v1441
      %1575 = vmatprep.subr.bf16.mxu0 0
      %1576 = vmatpush1.bf16.msra.mxu0 0
      %1577 = vmatprep.subr.bf16.mxu0 0
      %1578 = vmatpush1.bf16.msra.mxu0 0
      %1579 = vmatprep.subr.bf16.mxu0 0
      %1580 = vmatpush1.bf16.msra.mxu0 0
      %1581 = vmatprep.subr.bf16.mxu0 0
      %1582 = vmatpush1.bf16.msra.mxu0 0
      %1583 = vmatprep.subr.bf16.mxu0 0
      %1584 = vmatpush1.bf16.msra.mxu0 0
      %1585 = vmatprep.subr.bf16.mxu0 0
      %1586 = vmatpush1.bf16.msra.mxu0 0
      %1587 = vmatprep.subr.bf16.mxu0 0
      %1588 = vmatpush1.bf16.msra.mxu0 0
      %1589 = vmatprep.subr.bf16.mxu0 0
      %1590 = vmatpush1.bf16.msra.mxu0 0
      %1591 = vmatprep.mubr.bf16.mxu0 0
      %1592 = vmatmul.mubr.bf16.gmra.mrb[0].mxu0 %v1316
      %v1593 = vpop.f32.mrb[0].mxu0
      %v1594 = vadd.f32 %v1334, %v1593
      %v1595 = vpop.f32.mrb[0].mxu0
      %v1596 = vpop.f32.mrb[0].mxu0
      %v1597 = vadd.f32 %v1334, %v1596
      %v1598 = vpop.f32.mrb[0].mxu0
      %1599 = vmatprep.mubr.bf16.mxu0 0
      %1600 = vmatmul.mubr.bf16.gmra.mrb[0].mxu0 %v1317
      %v1601 = vpop.f32.mrb[0].mxu0
      %v1602 = vadd.f32 %v1334, %v1601
      %v1603 = vpop.f32.mrb[0].mxu0
      %v1604 = vpop.f32.mrb[0].mxu0
      %v1605 = vadd.f32 %v1334, %v1604
      %v1606 = vpop.f32.mrb[0].mxu0
      %1607 = vmatprep.mubr.bf16.mxu0 0
      %1608 = vmatmul.mubr.bf16.gmra.mrb[0].mxu0 %v1318
      %v1609 = vpop.f32.mrb[0].mxu0
      %v1610 = vadd.f32 %v1334, %v1609
      %v1611 = vpop.f32.mrb[0].mxu0
      %v1612 = vpop.f32.mrb[0].mxu0
      %v1613 = vadd.f32 %v1334, %v1612
      %v1614 = vpop.f32.mrb[0].mxu0
      %1615 = vmatprep.mubr.bf16.mxu0 0
      %1616 = vmatmul.mubr.bf16.gmra.mrb[0].mxu0 %v1319
      %v1617 = vpop.f32.mrb[0].mxu0
      %v1618 = vadd.f32 %v1334, %v1617
      %v1619 = vpop.f32.mrb[0].mxu0
      %v1620 = vpop.f32.mrb[0].mxu0
      %v1621 = vadd.f32 %v1334, %v1620
      %v1622 = vpop.f32.mrb[0].mxu0
      %1623 = vmatprep.mubr.bf16.mxu0 0
      %1624 = vmatmul.mubr.bf16.gmra.mrb[0].mxu0 %v1320
      %v1625 = vpop.f32.mrb[0].mxu0
      %v1626 = vadd.f32 %v1334, %v1625
      %v1627 = vpop.f32.mrb[0].mxu0
      %v1628 = vpop.f32.mrb[0].mxu0
      %v1629 = vadd.f32 %v1334, %v1628
      %v1630 = vpop.f32.mrb[0].mxu0
      %1631 = vmatprep.mubr.bf16.mxu0 0
      %1632 = vmatmul.mubr.bf16.gmra.mrb[0].mxu0 %v1321
      %v1633 = vpop.f32.mrb[0].mxu0
      %v1634 = vadd.f32 %v1334, %v1633
      %v1635 = vpop.f32.mrb[0].mxu0
      %v1636 = vpop.f32.mrb[0].mxu0
      %v1637 = vadd.f32 %v1334, %v1636
      %v1638 = vpop.f32.mrb[0].mxu0
      %1639 = vdwg.mxu0
      %v1640 = vpack.c.bf16 %v1505, %v1501
      %v1641 = vpack.c.bf16 %v1507, %v1503
      %v1642 = vpack.c.bf16 %v1597, %v1594
      %v1643 = vpack.c.bf16 %v1515, %v1511
      %v1644 = vpack.c.bf16 %v1517, %v1513
      %v1645 = vpack.c.bf16 %v1605, %v1602
      %v1646 = vpack.c.bf16 %v1525, %v1521
      %v1647 = vpack.c.bf16 %v1527, %v1523
      %v1648 = vpack.c.bf16 %v1613, %v1610
      %v1649 = vpack.c.bf16 %v1535, %v1531
      %v1650 = vpack.c.bf16 %v1537, %v1533
      %v1651 = vpack.c.bf16 %v1621, %v1618
      %v1652 = vpack.c.bf16 %v1545, %v1541
      %v1653 = vpack.c.bf16 %v1547, %v1543
      %v1654 = vpack.c.bf16 %v1629, %v1626
      %v1655 = vpack.c.bf16 %v1555, %v1551
      %v1656 = vpack.c.bf16 %v1557, %v1553
      %v1657 = vpack.c.bf16 %v1637, %v1634
      %v1664 = vunpack.c.l.b16 %v1640
      %v1665 = vunpack.c.h.b16 %v1640
      %v1666 = vunpack.c.l.b16 %v1643
      %v1667 = vunpack.c.h.b16 %v1643
      %v1668 = vunpack.c.l.b16 %v1646
      %v1669 = vunpack.c.h.b16 %v1646
      %v1670 = vunpack.c.l.b16 %v1649
      %v1671 = vunpack.c.h.b16 %v1649
      %v1672 = vunpack.c.l.b16 %v1652
      %v1673 = vunpack.c.h.b16 %v1652
      %v1674 = vunpack.c.l.b16 %v1655
      %v1675 = vunpack.c.h.b16 %v1655
      %v1682 = vunpack.c.l.b16 %v1641
      %v1683 = vunpack.c.h.b16 %v1641
      %v1684 = vunpack.c.l.b16 %v1644
      %v1685 = vunpack.c.h.b16 %v1644
      %v1686 = vunpack.c.l.b16 %v1647
      %v1687 = vunpack.c.h.b16 %v1647
      %v1688 = vunpack.c.l.b16 %v1650
      %v1689 = vunpack.c.h.b16 %v1650
      %v1690 = vunpack.c.l.b16 %v1653
      %v1691 = vunpack.c.h.b16 %v1653
      %v1692 = vunpack.c.l.b16 %v1656
      %v1693 = vunpack.c.h.b16 %v1656
      %v1700 = vunpack.c.l.b16 %v1642
      %v1701 = vunpack.c.h.b16 %v1642
      %v1702 = vunpack.c.l.b16 %v1645
      %v1703 = vunpack.c.h.b16 %v1645
      %v1704 = vunpack.c.l.b16 %v1648
      %v1705 = vunpack.c.h.b16 %v1648
      %v1706 = vunpack.c.l.b16 %v1651
      %v1707 = vunpack.c.h.b16 %v1651
      %v1708 = vunpack.c.l.b16 %v1654
      %v1709 = vunpack.c.h.b16 %v1654
      %v1710 = vunpack.c.l.b16 %v1657
      %v1711 = vunpack.c.h.b16 %v1657
      %v1712 = vpack.c.b16 %v1665, %v1664
      %v1713 = vpack.c.b16 %v1666, %v1666
      %v1714 = vpack.c.b16 %v1683, %v1682
      %v1715 = vpack.c.b16 %v1684, %v1684
      %vm1716 = vcmask 261120
      %v1718 = vsel %vm1716, %v1712, 0
      %v1721 = vsel %vm1716, %v1713, 0
      %v1724 = vsel %vm1716, %v1714, 0
      %v1727 = vsel %vm1716, %v1715, 0
      %1729 = vmatprep.subr.bf16.mxu0 0
      %1730 = vmatpush1.bf16.xpose.msra.mxu0 %v1724
      %1731 = vmatprep.subr.bf16.mxu0 0
      %1732 = vmatpush1.bf16.xpose.msra.mxu0 %v1727
      %1733 = vmatprep.subr.bf16.mxu0 0
      %1734 = vmatpush1.bf16.xpose.msra.mxu0 0
      %1735 = vmatprep.subr.bf16.mxu0 0
      %1736 = vmatpush1.bf16.xpose.msra.mxu0 0
      %1737 = vmatprep.subr.bf16.mxu0 0
      %1738 = vmatpush1.bf16.xpose.msra.mxu0 0
      %1739 = vmatprep.subr.bf16.mxu0 0
      %1740 = vmatpush1.bf16.xpose.msra.mxu0 0
      %1741 = vmatprep.subr.bf16.mxu0 0
      %1742 = vmatpush1.bf16.xpose.msra.mxu0 0
      %1743 = vmatprep.subr.bf16.mxu0 0
      %1744 = vmatpush1.bf16.xpose.msra.mxu0 0
      %1745 = vmatprep.subr.bf16.mxu0 0
      %1746 = vmatpush1.bf16.xpose.msra.mxu0 0
      %1747 = vmatprep.subr.bf16.mxu0 0
      %1748 = vmatpush1.bf16.xpose.msra.mxu0 0
      %1749 = vmatprep.subr.bf16.mxu0 0
      %1750 = vmatpush1.bf16.xpose.msra.mxu0 0
      %1751 = vmatprep.subr.bf16.mxu0 0
      %1752 = vmatpush1.bf16.xpose.msra.mxu0 0
      %1753 = vmatprep.subr.bf16.mxu0 0
      %1754 = vmatpush1.bf16.xpose.msra.mxu0 0
      %1755 = vmatprep.subr.bf16.mxu0 0
      %1756 = vmatpush1.bf16.xpose.msra.mxu0 0
      %1757 = vmatprep.subr.bf16.mxu0 0
      %1758 = vmatpush1.bf16.xpose.msra.mxu0 0
      %1759 = vmatprep.subr.bf16.mxu0 0
      %1760 = vmatpush1.bf16.xpose.msra.mxu0 0
      %1761 = vmatprep.mubr.bf16.mxu0 0
      %1762 = vmatmul.mubr.bf16.gmra.mrb[0].mxu0 %v1718
      %v1763 = vpop.f32.mrb[0].mxu0
      %v1764 = vadd.f32 0.0, %v1763
      %v1765 = vpop.f32.mrb[0].mxu0
      %v1766 = vpop.f32.mrb[0].mxu0
      %v1767 = vadd.f32 0.0, %v1766
      %v1768 = vpop.f32.mrb[0].mxu0
      %1769 = vmatprep.mubr.bf16.mxu0 0
      %1770 = vmatmul.mubr.bf16.gmra.mrb[0].mxu0 %v1721
      %v1771 = vpop.f32.mrb[0].mxu0
      %v1772 = vadd.f32 0.0, %v1771
      %v1773 = vpop.f32.mrb[0].mxu0
      %v1774 = vpop.f32.mrb[0].mxu0
      %v1775 = vpop.f32.mrb[0].mxu0
      %1776 = vdwg.mxu0
      %v1777 = vpack.c.b16 %v1668, %v1667
      %v1778 = vpack.c.b16 %v1669, %v1669
      %v1779 = vpack.c.b16 %v1686, %v1685
      %v1780 = vpack.c.b16 %v1687, %v1687
      %v1782 = vsel %vm1716, %v1777, 0
      %v1785 = vsel %vm1716, %v1778, 0
      %v1788 = vsel %vm1716, %v1779, 0
      %v1791 = vsel %vm1716, %v1780, 0
      %1793 = vmatprep.subr.bf16.mxu0 0
      %1794 = vmatpush1.bf16.xpose.msra.mxu0 %v1788
      %1795 = vmatprep.subr.bf16.mxu0 0
      %1796 = vmatpush1.bf16.xpose.msra.mxu0 %v1791
      %1797 = vmatprep.subr.bf16.mxu0 0
      %1798 = vmatpush1.bf16.xpose.msra.mxu0 0
      %1799 = vmatprep.subr.bf16.mxu0 0
      %1800 = vmatpush1.bf16.xpose.msra.mxu0 0
      %1801 = vmatprep.subr.bf16.mxu0 0
      %1802 = vmatpush1.bf16.xpose.msra.mxu0 0
      %1803 = vmatprep.subr.bf16.mxu0 0
      %1804 = vmatpush1.bf16.xpose.msra.mxu0 0
      %1805 = vmatprep.subr.bf16.mxu0 0
      %1806 = vmatpush1.bf16.xpose.msra.mxu0 0
      %1807 = vmatprep.subr.bf16.mxu0 0
      %1808 = vmatpush1.bf16.xpose.msra.mxu0 0
      %1809 = vmatprep.subr.bf16.mxu0 0
      %1810 = vmatpush1.bf16.xpose.msra.mxu0 0
      %1811 = vmatprep.subr.bf16.mxu0 0
      %1812 = vmatpush1.bf16.xpose.msra.mxu0 0
      %1813 = vmatprep.subr.bf16.mxu0 0
      %1814 = vmatpush1.bf16.xpose.msra.mxu0 0
      %1815 = vmatprep.subr.bf16.mxu0 0
      %1816 = vmatpush1.bf16.xpose.msra.mxu0 0
      %1817 = vmatprep.subr.bf16.mxu0 0
      %1818 = vmatpush1.bf16.xpose.msra.mxu0 0
      %1819 = vmatprep.subr.bf16.mxu0 0
      %1820 = vmatpush1.bf16.xpose.msra.mxu0 0
      %1821 = vmatprep.subr.bf16.mxu0 0
      %1822 = vmatpush1.bf16.xpose.msra.mxu0 0
      %1823 = vmatprep.subr.bf16.mxu0 0
      %1824 = vmatpush1.bf16.xpose.msra.mxu0 0
      %1825 = vmatprep.mubr.bf16.mxu0 0
      %1826 = vmatmul.mubr.bf16.gmra.mrb[0].mxu0 %v1782
      %v1827 = vpop.f32.mrb[0].mxu0
      %v1828 = vadd.f32 0.0, %v1827
      %v1829 = vpop.f32.mrb[0].mxu0
      %v1830 = vpop.f32.mrb[0].mxu0
      %v1831 = vadd.f32 0.0, %v1830
      %v1832 = vpop.f32.mrb[0].mxu0
      %1833 = vmatprep.mubr.bf16.mxu0 0
      %1834 = vmatmul.mubr.bf16.gmra.mrb[0].mxu0 %v1785
      %v1835 = vpop.f32.mrb[0].mxu0
      %v1836 = vadd.f32 0.0, %v1835
      %v1837 = vpop.f32.mrb[0].mxu0
      %v1838 = vpop.f32.mrb[0].mxu0
      %v1839 = vpop.f32.mrb[0].mxu0
      %1840 = vdwg.mxu0
      %v1841 = vpack.c.b16 %v1671, %v1670
      %v1842 = vpack.c.b16 %v1672, %v1672
      %v1843 = vpack.c.b16 %v1689, %v1688
      %v1844 = vpack.c.b16 %v1690, %v1690
      %v1846 = vsel %vm1716, %v1841, 0
      %v1849 = vsel %vm1716, %v1842, 0
      %v1852 = vsel %vm1716, %v1843, 0
      %v1855 = vsel %vm1716, %v1844, 0
      %1857 = vmatprep.subr.bf16.mxu0 0
      %1858 = vmatpush1.bf16.xpose.msra.mxu0 %v1852
      %1859 = vmatprep.subr.bf16.mxu0 0
      %1860 = vmatpush1.bf16.xpose.msra.mxu0 %v1855
      %1861 = vmatprep.subr.bf16.mxu0 0
      %1862 = vmatpush1.bf16.xpose.msra.mxu0 0
      %1863 = vmatprep.subr.bf16.mxu0 0
      %1864 = vmatpush1.bf16.xpose.msra.mxu0 0
      %1865 = vmatprep.subr.bf16.mxu0 0
      %1866 = vmatpush1.bf16.xpose.msra.mxu0 0
      %1867 = vmatprep.subr.bf16.mxu0 0
      %1868 = vmatpush1.bf16.xpose.msra.mxu0 0
      %1869 = vmatprep.subr.bf16.mxu0 0
      %1870 = vmatpush1.bf16.xpose.msra.mxu0 0
      %1871 = vmatprep.subr.bf16.mxu0 0
      %1872 = vmatpush1.bf16.xpose.msra.mxu0 0
      %1873 = vmatprep.subr.bf16.mxu0 0
      %1874 = vmatpush1.bf16.xpose.msra.mxu0 0
      %1875 = vmatprep.subr.bf16.mxu0 0
      %1876 = vmatpush1.bf16.xpose.msra.mxu0 0
      %1877 = vmatprep.subr.bf16.mxu0 0
      %1878 = vmatpush1.bf16.xpose.msra.mxu0 0
      %1879 = vmatprep.subr.bf16.mxu0 0
      %1880 = vmatpush1.bf16.xpose.msra.mxu0 0
      %1881 = vmatprep.subr.bf16.mxu0 0
      %1882 = vmatpush1.bf16.xpose.msra.mxu0 0
      %1883 = vmatprep.subr.bf16.mxu0 0
      %1884 = vmatpush1.bf16.xpose.msra.mxu0 0
      %1885 = vmatprep.subr.bf16.mxu0 0
      %1886 = vmatpush1.bf16.xpose.msra.mxu0 0
      %1887 = vmatprep.subr.bf16.mxu0 0
      %1888 = vmatpush1.bf16.xpose.msra.mxu0 0
      %1889 = vmatprep.mubr.bf16.mxu0 0
      %1890 = vmatmul.mubr.bf16.gmra.mrb[0].mxu0 %v1846
      %v1891 = vpop.f32.mrb[0].mxu0
      %v1892 = vadd.f32 0.0, %v1891
      %v1893 = vpop.f32.mrb[0].mxu0
      %v1894 = vpop.f32.mrb[0].mxu0
      %v1895 = vadd.f32 0.0, %v1894
      %v1896 = vpop.f32.mrb[0].mxu0
      %1897 = vmatprep.mubr.bf16.mxu0 0
      %1898 = vmatmul.mubr.bf16.gmra.mrb[0].mxu0 %v1849
      %v1899 = vpop.f32.mrb[0].mxu0
      %v1900 = vadd.f32 0.0, %v1899
      %v1901 = vpop.f32.mrb[0].mxu0
      %v1902 = vpop.f32.mrb[0].mxu0
      %v1903 = vpop.f32.mrb[0].mxu0
      %1904 = vdwg.mxu0
      %v1905 = vpack.c.b16 %v1674, %v1673
      %v1906 = vpack.c.b16 %v1675, %v1675
      %v1907 = vpack.c.b16 %v1692, %v1691
      %v1908 = vpack.c.b16 %v1693, %v1693
      %v1910 = vsel %vm1716, %v1905, 0
      %v1913 = vsel %vm1716, %v1906, 0
      %v1916 = vsel %vm1716, %v1907, 0
      %v1919 = vsel %vm1716, %v1908, 0
      %1921 = vmatprep.subr.bf16.mxu0 0
      %1922 = vmatpush1.bf16.xpose.msra.mxu0 %v1916
      %1923 = vmatprep.subr.bf16.mxu0 0
      %1924 = vmatpush1.bf16.xpose.msra.mxu0 %v1919
      %1925 = vmatprep.subr.bf16.mxu0 0
      %1926 = vmatpush1.bf16.xpose.msra.mxu0 0
      %1927 = vmatprep.subr.bf16.mxu0 0
      %1928 = vmatpush1.bf16.xpose.msra.mxu0 0
      %1929 = vmatprep.subr.bf16.mxu0 0
      %1930 = vmatpush1.bf16.xpose.msra.mxu0 0
      %1931 = vmatprep.subr.bf16.mxu0 0
      %1932 = vmatpush1.bf16.xpose.msra.mxu0 0
      %1933 = vmatprep.subr.bf16.mxu0 0
      %1934 = vmatpush1.bf16.xpose.msra.mxu0 0
      %1935 = vmatprep.subr.bf16.mxu0 0
      %1936 = vmatpush1.bf16.xpose.msra.mxu0 0
      %1937 = vmatprep.subr.bf16.mxu0 0
      %1938 = vmatpush1.bf16.xpose.msra.mxu0 0
      %1939 = vmatprep.subr.bf16.mxu0 0
      %1940 = vmatpush1.bf16.xpose.msra.mxu0 0
      %1941 = vmatprep.subr.bf16.mxu0 0
      %1942 = vmatpush1.bf16.xpose.msra.mxu0 0
      %1943 = vmatprep.subr.bf16.mxu0 0
      %1944 = vmatpush1.bf16.xpose.msra.mxu0 0
      %1945 = vmatprep.subr.bf16.mxu0 0
      %1946 = vmatpush1.bf16.xpose.msra.mxu0 0
      %1947 = vmatprep.subr.bf16.mxu0 0
      %1948 = vmatpush1.bf16.xpose.msra.mxu0 0
      %1949 = vmatprep.subr.bf16.mxu0 0
      %1950 = vmatpush1.bf16.xpose.msra.mxu0 0
      %1951 = vmatprep.subr.bf16.mxu0 0
      %1952 = vmatpush1.bf16.xpose.msra.mxu0 0
      %1953 = vmatprep.mubr.bf16.mxu0 0
      %1954 = vmatmul.mubr.bf16.gmra.mrb[0].mxu0 %v1910
      %v1955 = vpop.f32.mrb[0].mxu0
      %v1956 = vadd.f32 0.0, %v1955
      %v1957 = vpop.f32.mrb[0].mxu0
      %v1958 = vpop.f32.mrb[0].mxu0
      %v1959 = vadd.f32 0.0, %v1958
      %v1960 = vpop.f32.mrb[0].mxu0
      %1961 = vmatprep.mubr.bf16.mxu0 0
      %1962 = vmatmul.mubr.bf16.gmra.mrb[0].mxu0 %v1913
      %v1963 = vpop.f32.mrb[0].mxu0
      %v1964 = vadd.f32 0.0, %v1963
      %v1965 = vpop.f32.mrb[0].mxu0
      %v1966 = vpop.f32.mrb[0].mxu0
      %v1967 = vpop.f32.mrb[0].mxu0
      %1968 = vdwg.mxu0
      %v1969 = vmul.f32 %v1764, 0.17677669
      %v1970 = vmul.f32 %v1767, 0.17677669
      %v1971 = vmul.f32 %v1772, 0.17677669
      %v1972 = vmul.f32 %v1828, 0.17677669
      %v1973 = vmul.f32 %v1831, 0.17677669
      %v1974 = vmul.f32 %v1836, 0.17677669
      %v1975 = vmul.f32 %v1892, 0.17677669
      %v1976 = vmul.f32 %v1895, 0.17677669
      %v1977 = vmul.f32 %v1900, 0.17677669
      %v1978 = vmul.f32 %v1956, 0.17677669
      %v1979 = vmul.f32 %v1959, 0.17677669
      %v1980 = vmul.f32 %v1964, 0.17677669
      %v1981 = vadd.f32 %v1969, %v1111
      %v1982 = vadd.f32 %v1970, %v1111
      %v1983 = vadd.f32 %v1971, %v1111
      %v1984 = vadd.f32 %v1972, %v1111
      %v1985 = vadd.f32 %v1973, %v1111
      %v1986 = vadd.f32 %v1974, %v1111
      %v1987 = vadd.f32 %v1975, %v1111
      %v1988 = vadd.f32 %v1976, %v1111
      %v1989 = vadd.f32 %v1977, %v1111
      %v1990 = vadd.f32 %v1978, %v1111
      %v1991 = vadd.f32 %v1979, %v1111
      %v1992 = vadd.f32 %v1980, %v1111
      %vm1993 = vcmask 195584
      %v1994 = vsel %vm1993, %v1981, -inf
      %1995 = vmax.xlane.f32.xlu0 %v1994
      %v1996 = vpop.xlane.xlu0 %1995
      %v1997 = vsel %vm1993, %v1982, -inf
      %1998 = vmax.xlane.f32.xlu0 %v1997
      %v1999 = vpop.xlane.xlu0 %1998
      %v2000 = vsel %vm1993, %v1983, -inf
      %2001 = vmax.xlane.f32.xlu0 %v2000
      %v2002 = vpop.xlane.xlu0 %2001
      %v2003 = vsel %vm1993, %v1984, -inf
      %2004 = vmax.xlane.f32.xlu0 %v2003
      %v2005 = vpop.xlane.xlu0 %2004
      %v2006 = vsel %vm1993, %v1985, -inf
      %2007 = vmax.xlane.f32.xlu0 %v2006
      %v2008 = vpop.xlane.xlu0 %2007
      %v2009 = vsel %vm1993, %v1986, -inf
      %2010 = vmax.xlane.f32.xlu0 %v2009
      %v2011 = vpop.xlane.xlu0 %2010
      %v2012 = vsel %vm1993, %v1987, -inf
      %2013 = vmax.xlane.f32.xlu0 %v2012
      %v2014 = vpop.xlane.xlu0 %2013
      %v2015 = vsel %vm1993, %v1988, -inf
      %2016 = vmax.xlane.f32.xlu0 %v2015
      %v2017 = vpop.xlane.xlu0 %2016
      %v2018 = vsel %vm1993, %v1989, -inf
      %2019 = vmax.xlane.f32.xlu0 %v2018
      %v2020 = vpop.xlane.xlu0 %2019
      %v2021 = vsel %vm1993, %v1990, -inf
      %2022 = vmax.xlane.f32.xlu0 %v2021
      %v2023 = vpop.xlane.xlu0 %2022
      %v2024 = vsel %vm1993, %v1991, -inf
      %2025 = vmax.xlane.f32.xlu0 %v2024
      %v2026 = vpop.xlane.xlu0 %2025
      %v2027 = vsel %vm1993, %v1992, -inf
      %2028 = vmax.xlane.f32.xlu0 %v2027
      %v2029 = vpop.xlane.xlu0 %2028
      %v2030 = vsub.f32 %v1981, %v1996
      %v2031 = vsub.f32 %v1982, %v1999
      %v2032 = vsub.f32 %v1983, %v2002
      %v2033 = vsub.f32 %v1984, %v2005
      %v2034 = vsub.f32 %v1985, %v2008
      %v2035 = vsub.f32 %v1986, %v2011
      %v2036 = vsub.f32 %v1987, %v2014
      %v2037 = vsub.f32 %v1988, %v2017
      %v2038 = vsub.f32 %v1989, %v2020
      %v2039 = vsub.f32 %v1990, %v2023
      %v2040 = vsub.f32 %v1991, %v2026
      %v2041 = vsub.f32 %v1992, %v2029
      %v2042 = vmul.f32 %v2030, 1.442695
      %v2043 = vpow.pop %v2042
      %v2044 = vmul.f32 %v2031, 1.442695
      %v2045 = vpow.pop %v2044
      %v2046 = vmul.f32 %v2032, 1.442695
      %v2047 = vpow.pop %v2046
      %v2048 = vmul.f32 %v2033, 1.442695
      %v2049 = vpow.pop %v2048
      %v2050 = vmul.f32 %v2034, 1.442695
      %v2051 = vpow.pop %v2050
      %v2052 = vmul.f32 %v2035, 1.442695
      %v2053 = vpow.pop %v2052
      %v2054 = vmul.f32 %v2036, 1.442695
      %v2055 = vpow.pop %v2054
      %v2056 = vmul.f32 %v2037, 1.442695
      %v2057 = vpow.pop %v2056
      %v2058 = vmul.f32 %v2038, 1.442695
      %v2059 = vpow.pop %v2058
      %v2060 = vmul.f32 %v2039, 1.442695
      %v2061 = vpow.pop %v2060
      %v2062 = vmul.f32 %v2040, 1.442695
      %v2063 = vpow.pop %v2062
      %v2064 = vmul.f32 %v2041, 1.442695
      %v2065 = vpow.pop %v2064
      %v2066 = vsel %vm1993, %v2043, 0.0
      %2067 = vadd.xlane.f32.xlu0 %v2066
      %v2068 = vpop.xlane.xlu0 %2067
      %v2069 = vsel %vm1993, %v2045, 0.0
      %2070 = vadd.xlane.f32.xlu0 %v2069
      %v2071 = vpop.xlane.xlu0 %2070
      %v2072 = vsel %vm1993, %v2047, 0.0
      %2073 = vadd.xlane.f32.xlu0 %v2072
      %v2074 = vpop.xlane.xlu0 %2073
      %v2075 = vsel %vm1993, %v2049, 0.0
      %2076 = vadd.xlane.f32.xlu0 %v2075
      %v2077 = vpop.xlane.xlu0 %2076
      %v2078 = vsel %vm1993, %v2051, 0.0
      %2079 = vadd.xlane.f32.xlu0 %v2078
      %v2080 = vpop.xlane.xlu0 %2079
      %v2081 = vsel %vm1993, %v2053, 0.0
      %2082 = vadd.xlane.f32.xlu0 %v2081
      %v2083 = vpop.xlane.xlu0 %2082
      %v2084 = vsel %vm1993, %v2055, 0.0
      %2085 = vadd.xlane.f32.xlu0 %v2084
      %v2086 = vpop.xlane.xlu0 %2085
      %v2087 = vsel %vm1993, %v2057, 0.0
      %2088 = vadd.xlane.f32.xlu0 %v2087
      %v2089 = vpop.xlane.xlu0 %2088
      %v2090 = vsel %vm1993, %v2059, 0.0
      %2091 = vadd.xlane.f32.xlu0 %v2090
      %v2092 = vpop.xlane.xlu0 %2091
      %v2093 = vsel %vm1993, %v2061, 0.0
      %2094 = vadd.xlane.f32.xlu0 %v2093
      %v2095 = vpop.xlane.xlu0 %2094
      %v2096 = vsel %vm1993, %v2063, 0.0
      %2097 = vadd.xlane.f32.xlu0 %v2096
      %v2098 = vpop.xlane.xlu0 %2097
      %v2099 = vsel %vm1993, %v2065, 0.0
      %2100 = vadd.xlane.f32.xlu0 %v2099
      %v2101 = vpop.xlane.xlu0 %2100
      %v2102 = vrcp.pop %v2068
      %v2103 = vrcp.pop %v2071
      %v2104 = vrcp.pop %v2074
      %v2105 = vrcp.pop %v2077
      %v2106 = vrcp.pop %v2080
      %v2107 = vrcp.pop %v2083
      %v2108 = vrcp.pop %v2086
      %v2109 = vrcp.pop %v2089
      %v2110 = vrcp.pop %v2092
      %v2111 = vrcp.pop %v2095
      %v2112 = vrcp.pop %v2098
      %v2113 = vrcp.pop %v2101
      %v2114 = vmul.f32 %v2043, %v2102
      %v2115 = vmul.f32 %v2045, %v2103
      %v2116 = vmul.f32 %v2047, %v2104
      %v2117 = vmul.f32 %v2049, %v2105
      %v2118 = vmul.f32 %v2051, %v2106
      %v2119 = vmul.f32 %v2053, %v2107
      %v2120 = vmul.f32 %v2055, %v2108
      %v2121 = vmul.f32 %v2057, %v2109
      %v2122 = vmul.f32 %v2059, %v2110
      %v2123 = vmul.f32 %v2061, %v2111
      %v2124 = vmul.f32 %v2063, %v2112
      %v2125 = vmul.f32 %v2065, %v2113
      %v2126 = vpack.c.bf16 %v2115, %v2114
      %v2127 = vpack.c.bf16 %v2116, %v2116
      %v2128 = vpack.c.bf16 %v2118, %v2117
      %v2129 = vpack.c.bf16 %v2119, %v2119
      %v2130 = vpack.c.bf16 %v2121, %v2120
      %v2131 = vpack.c.bf16 %v2122, %v2122
      %v2132 = vpack.c.bf16 %v2124, %v2123
      %v2133 = vpack.c.bf16 %v2125, %v2125
      %v2134 = vpack.c.b16 %v1701, %v1700
      %v2135 = vpack.c.b16 %v1702, %v1702
      %v2138 = vsel %vm1993, %v2126, 0
      %v2141 = vsel %vm1993, %v2127, 0
      %vm2143 = vcmask 1043456
      %v2145 = vsel %vm2143, %v2135, 0
      %2147 = vmatprep.subr.bf16.mxu0 0
      %2148 = vmatpush1.bf16.msra.mxu0 %v2134
      %2149 = vmatprep.subr.bf16.mxu0 0
      %2150 = vmatpush1.bf16.msra.mxu0 %v2145
      %2151 = vmatprep.subr.bf16.mxu0 0
      %2152 = vmatpush1.bf16.msra.mxu0 0
      %2153 = vmatprep.subr.bf16.mxu0 0
      %2154 = vmatpush1.bf16.msra.mxu0 0
      %2155 = vmatprep.subr.bf16.mxu0 0
      %2156 = vmatpush1.bf16.msra.mxu0 0
      %2157 = vmatprep.subr.bf16.mxu0 0
      %2158 = vmatpush1.bf16.msra.mxu0 0
      %2159 = vmatprep.subr.bf16.mxu0 0
      %2160 = vmatpush1.bf16.msra.mxu0 0
      %2161 = vmatprep.subr.bf16.mxu0 0
      %2162 = vmatpush1.bf16.msra.mxu0 0
      %2163 = vmatprep.subr.bf16.mxu0 0
      %2164 = vmatpush1.bf16.msra.mxu0 0
      %2165 = vmatprep.subr.bf16.mxu0 0
      %2166 = vmatpush1.bf16.msra.mxu0 0
      %2167 = vmatprep.subr.bf16.mxu0 0
      %2168 = vmatpush1.bf16.msra.mxu0 0
      %2169 = vmatprep.subr.bf16.mxu0 0
      %2170 = vmatpush1.bf16.msra.mxu0 0
      %2171 = vmatprep.subr.bf16.mxu0 0
      %2172 = vmatpush1.bf16.msra.mxu0 0
      %2173 = vmatprep.subr.bf16.mxu0 0
      %2174 = vmatpush1.bf16.msra.mxu0 0
      %2175 = vmatprep.subr.bf16.mxu0 0
      %2176 = vmatpush1.bf16.msra.mxu0 0
      %2177 = vmatprep.subr.bf16.mxu0 0
      %2178 = vmatpush1.bf16.msra.mxu0 0
      %2179 = vmatprep.mubr.bf16.mxu0 0
      %2180 = vmatmul.mubr.bf16.gmra.mrb[0].mxu0 %v2138
      %v2181 = vpop.f32.mrb[0].mxu0
      %v2182 = vadd.f32 0.0, %v2181
      %v2183 = vpop.f32.mrb[0].mxu0
      %v2184 = vpop.f32.mrb[0].mxu0
      %v2185 = vadd.f32 0.0, %v2184
      %v2186 = vpop.f32.mrb[0].mxu0
      %2187 = vmatprep.mubr.bf16.mxu0 0
      %2188 = vmatmul.mubr.bf16.gmra.mrb[0].mxu0 %v2141
      %v2189 = vpop.f32.mrb[0].mxu0
      %v2190 = vadd.f32 0.0, %v2189
      %v2191 = vpop.f32.mrb[0].mxu0
      %v2192 = vpop.f32.mrb[0].mxu0
      %v2193 = vpop.f32.mrb[0].mxu0
      %2194 = vdwg.mxu0
      %v2195 = vpack.c.b16 %v1704, %v1703
      %v2196 = vpack.c.b16 %v1705, %v1705
      %v2199 = vsel %vm1993, %v2128, 0
      %v2202 = vsel %vm1993, %v2129, 0
      %v2205 = vsel %vm2143, %v2196, 0
      %2207 = vmatprep.subr.bf16.mxu0 0
      %2208 = vmatpush1.bf16.msra.mxu0 %v2195
      %2209 = vmatprep.subr.bf16.mxu0 0
      %2210 = vmatpush1.bf16.msra.mxu0 %v2205
      %2211 = vmatprep.subr.bf16.mxu0 0
      %2212 = vmatpush1.bf16.msra.mxu0 0
      %2213 = vmatprep.subr.bf16.mxu0 0
      %2214 = vmatpush1.bf16.msra.mxu0 0
      %2215 = vmatprep.subr.bf16.mxu0 0
      %2216 = vmatpush1.bf16.msra.mxu0 0
      %2217 = vmatprep.subr.bf16.mxu0 0
      %2218 = vmatpush1.bf16.msra.mxu0 0
      %2219 = vmatprep.subr.bf16.mxu0 0
      %2220 = vmatpush1.bf16.msra.mxu0 0
      %2221 = vmatprep.subr.bf16.mxu0 0
      %2222 = vmatpush1.bf16.msra.mxu0 0
      %2223 = vmatprep.subr.bf16.mxu0 0
      %2224 = vmatpush1.bf16.msra.mxu0 0
      %2225 = vmatprep.subr.bf16.mxu0 0
      %2226 = vmatpush1.bf16.msra.mxu0 0
      %2227 = vmatprep.subr.bf16.mxu0 0
      %2228 = vmatpush1.bf16.msra.mxu0 0
      %2229 = vmatprep.subr.bf16.mxu0 0
      %2230 = vmatpush1.bf16.msra.mxu0 0
      %2231 = vmatprep.subr.bf16.mxu0 0
      %2232 = vmatpush1.bf16.msra.mxu0 0
      %2233 = vmatprep.subr.bf16.mxu0 0
      %2234 = vmatpush1.bf16.msra.mxu0 0
      %2235 = vmatprep.subr.bf16.mxu0 0
      %2236 = vmatpush1.bf16.msra.mxu0 0
      %2237 = vmatprep.subr.bf16.mxu0 0
      %2238 = vmatpush1.bf16.msra.mxu0 0
      %2239 = vmatprep.mubr.bf16.mxu0 0
      %2240 = vmatmul.mubr.bf16.gmra.mrb[0].mxu0 %v2199
      %v2241 = vpop.f32.mrb[0].mxu0
      %v2242 = vadd.f32 0.0, %v2241
      %v2243 = vpop.f32.mrb[0].mxu0
      %v2244 = vpop.f32.mrb[0].mxu0
      %v2245 = vadd.f32 0.0, %v2244
      %v2246 = vpop.f32.mrb[0].mxu0
      %2247 = vmatprep.mubr.bf16.mxu0 0
      %2248 = vmatmul.mubr.bf16.gmra.mrb[0].mxu0 %v2202
      %v2249 = vpop.f32.mrb[0].mxu0
      %v2250 = vadd.f32 0.0, %v2249
      %v2251 = vpop.f32.mrb[0].mxu0
      %v2252 = vpop.f32.mrb[0].mxu0
      %v2253 = vpop.f32.mrb[0].mxu0
      %2254 = vdwg.mxu0
      %v2255 = vpack.c.b16 %v1707, %v1706
      %v2256 = vpack.c.b16 %v1708, %v1708
      %v2259 = vsel %vm1993, %v2130, 0
      %v2262 = vsel %vm1993, %v2131, 0
      %v2265 = vsel %vm2143, %v2256, 0
      %2267 = vmatprep.subr.bf16.mxu0 0
      %2268 = vmatpush1.bf16.msra.mxu0 %v2255
      %2269 = vmatprep.subr.bf16.mxu0 0
      %2270 = vmatpush1.bf16.msra.mxu0 %v2265
      %2271 = vmatprep.subr.bf16.mxu0 0
      %2272 = vmatpush1.bf16.msra.mxu0 0
      %2273 = vmatprep.subr.bf16.mxu0 0
      %2274 = vmatpush1.bf16.msra.mxu0 0
      %2275 = vmatprep.subr.bf16.mxu0 0
      %2276 = vmatpush1.bf16.msra.mxu0 0
      %2277 = vmatprep.subr.bf16.mxu0 0
      %2278 = vmatpush1.bf16.msra.mxu0 0
      %2279 = vmatprep.subr.bf16.mxu0 0
      %2280 = vmatpush1.bf16.msra.mxu0 0
      %2281 = vmatprep.subr.bf16.mxu0 0
      %2282 = vmatpush1.bf16.msra.mxu0 0
      %2283 = vmatprep.subr.bf16.mxu0 0
      %2284 = vmatpush1.bf16.msra.mxu0 0
      %2285 = vmatprep.subr.bf16.mxu0 0
      %2286 = vmatpush1.bf16.msra.mxu0 0
      %2287 = vmatprep.subr.bf16.mxu0 0
      %2288 = vmatpush1.bf16.msra.mxu0 0
      %2289 = vmatprep.subr.bf16.mxu0 0
      %2290 = vmatpush1.bf16.msra.mxu0 0
      %2291 = vmatprep.subr.bf16.mxu0 0
      %2292 = vmatpush1.bf16.msra.mxu0 0
      %2293 = vmatprep.subr.bf16.mxu0 0
      %2294 = vmatpush1.bf16.msra.mxu0 0
      %2295 = vmatprep.subr.bf16.mxu0 0
      %2296 = vmatpush1.bf16.msra.mxu0 0
      %2297 = vmatprep.subr.bf16.mxu0 0
      %2298 = vmatpush1.bf16.msra.mxu0 0
      %2299 = vmatprep.mubr.bf16.mxu0 0
      %2300 = vmatmul.mubr.bf16.gmra.mrb[0].mxu0 %v2259
      %v2301 = vpop.f32.mrb[0].mxu0
      %v2302 = vadd.f32 0.0, %v2301
      %v2303 = vpop.f32.mrb[0].mxu0
      %v2304 = vpop.f32.mrb[0].mxu0
      %v2305 = vadd.f32 0.0, %v2304
      %v2306 = vpop.f32.mrb[0].mxu0
      %2307 = vmatprep.mubr.bf16.mxu0 0
      %2308 = vmatmul.mubr.bf16.gmra.mrb[0].mxu0 %v2262
      %v2309 = vpop.f32.mrb[0].mxu0
      %v2310 = vadd.f32 0.0, %v2309
      %v2311 = vpop.f32.mrb[0].mxu0
      %v2312 = vpop.f32.mrb[0].mxu0
      %v2313 = vpop.f32.mrb[0].mxu0
      %2314 = vdwg.mxu0
      %v2315 = vpack.c.b16 %v1710, %v1709
      %v2316 = vpack.c.b16 %v1711, %v1711
      %v2319 = vsel %vm1993, %v2132, 0
      %v2322 = vsel %vm1993, %v2133, 0
      %v2325 = vsel %vm2143, %v2316, 0
      %2327 = vmatprep.subr.bf16.mxu0 0
      %2328 = vmatpush1.bf16.msra.mxu0 %v2315
      %2329 = vmatprep.subr.bf16.mxu0 0
      %2330 = vmatpush1.bf16.msra.mxu0 %v2325
      %2331 = vmatprep.subr.bf16.mxu0 0
      %2332 = vmatpush1.bf16.msra.mxu0 0
      %2333 = vmatprep.subr.bf16.mxu0 0
      %2334 = vmatpush1.bf16.msra.mxu0 0
      %2335 = vmatprep.subr.bf16.mxu0 0
      %2336 = vmatpush1.bf16.msra.mxu0 0
      %2337 = vmatprep.subr.bf16.mxu0 0
      %2338 = vmatpush1.bf16.msra.mxu0 0
      %2339 = vmatprep.subr.bf16.mxu0 0
      %2340 = vmatpush1.bf16.msra.mxu0 0
      %2341 = vmatprep.subr.bf16.mxu0 0
      %2342 = vmatpush1.bf16.msra.mxu0 0
      %2343 = vmatprep.subr.bf16.mxu0 0
      %2344 = vmatpush1.bf16.msra.mxu0 0
      %2345 = vmatprep.subr.bf16.mxu0 0
      %2346 = vmatpush1.bf16.msra.mxu0 0
      %2347 = vmatprep.subr.bf16.mxu0 0
      %2348 = vmatpush1.bf16.msra.mxu0 0
      %2349 = vmatprep.subr.bf16.mxu0 0
      %2350 = vmatpush1.bf16.msra.mxu0 0
      %2351 = vmatprep.subr.bf16.mxu0 0
      %2352 = vmatpush1.bf16.msra.mxu0 0
      %2353 = vmatprep.subr.bf16.mxu0 0
      %2354 = vmatpush1.bf16.msra.mxu0 0
      %2355 = vmatprep.subr.bf16.mxu0 0
      %2356 = vmatpush1.bf16.msra.mxu0 0
      %2357 = vmatprep.subr.bf16.mxu0 0
      %2358 = vmatpush1.bf16.msra.mxu0 0
      %2359 = vmatprep.mubr.bf16.mxu0 0
      %2360 = vmatmul.mubr.bf16.gmra.mrb[0].mxu0 %v2319
      %v2361 = vpop.f32.mrb[0].mxu0
      %v2362 = vadd.f32 0.0, %v2361
      %v2363 = vpop.f32.mrb[0].mxu0
      %v2364 = vpop.f32.mrb[0].mxu0
      %v2365 = vadd.f32 0.0, %v2364
      %v2366 = vpop.f32.mrb[0].mxu0
      %2367 = vmatprep.mubr.bf16.mxu0 0
      %2368 = vmatmul.mubr.bf16.gmra.mrb[0].mxu0 %v2322
      %v2369 = vpop.f32.mrb[0].mxu0
      %v2370 = vadd.f32 0.0, %v2369
      %v2371 = vpop.f32.mrb[0].mxu0
      %v2372 = vpop.f32.mrb[0].mxu0
      %v2373 = vpop.f32.mrb[0].mxu0
      %2374 = vdwg.mxu0
      %2375 = vrot.lane.b32.xlu0 %v1712, 96
      %v2376 = vpop.permute.xlu0 %2375
      %2377 = vrot.lane.b32.xlu0 %v1713, 96
      %v2378 = vpop.permute.xlu0 %2377
      %2379 = vrot.lane.b32.xlu0 %v1714, 96
      %v2380 = vpop.permute.xlu0 %2379
      %2381 = vrot.lane.b32.xlu0 %v1715, 96
      %v2382 = vpop.permute.xlu0 %2381
      %v2384 = vsel %vm1716, %v2376, 0
      %v2387 = vsel %vm1716, %v2378, 0
      %v2390 = vsel %vm1716, %v2380, 0
      %v2393 = vsel %vm1716, %v2382, 0
      %2395 = vmatprep.subr.bf16.mxu0 0
      %2396 = vmatpush1.bf16.xpose.msra.mxu0 %v2390
      %2397 = vmatprep.subr.bf16.mxu0 0
      %2398 = vmatpush1.bf16.xpose.msra.mxu0 %v2393
      %2399 = vmatprep.subr.bf16.mxu0 0
      %2400 = vmatpush1.bf16.xpose.msra.mxu0 0
      %2401 = vmatprep.subr.bf16.mxu0 0
      %2402 = vmatpush1.bf16.xpose.msra.mxu0 0
      %2403 = vmatprep.subr.bf16.mxu0 0
      %2404 = vmatpush1.bf16.xpose.msra.mxu0 0
      %2405 = vmatprep.subr.bf16.mxu0 0
      %2406 = vmatpush1.bf16.xpose.msra.mxu0 0
      %2407 = vmatprep.subr.bf16.mxu0 0
      %2408 = vmatpush1.bf16.xpose.msra.mxu0 0
      %2409 = vmatprep.subr.bf16.mxu0 0
      %2410 = vmatpush1.bf16.xpose.msra.mxu0 0
      %2411 = vmatprep.subr.bf16.mxu0 0
      %2412 = vmatpush1.bf16.xpose.msra.mxu0 0
      %2413 = vmatprep.subr.bf16.mxu0 0
      %2414 = vmatpush1.bf16.xpose.msra.mxu0 0
      %2415 = vmatprep.subr.bf16.mxu0 0
      %2416 = vmatpush1.bf16.xpose.msra.mxu0 0
      %2417 = vmatprep.subr.bf16.mxu0 0
      %2418 = vmatpush1.bf16.xpose.msra.mxu0 0
      %2419 = vmatprep.subr.bf16.mxu0 0
      %2420 = vmatpush1.bf16.xpose.msra.mxu0 0
      %2421 = vmatprep.subr.bf16.mxu0 0
      %2422 = vmatpush1.bf16.xpose.msra.mxu0 0
      %2423 = vmatprep.subr.bf16.mxu0 0
      %2424 = vmatpush1.bf16.xpose.msra.mxu0 0
      %2425 = vmatprep.subr.bf16.mxu0 0
      %2426 = vmatpush1.bf16.xpose.msra.mxu0 0
      %2427 = vmatprep.mubr.bf16.mxu0 0
      %2428 = vmatmul.mubr.bf16.gmra.mrb[0].mxu0 %v2384
      %v2429 = vpop.f32.mrb[0].mxu0
      %v2430 = vadd.f32 0.0, %v2429
      %v2431 = vpop.f32.mrb[0].mxu0
      %v2432 = vpop.f32.mrb[0].mxu0
      %v2433 = vadd.f32 0.0, %v2432
      %v2434 = vpop.f32.mrb[0].mxu0
      %2435 = vmatprep.mubr.bf16.mxu0 0
      %2436 = vmatmul.mubr.bf16.gmra.mrb[0].mxu0 %v2387
      %v2437 = vpop.f32.mrb[0].mxu0
      %v2438 = vadd.f32 0.0, %v2437
      %v2439 = vpop.f32.mrb[0].mxu0
      %v2440 = vpop.f32.mrb[0].mxu0
      %v2441 = vpop.f32.mrb[0].mxu0
      %2442 = vdwg.mxu0
      %2443 = vrot.lane.b32.xlu0 %v1777, 96
      %v2444 = vpop.permute.xlu0 %2443
      %2445 = vrot.lane.b32.xlu0 %v1778, 96
      %v2446 = vpop.permute.xlu0 %2445
      %2447 = vrot.lane.b32.xlu0 %v1779, 96
      %v2448 = vpop.permute.xlu0 %2447
      %2449 = vrot.lane.b32.xlu0 %v1780, 96
      %v2450 = vpop.permute.xlu0 %2449
      %v2452 = vsel %vm1716, %v2444, 0
      %v2455 = vsel %vm1716, %v2446, 0
      %v2458 = vsel %vm1716, %v2448, 0
      %v2461 = vsel %vm1716, %v2450, 0
      %2463 = vmatprep.subr.bf16.mxu0 0
      %2464 = vmatpush1.bf16.xpose.msra.mxu0 %v2458
      %2465 = vmatprep.subr.bf16.mxu0 0
      %2466 = vmatpush1.bf16.xpose.msra.mxu0 %v2461
      %2467 = vmatprep.subr.bf16.mxu0 0
      %2468 = vmatpush1.bf16.xpose.msra.mxu0 0
      %2469 = vmatprep.subr.bf16.mxu0 0
      %2470 = vmatpush1.bf16.xpose.msra.mxu0 0
      %2471 = vmatprep.subr.bf16.mxu0 0
      %2472 = vmatpush1.bf16.xpose.msra.mxu0 0
      %2473 = vmatprep.subr.bf16.mxu0 0
      %2474 = vmatpush1.bf16.xpose.msra.mxu0 0
      %2475 = vmatprep.subr.bf16.mxu0 0
      %2476 = vmatpush1.bf16.xpose.msra.mxu0 0
      %2477 = vmatprep.subr.bf16.mxu0 0
      %2478 = vmatpush1.bf16.xpose.msra.mxu0 0
      %2479 = vmatprep.subr.bf16.mxu0 0
      %2480 = vmatpush1.bf16.xpose.msra.mxu0 0
      %2481 = vmatprep.subr.bf16.mxu0 0
      %2482 = vmatpush1.bf16.xpose.msra.mxu0 0
      %2483 = vmatprep.subr.bf16.mxu0 0
      %2484 = vmatpush1.bf16.xpose.msra.mxu0 0
      %2485 = vmatprep.subr.bf16.mxu0 0
      %2486 = vmatpush1.bf16.xpose.msra.mxu0 0
      %2487 = vmatprep.subr.bf16.mxu0 0
      %2488 = vmatpush1.bf16.xpose.msra.mxu0 0
      %2489 = vmatprep.subr.bf16.mxu0 0
      %2490 = vmatpush1.bf16.xpose.msra.mxu0 0
      %2491 = vmatprep.subr.bf16.mxu0 0
      %2492 = vmatpush1.bf16.xpose.msra.mxu0 0
      %2493 = vmatprep.subr.bf16.mxu0 0
      %2494 = vmatpush1.bf16.xpose.msra.mxu0 0
      %2495 = vmatprep.mubr.bf16.mxu0 0
      %2496 = vmatmul.mubr.bf16.gmra.mrb[0].mxu0 %v2452
      %v2497 = vpop.f32.mrb[0].mxu0
      %v2498 = vadd.f32 0.0, %v2497
      %v2499 = vpop.f32.mrb[0].mxu0
      %v2500 = vpop.f32.mrb[0].mxu0
      %v2501 = vadd.f32 0.0, %v2500
      %v2502 = vpop.f32.mrb[0].mxu0
      %2503 = vmatprep.mubr.bf16.mxu0 0
      %2504 = vmatmul.mubr.bf16.gmra.mrb[0].mxu0 %v2455
      %v2505 = vpop.f32.mrb[0].mxu0
      %v2506 = vadd.f32 0.0, %v2505
      %v2507 = vpop.f32.mrb[0].mxu0
      %v2508 = vpop.f32.mrb[0].mxu0
      %v2509 = vpop.f32.mrb[0].mxu0
      %2510 = vdwg.mxu0
      %2511 = vrot.lane.b32.xlu0 %v1841, 96
      %v2512 = vpop.permute.xlu0 %2511
      %2513 = vrot.lane.b32.xlu0 %v1842, 96
      %v2514 = vpop.permute.xlu0 %2513
      %2515 = vrot.lane.b32.xlu0 %v1843, 96
      %v2516 = vpop.permute.xlu0 %2515
      %2517 = vrot.lane.b32.xlu0 %v1844, 96
      %v2518 = vpop.permute.xlu0 %2517
      %v2520 = vsel %vm1716, %v2512, 0
      %v2523 = vsel %vm1716, %v2514, 0
      %v2526 = vsel %vm1716, %v2516, 0
      %v2529 = vsel %vm1716, %v2518, 0
      %2531 = vmatprep.subr.bf16.mxu0 0
      %2532 = vmatpush1.bf16.xpose.msra.mxu0 %v2526
      %2533 = vmatprep.subr.bf16.mxu0 0
      %2534 = vmatpush1.bf16.xpose.msra.mxu0 %v2529
      %2535 = vmatprep.subr.bf16.mxu0 0
      %2536 = vmatpush1.bf16.xpose.msra.mxu0 0
      %2537 = vmatprep.subr.bf16.mxu0 0
      %2538 = vmatpush1.bf16.xpose.msra.mxu0 0
      %2539 = vmatprep.subr.bf16.mxu0 0
      %2540 = vmatpush1.bf16.xpose.msra.mxu0 0
      %2541 = vmatprep.subr.bf16.mxu0 0
      %2542 = vmatpush1.bf16.xpose.msra.mxu0 0
      %2543 = vmatprep.subr.bf16.mxu0 0
      %2544 = vmatpush1.bf16.xpose.msra.mxu0 0
      %2545 = vmatprep.subr.bf16.mxu0 0
      %2546 = vmatpush1.bf16.xpose.msra.mxu0 0
      %2547 = vmatprep.subr.bf16.mxu0 0
      %2548 = vmatpush1.bf16.xpose.msra.mxu0 0
      %2549 = vmatprep.subr.bf16.mxu0 0
      %2550 = vmatpush1.bf16.xpose.msra.mxu0 0
      %2551 = vmatprep.subr.bf16.mxu0 0
      %2552 = vmatpush1.bf16.xpose.msra.mxu0 0
      %2553 = vmatprep.subr.bf16.mxu0 0
      %2554 = vmatpush1.bf16.xpose.msra.mxu0 0
      %2555 = vmatprep.subr.bf16.mxu0 0
      %2556 = vmatpush1.bf16.xpose.msra.mxu0 0
      %2557 = vmatprep.subr.bf16.mxu0 0
      %2558 = vmatpush1.bf16.xpose.msra.mxu0 0
      %2559 = vmatprep.subr.bf16.mxu0 0
      %2560 = vmatpush1.bf16.xpose.msra.mxu0 0
      %2561 = vmatprep.subr.bf16.mxu0 0
      %2562 = vmatpush1.bf16.xpose.msra.mxu0 0
      %2563 = vmatprep.mubr.bf16.mxu0 0
      %2564 = vmatmul.mubr.bf16.gmra.mrb[0].mxu0 %v2520
      %v2565 = vpop.f32.mrb[0].mxu0
      %v2566 = vadd.f32 0.0, %v2565
      %v2567 = vpop.f32.mrb[0].mxu0
      %v2568 = vpop.f32.mrb[0].mxu0
      %v2569 = vadd.f32 0.0, %v2568
      %v2570 = vpop.f32.mrb[0].mxu0
      %2571 = vmatprep.mubr.bf16.mxu0 0
      %2572 = vmatmul.mubr.bf16.gmra.mrb[0].mxu0 %v2523
      %v2573 = vpop.f32.mrb[0].mxu0
      %v2574 = vadd.f32 0.0, %v2573
      %v2575 = vpop.f32.mrb[0].mxu0
      %v2576 = vpop.f32.mrb[0].mxu0
      %v2577 = vpop.f32.mrb[0].mxu0
      %2578 = vdwg.mxu0
      %2579 = vrot.lane.b32.xlu0 %v1905, 96
      %v2580 = vpop.permute.xlu0 %2579
      %2581 = vrot.lane.b32.xlu0 %v1906, 96
      %v2582 = vpop.permute.xlu0 %2581
      %2583 = vrot.lane.b32.xlu0 %v1907, 96
      %v2584 = vpop.permute.xlu0 %2583
      %2585 = vrot.lane.b32.xlu0 %v1908, 96
      %v2586 = vpop.permute.xlu0 %2585
      %v2588 = vsel %vm1716, %v2580, 0
      %v2591 = vsel %vm1716, %v2582, 0
      %v2594 = vsel %vm1716, %v2584, 0
      %v2597 = vsel %vm1716, %v2586, 0
      %2599 = vmatprep.subr.bf16.mxu0 0
      %2600 = vmatpush1.bf16.xpose.msra.mxu0 %v2594
      %2601 = vmatprep.subr.bf16.mxu0 0
      %2602 = vmatpush1.bf16.xpose.msra.mxu0 %v2597
      %2603 = vmatprep.subr.bf16.mxu0 0
      %2604 = vmatpush1.bf16.xpose.msra.mxu0 0
      %2605 = vmatprep.subr.bf16.mxu0 0
      %2606 = vmatpush1.bf16.xpose.msra.mxu0 0
      %2607 = vmatprep.subr.bf16.mxu0 0
      %2608 = vmatpush1.bf16.xpose.msra.mxu0 0
      %2609 = vmatprep.subr.bf16.mxu0 0
      %2610 = vmatpush1.bf16.xpose.msra.mxu0 0
      %2611 = vmatprep.subr.bf16.mxu0 0
      %2612 = vmatpush1.bf16.xpose.msra.mxu0 0
      %2613 = vmatprep.subr.bf16.mxu0 0
      %2614 = vmatpush1.bf16.xpose.msra.mxu0 0
      %2615 = vmatprep.subr.bf16.mxu0 0
      %2616 = vmatpush1.bf16.xpose.msra.mxu0 0
      %2617 = vmatprep.subr.bf16.mxu0 0
      %2618 = vmatpush1.bf16.xpose.msra.mxu0 0
      %2619 = vmatprep.subr.bf16.mxu0 0
      %2620 = vmatpush1.bf16.xpose.msra.mxu0 0
      %2621 = vmatprep.subr.bf16.mxu0 0
      %2622 = vmatpush1.bf16.xpose.msra.mxu0 0
      %2623 = vmatprep.subr.bf16.mxu0 0
      %2624 = vmatpush1.bf16.xpose.msra.mxu0 0
      %2625 = vmatprep.subr.bf16.mxu0 0
      %2626 = vmatpush1.bf16.xpose.msra.mxu0 0
      %2627 = vmatprep.subr.bf16.mxu0 0
      %2628 = vmatpush1.bf16.xpose.msra.mxu0 0
      %2629 = vmatprep.subr.bf16.mxu0 0
      %2630 = vmatpush1.bf16.xpose.msra.mxu0 0
      %2631 = vmatprep.mubr.bf16.mxu0 0
      %2632 = vmatmul.mubr.bf16.gmra.mrb[0].mxu0 %v2588
      %v2633 = vpop.f32.mrb[0].mxu0
      %v2634 = vadd.f32 0.0, %v2633
      %v2635 = vpop.f32.mrb[0].mxu0
      %v2636 = vpop.f32.mrb[0].mxu0
      %v2637 = vadd.f32 0.0, %v2636
      %v2638 = vpop.f32.mrb[0].mxu0
      %2639 = vmatprep.mubr.bf16.mxu0 0
      %2640 = vmatmul.mubr.bf16.gmra.mrb[0].mxu0 %v2591
      %v2641 = vpop.f32.mrb[0].mxu0
      %v2642 = vadd.f32 0.0, %v2641
      %v2643 = vpop.f32.mrb[0].mxu0
      %v2644 = vpop.f32.mrb[0].mxu0
      %v2645 = vpop.f32.mrb[0].mxu0
      %2646 = vdwg.mxu0
      %v2647 = vmul.f32 %v2430, 0.17677669
      %v2648 = vmul.f32 %v2433, 0.17677669
      %v2649 = vmul.f32 %v2438, 0.17677669
      %v2650 = vmul.f32 %v2498, 0.17677669
      %v2651 = vmul.f32 %v2501, 0.17677669
      %v2652 = vmul.f32 %v2506, 0.17677669
      %v2653 = vmul.f32 %v2566, 0.17677669
      %v2654 = vmul.f32 %v2569, 0.17677669
      %v2655 = vmul.f32 %v2574, 0.17677669
      %v2656 = vmul.f32 %v2634, 0.17677669
      %v2657 = vmul.f32 %v2637, 0.17677669
      %v2658 = vmul.f32 %v2642, 0.17677669
      %v2659 = vadd.f32 %v2647, %v1111
      %v2660 = vadd.f32 %v2648, %v1111
      %v2661 = vadd.f32 %v2649, %v1111
      %v2662 = vadd.f32 %v2650, %v1111
      %v2663 = vadd.f32 %v2651, %v1111
      %v2664 = vadd.f32 %v2652, %v1111
      %v2665 = vadd.f32 %v2653, %v1111
      %v2666 = vadd.f32 %v2654, %v1111
      %v2667 = vadd.f32 %v2655, %v1111
      %v2668 = vadd.f32 %v2656, %v1111
      %v2669 = vadd.f32 %v2657, %v1111
      %v2670 = vadd.f32 %v2658, %v1111
      %v2671 = vsel %vm1993, %v2659, -inf
      %2672 = vmax.xlane.f32.xlu0 %v2671
      %v2673 = vpop.xlane.xlu0 %2672
      %v2674 = vsel %vm1993, %v2660, -inf
      %2675 = vmax.xlane.f32.xlu0 %v2674
      %v2676 = vpop.xlane.xlu0 %2675
      %v2677 = vsel %vm1993, %v2661, -inf
      %2678 = vmax.xlane.f32.xlu0 %v2677
      %v2679 = vpop.xlane.xlu0 %2678
      %v2680 = vsel %vm1993, %v2662, -inf
      %2681 = vmax.xlane.f32.xlu0 %v2680
      %v2682 = vpop.xlane.xlu0 %2681
      %v2683 = vsel %vm1993, %v2663, -inf
      %2684 = vmax.xlane.f32.xlu0 %v2683
      %v2685 = vpop.xlane.xlu0 %2684
      %v2686 = vsel %vm1993, %v2664, -inf
      %2687 = vmax.xlane.f32.xlu0 %v2686
      %v2688 = vpop.xlane.xlu0 %2687
      %v2689 = vsel %vm1993, %v2665, -inf
      %2690 = vmax.xlane.f32.xlu0 %v2689
      %v2691 = vpop.xlane.xlu0 %2690
      %v2692 = vsel %vm1993, %v2666, -inf
      %2693 = vmax.xlane.f32.xlu0 %v2692
      %v2694 = vpop.xlane.xlu0 %2693
      %v2695 = vsel %vm1993, %v2667, -inf
      %2696 = vmax.xlane.f32.xlu0 %v2695
      %v2697 = vpop.xlane.xlu0 %2696
      %v2698 = vsel %vm1993, %v2668, -inf
      %2699 = vmax.xlane.f32.xlu0 %v2698
      %v2700 = vpop.xlane.xlu0 %2699
      %v2701 = vsel %vm1993, %v2669, -inf
      %2702 = vmax.xlane.f32.xlu0 %v2701
      %v2703 = vpop.xlane.xlu0 %2702
      %v2704 = vsel %vm1993, %v2670, -inf
      %2705 = vmax.xlane.f32.xlu0 %v2704
      %v2706 = vpop.xlane.xlu0 %2705
      %v2707 = vsub.f32 %v2659, %v2673
      %v2708 = vsub.f32 %v2660, %v2676
      %v2709 = vsub.f32 %v2661, %v2679
      %v2710 = vsub.f32 %v2662, %v2682
      %v2711 = vsub.f32 %v2663, %v2685
      %v2712 = vsub.f32 %v2664, %v2688
      %v2713 = vsub.f32 %v2665, %v2691
      %v2714 = vsub.f32 %v2666, %v2694
      %v2715 = vsub.f32 %v2667, %v2697
      %v2716 = vsub.f32 %v2668, %v2700
      %v2717 = vsub.f32 %v2669, %v2703
      %v2718 = vsub.f32 %v2670, %v2706
      %v2719 = vmul.f32 %v2707, 1.442695
      %v2720 = vpow.pop %v2719
      %v2721 = vmul.f32 %v2708, 1.442695
      %v2722 = vpow.pop %v2721
      %v2723 = vmul.f32 %v2709, 1.442695
      %v2724 = vpow.pop %v2723
      %v2725 = vmul.f32 %v2710, 1.442695
      %v2726 = vpow.pop %v2725
      %v2727 = vmul.f32 %v2711, 1.442695
      %v2728 = vpow.pop %v2727
      %v2729 = vmul.f32 %v2712, 1.442695
      %v2730 = vpow.pop %v2729
      %v2731 = vmul.f32 %v2713, 1.442695
      %v2732 = vpow.pop %v2731
      %v2733 = vmul.f32 %v2714, 1.442695
      %v2734 = vpow.pop %v2733
      %v2735 = vmul.f32 %v2715, 1.442695
      %v2736 = vpow.pop %v2735
      %v2737 = vmul.f32 %v2716, 1.442695
      %v2738 = vpow.pop %v2737
      %v2739 = vmul.f32 %v2717, 1.442695
      %v2740 = vpow.pop %v2739
      %v2741 = vmul.f32 %v2718, 1.442695
      %v2742 = vpow.pop %v2741
      %v2743 = vsel %vm1993, %v2720, 0.0
      %2744 = vadd.xlane.f32.xlu0 %v2743
      %v2745 = vpop.xlane.xlu0 %2744
      %v2746 = vsel %vm1993, %v2722, 0.0
      %2747 = vadd.xlane.f32.xlu0 %v2746
      %v2748 = vpop.xlane.xlu0 %2747
      %v2749 = vsel %vm1993, %v2724, 0.0
      %2750 = vadd.xlane.f32.xlu0 %v2749
      %v2751 = vpop.xlane.xlu0 %2750
      %v2752 = vsel %vm1993, %v2726, 0.0
      %2753 = vadd.xlane.f32.xlu0 %v2752
      %v2754 = vpop.xlane.xlu0 %2753
      %v2755 = vsel %vm1993, %v2728, 0.0
      %2756 = vadd.xlane.f32.xlu0 %v2755
      %v2757 = vpop.xlane.xlu0 %2756
      %v2758 = vsel %vm1993, %v2730, 0.0
      %2759 = vadd.xlane.f32.xlu0 %v2758
      %v2760 = vpop.xlane.xlu0 %2759
      %v2761 = vsel %vm1993, %v2732, 0.0
      %2762 = vadd.xlane.f32.xlu0 %v2761
      %v2763 = vpop.xlane.xlu0 %2762
      %v2764 = vsel %vm1993, %v2734, 0.0
      %2765 = vadd.xlane.f32.xlu0 %v2764
      %v2766 = vpop.xlane.xlu0 %2765
      %v2767 = vsel %vm1993, %v2736, 0.0
      %2768 = vadd.xlane.f32.xlu0 %v2767
      %v2769 = vpop.xlane.xlu0 %2768
      %v2770 = vsel %vm1993, %v2738, 0.0
      %2771 = vadd.xlane.f32.xlu0 %v2770
      %v2772 = vpop.xlane.xlu0 %2771
      %v2773 = vsel %vm1993, %v2740, 0.0
      %2774 = vadd.xlane.f32.xlu0 %v2773
      %v2775 = vpop.xlane.xlu0 %2774
      %v2776 = vsel %vm1993, %v2742, 0.0
      %2777 = vadd.xlane.f32.xlu0 %v2776
      %v2778 = vpop.xlane.xlu0 %2777
      %v2779 = vrcp.pop %v2745
      %v2780 = vrcp.pop %v2748
      %v2781 = vrcp.pop %v2751
      %v2782 = vrcp.pop %v2754
      %v2783 = vrcp.pop %v2757
      %v2784 = vrcp.pop %v2760
      %v2785 = vrcp.pop %v2763
      %v2786 = vrcp.pop %v2766
      %v2787 = vrcp.pop %v2769
      %v2788 = vrcp.pop %v2772
      %v2789 = vrcp.pop %v2775
      %v2790 = vrcp.pop %v2778
      %v2791 = vmul.f32 %v2720, %v2779
      %v2792 = vmul.f32 %v2722, %v2780
      %v2793 = vmul.f32 %v2724, %v2781
      %v2794 = vmul.f32 %v2726, %v2782
      %v2795 = vmul.f32 %v2728, %v2783
      %v2796 = vmul.f32 %v2730, %v2784
      %v2797 = vmul.f32 %v2732, %v2785
      %v2798 = vmul.f32 %v2734, %v2786
      %v2799 = vmul.f32 %v2736, %v2787
      %v2800 = vmul.f32 %v2738, %v2788
      %v2801 = vmul.f32 %v2740, %v2789
      %v2802 = vmul.f32 %v2742, %v2790
      %v2803 = vpack.c.bf16 %v2792, %v2791
      %v2804 = vpack.c.bf16 %v2793, %v2793
      %v2805 = vpack.c.bf16 %v2795, %v2794
      %v2806 = vpack.c.bf16 %v2796, %v2796
      %v2807 = vpack.c.bf16 %v2798, %v2797
      %v2808 = vpack.c.bf16 %v2799, %v2799
      %v2809 = vpack.c.bf16 %v2801, %v2800
      %v2810 = vpack.c.bf16 %v2802, %v2802
      %2811 = vrot.lane.b32.xlu0 %v2134, 96
      %v2812 = vpop.permute.xlu0 %2811
      %2813 = vrot.lane.b32.xlu0 %v2135, 96
      %v2814 = vpop.permute.xlu0 %2813
      %v2817 = vsel %vm1993, %v2803, 0
      %v2820 = vsel %vm1993, %v2804, 0
      %v2823 = vsel %vm2143, %v2814, 0
      %2825 = vmatprep.subr.bf16.mxu0 0
      %2826 = vmatpush1.bf16.msra.mxu0 %v2812
      %2827 = vmatprep.subr.bf16.mxu0 0
      %2828 = vmatpush1.bf16.msra.mxu0 %v2823
      %2829 = vmatprep.subr.bf16.mxu0 0
      %2830 = vmatpush1.bf16.msra.mxu0 0
      %2831 = vmatprep.subr.bf16.mxu0 0
      %2832 = vmatpush1.bf16.msra.mxu0 0
      %2833 = vmatprep.subr.bf16.mxu0 0
      %2834 = vmatpush1.bf16.msra.mxu0 0
      %2835 = vmatprep.subr.bf16.mxu0 0
      %2836 = vmatpush1.bf16.msra.mxu0 0
      %2837 = vmatprep.subr.bf16.mxu0 0
      %2838 = vmatpush1.bf16.msra.mxu0 0
      %2839 = vmatprep.subr.bf16.mxu0 0
      %2840 = vmatpush1.bf16.msra.mxu0 0
      %2841 = vmatprep.subr.bf16.mxu0 0
      %2842 = vmatpush1.bf16.msra.mxu0 0
      %2843 = vmatprep.subr.bf16.mxu0 0
      %2844 = vmatpush1.bf16.msra.mxu0 0
      %2845 = vmatprep.subr.bf16.mxu0 0
      %2846 = vmatpush1.bf16.msra.mxu0 0
      %2847 = vmatprep.subr.bf16.mxu0 0
      %2848 = vmatpush1.bf16.msra.mxu0 0
      %2849 = vmatprep.subr.bf16.mxu0 0
      %2850 = vmatpush1.bf16.msra.mxu0 0
      %2851 = vmatprep.subr.bf16.mxu0 0
      %2852 = vmatpush1.bf16.msra.mxu0 0
      %2853 = vmatprep.subr.bf16.mxu0 0
      %2854 = vmatpush1.bf16.msra.mxu0 0
      %2855 = vmatprep.subr.bf16.mxu0 0
      %2856 = vmatpush1.bf16.msra.mxu0 0
      %2857 = vmatprep.mubr.bf16.mxu0 0
      %2858 = vmatmul.mubr.bf16.gmra.mrb[0].mxu0 %v2817
      %v2859 = vpop.f32.mrb[0].mxu0
      %v2860 = vadd.f32 0.0, %v2859
      %v2861 = vpop.f32.mrb[0].mxu0
      %v2862 = vpop.f32.mrb[0].mxu0
      %v2863 = vadd.f32 0.0, %v2862
      %v2864 = vpop.f32.mrb[0].mxu0
      %2865 = vmatprep.mubr.bf16.mxu0 0
      %2866 = vmatmul.mubr.bf16.gmra.mrb[0].mxu0 %v2820
      %v2867 = vpop.f32.mrb[0].mxu0
      %v2868 = vadd.f32 0.0, %v2867
      %v2869 = vpop.f32.mrb[0].mxu0
      %v2870 = vpop.f32.mrb[0].mxu0
      %v2871 = vpop.f32.mrb[0].mxu0
      %2872 = vdwg.mxu0
      %2873 = vrot.lane.b32.xlu0 %v2195, 96
      %v2874 = vpop.permute.xlu0 %2873
      %2875 = vrot.lane.b32.xlu0 %v2196, 96
      %v2876 = vpop.permute.xlu0 %2875
      %v2879 = vsel %vm1993, %v2805, 0
      %v2882 = vsel %vm1993, %v2806, 0
      %v2885 = vsel %vm2143, %v2876, 0
      %2887 = vmatprep.subr.bf16.mxu0 0
      %2888 = vmatpush1.bf16.msra.mxu0 %v2874
      %2889 = vmatprep.subr.bf16.mxu0 0
      %2890 = vmatpush1.bf16.msra.mxu0 %v2885
      %2891 = vmatprep.subr.bf16.mxu0 0
      %2892 = vmatpush1.bf16.msra.mxu0 0
      %2893 = vmatprep.subr.bf16.mxu0 0
      %2894 = vmatpush1.bf16.msra.mxu0 0
      %2895 = vmatprep.subr.bf16.mxu0 0
      %2896 = vmatpush1.bf16.msra.mxu0 0
      %2897 = vmatprep.subr.bf16.mxu0 0
      %2898 = vmatpush1.bf16.msra.mxu0 0
      %2899 = vmatprep.subr.bf16.mxu0 0
      %2900 = vmatpush1.bf16.msra.mxu0 0
      %2901 = vmatprep.subr.bf16.mxu0 0
      %2902 = vmatpush1.bf16.msra.mxu0 0
      %2903 = vmatprep.subr.bf16.mxu0 0
      %2904 = vmatpush1.bf16.msra.mxu0 0
      %2905 = vmatprep.subr.bf16.mxu0 0
      %2906 = vmatpush1.bf16.msra.mxu0 0
      %2907 = vmatprep.subr.bf16.mxu0 0
      %2908 = vmatpush1.bf16.msra.mxu0 0
      %2909 = vmatprep.subr.bf16.mxu0 0
      %2910 = vmatpush1.bf16.msra.mxu0 0
      %2911 = vmatprep.subr.bf16.mxu0 0
      %2912 = vmatpush1.bf16.msra.mxu0 0
      %2913 = vmatprep.subr.bf16.mxu0 0
      %2914 = vmatpush1.bf16.msra.mxu0 0
      %2915 = vmatprep.subr.bf16.mxu0 0
      %2916 = vmatpush1.bf16.msra.mxu0 0
      %2917 = vmatprep.subr.bf16.mxu0 0
      %2918 = vmatpush1.bf16.msra.mxu0 0
      %2919 = vmatprep.mubr.bf16.mxu0 0
      %2920 = vmatmul.mubr.bf16.gmra.mrb[0].mxu0 %v2879
      %v2921 = vpop.f32.mrb[0].mxu0
      %v2922 = vadd.f32 0.0, %v2921
      %v2923 = vpop.f32.mrb[0].mxu0
      %v2924 = vpop.f32.mrb[0].mxu0
      %v2925 = vadd.f32 0.0, %v2924
      %v2926 = vpop.f32.mrb[0].mxu0
      %2927 = vmatprep.mubr.bf16.mxu0 0
      %2928 = vmatmul.mubr.bf16.gmra.mrb[0].mxu0 %v2882
      %v2929 = vpop.f32.mrb[0].mxu0
      %v2930 = vadd.f32 0.0, %v2929
      %v2931 = vpop.f32.mrb[0].mxu0
      %v2932 = vpop.f32.mrb[0].mxu0
      %v2933 = vpop.f32.mrb[0].mxu0
      %2934 = vdwg.mxu0
      %2935 = vrot.lane.b32.xlu0 %v2255, 96
      %v2936 = vpop.permute.xlu0 %2935
      %2937 = vrot.lane.b32.xlu0 %v2256, 96
      %v2938 = vpop.permute.xlu0 %2937
      %v2941 = vsel %vm1993, %v2807, 0
      %v2944 = vsel %vm1993, %v2808, 0
      %v2947 = vsel %vm2143, %v2938, 0
      %2949 = vmatprep.subr.bf16.mxu0 0
      %2950 = vmatpush1.bf16.msra.mxu0 %v2936
      %2951 = vmatprep.subr.bf16.mxu0 0
      %2952 = vmatpush1.bf16.msra.mxu0 %v2947
      %2953 = vmatprep.subr.bf16.mxu0 0
      %2954 = vmatpush1.bf16.msra.mxu0 0
      %2955 = vmatprep.subr.bf16.mxu0 0
      %2956 = vmatpush1.bf16.msra.mxu0 0
      %2957 = vmatprep.subr.bf16.mxu0 0
      %2958 = vmatpush1.bf16.msra.mxu0 0
      %2959 = vmatprep.subr.bf16.mxu0 0
      %2960 = vmatpush1.bf16.msra.mxu0 0
      %2961 = vmatprep.subr.bf16.mxu0 0
      %2962 = vmatpush1.bf16.msra.mxu0 0
      %2963 = vmatprep.subr.bf16.mxu0 0
      %2964 = vmatpush1.bf16.msra.mxu0 0
      %2965 = vmatprep.subr.bf16.mxu0 0
      %2966 = vmatpush1.bf16.msra.mxu0 0
      %2967 = vmatprep.subr.bf16.mxu0 0
      %2968 = vmatpush1.bf16.msra.mxu0 0
      %2969 = vmatprep.subr.bf16.mxu0 0
      %2970 = vmatpush1.bf16.msra.mxu0 0
      %2971 = vmatprep.subr.bf16.mxu0 0
      %2972 = vmatpush1.bf16.msra.mxu0 0
      %2973 = vmatprep.subr.bf16.mxu0 0
      %2974 = vmatpush1.bf16.msra.mxu0 0
      %2975 = vmatprep.subr.bf16.mxu0 0
      %2976 = vmatpush1.bf16.msra.mxu0 0
      %2977 = vmatprep.subr.bf16.mxu0 0
      %2978 = vmatpush1.bf16.msra.mxu0 0
      %2979 = vmatprep.subr.bf16.mxu0 0
      %2980 = vmatpush1.bf16.msra.mxu0 0
      %2981 = vmatprep.mubr.bf16.mxu0 0
      %2982 = vmatmul.mubr.bf16.gmra.mrb[0].mxu0 %v2941
      %v2983 = vpop.f32.mrb[0].mxu0
      %v2984 = vadd.f32 0.0, %v2983
      %v2985 = vpop.f32.mrb[0].mxu0
      %v2986 = vpop.f32.mrb[0].mxu0
      %v2987 = vadd.f32 0.0, %v2986
      %v2988 = vpop.f32.mrb[0].mxu0
      %2989 = vmatprep.mubr.bf16.mxu0 0
      %2990 = vmatmul.mubr.bf16.gmra.mrb[0].mxu0 %v2944
      %v2991 = vpop.f32.mrb[0].mxu0
      %v2992 = vadd.f32 0.0, %v2991
      %v2993 = vpop.f32.mrb[0].mxu0
      %v2994 = vpop.f32.mrb[0].mxu0
      %v2995 = vpop.f32.mrb[0].mxu0
      %2996 = vdwg.mxu0
      %2997 = vrot.lane.b32.xlu0 %v2315, 96
      %v2998 = vpop.permute.xlu0 %2997
      %2999 = vrot.lane.b32.xlu0 %v2316, 96
      %v3000 = vpop.permute.xlu0 %2999
      %v3003 = vsel %vm1993, %v2809, 0
      %v3006 = vsel %vm1993, %v2810, 0
      %v3009 = vsel %vm2143, %v3000, 0
      %3011 = vmatprep.subr.bf16.mxu0 0
      %3012 = vmatpush1.bf16.msra.mxu0 %v2998
      %3013 = vmatprep.subr.bf16.mxu0 0
      %3014 = vmatpush1.bf16.msra.mxu0 %v3009
      %3015 = vmatprep.subr.bf16.mxu0 0
      %3016 = vmatpush1.bf16.msra.mxu0 0
      %3017 = vmatprep.subr.bf16.mxu0 0
      %3018 = vmatpush1.bf16.msra.mxu0 0
      %3019 = vmatprep.subr.bf16.mxu0 0
      %3020 = vmatpush1.bf16.msra.mxu0 0
      %3021 = vmatprep.subr.bf16.mxu0 0
      %3022 = vmatpush1.bf16.msra.mxu0 0
      %3023 = vmatprep.subr.bf16.mxu0 0
      %3024 = vmatpush1.bf16.msra.mxu0 0
      %3025 = vmatprep.subr.bf16.mxu0 0
      %3026 = vmatpush1.bf16.msra.mxu0 0
      %3027 = vmatprep.subr.bf16.mxu0 0
      %3028 = vmatpush1.bf16.msra.mxu0 0
      %3029 = vmatprep.subr.bf16.mxu0 0
      %3030 = vmatpush1.bf16.msra.mxu0 0
      %3031 = vmatprep.subr.bf16.mxu0 0
      %3032 = vmatpush1.bf16.msra.mxu0 0
      %3033 = vmatprep.subr.bf16.mxu0 0
      %3034 = vmatpush1.bf16.msra.mxu0 0
      %3035 = vmatprep.subr.bf16.mxu0 0
      %3036 = vmatpush1.bf16.msra.mxu0 0
      %3037 = vmatprep.subr.bf16.mxu0 0
      %3038 = vmatpush1.bf16.msra.mxu0 0
      %3039 = vmatprep.subr.bf16.mxu0 0
      %3040 = vmatpush1.bf16.msra.mxu0 0
      %3041 = vmatprep.subr.bf16.mxu0 0
      %3042 = vmatpush1.bf16.msra.mxu0 0
      %3043 = vmatprep.mubr.bf16.mxu0 0
      %3044 = vmatmul.mubr.bf16.gmra.mrb[0].mxu0 %v3003
      %v3045 = vpop.f32.mrb[0].mxu0
      %v3046 = vadd.f32 0.0, %v3045
      %v3047 = vpop.f32.mrb[0].mxu0
      %v3048 = vpop.f32.mrb[0].mxu0
      %v3049 = vadd.f32 0.0, %v3048
      %v3050 = vpop.f32.mrb[0].mxu0
      %3051 = vmatprep.mubr.bf16.mxu0 0
      %3052 = vmatmul.mubr.bf16.gmra.mrb[0].mxu0 %v3006
      %v3053 = vpop.f32.mrb[0].mxu0
      %v3054 = vadd.f32 0.0, %v3053
      %v3055 = vpop.f32.mrb[0].mxu0
      %v3056 = vpop.f32.mrb[0].mxu0
      %v3057 = vpop.f32.mrb[0].mxu0
      %3058 = vdwg.mxu0
      %3059 = vrot.lane.b32.xlu0 %v1712, 64
      %v3060 = vpop.permute.xlu0 %3059
      %3061 = vrot.lane.b32.xlu0 %v1713, 64
      %v3062 = vpop.permute.xlu0 %3061
      %3063 = vrot.lane.b32.xlu0 %v1714, 64
      %v3064 = vpop.permute.xlu0 %3063
      %3065 = vrot.lane.b32.xlu0 %v1715, 64
      %v3066 = vpop.permute.xlu0 %3065
      %v3068 = vsel %vm1716, %v3060, 0
      %v3071 = vsel %vm1716, %v3062, 0
      %v3074 = vsel %vm1716, %v3064, 0
      %v3077 = vsel %vm1716, %v3066, 0
      %3079 = vmatprep.subr.bf16.mxu0 0
      %3080 = vmatpush1.bf16.xpose.msra.mxu0 %v3074
      %3081 = vmatprep.subr.bf16.mxu0 0
      %3082 = vmatpush1.bf16.xpose.msra.mxu0 %v3077
      %3083 = vmatprep.subr.bf16.mxu0 0
      %3084 = vmatpush1.bf16.xpose.msra.mxu0 0
      %3085 = vmatprep.subr.bf16.mxu0 0
      %3086 = vmatpush1.bf16.xpose.msra.mxu0 0
      %3087 = vmatprep.subr.bf16.mxu0 0
      %3088 = vmatpush1.bf16.xpose.msra.mxu0 0
      %3089 = vmatprep.subr.bf16.mxu0 0
      %3090 = vmatpush1.bf16.xpose.msra.mxu0 0
      %3091 = vmatprep.subr.bf16.mxu0 0
      %3092 = vmatpush1.bf16.xpose.msra.mxu0 0
      %3093 = vmatprep.subr.bf16.mxu0 0
      %3094 = vmatpush1.bf16.xpose.msra.mxu0 0
      %3095 = vmatprep.subr.bf16.mxu0 0
      %3096 = vmatpush1.bf16.xpose.msra.mxu0 0
      %3097 = vmatprep.subr.bf16.mxu0 0
      %3098 = vmatpush1.bf16.xpose.msra.mxu0 0
      %3099 = vmatprep.subr.bf16.mxu0 0
      %3100 = vmatpush1.bf16.xpose.msra.mxu0 0
      %3101 = vmatprep.subr.bf16.mxu0 0
      %3102 = vmatpush1.bf16.xpose.msra.mxu0 0
      %3103 = vmatprep.subr.bf16.mxu0 0
      %3104 = vmatpush1.bf16.xpose.msra.mxu0 0
      %3105 = vmatprep.subr.bf16.mxu0 0
      %3106 = vmatpush1.bf16.xpose.msra.mxu0 0
      %3107 = vmatprep.subr.bf16.mxu0 0
      %3108 = vmatpush1.bf16.xpose.msra.mxu0 0
      %3109 = vmatprep.subr.bf16.mxu0 0
      %3110 = vmatpush1.bf16.xpose.msra.mxu0 0
      %3111 = vmatprep.mubr.bf16.mxu0 0
      %3112 = vmatmul.mubr.bf16.gmra.mrb[0].mxu0 %v3068
      %v3113 = vpop.f32.mrb[0].mxu0
      %v3114 = vadd.f32 0.0, %v3113
      %v3115 = vpop.f32.mrb[0].mxu0
      %v3116 = vpop.f32.mrb[0].mxu0
      %v3117 = vadd.f32 0.0, %v3116
      %v3118 = vpop.f32.mrb[0].mxu0
      %3119 = vmatprep.mubr.bf16.mxu0 0
      %3120 = vmatmul.mubr.bf16.gmra.mrb[0].mxu0 %v3071
      %v3121 = vpop.f32.mrb[0].mxu0
      %v3122 = vadd.f32 0.0, %v3121
      %v3123 = vpop.f32.mrb[0].mxu0
      %v3124 = vpop.f32.mrb[0].mxu0
      %v3125 = vpop.f32.mrb[0].mxu0
      %3126 = vdwg.mxu0
      %3127 = vrot.lane.b32.xlu0 %v1777, 64
      %v3128 = vpop.permute.xlu0 %3127
      %3129 = vrot.lane.b32.xlu0 %v1778, 64
      %v3130 = vpop.permute.xlu0 %3129
      %3131 = vrot.lane.b32.xlu0 %v1779, 64
      %v3132 = vpop.permute.xlu0 %3131
      %3133 = vrot.lane.b32.xlu0 %v1780, 64
      %v3134 = vpop.permute.xlu0 %3133
      %v3136 = vsel %vm1716, %v3128, 0
      %v3139 = vsel %vm1716, %v3130, 0
      %v3142 = vsel %vm1716, %v3132, 0
      %v3145 = vsel %vm1716, %v3134, 0
      %3147 = vmatprep.subr.bf16.mxu0 0
      %3148 = vmatpush1.bf16.xpose.msra.mxu0 %v3142
      %3149 = vmatprep.subr.bf16.mxu0 0
      %3150 = vmatpush1.bf16.xpose.msra.mxu0 %v3145
      %3151 = vmatprep.subr.bf16.mxu0 0
      %3152 = vmatpush1.bf16.xpose.msra.mxu0 0
      %3153 = vmatprep.subr.bf16.mxu0 0
      %3154 = vmatpush1.bf16.xpose.msra.mxu0 0
      %3155 = vmatprep.subr.bf16.mxu0 0
      %3156 = vmatpush1.bf16.xpose.msra.mxu0 0
      %3157 = vmatprep.subr.bf16.mxu0 0
      %3158 = vmatpush1.bf16.xpose.msra.mxu0 0
      %3159 = vmatprep.subr.bf16.mxu0 0
      %3160 = vmatpush1.bf16.xpose.msra.mxu0 0
      %3161 = vmatprep.subr.bf16.mxu0 0
      %3162 = vmatpush1.bf16.xpose.msra.mxu0 0
      %3163 = vmatprep.subr.bf16.mxu0 0
      %3164 = vmatpush1.bf16.xpose.msra.mxu0 0
      %3165 = vmatprep.subr.bf16.mxu0 0
      %3166 = vmatpush1.bf16.xpose.msra.mxu0 0
      %3167 = vmatprep.subr.bf16.mxu0 0
      %3168 = vmatpush1.bf16.xpose.msra.mxu0 0
      %3169 = vmatprep.subr.bf16.mxu0 0
      %3170 = vmatpush1.bf16.xpose.msra.mxu0 0
      %3171 = vmatprep.subr.bf16.mxu0 0
      %3172 = vmatpush1.bf16.xpose.msra.mxu0 0
      %3173 = vmatprep.subr.bf16.mxu0 0
      %3174 = vmatpush1.bf16.xpose.msra.mxu0 0
      %3175 = vmatprep.subr.bf16.mxu0 0
      %3176 = vmatpush1.bf16.xpose.msra.mxu0 0
      %3177 = vmatprep.subr.bf16.mxu0 0
      %3178 = vmatpush1.bf16.xpose.msra.mxu0 0
      %3179 = vmatprep.mubr.bf16.mxu0 0
      %3180 = vmatmul.mubr.bf16.gmra.mrb[0].mxu0 %v3136
      %v3181 = vpop.f32.mrb[0].mxu0
      %v3182 = vadd.f32 0.0, %v3181
      %v3183 = vpop.f32.mrb[0].mxu0
      %v3184 = vpop.f32.mrb[0].mxu0
      %v3185 = vadd.f32 0.0, %v3184
      %v3186 = vpop.f32.mrb[0].mxu0
      %3187 = vmatprep.mubr.bf16.mxu0 0
      %3188 = vmatmul.mubr.bf16.gmra.mrb[0].mxu0 %v3139
      %v3189 = vpop.f32.mrb[0].mxu0
      %v3190 = vadd.f32 0.0, %v3189
      %v3191 = vpop.f32.mrb[0].mxu0
      %v3192 = vpop.f32.mrb[0].mxu0
      %v3193 = vpop.f32.mrb[0].mxu0
      %3194 = vdwg.mxu0
      %3195 = vrot.lane.b32.xlu0 %v1841, 64
      %v3196 = vpop.permute.xlu0 %3195
      %3197 = vrot.lane.b32.xlu0 %v1842, 64
      %v3198 = vpop.permute.xlu0 %3197
      %3199 = vrot.lane.b32.xlu0 %v1843, 64
      %v3200 = vpop.permute.xlu0 %3199
      %3201 = vrot.lane.b32.xlu0 %v1844, 64
      %v3202 = vpop.permute.xlu0 %3201
      %v3204 = vsel %vm1716, %v3196, 0
      %v3207 = vsel %vm1716, %v3198, 0
      %v3210 = vsel %vm1716, %v3200, 0
      %v3213 = vsel %vm1716, %v3202, 0
      %3215 = vmatprep.subr.bf16.mxu0 0
      %3216 = vmatpush1.bf16.xpose.msra.mxu0 %v3210
      %3217 = vmatprep.subr.bf16.mxu0 0
      %3218 = vmatpush1.bf16.xpose.msra.mxu0 %v3213
      %3219 = vmatprep.subr.bf16.mxu0 0
      %3220 = vmatpush1.bf16.xpose.msra.mxu0 0
      %3221 = vmatprep.subr.bf16.mxu0 0
      %3222 = vmatpush1.bf16.xpose.msra.mxu0 0
      %3223 = vmatprep.subr.bf16.mxu0 0
      %3224 = vmatpush1.bf16.xpose.msra.mxu0 0
      %3225 = vmatprep.subr.bf16.mxu0 0
      %3226 = vmatpush1.bf16.xpose.msra.mxu0 0
      %3227 = vmatprep.subr.bf16.mxu0 0
      %3228 = vmatpush1.bf16.xpose.msra.mxu0 0
      %3229 = vmatprep.subr.bf16.mxu0 0
      %3230 = vmatpush1.bf16.xpose.msra.mxu0 0
      %3231 = vmatprep.subr.bf16.mxu0 0
      %3232 = vmatpush1.bf16.xpose.msra.mxu0 0
      %3233 = vmatprep.subr.bf16.mxu0 0
      %3234 = vmatpush1.bf16.xpose.msra.mxu0 0
      %3235 = vmatprep.subr.bf16.mxu0 0
      %3236 = vmatpush1.bf16.xpose.msra.mxu0 0
      %3237 = vmatprep.subr.bf16.mxu0 0
      %3238 = vmatpush1.bf16.xpose.msra.mxu0 0
      %3239 = vmatprep.subr.bf16.mxu0 0
      %3240 = vmatpush1.bf16.xpose.msra.mxu0 0
      %3241 = vmatprep.subr.bf16.mxu0 0
      %3242 = vmatpush1.bf16.xpose.msra.mxu0 0
      %3243 = vmatprep.subr.bf16.mxu0 0
      %3244 = vmatpush1.bf16.xpose.msra.mxu0 0
      %3245 = vmatprep.subr.bf16.mxu0 0
      %3246 = vmatpush1.bf16.xpose.msra.mxu0 0
      %3247 = vmatprep.mubr.bf16.mxu0 0
      %3248 = vmatmul.mubr.bf16.gmra.mrb[0].mxu0 %v3204
      %v3249 = vpop.f32.mrb[0].mxu0
      %v3250 = vadd.f32 0.0, %v3249
      %v3251 = vpop.f32.mrb[0].mxu0
      %v3252 = vpop.f32.mrb[0].mxu0
      %v3253 = vadd.f32 0.0, %v3252
      %v3254 = vpop.f32.mrb[0].mxu0
      %3255 = vmatprep.mubr.bf16.mxu0 0
      %3256 = vmatmul.mubr.bf16.gmra.mrb[0].mxu0 %v3207
      %v3257 = vpop.f32.mrb[0].mxu0
      %v3258 = vadd.f32 0.0, %v3257
      %v3259 = vpop.f32.mrb[0].mxu0
      %v3260 = vpop.f32.mrb[0].mxu0
      %v3261 = vpop.f32.mrb[0].mxu0
      %3262 = vdwg.mxu0
      %3263 = vrot.lane.b32.xlu0 %v1905, 64
      %v3264 = vpop.permute.xlu0 %3263
      %3265 = vrot.lane.b32.xlu0 %v1906, 64
      %v3266 = vpop.permute.xlu0 %3265
      %3267 = vrot.lane.b32.xlu0 %v1907, 64
      %v3268 = vpop.permute.xlu0 %3267
      %3269 = vrot.lane.b32.xlu0 %v1908, 64
      %v3270 = vpop.permute.xlu0 %3269
      %v3272 = vsel %vm1716, %v3264, 0
      %v3275 = vsel %vm1716, %v3266, 0
      %v3278 = vsel %vm1716, %v3268, 0
      %v3281 = vsel %vm1716, %v3270, 0
      %3283 = vmatprep.subr.bf16.mxu0 0
      %3284 = vmatpush1.bf16.xpose.msra.mxu0 %v3278
      %3285 = vmatprep.subr.bf16.mxu0 0
      %3286 = vmatpush1.bf16.xpose.msra.mxu0 %v3281
      %3287 = vmatprep.subr.bf16.mxu0 0
      %3288 = vmatpush1.bf16.xpose.msra.mxu0 0
      %3289 = vmatprep.subr.bf16.mxu0 0
      %3290 = vmatpush1.bf16.xpose.msra.mxu0 0
      %3291 = vmatprep.subr.bf16.mxu0 0
      %3292 = vmatpush1.bf16.xpose.msra.mxu0 0
      %3293 = vmatprep.subr.bf16.mxu0 0
      %3294 = vmatpush1.bf16.xpose.msra.mxu0 0
      %3295 = vmatprep.subr.bf16.mxu0 0
      %3296 = vmatpush1.bf16.xpose.msra.mxu0 0
      %3297 = vmatprep.subr.bf16.mxu0 0
      %3298 = vmatpush1.bf16.xpose.msra.mxu0 0
      %3299 = vmatprep.subr.bf16.mxu0 0
      %3300 = vmatpush1.bf16.xpose.msra.mxu0 0
      %3301 = vmatprep.subr.bf16.mxu0 0
      %3302 = vmatpush1.bf16.xpose.msra.mxu0 0
      %3303 = vmatprep.subr.bf16.mxu0 0
      %3304 = vmatpush1.bf16.xpose.msra.mxu0 0
      %3305 = vmatprep.subr.bf16.mxu0 0
      %3306 = vmatpush1.bf16.xpose.msra.mxu0 0
      %3307 = vmatprep.subr.bf16.mxu0 0
      %3308 = vmatpush1.bf16.xpose.msra.mxu0 0
      %3309 = vmatprep.subr.bf16.mxu0 0
      %3310 = vmatpush1.bf16.xpose.msra.mxu0 0
      %3311 = vmatprep.subr.bf16.mxu0 0
      %3312 = vmatpush1.bf16.xpose.msra.mxu0 0
      %3313 = vmatprep.subr.bf16.mxu0 0
      %3314 = vmatpush1.bf16.xpose.msra.mxu0 0
      %3315 = vmatprep.mubr.bf16.mxu0 0
      %3316 = vmatmul.mubr.bf16.gmra.mrb[0].mxu0 %v3272
      %v3317 = vpop.f32.mrb[0].mxu0
      %v3318 = vadd.f32 0.0, %v3317
      %v3319 = vpop.f32.mrb[0].mxu0
      %v3320 = vpop.f32.mrb[0].mxu0
      %v3321 = vadd.f32 0.0, %v3320
      %v3322 = vpop.f32.mrb[0].mxu0
      %3323 = vmatprep.mubr.bf16.mxu0 0
      %3324 = vmatmul.mubr.bf16.gmra.mrb[0].mxu0 %v3275
      %v3325 = vpop.f32.mrb[0].mxu0
      %v3326 = vadd.f32 0.0, %v3325
      %v3327 = vpop.f32.mrb[0].mxu0
      %v3328 = vpop.f32.mrb[0].mxu0
      %v3329 = vpop.f32.mrb[0].mxu0
      %3330 = vdwg.mxu0
      %v3331 = vmul.f32 %v3114, 0.17677669
      %v3332 = vmul.f32 %v3117, 0.17677669
      %v3333 = vmul.f32 %v3122, 0.17677669
      %v3334 = vmul.f32 %v3182, 0.17677669
      %v3335 = vmul.f32 %v3185, 0.17677669
      %v3336 = vmul.f32 %v3190, 0.17677669
      %v3337 = vmul.f32 %v3250, 0.17677669
      %v3338 = vmul.f32 %v3253, 0.17677669
      %v3339 = vmul.f32 %v3258, 0.17677669
      %v3340 = vmul.f32 %v3318, 0.17677669
      %v3341 = vmul.f32 %v3321, 0.17677669
      %v3342 = vmul.f32 %v3326, 0.17677669
      %v3343 = vadd.f32 %v3331, %v1111
      %v3344 = vadd.f32 %v3332, %v1111
      %v3345 = vadd.f32 %v3333, %v1111
      %v3346 = vadd.f32 %v3334, %v1111
      %v3347 = vadd.f32 %v3335, %v1111
      %v3348 = vadd.f32 %v3336, %v1111
      %v3349 = vadd.f32 %v3337, %v1111
      %v3350 = vadd.f32 %v3338, %v1111
      %v3351 = vadd.f32 %v3339, %v1111
      %v3352 = vadd.f32 %v3340, %v1111
      %v3353 = vadd.f32 %v3341, %v1111
      %v3354 = vadd.f32 %v3342, %v1111
      %v3355 = vsel %vm1993, %v3343, -inf
      %3356 = vmax.xlane.f32.xlu0 %v3355
      %v3357 = vpop.xlane.xlu0 %3356
      %v3358 = vsel %vm1993, %v3344, -inf
      %3359 = vmax.xlane.f32.xlu0 %v3358
      %v3360 = vpop.xlane.xlu0 %3359
      %v3361 = vsel %vm1993, %v3345, -inf
      %3362 = vmax.xlane.f32.xlu0 %v3361
      %v3363 = vpop.xlane.xlu0 %3362
      %v3364 = vsel %vm1993, %v3346, -inf
      %3365 = vmax.xlane.f32.xlu0 %v3364
      %v3366 = vpop.xlane.xlu0 %3365
      %v3367 = vsel %vm1993, %v3347, -inf
      %3368 = vmax.xlane.f32.xlu0 %v3367
      %v3369 = vpop.xlane.xlu0 %3368
      %v3370 = vsel %vm1993, %v3348, -inf
      %3371 = vmax.xlane.f32.xlu0 %v3370
      %v3372 = vpop.xlane.xlu0 %3371
      %v3373 = vsel %vm1993, %v3349, -inf
      %3374 = vmax.xlane.f32.xlu0 %v3373
      %v3375 = vpop.xlane.xlu0 %3374
      %v3376 = vsel %vm1993, %v3350, -inf
      %3377 = vmax.xlane.f32.xlu0 %v3376
      %v3378 = vpop.xlane.xlu0 %3377
      %v3379 = vsel %vm1993, %v3351, -inf
      %3380 = vmax.xlane.f32.xlu0 %v3379
      %v3381 = vpop.xlane.xlu0 %3380
      %v3382 = vsel %vm1993, %v3352, -inf
      %3383 = vmax.xlane.f32.xlu0 %v3382
      %v3384 = vpop.xlane.xlu0 %3383
      %v3385 = vsel %vm1993, %v3353, -inf
      %3386 = vmax.xlane.f32.xlu0 %v3385
      %v3387 = vpop.xlane.xlu0 %3386
      %v3388 = vsel %vm1993, %v3354, -inf
      %3389 = vmax.xlane.f32.xlu0 %v3388
      %v3390 = vpop.xlane.xlu0 %3389
      %v3391 = vsub.f32 %v3343, %v3357
      %v3392 = vsub.f32 %v3344, %v3360
      %v3393 = vsub.f32 %v3345, %v3363
      %v3394 = vsub.f32 %v3346, %v3366
      %v3395 = vsub.f32 %v3347, %v3369
      %v3396 = vsub.f32 %v3348, %v3372
      %v3397 = vsub.f32 %v3349, %v3375
      %v3398 = vsub.f32 %v3350, %v3378
      %v3399 = vsub.f32 %v3351, %v3381
      %v3400 = vsub.f32 %v3352, %v3384
      %v3401 = vsub.f32 %v3353, %v3387
      %v3402 = vsub.f32 %v3354, %v3390
      %v3403 = vmul.f32 %v3391, 1.442695
      %v3404 = vpow.pop %v3403
      %v3405 = vmul.f32 %v3392, 1.442695
      %v3406 = vpow.pop %v3405
      %v3407 = vmul.f32 %v3393, 1.442695
      %v3408 = vpow.pop %v3407
      %v3409 = vmul.f32 %v3394, 1.442695
      %v3410 = vpow.pop %v3409
      %v3411 = vmul.f32 %v3395, 1.442695
      %v3412 = vpow.pop %v3411
      %v3413 = vmul.f32 %v3396, 1.442695
      %v3414 = vpow.pop %v3413
      %v3415 = vmul.f32 %v3397, 1.442695
      %v3416 = vpow.pop %v3415
      %v3417 = vmul.f32 %v3398, 1.442695
      %v3418 = vpow.pop %v3417
      %v3419 = vmul.f32 %v3399, 1.442695
      %v3420 = vpow.pop %v3419
      %v3421 = vmul.f32 %v3400, 1.442695
      %v3422 = vpow.pop %v3421
      %v3423 = vmul.f32 %v3401, 1.442695
      %v3424 = vpow.pop %v3423
      %v3425 = vmul.f32 %v3402, 1.442695
      %v3426 = vpow.pop %v3425
      %v3427 = vsel %vm1993, %v3404, 0.0
      %3428 = vadd.xlane.f32.xlu0 %v3427
      %v3429 = vpop.xlane.xlu0 %3428
      %v3430 = vsel %vm1993, %v3406, 0.0
      %3431 = vadd.xlane.f32.xlu0 %v3430
      %v3432 = vpop.xlane.xlu0 %3431
      %v3433 = vsel %vm1993, %v3408, 0.0
      %3434 = vadd.xlane.f32.xlu0 %v3433
      %v3435 = vpop.xlane.xlu0 %3434
      %v3436 = vsel %vm1993, %v3410, 0.0
      %3437 = vadd.xlane.f32.xlu0 %v3436
      %v3438 = vpop.xlane.xlu0 %3437
      %v3439 = vsel %vm1993, %v3412, 0.0
      %3440 = vadd.xlane.f32.xlu0 %v3439
      %v3441 = vpop.xlane.xlu0 %3440
      %v3442 = vsel %vm1993, %v3414, 0.0
      %3443 = vadd.xlane.f32.xlu0 %v3442
      %v3444 = vpop.xlane.xlu0 %3443
      %v3445 = vsel %vm1993, %v3416, 0.0
      %3446 = vadd.xlane.f32.xlu0 %v3445
      %v3447 = vpop.xlane.xlu0 %3446
      %v3448 = vsel %vm1993, %v3418, 0.0
      %3449 = vadd.xlane.f32.xlu0 %v3448
      %v3450 = vpop.xlane.xlu0 %3449
      %v3451 = vsel %vm1993, %v3420, 0.0
      %3452 = vadd.xlane.f32.xlu0 %v3451
      %v3453 = vpop.xlane.xlu0 %3452
      %v3454 = vsel %vm1993, %v3422, 0.0
      %3455 = vadd.xlane.f32.xlu0 %v3454
      %v3456 = vpop.xlane.xlu0 %3455
      %v3457 = vsel %vm1993, %v3424, 0.0
      %3458 = vadd.xlane.f32.xlu0 %v3457
      %v3459 = vpop.xlane.xlu0 %3458
      %v3460 = vsel %vm1993, %v3426, 0.0
      %3461 = vadd.xlane.f32.xlu0 %v3460
      %v3462 = vpop.xlane.xlu0 %3461
      %v3463 = vrcp.pop %v3429
      %v3464 = vrcp.pop %v3432
      %v3465 = vrcp.pop %v3435
      %v3466 = vrcp.pop %v3438
      %v3467 = vrcp.pop %v3441
      %v3468 = vrcp.pop %v3444
      %v3469 = vrcp.pop %v3447
      %v3470 = vrcp.pop %v3450
      %v3471 = vrcp.pop %v3453
      %v3472 = vrcp.pop %v3456
      %v3473 = vrcp.pop %v3459
      %v3474 = vrcp.pop %v3462
      %v3475 = vmul.f32 %v3404, %v3463
      %v3476 = vmul.f32 %v3406, %v3464
      %v3477 = vmul.f32 %v3408, %v3465
      %v3478 = vmul.f32 %v3410, %v3466
      %v3479 = vmul.f32 %v3412, %v3467
      %v3480 = vmul.f32 %v3414, %v3468
      %v3481 = vmul.f32 %v3416, %v3469
      %v3482 = vmul.f32 %v3418, %v3470
      %v3483 = vmul.f32 %v3420, %v3471
      %v3484 = vmul.f32 %v3422, %v3472
      %v3485 = vmul.f32 %v3424, %v3473
      %v3486 = vmul.f32 %v3426, %v3474
      %v3487 = vpack.c.bf16 %v3476, %v3475
      %v3488 = vpack.c.bf16 %v3477, %v3477
      %v3489 = vpack.c.bf16 %v3479, %v3478
      %v3490 = vpack.c.bf16 %v3480, %v3480
      %v3491 = vpack.c.bf16 %v3482, %v3481
      %v3492 = vpack.c.bf16 %v3483, %v3483
      %v3493 = vpack.c.bf16 %v3485, %v3484
      %v3494 = vpack.c.bf16 %v3486, %v3486
      %3495 = vrot.lane.b32.xlu0 %v2134, 64
      %v3496 = vpop.permute.xlu0 %3495
      %3497 = vrot.lane.b32.xlu0 %v2135, 64
      %v3498 = vpop.permute.xlu0 %3497
      %v3501 = vsel %vm1993, %v3487, 0
      %v3504 = vsel %vm1993, %v3488, 0
      %v3507 = vsel %vm2143, %v3498, 0
      %3509 = vmatprep.subr.bf16.mxu0 0
      %3510 = vmatpush1.bf16.msra.mxu0 %v3496
      %3511 = vmatprep.subr.bf16.mxu0 0
      %3512 = vmatpush1.bf16.msra.mxu0 %v3507
      %3513 = vmatprep.subr.bf16.mxu0 0
      %3514 = vmatpush1.bf16.msra.mxu0 0
      %3515 = vmatprep.subr.bf16.mxu0 0
      %3516 = vmatpush1.bf16.msra.mxu0 0
      %3517 = vmatprep.subr.bf16.mxu0 0
      %3518 = vmatpush1.bf16.msra.mxu0 0
      %3519 = vmatprep.subr.bf16.mxu0 0
      %3520 = vmatpush1.bf16.msra.mxu0 0
      %3521 = vmatprep.subr.bf16.mxu0 0
      %3522 = vmatpush1.bf16.msra.mxu0 0
      %3523 = vmatprep.subr.bf16.mxu0 0
      %3524 = vmatpush1.bf16.msra.mxu0 0
      %3525 = vmatprep.subr.bf16.mxu0 0
      %3526 = vmatpush1.bf16.msra.mxu0 0
      %3527 = vmatprep.subr.bf16.mxu0 0
      %3528 = vmatpush1.bf16.msra.mxu0 0
      %3529 = vmatprep.subr.bf16.mxu0 0
      %3530 = vmatpush1.bf16.msra.mxu0 0
      %3531 = vmatprep.subr.bf16.mxu0 0
      %3532 = vmatpush1.bf16.msra.mxu0 0
      %3533 = vmatprep.subr.bf16.mxu0 0
      %3534 = vmatpush1.bf16.msra.mxu0 0
      %3535 = vmatprep.subr.bf16.mxu0 0
      %3536 = vmatpush1.bf16.msra.mxu0 0
      %3537 = vmatprep.subr.bf16.mxu0 0
      %3538 = vmatpush1.bf16.msra.mxu0 0
      %3539 = vmatprep.subr.bf16.mxu0 0
      %3540 = vmatpush1.bf16.msra.mxu0 0
      %3541 = vmatprep.mubr.bf16.mxu0 0
      %3542 = vmatmul.mubr.bf16.gmra.mrb[0].mxu0 %v3501
      %v3543 = vpop.f32.mrb[0].mxu0
      %v3544 = vadd.f32 0.0, %v3543
      %v3545 = vpop.f32.mrb[0].mxu0
      %v3546 = vpop.f32.mrb[0].mxu0
      %v3547 = vadd.f32 0.0, %v3546
      %v3548 = vpop.f32.mrb[0].mxu0
      %3549 = vmatprep.mubr.bf16.mxu0 0
      %3550 = vmatmul.mubr.bf16.gmra.mrb[0].mxu0 %v3504
      %v3551 = vpop.f32.mrb[0].mxu0
      %v3552 = vadd.f32 0.0, %v3551
      %v3553 = vpop.f32.mrb[0].mxu0
      %v3554 = vpop.f32.mrb[0].mxu0
      %v3555 = vpop.f32.mrb[0].mxu0
      %3556 = vdwg.mxu0
      %3557 = vrot.lane.b32.xlu0 %v2195, 64
      %v3558 = vpop.permute.xlu0 %3557
      %3559 = vrot.lane.b32.xlu0 %v2196, 64
      %v3560 = vpop.permute.xlu0 %3559
      %v3563 = vsel %vm1993, %v3489, 0
      %v3566 = vsel %vm1993, %v3490, 0
      %v3569 = vsel %vm2143, %v3560, 0
      %3571 = vmatprep.subr.bf16.mxu0 0
      %3572 = vmatpush1.bf16.msra.mxu0 %v3558
      %3573 = vmatprep.subr.bf16.mxu0 0
      %3574 = vmatpush1.bf16.msra.mxu0 %v3569
      %3575 = vmatprep.subr.bf16.mxu0 0
      %3576 = vmatpush1.bf16.msra.mxu0 0
      %3577 = vmatprep.subr.bf16.mxu0 0
      %3578 = vmatpush1.bf16.msra.mxu0 0
      %3579 = vmatprep.subr.bf16.mxu0 0
      %3580 = vmatpush1.bf16.msra.mxu0 0
      %3581 = vmatprep.subr.bf16.mxu0 0
      %3582 = vmatpush1.bf16.msra.mxu0 0
      %3583 = vmatprep.subr.bf16.mxu0 0
      %3584 = vmatpush1.bf16.msra.mxu0 0
      %3585 = vmatprep.subr.bf16.mxu0 0
      %3586 = vmatpush1.bf16.msra.mxu0 0
      %3587 = vmatprep.subr.bf16.mxu0 0
      %3588 = vmatpush1.bf16.msra.mxu0 0
      %3589 = vmatprep.subr.bf16.mxu0 0
      %3590 = vmatpush1.bf16.msra.mxu0 0
      %3591 = vmatprep.subr.bf16.mxu0 0
      %3592 = vmatpush1.bf16.msra.mxu0 0
      %3593 = vmatprep.subr.bf16.mxu0 0
      %3594 = vmatpush1.bf16.msra.mxu0 0
      %3595 = vmatprep.subr.bf16.mxu0 0
      %3596 = vmatpush1.bf16.msra.mxu0 0
      %3597 = vmatprep.subr.bf16.mxu0 0
      %3598 = vmatpush1.bf16.msra.mxu0 0
      %3599 = vmatprep.subr.bf16.mxu0 0
      %3600 = vmatpush1.bf16.msra.mxu0 0
      %3601 = vmatprep.subr.bf16.mxu0 0
      %3602 = vmatpush1.bf16.msra.mxu0 0
      %3603 = vmatprep.mubr.bf16.mxu0 0
      %3604 = vmatmul.mubr.bf16.gmra.mrb[0].mxu0 %v3563
      %v3605 = vpop.f32.mrb[0].mxu0
      %v3606 = vadd.f32 0.0, %v3605
      %v3607 = vpop.f32.mrb[0].mxu0
      %v3608 = vpop.f32.mrb[0].mxu0
      %v3609 = vadd.f32 0.0, %v3608
      %v3610 = vpop.f32.mrb[0].mxu0
      %3611 = vmatprep.mubr.bf16.mxu0 0
      %3612 = vmatmul.mubr.bf16.gmra.mrb[0].mxu0 %v3566
      %v3613 = vpop.f32.mrb[0].mxu0
      %v3614 = vadd.f32 0.0, %v3613
      %v3615 = vpop.f32.mrb[0].mxu0
      %v3616 = vpop.f32.mrb[0].mxu0
      %v3617 = vpop.f32.mrb[0].mxu0
      %3618 = vdwg.mxu0
      %3619 = vrot.lane.b32.xlu0 %v2255, 64
      %v3620 = vpop.permute.xlu0 %3619
      %3621 = vrot.lane.b32.xlu0 %v2256, 64
      %v3622 = vpop.permute.xlu0 %3621
      %v3625 = vsel %vm1993, %v3491, 0
      %v3628 = vsel %vm1993, %v3492, 0
      %v3631 = vsel %vm2143, %v3622, 0
      %3633 = vmatprep.subr.bf16.mxu0 0
      %3634 = vmatpush1.bf16.msra.mxu0 %v3620
      %3635 = vmatprep.subr.bf16.mxu0 0
      %3636 = vmatpush1.bf16.msra.mxu0 %v3631
      %3637 = vmatprep.subr.bf16.mxu0 0
      %3638 = vmatpush1.bf16.msra.mxu0 0
      %3639 = vmatprep.subr.bf16.mxu0 0
      %3640 = vmatpush1.bf16.msra.mxu0 0
      %3641 = vmatprep.subr.bf16.mxu0 0
      %3642 = vmatpush1.bf16.msra.mxu0 0
      %3643 = vmatprep.subr.bf16.mxu0 0
      %3644 = vmatpush1.bf16.msra.mxu0 0
      %3645 = vmatprep.subr.bf16.mxu0 0
      %3646 = vmatpush1.bf16.msra.mxu0 0
      %3647 = vmatprep.subr.bf16.mxu0 0
      %3648 = vmatpush1.bf16.msra.mxu0 0
      %3649 = vmatprep.subr.bf16.mxu0 0
      %3650 = vmatpush1.bf16.msra.mxu0 0
      %3651 = vmatprep.subr.bf16.mxu0 0
      %3652 = vmatpush1.bf16.msra.mxu0 0
      %3653 = vmatprep.subr.bf16.mxu0 0
      %3654 = vmatpush1.bf16.msra.mxu0 0
      %3655 = vmatprep.subr.bf16.mxu0 0
      %3656 = vmatpush1.bf16.msra.mxu0 0
      %3657 = vmatprep.subr.bf16.mxu0 0
      %3658 = vmatpush1.bf16.msra.mxu0 0
      %3659 = vmatprep.subr.bf16.mxu0 0
      %3660 = vmatpush1.bf16.msra.mxu0 0
      %3661 = vmatprep.subr.bf16.mxu0 0
      %3662 = vmatpush1.bf16.msra.mxu0 0
      %3663 = vmatprep.subr.bf16.mxu0 0
      %3664 = vmatpush1.bf16.msra.mxu0 0
      %3665 = vmatprep.mubr.bf16.mxu0 0
      %3666 = vmatmul.mubr.bf16.gmra.mrb[0].mxu0 %v3625
      %v3667 = vpop.f32.mrb[0].mxu0
      %v3668 = vadd.f32 0.0, %v3667
      %v3669 = vpop.f32.mrb[0].mxu0
      %v3670 = vpop.f32.mrb[0].mxu0
      %v3671 = vadd.f32 0.0, %v3670
      %v3672 = vpop.f32.mrb[0].mxu0
      %3673 = vmatprep.mubr.bf16.mxu0 0
      %3674 = vmatmul.mubr.bf16.gmra.mrb[0].mxu0 %v3628
      %v3675 = vpop.f32.mrb[0].mxu0
      %v3676 = vadd.f32 0.0, %v3675
      %v3677 = vpop.f32.mrb[0].mxu0
      %v3678 = vpop.f32.mrb[0].mxu0
      %v3679 = vpop.f32.mrb[0].mxu0
      %3680 = vdwg.mxu0
      %3681 = vrot.lane.b32.xlu0 %v2315, 64
      %v3682 = vpop.permute.xlu0 %3681
      %3683 = vrot.lane.b32.xlu0 %v2316, 64
      %v3684 = vpop.permute.xlu0 %3683
      %v3687 = vsel %vm1993, %v3493, 0
      %v3690 = vsel %vm1993, %v3494, 0
      %v3693 = vsel %vm2143, %v3684, 0
      %3695 = vmatprep.subr.bf16.mxu0 0
      %3696 = vmatpush1.bf16.msra.mxu0 %v3682
      %3697 = vmatprep.subr.bf16.mxu0 0
      %3698 = vmatpush1.bf16.msra.mxu0 %v3693
      %3699 = vmatprep.subr.bf16.mxu0 0
      %3700 = vmatpush1.bf16.msra.mxu0 0
      %3701 = vmatprep.subr.bf16.mxu0 0
      %3702 = vmatpush1.bf16.msra.mxu0 0
      %3703 = vmatprep.subr.bf16.mxu0 0
      %3704 = vmatpush1.bf16.msra.mxu0 0
      %3705 = vmatprep.subr.bf16.mxu0 0
      %3706 = vmatpush1.bf16.msra.mxu0 0
      %3707 = vmatprep.subr.bf16.mxu0 0
      %3708 = vmatpush1.bf16.msra.mxu0 0
      %3709 = vmatprep.subr.bf16.mxu0 0
      %3710 = vmatpush1.bf16.msra.mxu0 0
      %3711 = vmatprep.subr.bf16.mxu0 0
      %3712 = vmatpush1.bf16.msra.mxu0 0
      %3713 = vmatprep.subr.bf16.mxu0 0
      %3714 = vmatpush1.bf16.msra.mxu0 0
      %3715 = vmatprep.subr.bf16.mxu0 0
      %3716 = vmatpush1.bf16.msra.mxu0 0
      %3717 = vmatprep.subr.bf16.mxu0 0
      %3718 = vmatpush1.bf16.msra.mxu0 0
      %3719 = vmatprep.subr.bf16.mxu0 0
      %3720 = vmatpush1.bf16.msra.mxu0 0
      %3721 = vmatprep.subr.bf16.mxu0 0
      %3722 = vmatpush1.bf16.msra.mxu0 0
      %3723 = vmatprep.subr.bf16.mxu0 0
      %3724 = vmatpush1.bf16.msra.mxu0 0
      %3725 = vmatprep.subr.bf16.mxu0 0
      %3726 = vmatpush1.bf16.msra.mxu0 0
      %3727 = vmatprep.mubr.bf16.mxu0 0
      %3728 = vmatmul.mubr.bf16.gmra.mrb[0].mxu0 %v3687
      %v3729 = vpop.f32.mrb[0].mxu0
      %v3730 = vadd.f32 0.0, %v3729
      %v3731 = vpop.f32.mrb[0].mxu0
      %v3732 = vpop.f32.mrb[0].mxu0
      %v3733 = vadd.f32 0.0, %v3732
      %v3734 = vpop.f32.mrb[0].mxu0
      %3735 = vmatprep.mubr.bf16.mxu0 0
      %3736 = vmatmul.mubr.bf16.gmra.mrb[0].mxu0 %v3690
      %v3737 = vpop.f32.mrb[0].mxu0
      %v3738 = vadd.f32 0.0, %v3737
      %v3739 = vpop.f32.mrb[0].mxu0
      %v3740 = vpop.f32.mrb[0].mxu0
      %v3741 = vpop.f32.mrb[0].mxu0
      %3742 = vdwg.mxu0
      %3743 = vrot.lane.b32.xlu0 %v1712, 32
      %v3744 = vpop.permute.xlu0 %3743
      %3745 = vrot.lane.b32.xlu0 %v1713, 32
      %v3746 = vpop.permute.xlu0 %3745
      %3747 = vrot.lane.b32.xlu0 %v1714, 32
      %v3748 = vpop.permute.xlu0 %3747
      %3749 = vrot.lane.b32.xlu0 %v1715, 32
      %v3750 = vpop.permute.xlu0 %3749
      %v3752 = vsel %vm1716, %v3744, 0
      %v3755 = vsel %vm1716, %v3746, 0
      %v3758 = vsel %vm1716, %v3748, 0
      %v3761 = vsel %vm1716, %v3750, 0
      %3763 = vmatprep.subr.bf16.mxu0 0
      %3764 = vmatpush1.bf16.xpose.msra.mxu0 %v3758
      %3765 = vmatprep.subr.bf16.mxu0 0
      %3766 = vmatpush1.bf16.xpose.msra.mxu0 %v3761
      %3767 = vmatprep.subr.bf16.mxu0 0
      %3768 = vmatpush1.bf16.xpose.msra.mxu0 0
      %3769 = vmatprep.subr.bf16.mxu0 0
      %3770 = vmatpush1.bf16.xpose.msra.mxu0 0
      %3771 = vmatprep.subr.bf16.mxu0 0
      %3772 = vmatpush1.bf16.xpose.msra.mxu0 0
      %3773 = vmatprep.subr.bf16.mxu0 0
      %3774 = vmatpush1.bf16.xpose.msra.mxu0 0
      %3775 = vmatprep.subr.bf16.mxu0 0
      %3776 = vmatpush1.bf16.xpose.msra.mxu0 0
      %3777 = vmatprep.subr.bf16.mxu0 0
      %3778 = vmatpush1.bf16.xpose.msra.mxu0 0
      %3779 = vmatprep.subr.bf16.mxu0 0
      %3780 = vmatpush1.bf16.xpose.msra.mxu0 0
      %3781 = vmatprep.subr.bf16.mxu0 0
      %3782 = vmatpush1.bf16.xpose.msra.mxu0 0
      %3783 = vmatprep.subr.bf16.mxu0 0
      %3784 = vmatpush1.bf16.xpose.msra.mxu0 0
      %3785 = vmatprep.subr.bf16.mxu0 0
      %3786 = vmatpush1.bf16.xpose.msra.mxu0 0
      %3787 = vmatprep.subr.bf16.mxu0 0
      %3788 = vmatpush1.bf16.xpose.msra.mxu0 0
      %3789 = vmatprep.subr.bf16.mxu0 0
      %3790 = vmatpush1.bf16.xpose.msra.mxu0 0
      %3791 = vmatprep.subr.bf16.mxu0 0
      %3792 = vmatpush1.bf16.xpose.msra.mxu0 0
      %3793 = vmatprep.subr.bf16.mxu0 0
      %3794 = vmatpush1.bf16.xpose.msra.mxu0 0
      %3795 = vmatprep.mubr.bf16.mxu0 0
      %3796 = vmatmul.mubr.bf16.gmra.mrb[0].mxu0 %v3752
      %v3797 = vpop.f32.mrb[0].mxu0
      %v3798 = vadd.f32 0.0, %v3797
      %v3799 = vpop.f32.mrb[0].mxu0
      %v3800 = vpop.f32.mrb[0].mxu0
      %v3801 = vadd.f32 0.0, %v3800
      %v3802 = vpop.f32.mrb[0].mxu0
      %3803 = vmatprep.mubr.bf16.mxu0 0
      %3804 = vmatmul.mubr.bf16.gmra.mrb[0].mxu0 %v3755
      %v3805 = vpop.f32.mrb[0].mxu0
      %v3806 = vadd.f32 0.0, %v3805
      %v3807 = vpop.f32.mrb[0].mxu0
      %v3808 = vpop.f32.mrb[0].mxu0
      %v3809 = vpop.f32.mrb[0].mxu0
      %3810 = vdwg.mxu0
      %3811 = vrot.lane.b32.xlu0 %v1777, 32
      %v3812 = vpop.permute.xlu0 %3811
      %3813 = vrot.lane.b32.xlu0 %v1778, 32
      %v3814 = vpop.permute.xlu0 %3813
      %3815 = vrot.lane.b32.xlu0 %v1779, 32
      %v3816 = vpop.permute.xlu0 %3815
      %3817 = vrot.lane.b32.xlu0 %v1780, 32
      %v3818 = vpop.permute.xlu0 %3817
      %v3820 = vsel %vm1716, %v3812, 0
      %v3823 = vsel %vm1716, %v3814, 0
      %v3826 = vsel %vm1716, %v3816, 0
      %v3829 = vsel %vm1716, %v3818, 0
      %3831 = vmatprep.subr.bf16.mxu0 0
      %3832 = vmatpush1.bf16.xpose.msra.mxu0 %v3826
      %3833 = vmatprep.subr.bf16.mxu0 0
      %3834 = vmatpush1.bf16.xpose.msra.mxu0 %v3829
      %3835 = vmatprep.subr.bf16.mxu0 0
      %3836 = vmatpush1.bf16.xpose.msra.mxu0 0
      %3837 = vmatprep.subr.bf16.mxu0 0
      %3838 = vmatpush1.bf16.xpose.msra.mxu0 0
      %3839 = vmatprep.subr.bf16.mxu0 0
      %3840 = vmatpush1.bf16.xpose.msra.mxu0 0
      %3841 = vmatprep.subr.bf16.mxu0 0
      %3842 = vmatpush1.bf16.xpose.msra.mxu0 0
      %3843 = vmatprep.subr.bf16.mxu0 0
      %3844 = vmatpush1.bf16.xpose.msra.mxu0 0
      %3845 = vmatprep.subr.bf16.mxu0 0
      %3846 = vmatpush1.bf16.xpose.msra.mxu0 0
      %3847 = vmatprep.subr.bf16.mxu0 0
      %3848 = vmatpush1.bf16.xpose.msra.mxu0 0
      %3849 = vmatprep.subr.bf16.mxu0 0
      %3850 = vmatpush1.bf16.xpose.msra.mxu0 0
      %3851 = vmatprep.subr.bf16.mxu0 0
      %3852 = vmatpush1.bf16.xpose.msra.mxu0 0
      %3853 = vmatprep.subr.bf16.mxu0 0
      %3854 = vmatpush1.bf16.xpose.msra.mxu0 0
      %3855 = vmatprep.subr.bf16.mxu0 0
      %3856 = vmatpush1.bf16.xpose.msra.mxu0 0
      %3857 = vmatprep.subr.bf16.mxu0 0
      %3858 = vmatpush1.bf16.xpose.msra.mxu0 0
      %3859 = vmatprep.subr.bf16.mxu0 0
      %3860 = vmatpush1.bf16.xpose.msra.mxu0 0
      %3861 = vmatprep.subr.bf16.mxu0 0
      %3862 = vmatpush1.bf16.xpose.msra.mxu0 0
      %3863 = vmatprep.mubr.bf16.mxu0 0
      %3864 = vmatmul.mubr.bf16.gmra.mrb[0].mxu0 %v3820
      %v3865 = vpop.f32.mrb[0].mxu0
      %v3866 = vadd.f32 0.0, %v3865
      %v3867 = vpop.f32.mrb[0].mxu0
      %v3868 = vpop.f32.mrb[0].mxu0
      %v3869 = vadd.f32 0.0, %v3868
      %v3870 = vpop.f32.mrb[0].mxu0
      %3871 = vmatprep.mubr.bf16.mxu0 0
      %3872 = vmatmul.mubr.bf16.gmra.mrb[0].mxu0 %v3823
      %v3873 = vpop.f32.mrb[0].mxu0
      %v3874 = vadd.f32 0.0, %v3873
      %v3875 = vpop.f32.mrb[0].mxu0
      %v3876 = vpop.f32.mrb[0].mxu0
      %v3877 = vpop.f32.mrb[0].mxu0
      %3878 = vdwg.mxu0
      %3879 = vrot.lane.b32.xlu0 %v1841, 32
      %v3880 = vpop.permute.xlu0 %3879
      %3881 = vrot.lane.b32.xlu0 %v1842, 32
      %v3882 = vpop.permute.xlu0 %3881
      %3883 = vrot.lane.b32.xlu0 %v1843, 32
      %v3884 = vpop.permute.xlu0 %3883
      %3885 = vrot.lane.b32.xlu0 %v1844, 32
      %v3886 = vpop.permute.xlu0 %3885
      %v3888 = vsel %vm1716, %v3880, 0
      %v3891 = vsel %vm1716, %v3882, 0
      %v3894 = vsel %vm1716, %v3884, 0
      %v3897 = vsel %vm1716, %v3886, 0
      %3899 = vmatprep.subr.bf16.mxu0 0
      %3900 = vmatpush1.bf16.xpose.msra.mxu0 %v3894
      %3901 = vmatprep.subr.bf16.mxu0 0
      %3902 = vmatpush1.bf16.xpose.msra.mxu0 %v3897
      %3903 = vmatprep.subr.bf16.mxu0 0
      %3904 = vmatpush1.bf16.xpose.msra.mxu0 0
      %3905 = vmatprep.subr.bf16.mxu0 0
      %3906 = vmatpush1.bf16.xpose.msra.mxu0 0
      %3907 = vmatprep.subr.bf16.mxu0 0
      %3908 = vmatpush1.bf16.xpose.msra.mxu0 0
      %3909 = vmatprep.subr.bf16.mxu0 0
      %3910 = vmatpush1.bf16.xpose.msra.mxu0 0
      %3911 = vmatprep.subr.bf16.mxu0 0
      %3912 = vmatpush1.bf16.xpose.msra.mxu0 0
      %3913 = vmatprep.subr.bf16.mxu0 0
      %3914 = vmatpush1.bf16.xpose.msra.mxu0 0
      %3915 = vmatprep.subr.bf16.mxu0 0
      %3916 = vmatpush1.bf16.xpose.msra.mxu0 0
      %3917 = vmatprep.subr.bf16.mxu0 0
      %3918 = vmatpush1.bf16.xpose.msra.mxu0 0
      %3919 = vmatprep.subr.bf16.mxu0 0
      %3920 = vmatpush1.bf16.xpose.msra.mxu0 0
      %3921 = vmatprep.subr.bf16.mxu0 0
      %3922 = vmatpush1.bf16.xpose.msra.mxu0 0
      %3923 = vmatprep.subr.bf16.mxu0 0
      %3924 = vmatpush1.bf16.xpose.msra.mxu0 0
      %3925 = vmatprep.subr.bf16.mxu0 0
      %3926 = vmatpush1.bf16.xpose.msra.mxu0 0
      %3927 = vmatprep.subr.bf16.mxu0 0
      %3928 = vmatpush1.bf16.xpose.msra.mxu0 0
      %3929 = vmatprep.subr.bf16.mxu0 0
      %3930 = vmatpush1.bf16.xpose.msra.mxu0 0
      %3931 = vmatprep.mubr.bf16.mxu0 0
      %3932 = vmatmul.mubr.bf16.gmra.mrb[0].mxu0 %v3888
      %v3933 = vpop.f32.mrb[0].mxu0
      %v3934 = vadd.f32 0.0, %v3933
      %v3935 = vpop.f32.mrb[0].mxu0
      %v3936 = vpop.f32.mrb[0].mxu0
      %v3937 = vadd.f32 0.0, %v3936
      %v3938 = vpop.f32.mrb[0].mxu0
      %3939 = vmatprep.mubr.bf16.mxu0 0
      %3940 = vmatmul.mubr.bf16.gmra.mrb[0].mxu0 %v3891
      %v3941 = vpop.f32.mrb[0].mxu0
      %v3942 = vadd.f32 0.0, %v3941
      %v3943 = vpop.f32.mrb[0].mxu0
      %v3944 = vpop.f32.mrb[0].mxu0
      %v3945 = vpop.f32.mrb[0].mxu0
      %3946 = vdwg.mxu0
      %3947 = vrot.lane.b32.xlu0 %v1905, 32
      %v3948 = vpop.permute.xlu0 %3947
      %3949 = vrot.lane.b32.xlu0 %v1906, 32
      %v3950 = vpop.permute.xlu0 %3949
      %3951 = vrot.lane.b32.xlu0 %v1907, 32
      %v3952 = vpop.permute.xlu0 %3951
      %3953 = vrot.lane.b32.xlu0 %v1908, 32
      %v3954 = vpop.permute.xlu0 %3953
      %v3956 = vsel %vm1716, %v3948, 0
      %v3959 = vsel %vm1716, %v3950, 0
      %v3962 = vsel %vm1716, %v3952, 0
      %v3965 = vsel %vm1716, %v3954, 0
      %3967 = vmatprep.subr.bf16.mxu0 0
      %3968 = vmatpush1.bf16.xpose.msra.mxu0 %v3962
      %3969 = vmatprep.subr.bf16.mxu0 0
      %3970 = vmatpush1.bf16.xpose.msra.mxu0 %v3965
      %3971 = vmatprep.subr.bf16.mxu0 0
      %3972 = vmatpush1.bf16.xpose.msra.mxu0 0
      %3973 = vmatprep.subr.bf16.mxu0 0
      %3974 = vmatpush1.bf16.xpose.msra.mxu0 0
      %3975 = vmatprep.subr.bf16.mxu0 0
      %3976 = vmatpush1.bf16.xpose.msra.mxu0 0
      %3977 = vmatprep.subr.bf16.mxu0 0
      %3978 = vmatpush1.bf16.xpose.msra.mxu0 0
      %3979 = vmatprep.subr.bf16.mxu0 0
      %3980 = vmatpush1.bf16.xpose.msra.mxu0 0
      %3981 = vmatprep.subr.bf16.mxu0 0
      %3982 = vmatpush1.bf16.xpose.msra.mxu0 0
      %3983 = vmatprep.subr.bf16.mxu0 0
      %3984 = vmatpush1.bf16.xpose.msra.mxu0 0
      %3985 = vmatprep.subr.bf16.mxu0 0
      %3986 = vmatpush1.bf16.xpose.msra.mxu0 0
      %3987 = vmatprep.subr.bf16.mxu0 0
      %3988 = vmatpush1.bf16.xpose.msra.mxu0 0
      %3989 = vmatprep.subr.bf16.mxu0 0
      %3990 = vmatpush1.bf16.xpose.msra.mxu0 0
      %3991 = vmatprep.subr.bf16.mxu0 0
      %3992 = vmatpush1.bf16.xpose.msra.mxu0 0
      %3993 = vmatprep.subr.bf16.mxu0 0
      %3994 = vmatpush1.bf16.xpose.msra.mxu0 0
      %3995 = vmatprep.subr.bf16.mxu0 0
      %3996 = vmatpush1.bf16.xpose.msra.mxu0 0
      %3997 = vmatprep.subr.bf16.mxu0 0
      %3998 = vmatpush1.bf16.xpose.msra.mxu0 0
      %3999 = vmatprep.mubr.bf16.mxu0 0
      %4000 = vmatmul.mubr.bf16.gmra.mrb[0].mxu0 %v3956
      %v4001 = vpop.f32.mrb[0].mxu0
      %v4002 = vadd.f32 0.0, %v4001
      %v4003 = vpop.f32.mrb[0].mxu0
      %v4004 = vpop.f32.mrb[0].mxu0
      %v4005 = vadd.f32 0.0, %v4004
      %v4006 = vpop.f32.mrb[0].mxu0
      %4007 = vmatprep.mubr.bf16.mxu0 0
      %4008 = vmatmul.mubr.bf16.gmra.mrb[0].mxu0 %v3959
      %v4009 = vpop.f32.mrb[0].mxu0
      %v4010 = vadd.f32 0.0, %v4009
      %v4011 = vpop.f32.mrb[0].mxu0
      %v4012 = vpop.f32.mrb[0].mxu0
      %v4013 = vpop.f32.mrb[0].mxu0
      %4014 = vdwg.mxu0
      %v4015 = vmul.f32 %v3798, 0.17677669
      %v4016 = vmul.f32 %v3801, 0.17677669
      %v4017 = vmul.f32 %v3806, 0.17677669
      %v4018 = vmul.f32 %v3866, 0.17677669
      %v4019 = vmul.f32 %v3869, 0.17677669
      %v4020 = vmul.f32 %v3874, 0.17677669
      %v4021 = vmul.f32 %v3934, 0.17677669
      %v4022 = vmul.f32 %v3937, 0.17677669
      %v4023 = vmul.f32 %v3942, 0.17677669
      %v4024 = vmul.f32 %v4002, 0.17677669
      %v4025 = vmul.f32 %v4005, 0.17677669
      %v4026 = vmul.f32 %v4010, 0.17677669
      %v4027 = vadd.f32 %v4015, %v1111
      %v4028 = vadd.f32 %v4016, %v1111
      %v4029 = vadd.f32 %v4017, %v1111
      %v4030 = vadd.f32 %v4018, %v1111
      %v4031 = vadd.f32 %v4019, %v1111
      %v4032 = vadd.f32 %v4020, %v1111
      %v4033 = vadd.f32 %v4021, %v1111
      %v4034 = vadd.f32 %v4022, %v1111
      %v4035 = vadd.f32 %v4023, %v1111
      %v4036 = vadd.f32 %v4024, %v1111
      %v4037 = vadd.f32 %v4025, %v1111
      %v4038 = vadd.f32 %v4026, %v1111
      %v4039 = vsel %vm1993, %v4027, -inf
      %4040 = vmax.xlane.f32.xlu0 %v4039
      %v4041 = vpop.xlane.xlu0 %4040
      %v4042 = vsel %vm1993, %v4028, -inf
      %4043 = vmax.xlane.f32.xlu0 %v4042
      %v4044 = vpop.xlane.xlu0 %4043
      %v4045 = vsel %vm1993, %v4029, -inf
      %4046 = vmax.xlane.f32.xlu0 %v4045
      %v4047 = vpop.xlane.xlu0 %4046
      %v4048 = vsel %vm1993, %v4030, -inf
      %4049 = vmax.xlane.f32.xlu0 %v4048
      %v4050 = vpop.xlane.xlu0 %4049
      %v4051 = vsel %vm1993, %v4031, -inf
      %4052 = vmax.xlane.f32.xlu0 %v4051
      %v4053 = vpop.xlane.xlu0 %4052
      %v4054 = vsel %vm1993, %v4032, -inf
      %4055 = vmax.xlane.f32.xlu0 %v4054
      %v4056 = vpop.xlane.xlu0 %4055
      %v4057 = vsel %vm1993, %v4033, -inf
      %4058 = vmax.xlane.f32.xlu0 %v4057
      %v4059 = vpop.xlane.xlu0 %4058
      %v4060 = vsel %vm1993, %v4034, -inf
      %4061 = vmax.xlane.f32.xlu0 %v4060
      %v4062 = vpop.xlane.xlu0 %4061
      %v4063 = vsel %vm1993, %v4035, -inf
      %4064 = vmax.xlane.f32.xlu0 %v4063
      %v4065 = vpop.xlane.xlu0 %4064
      %v4066 = vsel %vm1993, %v4036, -inf
      %4067 = vmax.xlane.f32.xlu0 %v4066
      %v4068 = vpop.xlane.xlu0 %4067
      %v4069 = vsel %vm1993, %v4037, -inf
      %4070 = vmax.xlane.f32.xlu0 %v4069
      %v4071 = vpop.xlane.xlu0 %4070
      %v4072 = vsel %vm1993, %v4038, -inf
      %4073 = vmax.xlane.f32.xlu0 %v4072
      %v4074 = vpop.xlane.xlu0 %4073
      %v4075 = vsub.f32 %v4027, %v4041
      %v4076 = vsub.f32 %v4028, %v4044
      %v4077 = vsub.f32 %v4029, %v4047
      %v4078 = vsub.f32 %v4030, %v4050
      %v4079 = vsub.f32 %v4031, %v4053
      %v4080 = vsub.f32 %v4032, %v4056
      %v4081 = vsub.f32 %v4033, %v4059
      %v4082 = vsub.f32 %v4034, %v4062
      %v4083 = vsub.f32 %v4035, %v4065
      %v4084 = vsub.f32 %v4036, %v4068
      %v4085 = vsub.f32 %v4037, %v4071
      %v4086 = vsub.f32 %v4038, %v4074
      %v4087 = vmul.f32 %v4075, 1.442695
      %v4088 = vpow.pop %v4087
      %v4089 = vmul.f32 %v4076, 1.442695
      %v4090 = vpow.pop %v4089
      %v4091 = vmul.f32 %v4077, 1.442695
      %v4092 = vpow.pop %v4091
      %v4093 = vmul.f32 %v4078, 1.442695
      %v4094 = vpow.pop %v4093
      %v4095 = vmul.f32 %v4079, 1.442695
      %v4096 = vpow.pop %v4095
      %v4097 = vmul.f32 %v4080, 1.442695
      %v4098 = vpow.pop %v4097
      %v4099 = vmul.f32 %v4081, 1.442695
      %v4100 = vpow.pop %v4099
      %v4101 = vmul.f32 %v4082, 1.442695
      %v4102 = vpow.pop %v4101
      %v4103 = vmul.f32 %v4083, 1.442695
      %v4104 = vpow.pop %v4103
      %v4105 = vmul.f32 %v4084, 1.442695
      %v4106 = vpow.pop %v4105
      %v4107 = vmul.f32 %v4085, 1.442695
      %v4108 = vpow.pop %v4107
      %v4109 = vmul.f32 %v4086, 1.442695
      %v4110 = vpow.pop %v4109
      %v4111 = vsel %vm1993, %v4088, 0.0
      %4112 = vadd.xlane.f32.xlu0 %v4111
      %v4113 = vpop.xlane.xlu0 %4112
      %v4114 = vsel %vm1993, %v4090, 0.0
      %4115 = vadd.xlane.f32.xlu0 %v4114
      %v4116 = vpop.xlane.xlu0 %4115
      %v4117 = vsel %vm1993, %v4092, 0.0
      %4118 = vadd.xlane.f32.xlu0 %v4117
      %v4119 = vpop.xlane.xlu0 %4118
      %v4120 = vsel %vm1993, %v4094, 0.0
      %4121 = vadd.xlane.f32.xlu0 %v4120
      %v4122 = vpop.xlane.xlu0 %4121
      %v4123 = vsel %vm1993, %v4096, 0.0
      %4124 = vadd.xlane.f32.xlu0 %v4123
      %v4125 = vpop.xlane.xlu0 %4124
      %v4126 = vsel %vm1993, %v4098, 0.0
      %4127 = vadd.xlane.f32.xlu0 %v4126
      %v4128 = vpop.xlane.xlu0 %4127
      %v4129 = vsel %vm1993, %v4100, 0.0
      %4130 = vadd.xlane.f32.xlu0 %v4129
      %v4131 = vpop.xlane.xlu0 %4130
      %v4132 = vsel %vm1993, %v4102, 0.0
      %4133 = vadd.xlane.f32.xlu0 %v4132
      %v4134 = vpop.xlane.xlu0 %4133
      %v4135 = vsel %vm1993, %v4104, 0.0
      %4136 = vadd.xlane.f32.xlu0 %v4135
      %v4137 = vpop.xlane.xlu0 %4136
      %v4138 = vsel %vm1993, %v4106, 0.0
      %4139 = vadd.xlane.f32.xlu0 %v4138
      %v4140 = vpop.xlane.xlu0 %4139
      %v4141 = vsel %vm1993, %v4108, 0.0
      %4142 = vadd.xlane.f32.xlu0 %v4141
      %v4143 = vpop.xlane.xlu0 %4142
      %v4144 = vsel %vm1993, %v4110, 0.0
      %4145 = vadd.xlane.f32.xlu0 %v4144
      %v4146 = vpop.xlane.xlu0 %4145
      %v4147 = vrcp.pop %v4113
      %v4148 = vrcp.pop %v4116
      %v4149 = vrcp.pop %v4119
      %v4150 = vrcp.pop %v4122
      %v4151 = vrcp.pop %v4125
      %v4152 = vrcp.pop %v4128
      %v4153 = vrcp.pop %v4131
      %v4154 = vrcp.pop %v4134
      %v4155 = vrcp.pop %v4137
      %v4156 = vrcp.pop %v4140
      %v4157 = vrcp.pop %v4143
      %v4158 = vrcp.pop %v4146
      %v4159 = vmul.f32 %v4088, %v4147
      %v4160 = vmul.f32 %v4090, %v4148
      %v4161 = vmul.f32 %v4092, %v4149
      %v4162 = vmul.f32 %v4094, %v4150
      %v4163 = vmul.f32 %v4096, %v4151
      %v4164 = vmul.f32 %v4098, %v4152
      %v4165 = vmul.f32 %v4100, %v4153
      %v4166 = vmul.f32 %v4102, %v4154
      %v4167 = vmul.f32 %v4104, %v4155
      %v4168 = vmul.f32 %v4106, %v4156
      %v4169 = vmul.f32 %v4108, %v4157
      %v4170 = vmul.f32 %v4110, %v4158
      %v4171 = vpack.c.bf16 %v4160, %v4159
      %v4172 = vpack.c.bf16 %v4161, %v4161
      %v4173 = vpack.c.bf16 %v4163, %v4162
      %v4174 = vpack.c.bf16 %v4164, %v4164
      %v4175 = vpack.c.bf16 %v4166, %v4165
      %v4176 = vpack.c.bf16 %v4167, %v4167
      %v4177 = vpack.c.bf16 %v4169, %v4168
      %v4178 = vpack.c.bf16 %v4170, %v4170
      %4179 = vrot.lane.b32.xlu0 %v2134, 32
      %v4180 = vpop.permute.xlu0 %4179
      %4181 = vrot.lane.b32.xlu0 %v2135, 32
      %v4182 = vpop.permute.xlu0 %4181
      %v4185 = vsel %vm1993, %v4171, 0
      %v4188 = vsel %vm1993, %v4172, 0
      %v4191 = vsel %vm2143, %v4182, 0
      %4193 = vmatprep.subr.bf16.mxu0 0
      %4194 = vmatpush1.bf16.msra.mxu0 %v4180
      %4195 = vmatprep.subr.bf16.mxu0 0
      %4196 = vmatpush1.bf16.msra.mxu0 %v4191
      %4197 = vmatprep.subr.bf16.mxu0 0
      %4198 = vmatpush1.bf16.msra.mxu0 0
      %4199 = vmatprep.subr.bf16.mxu0 0
      %4200 = vmatpush1.bf16.msra.mxu0 0
      %4201 = vmatprep.subr.bf16.mxu0 0
      %4202 = vmatpush1.bf16.msra.mxu0 0
      %4203 = vmatprep.subr.bf16.mxu0 0
      %4204 = vmatpush1.bf16.msra.mxu0 0
      %4205 = vmatprep.subr.bf16.mxu0 0
      %4206 = vmatpush1.bf16.msra.mxu0 0
      %4207 = vmatprep.subr.bf16.mxu0 0
      %4208 = vmatpush1.bf16.msra.mxu0 0
      %4209 = vmatprep.subr.bf16.mxu0 0
      %4210 = vmatpush1.bf16.msra.mxu0 0
      %4211 = vmatprep.subr.bf16.mxu0 0
      %4212 = vmatpush1.bf16.msra.mxu0 0
      %4213 = vmatprep.subr.bf16.mxu0 0
      %4214 = vmatpush1.bf16.msra.mxu0 0
      %4215 = vmatprep.subr.bf16.mxu0 0
      %4216 = vmatpush1.bf16.msra.mxu0 0
      %4217 = vmatprep.subr.bf16.mxu0 0
      %4218 = vmatpush1.bf16.msra.mxu0 0
      %4219 = vmatprep.subr.bf16.mxu0 0
      %4220 = vmatpush1.bf16.msra.mxu0 0
      %4221 = vmatprep.subr.bf16.mxu0 0
      %4222 = vmatpush1.bf16.msra.mxu0 0
      %4223 = vmatprep.subr.bf16.mxu0 0
      %4224 = vmatpush1.bf16.msra.mxu0 0
      %4225 = vmatprep.mubr.bf16.mxu0 0
      %4226 = vmatmul.mubr.bf16.gmra.mrb[0].mxu0 %v4185
      %v4227 = vpop.f32.mrb[0].mxu0
      %v4228 = vadd.f32 0.0, %v4227
      %v4229 = vpop.f32.mrb[0].mxu0
      %v4230 = vpop.f32.mrb[0].mxu0
      %v4231 = vadd.f32 0.0, %v4230
      %v4232 = vpop.f32.mrb[0].mxu0
      %4233 = vmatprep.mubr.bf16.mxu0 0
      %4234 = vmatmul.mubr.bf16.gmra.mrb[0].mxu0 %v4188
      %v4235 = vpop.f32.mrb[0].mxu0
      %v4236 = vadd.f32 0.0, %v4235
      %v4237 = vpop.f32.mrb[0].mxu0
      %v4238 = vpop.f32.mrb[0].mxu0
      %v4239 = vpop.f32.mrb[0].mxu0
      %4240 = vdwg.mxu0
      %4241 = vrot.lane.b32.xlu0 %v2195, 32
      %v4242 = vpop.permute.xlu0 %4241
      %4243 = vrot.lane.b32.xlu0 %v2196, 32
      %v4244 = vpop.permute.xlu0 %4243
      %v4247 = vsel %vm1993, %v4173, 0
      %v4250 = vsel %vm1993, %v4174, 0
      %v4253 = vsel %vm2143, %v4244, 0
      %4255 = vmatprep.subr.bf16.mxu0 0
      %4256 = vmatpush1.bf16.msra.mxu0 %v4242
      %4257 = vmatprep.subr.bf16.mxu0 0
      %4258 = vmatpush1.bf16.msra.mxu0 %v4253
      %4259 = vmatprep.subr.bf16.mxu0 0
      %4260 = vmatpush1.bf16.msra.mxu0 0
      %4261 = vmatprep.subr.bf16.mxu0 0
      %4262 = vmatpush1.bf16.msra.mxu0 0
      %4263 = vmatprep.subr.bf16.mxu0 0
      %4264 = vmatpush1.bf16.msra.mxu0 0
      %4265 = vmatprep.subr.bf16.mxu0 0
      %4266 = vmatpush1.bf16.msra.mxu0 0
      %4267 = vmatprep.subr.bf16.mxu0 0
      %4268 = vmatpush1.bf16.msra.mxu0 0
      %4269 = vmatprep.subr.bf16.mxu0 0
      %4270 = vmatpush1.bf16.msra.mxu0 0
      %4271 = vmatprep.subr.bf16.mxu0 0
      %4272 = vmatpush1.bf16.msra.mxu0 0
      %4273 = vmatprep.subr.bf16.mxu0 0
      %4274 = vmatpush1.bf16.msra.mxu0 0
      %4275 = vmatprep.subr.bf16.mxu0 0
      %4276 = vmatpush1.bf16.msra.mxu0 0
      %4277 = vmatprep.subr.bf16.mxu0 0
      %4278 = vmatpush1.bf16.msra.mxu0 0
      %4279 = vmatprep.subr.bf16.mxu0 0
      %4280 = vmatpush1.bf16.msra.mxu0 0
      %4281 = vmatprep.subr.bf16.mxu0 0
      %4282 = vmatpush1.bf16.msra.mxu0 0
      %4283 = vmatprep.subr.bf16.mxu0 0
      %4284 = vmatpush1.bf16.msra.mxu0 0
      %4285 = vmatprep.subr.bf16.mxu0 0
      %4286 = vmatpush1.bf16.msra.mxu0 0
      %4287 = vmatprep.mubr.bf16.mxu0 0
      %4288 = vmatmul.mubr.bf16.gmra.mrb[0].mxu0 %v4247
      %v4289 = vpop.f32.mrb[0].mxu0
      %v4290 = vadd.f32 0.0, %v4289
      %v4291 = vpop.f32.mrb[0].mxu0
      %v4292 = vpop.f32.mrb[0].mxu0
      %v4293 = vadd.f32 0.0, %v4292
      %v4294 = vpop.f32.mrb[0].mxu0
      %4295 = vmatprep.mubr.bf16.mxu0 0
      %4296 = vmatmul.mubr.bf16.gmra.mrb[0].mxu0 %v4250
      %v4297 = vpop.f32.mrb[0].mxu0
      %v4298 = vadd.f32 0.0, %v4297
      %v4299 = vpop.f32.mrb[0].mxu0
      %v4300 = vpop.f32.mrb[0].mxu0
      %v4301 = vpop.f32.mrb[0].mxu0
      %4302 = vdwg.mxu0
      %4303 = vrot.lane.b32.xlu0 %v2255, 32
      %v4304 = vpop.permute.xlu0 %4303
      %4305 = vrot.lane.b32.xlu0 %v2256, 32
      %v4306 = vpop.permute.xlu0 %4305
      %v4309 = vsel %vm1993, %v4175, 0
      %v4312 = vsel %vm1993, %v4176, 0
      %v4315 = vsel %vm2143, %v4306, 0
      %4317 = vmatprep.subr.bf16.mxu0 0
      %4318 = vmatpush1.bf16.msra.mxu0 %v4304
      %4319 = vmatprep.subr.bf16.mxu0 0
      %4320 = vmatpush1.bf16.msra.mxu0 %v4315
      %4321 = vmatprep.subr.bf16.mxu0 0
      %4322 = vmatpush1.bf16.msra.mxu0 0
      %4323 = vmatprep.subr.bf16.mxu0 0
      %4324 = vmatpush1.bf16.msra.mxu0 0
      %4325 = vmatprep.subr.bf16.mxu0 0
      %4326 = vmatpush1.bf16.msra.mxu0 0
      %4327 = vmatprep.subr.bf16.mxu0 0
      %4328 = vmatpush1.bf16.msra.mxu0 0
      %4329 = vmatprep.subr.bf16.mxu0 0
      %4330 = vmatpush1.bf16.msra.mxu0 0
      %4331 = vmatprep.subr.bf16.mxu0 0
      %4332 = vmatpush1.bf16.msra.mxu0 0
      %4333 = vmatprep.subr.bf16.mxu0 0
      %4334 = vmatpush1.bf16.msra.mxu0 0
      %4335 = vmatprep.subr.bf16.mxu0 0
      %4336 = vmatpush1.bf16.msra.mxu0 0
      %4337 = vmatprep.subr.bf16.mxu0 0
      %4338 = vmatpush1.bf16.msra.mxu0 0
      %4339 = vmatprep.subr.bf16.mxu0 0
      %4340 = vmatpush1.bf16.msra.mxu0 0
      %4341 = vmatprep.subr.bf16.mxu0 0
      %4342 = vmatpush1.bf16.msra.mxu0 0
      %4343 = vmatprep.subr.bf16.mxu0 0
      %4344 = vmatpush1.bf16.msra.mxu0 0
      %4345 = vmatprep.subr.bf16.mxu0 0
      %4346 = vmatpush1.bf16.msra.mxu0 0
      %4347 = vmatprep.subr.bf16.mxu0 0
      %4348 = vmatpush1.bf16.msra.mxu0 0
      %4349 = vmatprep.mubr.bf16.mxu0 0
      %4350 = vmatmul.mubr.bf16.gmra.mrb[0].mxu0 %v4309
      %v4351 = vpop.f32.mrb[0].mxu0
      %v4352 = vadd.f32 0.0, %v4351
      %v4353 = vpop.f32.mrb[0].mxu0
      %v4354 = vpop.f32.mrb[0].mxu0
      %v4355 = vadd.f32 0.0, %v4354
      %v4356 = vpop.f32.mrb[0].mxu0
      %4357 = vmatprep.mubr.bf16.mxu0 0
      %4358 = vmatmul.mubr.bf16.gmra.mrb[0].mxu0 %v4312
      %v4359 = vpop.f32.mrb[0].mxu0
      %v4360 = vadd.f32 0.0, %v4359
      %v4361 = vpop.f32.mrb[0].mxu0
      %v4362 = vpop.f32.mrb[0].mxu0
      %v4363 = vpop.f32.mrb[0].mxu0
      %4364 = vdwg.mxu0
      %4365 = vrot.lane.b32.xlu0 %v2315, 32
      %v4366 = vpop.permute.xlu0 %4365
      %4367 = vrot.lane.b32.xlu0 %v2316, 32
      %v4368 = vpop.permute.xlu0 %4367
      %v4371 = vsel %vm1993, %v4177, 0
      %v4374 = vsel %vm1993, %v4178, 0
      %v4377 = vsel %vm2143, %v4368, 0
      %4379 = vmatprep.subr.bf16.mxu0 0
      %4380 = vmatpush1.bf16.msra.mxu0 %v4366
      %4381 = vmatprep.subr.bf16.mxu0 0
      %4382 = vmatpush1.bf16.msra.mxu0 %v4377
      %4383 = vmatprep.subr.bf16.mxu0 0
      %4384 = vmatpush1.bf16.msra.mxu0 0
      %4385 = vmatprep.subr.bf16.mxu0 0
      %4386 = vmatpush1.bf16.msra.mxu0 0
      %4387 = vmatprep.subr.bf16.mxu0 0
      %4388 = vmatpush1.bf16.msra.mxu0 0
      %4389 = vmatprep.subr.bf16.mxu0 0
      %4390 = vmatpush1.bf16.msra.mxu0 0
      %4391 = vmatprep.subr.bf16.mxu0 0
      %4392 = vmatpush1.bf16.msra.mxu0 0
      %4393 = vmatprep.subr.bf16.mxu0 0
      %4394 = vmatpush1.bf16.msra.mxu0 0
      %4395 = vmatprep.subr.bf16.mxu0 0
      %4396 = vmatpush1.bf16.msra.mxu0 0
      %4397 = vmatprep.subr.bf16.mxu0 0
      %4398 = vmatpush1.bf16.msra.mxu0 0
      %4399 = vmatprep.subr.bf16.mxu0 0
      %4400 = vmatpush1.bf16.msra.mxu0 0
      %4401 = vmatprep.subr.bf16.mxu0 0
      %4402 = vmatpush1.bf16.msra.mxu0 0
      %4403 = vmatprep.subr.bf16.mxu0 0
      %4404 = vmatpush1.bf16.msra.mxu0 0
      %4405 = vmatprep.subr.bf16.mxu0 0
      %4406 = vmatpush1.bf16.msra.mxu0 0
      %4407 = vmatprep.subr.bf16.mxu0 0
      %4408 = vmatpush1.bf16.msra.mxu0 0
      %4409 = vmatprep.subr.bf16.mxu0 0
      %4410 = vmatpush1.bf16.msra.mxu0 0
      %4411 = vmatprep.mubr.bf16.mxu0 0
      %4412 = vmatmul.mubr.bf16.gmra.mrb[0].mxu0 %v4371
      %v4413 = vpop.f32.mrb[0].mxu0
      %v4414 = vadd.f32 0.0, %v4413
      %v4415 = vpop.f32.mrb[0].mxu0
      %v4416 = vpop.f32.mrb[0].mxu0
      %v4417 = vadd.f32 0.0, %v4416
      %v4418 = vpop.f32.mrb[0].mxu0
      %4419 = vmatprep.mubr.bf16.mxu0 0
      %4420 = vmatmul.mubr.bf16.gmra.mrb[0].mxu0 %v4374
      %v4421 = vpop.f32.mrb[0].mxu0
      %v4422 = vadd.f32 0.0, %v4421
      %v4423 = vpop.f32.mrb[0].mxu0
      %v4424 = vpop.f32.mrb[0].mxu0
      %v4425 = vpop.f32.mrb[0].mxu0
      %4426 = vdwg.mxu0
      %4439 = vrot.lane.b32.xlu0 %v2860, 32
      %v4440 = vpop.permute.xlu0 %4439
      %4441 = vrot.lane.b32.xlu0 %v2863, 32
      %v4442 = vpop.permute.xlu0 %4441
      %4443 = vrot.lane.b32.xlu0 %v2868, 32
      %v4444 = vpop.permute.xlu0 %4443
      %4445 = vrot.lane.b32.xlu0 %v2922, 32
      %v4446 = vpop.permute.xlu0 %4445
      %4447 = vrot.lane.b32.xlu0 %v2925, 32
      %v4448 = vpop.permute.xlu0 %4447
      %4449 = vrot.lane.b32.xlu0 %v2930, 32
      %v4450 = vpop.permute.xlu0 %4449
      %4451 = vrot.lane.b32.xlu0 %v2984, 32
      %v4452 = vpop.permute.xlu0 %4451
      %4453 = vrot.lane.b32.xlu0 %v2987, 32
      %v4454 = vpop.permute.xlu0 %4453
      %4455 = vrot.lane.b32.xlu0 %v2992, 32
      %v4456 = vpop.permute.xlu0 %4455
      %4457 = vrot.lane.b32.xlu0 %v3046, 32
      %v4458 = vpop.permute.xlu0 %4457
      %4459 = vrot.lane.b32.xlu0 %v3049, 32
      %v4460 = vpop.permute.xlu0 %4459
      %4461 = vrot.lane.b32.xlu0 %v3054, 32
      %v4462 = vpop.permute.xlu0 %4461
      %4487 = vrot.lane.b32.xlu0 %v3544, 64
      %v4488 = vpop.permute.xlu0 %4487
      %4489 = vrot.lane.b32.xlu0 %v3547, 64
      %v4490 = vpop.permute.xlu0 %4489
      %4491 = vrot.lane.b32.xlu0 %v3552, 64
      %v4492 = vpop.permute.xlu0 %4491
      %4493 = vrot.lane.b32.xlu0 %v3606, 64
      %v4494 = vpop.permute.xlu0 %4493
      %4495 = vrot.lane.b32.xlu0 %v3609, 64
      %v4496 = vpop.permute.xlu0 %4495
      %4497 = vrot.lane.b32.xlu0 %v3614, 64
      %v4498 = vpop.permute.xlu0 %4497
      %4499 = vrot.lane.b32.xlu0 %v3668, 64
      %v4500 = vpop.permute.xlu0 %4499
      %4501 = vrot.lane.b32.xlu0 %v3671, 64
      %v4502 = vpop.permute.xlu0 %4501
      %4503 = vrot.lane.b32.xlu0 %v3676, 64
      %v4504 = vpop.permute.xlu0 %4503
      %4505 = vrot.lane.b32.xlu0 %v3730, 64
      %v4506 = vpop.permute.xlu0 %4505
      %4507 = vrot.lane.b32.xlu0 %v3733, 64
      %v4508 = vpop.permute.xlu0 %4507
      %4509 = vrot.lane.b32.xlu0 %v3738, 64
      %v4510 = vpop.permute.xlu0 %4509
      %4535 = vrot.lane.b32.xlu0 %v4228, 96
      %v4536 = vpop.permute.xlu0 %4535
      %4537 = vrot.lane.b32.xlu0 %v4231, 96
      %v4538 = vpop.permute.xlu0 %4537
      %4539 = vrot.lane.b32.xlu0 %v4236, 96
      %v4540 = vpop.permute.xlu0 %4539
      %4541 = vrot.lane.b32.xlu0 %v4290, 96
      %v4542 = vpop.permute.xlu0 %4541
      %4543 = vrot.lane.b32.xlu0 %v4293, 96
      %v4544 = vpop.permute.xlu0 %4543
      %4545 = vrot.lane.b32.xlu0 %v4298, 96
      %v4546 = vpop.permute.xlu0 %4545
      %4547 = vrot.lane.b32.xlu0 %v4352, 96
      %v4548 = vpop.permute.xlu0 %4547
      %4549 = vrot.lane.b32.xlu0 %v4355, 96
      %v4550 = vpop.permute.xlu0 %4549
      %4551 = vrot.lane.b32.xlu0 %v4360, 96
      %v4552 = vpop.permute.xlu0 %4551
      %4553 = vrot.lane.b32.xlu0 %v4414, 96
      %v4554 = vpop.permute.xlu0 %4553
      %4555 = vrot.lane.b32.xlu0 %v4417, 96
      %v4556 = vpop.permute.xlu0 %4555
      %4557 = vrot.lane.b32.xlu0 %v4422, 96
      %v4558 = vpop.permute.xlu0 %4557
      %v4571 = vsel %vm1716, %v2182, %v4440
      %v4572 = vsel %vm1716, %v2185, %v4442
      %v4573 = vsel %vm1716, %v2190, %v4444
      %v4574 = vsel %vm1716, %v2242, %v4446
      %v4575 = vsel %vm1716, %v2245, %v4448
      %v4576 = vsel %vm1716, %v2250, %v4450
      %v4577 = vsel %vm1716, %v2302, %v4452
      %v4578 = vsel %vm1716, %v2305, %v4454
      %v4579 = vsel %vm1716, %v2310, %v4456
      %v4580 = vsel %vm1716, %v2362, %v4458
      %v4581 = vsel %vm1716, %v2365, %v4460
      %v4582 = vsel %vm1716, %v2370, %v4462
      %vm4583 = vcmask 523264
      %v4584 = vsel %vm4583, %v4571, %v4488
      %v4585 = vsel %vm4583, %v4572, %v4490
      %v4586 = vsel %vm4583, %v4573, %v4492
      %v4587 = vsel %vm4583, %v4574, %v4494
      %v4588 = vsel %vm4583, %v4575, %v4496
      %v4589 = vsel %vm4583, %v4576, %v4498
      %v4590 = vsel %vm4583, %v4577, %v4500
      %v4591 = vsel %vm4583, %v4578, %v4502
      %v4592 = vsel %vm4583, %v4579, %v4504
      %v4593 = vsel %vm4583, %v4580, %v4506
      %v4594 = vsel %vm4583, %v4581, %v4508
      %v4595 = vsel %vm4583, %v4582, %v4510
      %vm4596 = vcmask 785408
      %v4597 = vsel %vm4596, %v4584, %v4536
      %v4598 = vsel %vm4596, %v4585, %v4538
      %v4599 = vsel %vm4596, %v4586, %v4540
      %v4600 = vsel %vm4596, %v4587, %v4542
      %v4601 = vsel %vm4596, %v4588, %v4544
      %v4602 = vsel %vm4596, %v4589, %v4546
      %v4603 = vsel %vm4596, %v4590, %v4548
      %v4604 = vsel %vm4596, %v4591, %v4550
      %v4605 = vsel %vm4596, %v4592, %v4552
      %v4606 = vsel %vm4596, %v4593, %v4554
      %v4607 = vsel %vm4596, %v4594, %v4556
      %v4608 = vsel %vm4596, %v4595, %v4558
      %v4609 = vld [vmem:[%s850] sm:$0xf]
      %v4610 = vld [vmem:[%s850 + $0x4] sm:$0xf]
      %v4611 = vld [vmem:[%s850 + $0x8] sm:$0xf]
      %v4612 = vld [vmem:[%s850 + $0xc] sm:$0xf]
      %v4613 = vld [vmem:[%s850 + $0x10] sm:$0xf]
      %v4614 = vld [vmem:[%s850 + $0x14] sm:$0xf]
      %v4615 = vld [vmem:[%s850 + $0x18] sm:$0xf]
      %v4616 = vld [vmem:[%s850 + $0x1c] sm:$0xf]
      %v4617 = vld [vmem:[%s850 + $0x20] sm:$0xf]
      %v4618 = vld [vmem:[%s850 + $0x24] sm:$0xf]
      %v4619 = vld [vmem:[%s850 + $0x28] sm:$0xf]
      %v4620 = vld [vmem:[%s850 + $0x2c] sm:$0xf]
      %v4621 = vld [vmem:[%s850 + $0x30] sm:$0xf]
      %v4622 = vld [vmem:[%s850 + $0x34] sm:$0xf]
      %v4623 = vld [vmem:[%s850 + $0x38] sm:$0xf]
      %v4624 = vld [vmem:[%s850 + $0x3c] sm:$0xf]
      %v4625 = vld [vmem:[%s854] sm:$0x1]
      %v4626 = vpack.c.bf16 %v4598, %v4597
      %v4627 = vpack.c.bf16 %v4600, %v4599
      %v4628 = vpack.c.bf16 %v4602, %v4601
      %v4629 = vpack.c.bf16 %v4604, %v4603
      %v4630 = vpack.c.bf16 %v4606, %v4605
      %v4631 = vpack.c.bf16 %v4608, %v4607
      %v4633 = vlaneseq
      %v4634 = vshrl.u32 %v4633, 7
      %v4635 = vsub.s32 0, %v4634
      %v4636 = vrot.slane %v4625, %v4635
      %v4654 = vunpack.c.l.b16 %v4609
      %v4655 = vunpack.c.l.b16 %v4610
      %v4656 = vunpack.c.l.b16 %v4611
      %v4657 = vunpack.c.l.b16 %v4612
      %v4658 = vunpack.c.l.b16 %v4613
      %v4659 = vunpack.c.l.b16 %v4614
      %v4660 = vunpack.c.l.b16 %v4615
      %v4661 = vunpack.c.l.b16 %v4616
      %v4662 = vunpack.c.l.b16 %v4617
      %v4663 = vunpack.c.l.b16 %v4618
      %v4664 = vunpack.c.l.b16 %v4619
      %v4665 = vunpack.c.l.b16 %v4620
      %v4666 = vunpack.c.l.b16 %v4621
      %v4667 = vunpack.c.l.b16 %v4622
      %v4668 = vunpack.c.l.b16 %v4623
      %v4669 = vunpack.c.l.b16 %v4624
      %v4670 = vpack.c.b16 %v4655, %v4654
      %v4671 = vpack.c.b16 %v4657, %v4656
      %v4672 = vpack.c.b16 %v4659, %v4658
      %v4673 = vpack.c.b16 %v4661, %v4660
      %v4674 = vpack.c.b16 %v4663, %v4662
      %v4675 = vpack.c.b16 %v4665, %v4664
      %v4676 = vpack.c.b16 %v4667, %v4666
      %v4677 = vpack.c.b16 %v4669, %v4668
      %4686 = vmatprep.subr.bf16.mxu0 0
      %4687 = vmatpush1.bf16.msra.mxu0 %v4670
      %4688 = vmatprep.subr.bf16.mxu0 0
      %4689 = vmatpush1.bf16.msra.mxu0 %v4671
      %4690 = vmatprep.subr.bf16.mxu0 0
      %4691 = vmatpush1.bf16.msra.mxu0 %v4672
      %4692 = vmatprep.subr.bf16.mxu0 0
      %4693 = vmatpush1.bf16.msra.mxu0 %v4673
      %4694 = vmatprep.subr.bf16.mxu0 0
      %4695 = vmatpush1.bf16.msra.mxu0 %v4674
      %4696 = vmatprep.subr.bf16.mxu0 0
      %4697 = vmatpush1.bf16.msra.mxu0 %v4675
      %4698 = vmatprep.subr.bf16.mxu0 0
      %4699 = vmatpush1.bf16.msra.mxu0 %v4676
      %4700 = vmatprep.subr.bf16.mxu0 0
      %4701 = vmatpush1.bf16.msra.mxu0 %v4677
      %4702 = vmatprep.subr.bf16.mxu0 0
      %4703 = vmatpush1.bf16.msra.mxu0 0
      %4704 = vmatprep.subr.bf16.mxu0 0
      %4705 = vmatpush1.bf16.msra.mxu0 0
      %4706 = vmatprep.subr.bf16.mxu0 0
      %4707 = vmatpush1.bf16.msra.mxu0 0
      %4708 = vmatprep.subr.bf16.mxu0 0
      %4709 = vmatpush1.bf16.msra.mxu0 0
      %4710 = vmatprep.subr.bf16.mxu0 0
      %4711 = vmatpush1.bf16.msra.mxu0 0
      %4712 = vmatprep.subr.bf16.mxu0 0
      %4713 = vmatpush1.bf16.msra.mxu0 0
      %4714 = vmatprep.subr.bf16.mxu0 0
      %4715 = vmatpush1.bf16.msra.mxu0 0
      %4716 = vmatprep.subr.bf16.mxu0 0
      %4717 = vmatpush1.bf16.msra.mxu0 0
      %4718 = vmatprep.mubr.bf16.mxu0 0
      %4719 = vmatmul.mubr.bf16.gmra.mrb[0].mxu0 %v4626
      %v4720 = vpop.f32.mrb[0].mxu0
      %v4721 = vadd.f32 %v4636, %v4720
      %v4722 = vpop.f32.mrb[0].mxu0
      %v4723 = vpop.f32.mrb[0].mxu0
      %v4724 = vadd.f32 %v4636, %v4723
      %v4725 = vpop.f32.mrb[0].mxu0
      %4726 = vmatprep.mubr.bf16.mxu0 0
      %4727 = vmatmul.mubr.bf16.gmra.mrb[0].mxu0 %v4627
      %v4728 = vpop.f32.mrb[0].mxu0
      %v4729 = vadd.f32 %v4636, %v4728
      %v4730 = vpop.f32.mrb[0].mxu0
      %v4731 = vpop.f32.mrb[0].mxu0
      %v4732 = vadd.f32 %v4636, %v4731
      %v4733 = vpop.f32.mrb[0].mxu0
      %4734 = vmatprep.mubr.bf16.mxu0 0
      %4735 = vmatmul.mubr.bf16.gmra.mrb[0].mxu0 %v4628
      %v4736 = vpop.f32.mrb[0].mxu0
      %v4737 = vadd.f32 %v4636, %v4736
      %v4738 = vpop.f32.mrb[0].mxu0
      %v4739 = vpop.f32.mrb[0].mxu0
      %v4740 = vadd.f32 %v4636, %v4739
      %v4741 = vpop.f32.mrb[0].mxu0
      %4742 = vmatprep.mubr.bf16.mxu0 0
      %4743 = vmatmul.mubr.bf16.gmra.mrb[0].mxu0 %v4629
      %v4744 = vpop.f32.mrb[0].mxu0
      %v4745 = vadd.f32 %v4636, %v4744
      %v4746 = vpop.f32.mrb[0].mxu0
      %v4747 = vpop.f32.mrb[0].mxu0
      %v4748 = vadd.f32 %v4636, %v4747
      %v4749 = vpop.f32.mrb[0].mxu0
      %4750 = vmatprep.mubr.bf16.mxu0 0
      %4751 = vmatmul.mubr.bf16.gmra.mrb[0].mxu0 %v4630
      %v4752 = vpop.f32.mrb[0].mxu0
      %v4753 = vadd.f32 %v4636, %v4752
      %v4754 = vpop.f32.mrb[0].mxu0
      %v4755 = vpop.f32.mrb[0].mxu0
      %v4756 = vadd.f32 %v4636, %v4755
      %v4757 = vpop.f32.mrb[0].mxu0
      %4758 = vmatprep.mubr.bf16.mxu0 0
      %4759 = vmatmul.mubr.bf16.gmra.mrb[0].mxu0 %v4631
      %v4760 = vpop.f32.mrb[0].mxu0
      %v4761 = vadd.f32 %v4636, %v4760
      %v4762 = vpop.f32.mrb[0].mxu0
      %v4763 = vpop.f32.mrb[0].mxu0
      %v4764 = vadd.f32 %v4636, %v4763
      %v4765 = vpop.f32.mrb[0].mxu0
      %4766 = vdwg.mxu0
      %v4767 = vadd.f32 %v1096, %v4721
      %v4768 = vadd.f32 %v1097, %v4724
      %v4769 = vadd.f32 %v1098, %v4729
      %v4770 = vadd.f32 %v1099, %v4732
      %v4771 = vadd.f32 %v1100, %v4737
      %v4772 = vadd.f32 %v1101, %v4740
      %v4773 = vadd.f32 %v1102, %v4745
      %v4774 = vadd.f32 %v1103, %v4748
      %v4775 = vadd.f32 %v1104, %v4753
      %v4776 = vadd.f32 %v1105, %v4756
      %v4777 = vadd.f32 %v1106, %v4761
      %v4778 = vadd.f32 %v1107, %v4764
      %v4779 = vld [vmem:[%s858] sm:$0x1]
      %v4780 = vld [vmem:[%s862] sm:$0x1]
      %4781 = vadd.xlane.f32.xlu0 %v4767
      %v4782 = vpop.xlane.xlu0 %4781
      %4783 = vadd.xlane.f32.xlu0 %v4768
      %v4784 = vpop.xlane.xlu0 %4783
      %4785 = vadd.xlane.f32.xlu0 %v4769
      %v4786 = vpop.xlane.xlu0 %4785
      %4787 = vadd.xlane.f32.xlu0 %v4770
      %v4788 = vpop.xlane.xlu0 %4787
      %4789 = vadd.xlane.f32.xlu0 %v4771
      %v4790 = vpop.xlane.xlu0 %4789
      %4791 = vadd.xlane.f32.xlu0 %v4772
      %v4792 = vpop.xlane.xlu0 %4791
      %4793 = vadd.xlane.f32.xlu0 %v4773
      %v4794 = vpop.xlane.xlu0 %4793
      %4795 = vadd.xlane.f32.xlu0 %v4774
      %v4796 = vpop.xlane.xlu0 %4795
      %4797 = vadd.xlane.f32.xlu0 %v4775
      %v4798 = vpop.xlane.xlu0 %4797
      %4799 = vadd.xlane.f32.xlu0 %v4776
      %v4800 = vpop.xlane.xlu0 %4799
      %4801 = vadd.xlane.f32.xlu0 %v4777
      %v4802 = vpop.xlane.xlu0 %4801
      %4803 = vadd.xlane.f32.xlu0 %v4778
      %v4804 = vpop.xlane.xlu0 %4803
      %v4805 = vmul.f32 %v4782, %v1138
      %v4806 = vmul.f32 %v4784, %v1138
      %v4807 = vmul.f32 %v4786, %v1138
      %v4808 = vmul.f32 %v4788, %v1138
      %v4809 = vmul.f32 %v4790, %v1138
      %v4810 = vmul.f32 %v4792, %v1138
      %v4811 = vmul.f32 %v4794, %v1138
      %v4812 = vmul.f32 %v4796, %v1138
      %v4813 = vmul.f32 %v4798, %v1138
      %v4814 = vmul.f32 %v4800, %v1138
      %v4815 = vmul.f32 %v4802, %v1138
      %v4816 = vmul.f32 %v4804, %v1138
      %v4817 = vsub.f32 %v4767, %v4805
      %v4818 = vsub.f32 %v4768, %v4806
      %v4819 = vsub.f32 %v4769, %v4807
      %v4820 = vsub.f32 %v4770, %v4808
      %v4821 = vsub.f32 %v4771, %v4809
      %v4822 = vsub.f32 %v4772, %v4810
      %v4823 = vsub.f32 %v4773, %v4811
      %v4824 = vsub.f32 %v4774, %v4812
      %v4825 = vsub.f32 %v4775, %v4813
      %v4826 = vsub.f32 %v4776, %v4814
      %v4827 = vsub.f32 %v4777, %v4815
      %v4828 = vsub.f32 %v4778, %v4816
      %v4829 = vmul.f32 %v4817, %v4817
      %v4830 = vmul.f32 %v4818, %v4818
      %v4831 = vmul.f32 %v4819, %v4819
      %v4832 = vmul.f32 %v4820, %v4820
      %v4833 = vmul.f32 %v4821, %v4821
      %v4834 = vmul.f32 %v4822, %v4822
      %v4835 = vmul.f32 %v4823, %v4823
      %v4836 = vmul.f32 %v4824, %v4824
      %v4837 = vmul.f32 %v4825, %v4825
      %v4838 = vmul.f32 %v4826, %v4826
      %v4839 = vmul.f32 %v4827, %v4827
      %v4840 = vmul.f32 %v4828, %v4828
      %4841 = vadd.xlane.f32.xlu0 %v4829
      %v4842 = vpop.xlane.xlu0 %4841
      %4843 = vadd.xlane.f32.xlu0 %v4830
      %v4844 = vpop.xlane.xlu0 %4843
      %4845 = vadd.xlane.f32.xlu0 %v4831
      %v4846 = vpop.xlane.xlu0 %4845
      %4847 = vadd.xlane.f32.xlu0 %v4832
      %v4848 = vpop.xlane.xlu0 %4847
      %4849 = vadd.xlane.f32.xlu0 %v4833
      %v4850 = vpop.xlane.xlu0 %4849
      %4851 = vadd.xlane.f32.xlu0 %v4834
      %v4852 = vpop.xlane.xlu0 %4851
      %4853 = vadd.xlane.f32.xlu0 %v4835
      %v4854 = vpop.xlane.xlu0 %4853
      %4855 = vadd.xlane.f32.xlu0 %v4836
      %v4856 = vpop.xlane.xlu0 %4855
      %4857 = vadd.xlane.f32.xlu0 %v4837
      %v4858 = vpop.xlane.xlu0 %4857
      %4859 = vadd.xlane.f32.xlu0 %v4838
      %v4860 = vpop.xlane.xlu0 %4859
      %4861 = vadd.xlane.f32.xlu0 %v4839
      %v4862 = vpop.xlane.xlu0 %4861
      %4863 = vadd.xlane.f32.xlu0 %v4840
      %v4864 = vpop.xlane.xlu0 %4863
      %v4865 = vmul.f32 %v4842, %v1138
      %v4866 = vmul.f32 %v4844, %v1138
      %v4867 = vmul.f32 %v4846, %v1138
      %v4868 = vmul.f32 %v4848, %v1138
      %v4869 = vmul.f32 %v4850, %v1138
      %v4870 = vmul.f32 %v4852, %v1138
      %v4871 = vmul.f32 %v4854, %v1138
      %v4872 = vmul.f32 %v4856, %v1138
      %v4873 = vmul.f32 %v4858, %v1138
      %v4874 = vmul.f32 %v4860, %v1138
      %v4875 = vmul.f32 %v4862, %v1138
      %v4876 = vmul.f32 %v4864, %v1138
      %v4877 = vadd.f32 %v4865, 1e-06
      %v4878 = vadd.f32 %v4866, 1e-06
      %v4879 = vadd.f32 %v4867, 1e-06
      %v4880 = vadd.f32 %v4868, 1e-06
      %v4881 = vadd.f32 %v4869, 1e-06
      %v4882 = vadd.f32 %v4870, 1e-06
      %v4883 = vadd.f32 %v4871, 1e-06
      %v4884 = vadd.f32 %v4872, 1e-06
      %v4885 = vadd.f32 %v4873, 1e-06
      %v4886 = vadd.f32 %v4874, 1e-06
      %v4887 = vadd.f32 %v4875, 1e-06
      %v4888 = vadd.f32 %v4876, 1e-06
      %v4889 = vrsqrt.pop %v4877
      %v4890 = vrsqrt.pop %v4878
      %v4891 = vrsqrt.pop %v4879
      %v4892 = vrsqrt.pop %v4880
      %v4893 = vrsqrt.pop %v4881
      %v4894 = vrsqrt.pop %v4882
      %v4895 = vrsqrt.pop %v4883
      %v4896 = vrsqrt.pop %v4884
      %v4897 = vrsqrt.pop %v4885
      %v4898 = vrsqrt.pop %v4886
      %v4899 = vrsqrt.pop %v4887
      %v4900 = vrsqrt.pop %v4888
      %v4901 = vmul.f32 %v4817, %v4889
      %v4902 = vmul.f32 %v4818, %v4890
      %v4903 = vmul.f32 %v4819, %v4891
      %v4904 = vmul.f32 %v4820, %v4892
      %v4905 = vmul.f32 %v4821, %v4893
      %v4906 = vmul.f32 %v4822, %v4894
      %v4907 = vmul.f32 %v4823, %v4895
      %v4908 = vmul.f32 %v4824, %v4896
      %v4909 = vmul.f32 %v4825, %v4897
      %v4910 = vmul.f32 %v4826, %v4898
      %v4911 = vmul.f32 %v4827, %v4899
      %v4912 = vmul.f32 %v4828, %v4900
      %v4914 = vlaneseq
      %v4915 = vshrl.u32 %v4914, 7
      %v4916 = vsub.s32 0, %v4915
      %v4917 = vrot.slane %v4779, %v4916
      %v4919 = vmul.f32 %v4901, %v4917
      %v4920 = vmul.f32 %v4902, %v4917
      %v4921 = vmul.f32 %v4903, %v4917
      %v4922 = vmul.f32 %v4904, %v4917
      %v4923 = vmul.f32 %v4905, %v4917
      %v4924 = vmul.f32 %v4906, %v4917
      %v4925 = vmul.f32 %v4907, %v4917
      %v4926 = vmul.f32 %v4908, %v4917
      %v4927 = vmul.f32 %v4909, %v4917
      %v4928 = vmul.f32 %v4910, %v4917
      %v4929 = vmul.f32 %v4911, %v4917
      %v4930 = vmul.f32 %v4912, %v4917
      %v4932 = vlaneseq
      %v4933 = vshrl.u32 %v4932, 7
      %v4934 = vsub.s32 0, %v4933
      %v4935 = vrot.slane %v4780, %v4934
      %v4937 = vadd.f32 %v4919, %v4935
      %v4938 = vadd.f32 %v4920, %v4935
      %v4939 = vadd.f32 %v4921, %v4935
      %v4940 = vadd.f32 %v4922, %v4935
      %v4941 = vadd.f32 %v4923, %v4935
      %v4942 = vadd.f32 %v4924, %v4935
      %v4943 = vadd.f32 %v4925, %v4935
      %v4944 = vadd.f32 %v4926, %v4935
      %v4945 = vadd.f32 %v4927, %v4935
      %v4946 = vadd.f32 %v4928, %v4935
      %v4947 = vadd.f32 %v4929, %v4935
      %v4948 = vadd.f32 %v4930, %v4935
      %v4949 = vld [vmem:[%s867] sm:$0xff]
      %v4950 = vld [vmem:[%s867 + $0x8] sm:$0xff]
      %v4951 = vld [vmem:[%s867 + $0x10] sm:$0xff]
      %v4952 = vld [vmem:[%s867 + $0x18] sm:$0xff]
      %v4953 = vld [vmem:[%s867 + $0x20] sm:$0xff]
      %v4954 = vld [vmem:[%s867 + $0x28] sm:$0xff]
      %v4955 = vld [vmem:[%s867 + $0x30] sm:$0xff]
      %v4956 = vld [vmem:[%s867 + $0x38] sm:$0xff]
      %v4957 = vld [vmem:[%s867 + $0x40] sm:$0xff]
      %v4958 = vld [vmem:[%s867 + $0x48] sm:$0xff]
      %v4959 = vld [vmem:[%s867 + $0x50] sm:$0xff]
      %v4960 = vld [vmem:[%s867 + $0x58] sm:$0xff]
      %v4961 = vld [vmem:[%s867 + $0x60] sm:$0xff]
      %v4962 = vld [vmem:[%s867 + $0x68] sm:$0xff]
      %v4963 = vld [vmem:[%s867 + $0x70] sm:$0xff]
      %v4964 = vld [vmem:[%s867 + $0x78] sm:$0xff]
      %v4965 = vld [vmem:[%s871] sm:$0x3]
      %v4966 = vpack.c.bf16 %v4938, %v4937
      %v4967 = vpack.c.bf16 %v4940, %v4939
      %v4968 = vpack.c.bf16 %v4942, %v4941
      %v4969 = vpack.c.bf16 %v4944, %v4943
      %v4970 = vpack.c.bf16 %v4946, %v4945
      %v4971 = vpack.c.bf16 %v4948, %v4947
      %v4973 = vlaneseq
      %v4974 = vshrl.u32 %v4973, 7
      %v4975 = vsub.s32 0, %v4974
      %v4976 = vrot.slane %v4965, %v4975
      %v4977 = vlaneseq
      %v4978 = vshrl.u32 %v4977, 7
      %v4979 = vsub.s32 1, %v4978
      %v4980 = vrot.slane %v4965, %v4979
      %v4999 = vunpack.c.l.b16 %v4949
      %v5000 = vunpack.c.h.b16 %v4949
      %v5001 = vunpack.c.l.b16 %v4950
      %v5002 = vunpack.c.h.b16 %v4950
      %v5003 = vunpack.c.l.b16 %v4951
      %v5004 = vunpack.c.h.b16 %v4951
      %v5005 = vunpack.c.l.b16 %v4952
      %v5006 = vunpack.c.h.b16 %v4952
      %v5007 = vunpack.c.l.b16 %v4953
      %v5008 = vunpack.c.h.b16 %v4953
      %v5009 = vunpack.c.l.b16 %v4954
      %v5010 = vunpack.c.h.b16 %v4954
      %v5011 = vunpack.c.l.b16 %v4955
      %v5012 = vunpack.c.h.b16 %v4955
      %v5013 = vunpack.c.l.b16 %v4956
      %v5014 = vunpack.c.h.b16 %v4956
      %v5015 = vunpack.c.l.b16 %v4957
      %v5016 = vunpack.c.h.b16 %v4957
      %v5017 = vunpack.c.l.b16 %v4958
      %v5018 = vunpack.c.h.b16 %v4958
      %v5019 = vunpack.c.l.b16 %v4959
      %v5020 = vunpack.c.h.b16 %v4959
      %v5021 = vunpack.c.l.b16 %v4960
      %v5022 = vunpack.c.h.b16 %v4960
      %v5023 = vunpack.c.l.b16 %v4961
      %v5024 = vunpack.c.h.b16 %v4961
      %v5025 = vunpack.c.l.b16 %v4962
      %v5026 = vunpack.c.h.b16 %v4962
      %v5027 = vunpack.c.l.b16 %v4963
      %v5028 = vunpack.c.h.b16 %v4963
      %v5029 = vunpack.c.l.b16 %v4964
      %v5030 = vunpack.c.h.b16 %v4964
      %v5031 = vpack.c.b16 %v5001, %v4999
      %v5032 = vpack.c.b16 %v5002, %v5000
      %v5033 = vpack.c.b16 %v5005, %v5003
      %v5034 = vpack.c.b16 %v5006, %v5004
      %v5035 = vpack.c.b16 %v5009, %v5007
      %v5036 = vpack.c.b16 %v5010, %v5008
      %v5037 = vpack.c.b16 %v5013, %v5011
      %v5038 = vpack.c.b16 %v5014, %v5012
      %v5039 = vpack.c.b16 %v5017, %v5015
      %v5040 = vpack.c.b16 %v5018, %v5016
      %v5041 = vpack.c.b16 %v5021, %v5019
      %v5042 = vpack.c.b16 %v5022, %v5020
      %v5043 = vpack.c.b16 %v5025, %v5023
      %v5044 = vpack.c.b16 %v5026, %v5024
      %v5045 = vpack.c.b16 %v5029, %v5027
      %v5046 = vpack.c.b16 %v5030, %v5028
      %5063 = vmatprep.subr.bf16.mxu0 %v5032
      %5064 = vmatpush1.bf16.msra.mxu0 %v5031
      %5065 = vmatprep.subr.bf16.mxu0 %v5034
      %5066 = vmatpush1.bf16.msra.mxu0 %v5033
      %5067 = vmatprep.subr.bf16.mxu0 %v5036
      %5068 = vmatpush1.bf16.msra.mxu0 %v5035
      %5069 = vmatprep.subr.bf16.mxu0 %v5038
      %5070 = vmatpush1.bf16.msra.mxu0 %v5037
      %5071 = vmatprep.subr.bf16.mxu0 %v5040
      %5072 = vmatpush1.bf16.msra.mxu0 %v5039
      %5073 = vmatprep.subr.bf16.mxu0 %v5042
      %5074 = vmatpush1.bf16.msra.mxu0 %v5041
      %5075 = vmatprep.subr.bf16.mxu0 %v5044
      %5076 = vmatpush1.bf16.msra.mxu0 %v5043
      %5077 = vmatprep.subr.bf16.mxu0 %v5046
      %5078 = vmatpush1.bf16.msra.mxu0 %v5045
      %5079 = vmatprep.subr.bf16.mxu0 0
      %5080 = vmatpush1.bf16.msra.mxu0 0
      %5081 = vmatprep.subr.bf16.mxu0 0
      %5082 = vmatpush1.bf16.msra.mxu0 0
      %5083 = vmatprep.subr.bf16.mxu0 0
      %5084 = vmatpush1.bf16.msra.mxu0 0
      %5085 = vmatprep.subr.bf16.mxu0 0
      %5086 = vmatpush1.bf16.msra.mxu0 0
      %5087 = vmatprep.subr.bf16.mxu0 0
      %5088 = vmatpush1.bf16.msra.mxu0 0
      %5089 = vmatprep.subr.bf16.mxu0 0
      %5090 = vmatpush1.bf16.msra.mxu0 0
      %5091 = vmatprep.subr.bf16.mxu0 0
      %5092 = vmatpush1.bf16.msra.mxu0 0
      %5093 = vmatprep.subr.bf16.mxu0 0
      %5094 = vmatpush1.bf16.msra.mxu0 0
      %5095 = vmatprep.mubr.bf16.mxu0 0
      %5096 = vmatmul.mubr.bf16.gmra.mrb[0].mxu0 %v4966
      %v5097 = vpop.f32.mrb[0].mxu0
      %v5098 = vadd.f32 %v4976, %v5097
      %v5099 = vpop.f32.mrb[0].mxu0
      %v5100 = vadd.f32 %v4980, %v5099
      %v5101 = vpop.f32.mrb[0].mxu0
      %v5102 = vadd.f32 %v4976, %v5101
      %v5103 = vpop.f32.mrb[0].mxu0
      %v5104 = vadd.f32 %v4980, %v5103
      %5105 = vmatprep.mubr.bf16.mxu0 0
      %5106 = vmatmul.mubr.bf16.gmra.mrb[0].mxu0 %v4967
      %v5107 = vpop.f32.mrb[0].mxu0
      %v5108 = vadd.f32 %v4976, %v5107
      %v5109 = vpop.f32.mrb[0].mxu0
      %v5110 = vadd.f32 %v4980, %v5109
      %v5111 = vpop.f32.mrb[0].mxu0
      %v5112 = vadd.f32 %v4976, %v5111
      %v5113 = vpop.f32.mrb[0].mxu0
      %v5114 = vadd.f32 %v4980, %v5113
      %5115 = vmatprep.mubr.bf16.mxu0 0
      %5116 = vmatmul.mubr.bf16.gmra.mrb[0].mxu0 %v4968
      %v5117 = vpop.f32.mrb[0].mxu0
      %v5118 = vadd.f32 %v4976, %v5117
      %v5119 = vpop.f32.mrb[0].mxu0
      %v5120 = vadd.f32 %v4980, %v5119
      %v5121 = vpop.f32.mrb[0].mxu0
      %v5122 = vadd.f32 %v4976, %v5121
      %v5123 = vpop.f32.mrb[0].mxu0
      %v5124 = vadd.f32 %v4980, %v5123
      %5125 = vmatprep.mubr.bf16.mxu0 0
      %5126 = vmatmul.mubr.bf16.gmra.mrb[0].mxu0 %v4969
      %v5127 = vpop.f32.mrb[0].mxu0
      %v5128 = vadd.f32 %v4976, %v5127
      %v5129 = vpop.f32.mrb[0].mxu0
      %v5130 = vadd.f32 %v4980, %v5129
      %v5131 = vpop.f32.mrb[0].mxu0
      %v5132 = vadd.f32 %v4976, %v5131
      %v5133 = vpop.f32.mrb[0].mxu0
      %v5134 = vadd.f32 %v4980, %v5133
      %5135 = vmatprep.mubr.bf16.mxu0 0
      %5136 = vmatmul.mubr.bf16.gmra.mrb[0].mxu0 %v4970
      %v5137 = vpop.f32.mrb[0].mxu0
      %v5138 = vadd.f32 %v4976, %v5137
      %v5139 = vpop.f32.mrb[0].mxu0
      %v5140 = vadd.f32 %v4980, %v5139
      %v5141 = vpop.f32.mrb[0].mxu0
      %v5142 = vadd.f32 %v4976, %v5141
      %v5143 = vpop.f32.mrb[0].mxu0
      %v5144 = vadd.f32 %v4980, %v5143
      %5145 = vmatprep.mubr.bf16.mxu0 0
      %5146 = vmatmul.mubr.bf16.gmra.mrb[0].mxu0 %v4971
      %v5147 = vpop.f32.mrb[0].mxu0
      %v5148 = vadd.f32 %v4976, %v5147
      %v5149 = vpop.f32.mrb[0].mxu0
      %v5150 = vadd.f32 %v4980, %v5149
      %v5151 = vpop.f32.mrb[0].mxu0
      %v5152 = vadd.f32 %v4976, %v5151
      %v5153 = vpop.f32.mrb[0].mxu0
      %v5154 = vadd.f32 %v4980, %v5153
      %5155 = vdwg.mxu0
      %v5156 = vmul.f32 %v5098, %v5098
      %v5157 = vmul.f32 %v5100, %v5100
      %v5158 = vmul.f32 %v5102, %v5102
      %v5159 = vmul.f32 %v5104, %v5104
      %v5160 = vmul.f32 %v5108, %v5108
      %v5161 = vmul.f32 %v5110, %v5110
      %v5162 = vmul.f32 %v5112, %v5112
      %v5163 = vmul.f32 %v5114, %v5114
      %v5164 = vmul.f32 %v5118, %v5118
      %v5165 = vmul.f32 %v5120, %v5120
      %v5166 = vmul.f32 %v5122, %v5122
      %v5167 = vmul.f32 %v5124, %v5124
      %v5168 = vmul.f32 %v5128, %v5128
      %v5169 = vmul.f32 %v5130, %v5130
      %v5170 = vmul.f32 %v5132, %v5132
      %v5171 = vmul.f32 %v5134, %v5134
      %v5172 = vmul.f32 %v5138, %v5138
      %v5173 = vmul.f32 %v5140, %v5140
      %v5174 = vmul.f32 %v5142, %v5142
      %v5175 = vmul.f32 %v5144, %v5144
      %v5176 = vmul.f32 %v5148, %v5148
      %v5177 = vmul.f32 %v5150, %v5150
      %v5178 = vmul.f32 %v5152, %v5152
      %v5179 = vmul.f32 %v5154, %v5154
      %v5180 = vmul.f32 %v5098, %v5156
      %v5181 = vmul.f32 %v5100, %v5157
      %v5182 = vmul.f32 %v5102, %v5158
      %v5183 = vmul.f32 %v5104, %v5159
      %v5184 = vmul.f32 %v5108, %v5160
      %v5185 = vmul.f32 %v5110, %v5161
      %v5186 = vmul.f32 %v5112, %v5162
      %v5187 = vmul.f32 %v5114, %v5163
      %v5188 = vmul.f32 %v5118, %v5164
      %v5189 = vmul.f32 %v5120, %v5165
      %v5190 = vmul.f32 %v5122, %v5166
      %v5191 = vmul.f32 %v5124, %v5167
      %v5192 = vmul.f32 %v5128, %v5168
      %v5193 = vmul.f32 %v5130, %v5169
      %v5194 = vmul.f32 %v5132, %v5170
      %v5195 = vmul.f32 %v5134, %v5171
      %v5196 = vmul.f32 %v5138, %v5172
      %v5197 = vmul.f32 %v5140, %v5173
      %v5198 = vmul.f32 %v5142, %v5174
      %v5199 = vmul.f32 %v5144, %v5175
      %v5200 = vmul.f32 %v5148, %v5176
      %v5201 = vmul.f32 %v5150, %v5177
      %v5202 = vmul.f32 %v5152, %v5178
      %v5203 = vmul.f32 %v5154, %v5179
      %v5204 = vmul.f32 %v5180, 0.044715
      %v5205 = vmul.f32 %v5181, 0.044715
      %v5206 = vmul.f32 %v5182, 0.044715
      %v5207 = vmul.f32 %v5183, 0.044715
      %v5208 = vmul.f32 %v5184, 0.044715
      %v5209 = vmul.f32 %v5185, 0.044715
      %v5210 = vmul.f32 %v5186, 0.044715
      %v5211 = vmul.f32 %v5187, 0.044715
      %v5212 = vmul.f32 %v5188, 0.044715
      %v5213 = vmul.f32 %v5189, 0.044715
      %v5214 = vmul.f32 %v5190, 0.044715
      %v5215 = vmul.f32 %v5191, 0.044715
      %v5216 = vmul.f32 %v5192, 0.044715
      %v5217 = vmul.f32 %v5193, 0.044715
      %v5218 = vmul.f32 %v5194, 0.044715
      %v5219 = vmul.f32 %v5195, 0.044715
      %v5220 = vmul.f32 %v5196, 0.044715
      %v5221 = vmul.f32 %v5197, 0.044715
      %v5222 = vmul.f32 %v5198, 0.044715
      %v5223 = vmul.f32 %v5199, 0.044715
      %v5224 = vmul.f32 %v5200, 0.044715
      %v5225 = vmul.f32 %v5201, 0.044715
      %v5226 = vmul.f32 %v5202, 0.044715
      %v5227 = vmul.f32 %v5203, 0.044715
      %v5228 = vadd.f32 %v5098, %v5204
      %v5229 = vadd.f32 %v5100, %v5205
      %v5230 = vadd.f32 %v5102, %v5206
      %v5231 = vadd.f32 %v5104, %v5207
      %v5232 = vadd.f32 %v5108, %v5208
      %v5233 = vadd.f32 %v5110, %v5209
      %v5234 = vadd.f32 %v5112, %v5210
      %v5235 = vadd.f32 %v5114, %v5211
      %v5236 = vadd.f32 %v5118, %v5212
      %v5237 = vadd.f32 %v5120, %v5213
      %v5238 = vadd.f32 %v5122, %v5214
      %v5239 = vadd.f32 %v5124, %v5215
      %v5240 = vadd.f32 %v5128, %v5216
      %v5241 = vadd.f32 %v5130, %v5217
      %v5242 = vadd.f32 %v5132, %v5218
      %v5243 = vadd.f32 %v5134, %v5219
      %v5244 = vadd.f32 %v5138, %v5220
      %v5245 = vadd.f32 %v5140, %v5221
      %v5246 = vadd.f32 %v5142, %v5222
      %v5247 = vadd.f32 %v5144, %v5223
      %v5248 = vadd.f32 %v5148, %v5224
      %v5249 = vadd.f32 %v5150, %v5225
      %v5250 = vadd.f32 %v5152, %v5226
      %v5251 = vadd.f32 %v5154, %v5227
      %v5252 = vmul.f32 %v5228, 0.7978846
      %v5253 = vmul.f32 %v5229, 0.7978846
      %v5254 = vmul.f32 %v5230, 0.7978846
      %v5255 = vmul.f32 %v5231, 0.7978846
      %v5256 = vmul.f32 %v5232, 0.7978846
      %v5257 = vmul.f32 %v5233, 0.7978846
      %v5258 = vmul.f32 %v5234, 0.7978846
      %v5259 = vmul.f32 %v5235, 0.7978846
      %v5260 = vmul.f32 %v5236, 0.7978846
      %v5261 = vmul.f32 %v5237, 0.7978846
      %v5262 = vmul.f32 %v5238, 0.7978846
      %v5263 = vmul.f32 %v5239, 0.7978846
      %v5264 = vmul.f32 %v5240, 0.7978846
      %v5265 = vmul.f32 %v5241, 0.7978846
      %v5266 = vmul.f32 %v5242, 0.7978846
      %v5267 = vmul.f32 %v5243, 0.7978846
      %v5268 = vmul.f32 %v5244, 0.7978846
      %v5269 = vmul.f32 %v5245, 0.7978846
      %v5270 = vmul.f32 %v5246, 0.7978846
      %v5271 = vmul.f32 %v5247, 0.7978846
      %v5272 = vmul.f32 %v5248, 0.7978846
      %v5273 = vmul.f32 %v5249, 0.7978846
      %v5274 = vmul.f32 %v5250, 0.7978846
      %v5275 = vmul.f32 %v5251, 0.7978846
      %v5276 = vtanh.pop %v5252
      %v5277 = vtanh.pop %v5253
      %v5278 = vtanh.pop %v5254
      %v5279 = vtanh.pop %v5255
      %v5280 = vtanh.pop %v5256
      %v5281 = vtanh.pop %v5257
      %v5282 = vtanh.pop %v5258
      %v5283 = vtanh.pop %v5259
      %v5284 = vtanh.pop %v5260
      %v5285 = vtanh.pop %v5261
      %v5286 = vtanh.pop %v5262
      %v5287 = vtanh.pop %v5263
      %v5288 = vtanh.pop %v5264
      %v5289 = vtanh.pop %v5265
      %v5290 = vtanh.pop %v5266
      %v5291 = vtanh.pop %v5267
      %v5292 = vtanh.pop %v5268
      %v5293 = vtanh.pop %v5269
      %v5294 = vtanh.pop %v5270
      %v5295 = vtanh.pop %v5271
      %v5296 = vtanh.pop %v5272
      %v5297 = vtanh.pop %v5273
      %v5298 = vtanh.pop %v5274
      %v5299 = vtanh.pop %v5275
      %v5300 = vadd.f32 %v5276, 1.0
      %v5301 = vadd.f32 %v5277, 1.0
      %v5302 = vadd.f32 %v5278, 1.0
      %v5303 = vadd.f32 %v5279, 1.0
      %v5304 = vadd.f32 %v5280, 1.0
      %v5305 = vadd.f32 %v5281, 1.0
      %v5306 = vadd.f32 %v5282, 1.0
      %v5307 = vadd.f32 %v5283, 1.0
      %v5308 = vadd.f32 %v5284, 1.0
      %v5309 = vadd.f32 %v5285, 1.0
      %v5310 = vadd.f32 %v5286, 1.0
      %v5311 = vadd.f32 %v5287, 1.0
      %v5312 = vadd.f32 %v5288, 1.0
      %v5313 = vadd.f32 %v5289, 1.0
      %v5314 = vadd.f32 %v5290, 1.0
      %v5315 = vadd.f32 %v5291, 1.0
      %v5316 = vadd.f32 %v5292, 1.0
      %v5317 = vadd.f32 %v5293, 1.0
      %v5318 = vadd.f32 %v5294, 1.0
      %v5319 = vadd.f32 %v5295, 1.0
      %v5320 = vadd.f32 %v5296, 1.0
      %v5321 = vadd.f32 %v5297, 1.0
      %v5322 = vadd.f32 %v5298, 1.0
      %v5323 = vadd.f32 %v5299, 1.0
      %v5324 = vmul.f32 %v5300, 0.5
      %v5325 = vmul.f32 %v5301, 0.5
      %v5326 = vmul.f32 %v5302, 0.5
      %v5327 = vmul.f32 %v5303, 0.5
      %v5328 = vmul.f32 %v5304, 0.5
      %v5329 = vmul.f32 %v5305, 0.5
      %v5330 = vmul.f32 %v5306, 0.5
      %v5331 = vmul.f32 %v5307, 0.5
      %v5332 = vmul.f32 %v5308, 0.5
      %v5333 = vmul.f32 %v5309, 0.5
      %v5334 = vmul.f32 %v5310, 0.5
      %v5335 = vmul.f32 %v5311, 0.5
      %v5336 = vmul.f32 %v5312, 0.5
      %v5337 = vmul.f32 %v5313, 0.5
      %v5338 = vmul.f32 %v5314, 0.5
      %v5339 = vmul.f32 %v5315, 0.5
      %v5340 = vmul.f32 %v5316, 0.5
      %v5341 = vmul.f32 %v5317, 0.5
      %v5342 = vmul.f32 %v5318, 0.5
      %v5343 = vmul.f32 %v5319, 0.5
      %v5344 = vmul.f32 %v5320, 0.5
      %v5345 = vmul.f32 %v5321, 0.5
      %v5346 = vmul.f32 %v5322, 0.5
      %v5347 = vmul.f32 %v5323, 0.5
      %v5348 = vmul.f32 %v5098, %v5324
      %v5349 = vmul.f32 %v5100, %v5325
      %v5350 = vmul.f32 %v5102, %v5326
      %v5351 = vmul.f32 %v5104, %v5327
      %v5352 = vmul.f32 %v5108, %v5328
      %v5353 = vmul.f32 %v5110, %v5329
      %v5354 = vmul.f32 %v5112, %v5330
      %v5355 = vmul.f32 %v5114, %v5331
      %v5356 = vmul.f32 %v5118, %v5332
      %v5357 = vmul.f32 %v5120, %v5333
      %v5358 = vmul.f32 %v5122, %v5334
      %v5359 = vmul.f32 %v5124, %v5335
      %v5360 = vmul.f32 %v5128, %v5336
      %v5361 = vmul.f32 %v5130, %v5337
      %v5362 = vmul.f32 %v5132, %v5338
      %v5363 = vmul.f32 %v5134, %v5339
      %v5364 = vmul.f32 %v5138, %v5340
      %v5365 = vmul.f32 %v5140, %v5341
      %v5366 = vmul.f32 %v5142, %v5342
      %v5367 = vmul.f32 %v5144, %v5343
      %v5368 = vmul.f32 %v5148, %v5344
      %v5369 = vmul.f32 %v5150, %v5345
      %v5370 = vmul.f32 %v5152, %v5346
      %v5371 = vmul.f32 %v5154, %v5347
      %v5372 = vld [vmem:[%s876] sm:$0xf]
      %v5373 = vld [vmem:[%s876 + $0x4] sm:$0xf]
      %v5374 = vld [vmem:[%s876 + $0x8] sm:$0xf]
      %v5375 = vld [vmem:[%s876 + $0xc] sm:$0xf]
      %v5376 = vld [vmem:[%s876 + $0x10] sm:$0xf]
      %v5377 = vld [vmem:[%s876 + $0x14] sm:$0xf]
      %v5378 = vld [vmem:[%s876 + $0x18] sm:$0xf]
      %v5379 = vld [vmem:[%s876 + $0x1c] sm:$0xf]
      %v5380 = vld [vmem:[%s876 + $0x20] sm:$0xf]
      %v5381 = vld [vmem:[%s876 + $0x24] sm:$0xf]
      %v5382 = vld [vmem:[%s876 + $0x28] sm:$0xf]
      %v5383 = vld [vmem:[%s876 + $0x2c] sm:$0xf]
      %v5384 = vld [vmem:[%s876 + $0x30] sm:$0xf]
      %v5385 = vld [vmem:[%s876 + $0x34] sm:$0xf]
      %v5386 = vld [vmem:[%s876 + $0x38] sm:$0xf]
      %v5387 = vld [vmem:[%s876 + $0x3c] sm:$0xf]
      %v5388 = vld [vmem:[%s876 + $0x40] sm:$0xf]
      %v5389 = vld [vmem:[%s876 + $0x44] sm:$0xf]
      %v5390 = vld [vmem:[%s876 + $0x48] sm:$0xf]
      %v5391 = vld [vmem:[%s876 + $0x4c] sm:$0xf]
      %v5392 = vld [vmem:[%s876 + $0x50] sm:$0xf]
      %v5393 = vld [vmem:[%s876 + $0x54] sm:$0xf]
      %v5394 = vld [vmem:[%s876 + $0x58] sm:$0xf]
      %v5395 = vld [vmem:[%s876 + $0x5c] sm:$0xf]
      %v5396 = vld [vmem:[%s876 + $0x60] sm:$0xf]
      %v5397 = vld [vmem:[%s876 + $0x64] sm:$0xf]
      %v5398 = vld [vmem:[%s876 + $0x68] sm:$0xf]
      %v5399 = vld [vmem:[%s876 + $0x6c] sm:$0xf]
      %v5400 = vld [vmem:[%s876 + $0x70] sm:$0xf]
      %v5401 = vld [vmem:[%s876 + $0x74] sm:$0xf]
      %v5402 = vld [vmem:[%s876 + $0x78] sm:$0xf]
      %v5403 = vld [vmem:[%s876 + $0x7c] sm:$0xf]
      %v5404 = vld [vmem:[%s880] sm:$0x1]
      %v5405 = vpack.c.bf16 %v5350, %v5348
      %v5406 = vpack.c.bf16 %v5351, %v5349
      %v5407 = vpack.c.bf16 %v5354, %v5352
      %v5408 = vpack.c.bf16 %v5355, %v5353
      %v5409 = vpack.c.bf16 %v5358, %v5356
      %v5410 = vpack.c.bf16 %v5359, %v5357
      %v5411 = vpack.c.bf16 %v5362, %v5360
      %v5412 = vpack.c.bf16 %v5363, %v5361
      %v5413 = vpack.c.bf16 %v5366, %v5364
      %v5414 = vpack.c.bf16 %v5367, %v5365
      %v5415 = vpack.c.bf16 %v5370, %v5368
      %v5416 = vpack.c.bf16 %v5371, %v5369
      %v5418 = vlaneseq
      %v5419 = vshrl.u32 %v5418, 7
      %v5420 = vsub.s32 0, %v5419
      %v5421 = vrot.slane %v5404, %v5420
      %v5455 = vunpack.c.l.b16 %v5372
      %v5456 = vunpack.c.l.b16 %v5373
      %v5457 = vunpack.c.l.b16 %v5374
      %v5458 = vunpack.c.l.b16 %v5375
      %v5459 = vunpack.c.l.b16 %v5376
      %v5460 = vunpack.c.l.b16 %v5377
      %v5461 = vunpack.c.l.b16 %v5378
      %v5462 = vunpack.c.l.b16 %v5379
      %v5463 = vunpack.c.l.b16 %v5380
      %v5464 = vunpack.c.l.b16 %v5381
      %v5465 = vunpack.c.l.b16 %v5382
      %v5466 = vunpack.c.l.b16 %v5383
      %v5467 = vunpack.c.l.b16 %v5384
      %v5468 = vunpack.c.l.b16 %v5385
      %v5469 = vunpack.c.l.b16 %v5386
      %v5470 = vunpack.c.l.b16 %v5387
      %v5471 = vunpack.c.l.b16 %v5388
      %v5472 = vunpack.c.l.b16 %v5389
      %v5473 = vunpack.c.l.b16 %v5390
      %v5474 = vunpack.c.l.b16 %v5391
      %v5475 = vunpack.c.l.b16 %v5392
      %v5476 = vunpack.c.l.b16 %v5393
      %v5477 = vunpack.c.l.b16 %v5394
      %v5478 = vunpack.c.l.b16 %v5395
      %v5479 = vunpack.c.l.b16 %v5396
      %v5480 = vunpack.c.l.b16 %v5397
      %v5481 = vunpack.c.l.b16 %v5398
      %v5482 = vunpack.c.l.b16 %v5399
      %v5483 = vunpack.c.l.b16 %v5400
      %v5484 = vunpack.c.l.b16 %v5401
      %v5485 = vunpack.c.l.b16 %v5402
      %v5486 = vunpack.c.l.b16 %v5403
      %v5487 = vpack.c.b16 %v5456, %v5455
      %v5488 = vpack.c.b16 %v5458, %v5457
      %v5489 = vpack.c.b16 %v5460, %v5459
      %v5490 = vpack.c.b16 %v5462, %v5461
      %v5491 = vpack.c.b16 %v5464, %v5463
      %v5492 = vpack.c.b16 %v5466, %v5465
      %v5493 = vpack.c.b16 %v5468, %v5467
      %v5494 = vpack.c.b16 %v5470, %v5469
      %v5495 = vpack.c.b16 %v5472, %v5471
      %v5496 = vpack.c.b16 %v5474, %v5473
      %v5497 = vpack.c.b16 %v5476, %v5475
      %v5498 = vpack.c.b16 %v5478, %v5477
      %v5499 = vpack.c.b16 %v5480, %v5479
      %v5500 = vpack.c.b16 %v5482, %v5481
      %v5501 = vpack.c.b16 %v5484, %v5483
      %v5502 = vpack.c.b16 %v5486, %v5485
      %5519 = vmatprep.subr.bf16.mxu0 0
      %5520 = vmatpush1.bf16.msra.mxu0 %v5487
      %5521 = vmatprep.subr.bf16.mxu0 0
      %5522 = vmatpush1.bf16.msra.mxu0 %v5488
      %5523 = vmatprep.subr.bf16.mxu0 0
      %5524 = vmatpush1.bf16.msra.mxu0 %v5489
      %5525 = vmatprep.subr.bf16.mxu0 0
      %5526 = vmatpush1.bf16.msra.mxu0 %v5490
      %5527 = vmatprep.subr.bf16.mxu0 0
      %5528 = vmatpush1.bf16.msra.mxu0 %v5491
      %5529 = vmatprep.subr.bf16.mxu0 0
      %5530 = vmatpush1.bf16.msra.mxu0 %v5492
      %5531 = vmatprep.subr.bf16.mxu0 0
      %5532 = vmatpush1.bf16.msra.mxu0 %v5493
      %5533 = vmatprep.subr.bf16.mxu0 0
      %5534 = vmatpush1.bf16.msra.mxu0 %v5494
      %5535 = vmatprep.subr.bf16.mxu0 0
      %5536 = vmatpush1.bf16.msra.mxu0 %v5495
      %5537 = vmatprep.subr.bf16.mxu0 0
      %5538 = vmatpush1.bf16.msra.mxu0 %v5496
      %5539 = vmatprep.subr.bf16.mxu0 0
      %5540 = vmatpush1.bf16.msra.mxu0 %v5497
      %5541 = vmatprep.subr.bf16.mxu0 0
      %5542 = vmatpush1.bf16.msra.mxu0 %v5498
      %5543 = vmatprep.subr.bf16.mxu0 0
      %5544 = vmatpush1.bf16.msra.mxu0 %v5499
      %5545 = vmatprep.subr.bf16.mxu0 0
      %5546 = vmatpush1.bf16.msra.mxu0 %v5500
      %5547 = vmatprep.subr.bf16.mxu0 0
      %5548 = vmatpush1.bf16.msra.mxu0 %v5501
      %5549 = vmatprep.subr.bf16.mxu0 0
      %5550 = vmatpush1.bf16.msra.mxu0 %v5502
      %5551 = vmatprep.mubr.bf16.mxu0 %v5406
      %5552 = vmatmul.mubr.bf16.gmra.mrb[0].mxu0 %v5405
      %v5553 = vpop.f32.mrb[0].mxu0
      %v5554 = vadd.f32 %v5421, %v5553
      %v5555 = vpop.f32.mrb[0].mxu0
      %v5556 = vpop.f32.mrb[0].mxu0
      %v5557 = vadd.f32 %v5421, %v5556
      %v5558 = vpop.f32.mrb[0].mxu0
      %5559 = vmatprep.mubr.bf16.mxu0 %v5408
      %5560 = vmatmul.mubr.bf16.gmra.mrb[0].mxu0 %v5407
      %v5561 = vpop.f32.mrb[0].mxu0
      %v5562 = vadd.f32 %v5421, %v5561
      %v5563 = vpop.f32.mrb[0].mxu0
      %v5564 = vpop.f32.mrb[0].mxu0
      %v5565 = vadd.f32 %v5421, %v5564
      %v5566 = vpop.f32.mrb[0].mxu0
      %5567 = vmatprep.mubr.bf16.mxu0 %v5410
      %5568 = vmatmul.mubr.bf16.gmra.mrb[0].mxu0 %v5409
      %v5569 = vpop.f32.mrb[0].mxu0
      %v5570 = vadd.f32 %v5421, %v5569
      %v5571 = vpop.f32.mrb[0].mxu0
      %v5572 = vpop.f32.mrb[0].mxu0
      %v5573 = vadd.f32 %v5421, %v5572
      %v5574 = vpop.f32.mrb[0].mxu0
      %5575 = vmatprep.mubr.bf16.mxu0 %v5412
      %5576 = vmatmul.mubr.bf16.gmra.mrb[0].mxu0 %v5411
      %v5577 = vpop.f32.mrb[0].mxu0
      %v5578 = vadd.f32 %v5421, %v5577
      %v5579 = vpop.f32.mrb[0].mxu0
      %v5580 = vpop.f32.mrb[0].mxu0
      %v5581 = vadd.f32 %v5421, %v5580
      %v5582 = vpop.f32.mrb[0].mxu0
      %5583 = vmatprep.mubr.bf16.mxu0 %v5414
      %5584 = vmatmul.mubr.bf16.gmra.mrb[0].mxu0 %v5413
      %v5585 = vpop.f32.mrb[0].mxu0
      %v5586 = vadd.f32 %v5421, %v5585
      %v5587 = vpop.f32.mrb[0].mxu0
      %v5588 = vpop.f32.mrb[0].mxu0
      %v5589 = vadd.f32 %v5421, %v5588
      %v5590 = vpop.f32.mrb[0].mxu0
      %5591 = vmatprep.mubr.bf16.mxu0 %v5416
      %5592 = vmatmul.mubr.bf16.gmra.mrb[0].mxu0 %v5415
      %v5593 = vpop.f32.mrb[0].mxu0
      %v5594 = vadd.f32 %v5421, %v5593
      %v5595 = vpop.f32.mrb[0].mxu0
      %v5596 = vpop.f32.mrb[0].mxu0
      %v5597 = vadd.f32 %v5421, %v5596
      %v5598 = vpop.f32.mrb[0].mxu0
      %5599 = vdwg.mxu0
      %v5600 = vadd.f32 %v4767, %v5554
      %v5601 = vadd.f32 %v4768, %v5557
      %v5602 = vadd.f32 %v4769, %v5562
      %v5603 = vadd.f32 %v4770, %v5565
      %v5604 = vadd.f32 %v4771, %v5570
      %v5605 = vadd.f32 %v4772, %v5573
      %v5606 = vadd.f32 %v4773, %v5578
      %v5607 = vadd.f32 %v4774, %v5581
      %v5608 = vadd.f32 %v4775, %v5586
      %v5609 = vadd.f32 %v4776, %v5589
      %v5610 = vadd.f32 %v4777, %v5594
      %v5611 = vadd.f32 %v4778, %v5597
      %s5612 = scalar_lea.vmem %s832, 1
      %v5613 = vld [vmem:[%s5612] sm:$0x1]
      %s5614 = scalar_lea.vmem %s836, 1
      %v5615 = vld [vmem:[%s5614] sm:$0x1]
      %5616 = vadd.xlane.f32.xlu0 %v5600
      %v5617 = vpop.xlane.xlu0 %5616
      %5618 = vadd.xlane.f32.xlu0 %v5601
      %v5619 = vpop.xlane.xlu0 %5618
      %5620 = vadd.xlane.f32.xlu0 %v5602
      %v5621 = vpop.xlane.xlu0 %5620
      %5622 = vadd.xlane.f32.xlu0 %v5603
      %v5623 = vpop.xlane.xlu0 %5622
      %5624 = vadd.xlane.f32.xlu0 %v5604
      %v5625 = vpop.xlane.xlu0 %5624
      %5626 = vadd.xlane.f32.xlu0 %v5605
      %v5627 = vpop.xlane.xlu0 %5626
      %5628 = vadd.xlane.f32.xlu0 %v5606
      %v5629 = vpop.xlane.xlu0 %5628
      %5630 = vadd.xlane.f32.xlu0 %v5607
      %v5631 = vpop.xlane.xlu0 %5630
      %5632 = vadd.xlane.f32.xlu0 %v5608
      %v5633 = vpop.xlane.xlu0 %5632
      %5634 = vadd.xlane.f32.xlu0 %v5609
      %v5635 = vpop.xlane.xlu0 %5634
      %5636 = vadd.xlane.f32.xlu0 %v5610
      %v5637 = vpop.xlane.xlu0 %5636
      %5638 = vadd.xlane.f32.xlu0 %v5611
      %v5639 = vpop.xlane.xlu0 %5638
      %v5640 = vmul.f32 %v5617, %v1138
      %v5641 = vmul.f32 %v5619, %v1138
      %v5642 = vmul.f32 %v5621, %v1138
      %v5643 = vmul.f32 %v5623, %v1138
      %v5644 = vmul.f32 %v5625, %v1138
      %v5645 = vmul.f32 %v5627, %v1138
      %v5646 = vmul.f32 %v5629, %v1138
      %v5647 = vmul.f32 %v5631, %v1138
      %v5648 = vmul.f32 %v5633, %v1138
      %v5649 = vmul.f32 %v5635, %v1138
      %v5650 = vmul.f32 %v5637, %v1138
      %v5651 = vmul.f32 %v5639, %v1138
      %v5652 = vsub.f32 %v5600, %v5640
      %v5653 = vsub.f32 %v5601, %v5641
      %v5654 = vsub.f32 %v5602, %v5642
      %v5655 = vsub.f32 %v5603, %v5643
      %v5656 = vsub.f32 %v5604, %v5644
      %v5657 = vsub.f32 %v5605, %v5645
      %v5658 = vsub.f32 %v5606, %v5646
      %v5659 = vsub.f32 %v5607, %v5647
      %v5660 = vsub.f32 %v5608, %v5648
      %v5661 = vsub.f32 %v5609, %v5649
      %v5662 = vsub.f32 %v5610, %v5650
      %v5663 = vsub.f32 %v5611, %v5651
      %v5664 = vmul.f32 %v5652, %v5652
      %v5665 = vmul.f32 %v5653, %v5653
      %v5666 = vmul.f32 %v5654, %v5654
      %v5667 = vmul.f32 %v5655, %v5655
      %v5668 = vmul.f32 %v5656, %v5656
      %v5669 = vmul.f32 %v5657, %v5657
      %v5670 = vmul.f32 %v5658, %v5658
      %v5671 = vmul.f32 %v5659, %v5659
      %v5672 = vmul.f32 %v5660, %v5660
      %v5673 = vmul.f32 %v5661, %v5661
      %v5674 = vmul.f32 %v5662, %v5662
      %v5675 = vmul.f32 %v5663, %v5663
      %5676 = vadd.xlane.f32.xlu0 %v5664
      %v5677 = vpop.xlane.xlu0 %5676
      %5678 = vadd.xlane.f32.xlu0 %v5665
      %v5679 = vpop.xlane.xlu0 %5678
      %5680 = vadd.xlane.f32.xlu0 %v5666
      %v5681 = vpop.xlane.xlu0 %5680
      %5682 = vadd.xlane.f32.xlu0 %v5667
      %v5683 = vpop.xlane.xlu0 %5682
      %5684 = vadd.xlane.f32.xlu0 %v5668
      %v5685 = vpop.xlane.xlu0 %5684
      %5686 = vadd.xlane.f32.xlu0 %v5669
      %v5687 = vpop.xlane.xlu0 %5686
      %5688 = vadd.xlane.f32.xlu0 %v5670
      %v5689 = vpop.xlane.xlu0 %5688
      %5690 = vadd.xlane.f32.xlu0 %v5671
      %v5691 = vpop.xlane.xlu0 %5690
      %5692 = vadd.xlane.f32.xlu0 %v5672
      %v5693 = vpop.xlane.xlu0 %5692
      %5694 = vadd.xlane.f32.xlu0 %v5673
      %v5695 = vpop.xlane.xlu0 %5694
      %5696 = vadd.xlane.f32.xlu0 %v5674
      %v5697 = vpop.xlane.xlu0 %5696
      %5698 = vadd.xlane.f32.xlu0 %v5675
      %v5699 = vpop.xlane.xlu0 %5698
      %v5700 = vmul.f32 %v5677, %v1138
      %v5701 = vmul.f32 %v5679, %v1138
      %v5702 = vmul.f32 %v5681, %v1138
      %v5703 = vmul.f32 %v5683, %v1138
      %v5704 = vmul.f32 %v5685, %v1138
      %v5705 = vmul.f32 %v5687, %v1138
      %v5706 = vmul.f32 %v5689, %v1138
      %v5707 = vmul.f32 %v5691, %v1138
      %v5708 = vmul.f32 %v5693, %v1138
      %v5709 = vmul.f32 %v5695, %v1138
      %v5710 = vmul.f32 %v5697, %v1138
      %v5711 = vmul.f32 %v5699, %v1138
      %v5712 = vadd.f32 %v5700, 1e-06
      %v5713 = vadd.f32 %v5701, 1e-06
      %v5714 = vadd.f32 %v5702, 1e-06
      %v5715 = vadd.f32 %v5703, 1e-06
      %v5716 = vadd.f32 %v5704, 1e-06
      %v5717 = vadd.f32 %v5705, 1e-06
      %v5718 = vadd.f32 %v5706, 1e-06
      %v5719 = vadd.f32 %v5707, 1e-06
      %v5720 = vadd.f32 %v5708, 1e-06
      %v5721 = vadd.f32 %v5709, 1e-06
      %v5722 = vadd.f32 %v5710, 1e-06
      %v5723 = vadd.f32 %v5711, 1e-06
      %v5724 = vrsqrt.pop %v5712
      %v5725 = vrsqrt.pop %v5713
      %v5726 = vrsqrt.pop %v5714
      %v5727 = vrsqrt.pop %v5715
      %v5728 = vrsqrt.pop %v5716
      %v5729 = vrsqrt.pop %v5717
      %v5730 = vrsqrt.pop %v5718
      %v5731 = vrsqrt.pop %v5719
      %v5732 = vrsqrt.pop %v5720
      %v5733 = vrsqrt.pop %v5721
      %v5734 = vrsqrt.pop %v5722
      %v5735 = vrsqrt.pop %v5723
      %v5736 = vmul.f32 %v5652, %v5724
      %v5737 = vmul.f32 %v5653, %v5725
      %v5738 = vmul.f32 %v5654, %v5726
      %v5739 = vmul.f32 %v5655, %v5727
      %v5740 = vmul.f32 %v5656, %v5728
      %v5741 = vmul.f32 %v5657, %v5729
      %v5742 = vmul.f32 %v5658, %v5730
      %v5743 = vmul.f32 %v5659, %v5731
      %v5744 = vmul.f32 %v5660, %v5732
      %v5745 = vmul.f32 %v5661, %v5733
      %v5746 = vmul.f32 %v5662, %v5734
      %v5747 = vmul.f32 %v5663, %v5735
      %v5749 = vlaneseq
      %v5750 = vshrl.u32 %v5749, 7
      %v5751 = vsub.s32 0, %v5750
      %v5752 = vrot.slane %v5613, %v5751
      %v5754 = vmul.f32 %v5736, %v5752
      %v5755 = vmul.f32 %v5737, %v5752
      %v5756 = vmul.f32 %v5738, %v5752
      %v5757 = vmul.f32 %v5739, %v5752
      %v5758 = vmul.f32 %v5740, %v5752
      %v5759 = vmul.f32 %v5741, %v5752
      %v5760 = vmul.f32 %v5742, %v5752
      %v5761 = vmul.f32 %v5743, %v5752
      %v5762 = vmul.f32 %v5744, %v5752
      %v5763 = vmul.f32 %v5745, %v5752
      %v5764 = vmul.f32 %v5746, %v5752
      %v5765 = vmul.f32 %v5747, %v5752
      %v5767 = vlaneseq
      %v5768 = vshrl.u32 %v5767, 7
      %v5769 = vsub.s32 0, %v5768
      %v5770 = vrot.slane %v5615, %v5769
      %v5772 = vadd.f32 %v5754, %v5770
      %v5773 = vadd.f32 %v5755, %v5770
      %v5774 = vadd.f32 %v5756, %v5770
      %v5775 = vadd.f32 %v5757, %v5770
      %v5776 = vadd.f32 %v5758, %v5770
      %v5777 = vadd.f32 %v5759, %v5770
      %v5778 = vadd.f32 %v5760, %v5770
      %v5779 = vadd.f32 %v5761, %v5770
      %v5780 = vadd.f32 %v5762, %v5770
      %v5781 = vadd.f32 %v5763, %v5770
      %v5782 = vadd.f32 %v5764, %v5770
      %v5783 = vadd.f32 %v5765, %v5770
      %s5784 = scalar_lea.vmem %s841, 192
      %v5785 = vld [vmem:[%s5784] sm:$0xff]
      %v5786 = vld [vmem:[%s5784 + $0x8] sm:$0xf]
      %v5787 = vld [vmem:[%s5784 + $0xc] sm:$0xff]
      %v5788 = vld [vmem:[%s5784 + $0x14] sm:$0xf]
      %v5789 = vld [vmem:[%s5784 + $0x18] sm:$0xff]
      %v5790 = vld [vmem:[%s5784 + $0x20] sm:$0xf]
      %v5791 = vld [vmem:[%s5784 + $0x24] sm:$0xff]
      %v5792 = vld [vmem:[%s5784 + $0x2c] sm:$0xf]
      %v5793 = vld [vmem:[%s5784 + $0x30] sm:$0xff]
      %v5794 = vld [vmem:[%s5784 + $0x38] sm:$0xf]
      %v5795 = vld [vmem:[%s5784 + $0x3c] sm:$0xff]
      %v5796 = vld [vmem:[%s5784 + $0x44] sm:$0xf]
      %v5797 = vld [vmem:[%s5784 + $0x48] sm:$0xff]
      %v5798 = vld [vmem:[%s5784 + $0x50] sm:$0xf]
      %v5799 = vld [vmem:[%s5784 + $0x54] sm:$0xff]
      %v5800 = vld [vmem:[%s5784 + $0x5c] sm:$0xf]
      %v5801 = vld [vmem:[%s5784 + $0x60] sm:$0xff]
      %v5802 = vld [vmem:[%s5784 + $0x68] sm:$0xf]
      %v5803 = vld [vmem:[%s5784 + $0x6c] sm:$0xff]
      %v5804 = vld [vmem:[%s5784 + $0x74] sm:$0xf]
      %v5805 = vld [vmem:[%s5784 + $0x78] sm:$0xff]
      %v5806 = vld [vmem:[%s5784 + $0x80] sm:$0xf]
      %v5807 = vld [vmem:[%s5784 + $0x84] sm:$0xff]
      %v5808 = vld [vmem:[%s5784 + $0x8c] sm:$0xf]
      %v5809 = vld [vmem:[%s5784 + $0x90] sm:$0xff]
      %v5810 = vld [vmem:[%s5784 + $0x98] sm:$0xf]
      %v5811 = vld [vmem:[%s5784 + $0x9c] sm:$0xff]
      %v5812 = vld [vmem:[%s5784 + $0xa4] sm:$0xf]
      %v5813 = vld [vmem:[%s5784 + $0xa8] sm:$0xff]
      %v5814 = vld [vmem:[%s5784 + $0xb0] sm:$0xf]
      %v5815 = vld [vmem:[%s5784 + $0xb4] sm:$0xff]
      %v5816 = vld [vmem:[%s5784 + $0xbc] sm:$0xf]
      %s5817 = scalar_lea.vmem %s845, 3
      %v5818 = vld [vmem:[%s5817] sm:$0x7]
      %v5819 = vpack.c.bf16 %v5773, %v5772
      %v5820 = vpack.c.bf16 %v5775, %v5774
      %v5821 = vpack.c.bf16 %v5777, %v5776
      %v5822 = vpack.c.bf16 %v5779, %v5778
      %v5823 = vpack.c.bf16 %v5781, %v5780
      %v5824 = vpack.c.bf16 %v5783, %v5782
      %v5826 = vlaneseq
      %v5827 = vshrl.u32 %v5826, 7
      %v5828 = vsub.s32 0, %v5827
      %v5829 = vrot.slane %v5818, %v5828
      %v5830 = vlaneseq
      %v5831 = vshrl.u32 %v5830, 7
      %v5832 = vsub.s32 1, %v5831
      %v5833 = vrot.slane %v5818, %v5832
      %v5834 = vlaneseq
      %v5835 = vshrl.u32 %v5834, 7
      %v5836 = vsub.s32 2, %v5835
      %v5837 = vrot.slane %v5818, %v5836
      %v5873 = vunpack.c.l.b16 %v5785
      %v5874 = vunpack.c.h.b16 %v5785
      %v5875 = vunpack.c.l.b16 %v5786
      %v5876 = vunpack.c.l.b16 %v5787
      %v5877 = vunpack.c.h.b16 %v5787
      %v5878 = vunpack.c.l.b16 %v5788
      %v5879 = vunpack.c.l.b16 %v5789
      %v5880 = vunpack.c.h.b16 %v5789
      %v5881 = vunpack.c.l.b16 %v5790
      %v5882 = vunpack.c.l.b16 %v5791
      %v5883 = vunpack.c.h.b16 %v5791
      %v5884 = vunpack.c.l.b16 %v5792
      %v5885 = vunpack.c.l.b16 %v5793
      %v5886 = vunpack.c.h.b16 %v5793
      %v5887 = vunpack.c.l.b16 %v5794
      %v5888 = vunpack.c.l.b16 %v5795
      %v5889 = vunpack.c.h.b16 %v5795
      %v5890 = vunpack.c.l.b16 %v5796
      %v5891 = vunpack.c.l.b16 %v5797
      %v5892 = vunpack.c.h.b16 %v5797
      %v5893 = vunpack.c.l.b16 %v5798
      %v5894 = vunpack.c.l.b16 %v5799
      %v5895 = vunpack.c.h.b16 %v5799
      %v5896 = vunpack.c.l.b16 %v5800
      %v5897 = vunpack.c.l.b16 %v5801
      %v5898 = vunpack.c.h.b16 %v5801
      %v5899 = vunpack.c.l.b16 %v5802
      %v5900 = vunpack.c.l.b16 %v5803
      %v5901 = vunpack.c.h.b16 %v5803
      %v5902 = vunpack.c.l.b16 %v5804
      %v5903 = vunpack.c.l.b16 %v5805
      %v5904 = vunpack.c.h.b16 %v5805
      %v5905 = vunpack.c.l.b16 %v5806
      %v5906 = vunpack.c.l.b16 %v5807
      %v5907 = vunpack.c.h.b16 %v5807
      %v5908 = vunpack.c.l.b16 %v5808
      %v5909 = vunpack.c.l.b16 %v5809
      %v5910 = vunpack.c.h.b16 %v5809
      %v5911 = vunpack.c.l.b16 %v5810
      %v5912 = vunpack.c.l.b16 %v5811
      %v5913 = vunpack.c.h.b16 %v5811
      %v5914 = vunpack.c.l.b16 %v5812
      %v5915 = vunpack.c.l.b16 %v5813
      %v5916 = vunpack.c.h.b16 %v5813
      %v5917 = vunpack.c.l.b16 %v5814
      %v5918 = vunpack.c.l.b16 %v5815
      %v5919 = vunpack.c.h.b16 %v5815
      %v5920 = vunpack.c.l.b16 %v5816
      %v5921 = vpack.c.b16 %v5876, %v5873
      %v5922 = vpack.c.b16 %v5877, %v5874
      %v5923 = vpack.c.b16 %v5878, %v5875
      %v5924 = vpack.c.b16 %v5882, %v5879
      %v5925 = vpack.c.b16 %v5883, %v5880
      %v5926 = vpack.c.b16 %v5884, %v5881
      %v5927 = vpack.c.b16 %v5888, %v5885
      %v5928 = vpack.c.b16 %v5889, %v5886
      %v5929 = vpack.c.b16 %v5890, %v5887
      %v5930 = vpack.c.b16 %v5894, %v5891
      %v5931 = vpack.c.b16 %v5895, %v5892
      %v5932 = vpack.c.b16 %v5896, %v5893
      %v5933 = vpack.c.b16 %v5900, %v5897
      %v5934 = vpack.c.b16 %v5901, %v5898
      %v5935 = vpack.c.b16 %v5902, %v5899
      %v5936 = vpack.c.b16 %v5906, %v5903
      %v5937 = vpack.c.b16 %v5907, %v5904
      %v5938 = vpack.c.b16 %v5908, %v5905
      %v5939 = vpack.c.b16 %v5912, %v5909
      %v5940 = vpack.c.b16 %v5913, %v5910
      %v5941 = vpack.c.b16 %v5914, %v5911
      %v5942 = vpack.c.b16 %v5918, %v5915
      %v5943 = vpack.c.b16 %v5919, %v5916
      %v5944 = vpack.c.b16 %v5920, %v5917
      %5969 = vmatprep.subr.bf16.mxu0 %v5922
      %5970 = vmatpush1.bf16.msra.mxu0 %v5921
      %5971 = vmatprep.subr.bf16.mxu0 %v5925
      %5972 = vmatpush1.bf16.msra.mxu0 %v5924
      %5973 = vmatprep.subr.bf16.mxu0 %v5928
      %5974 = vmatpush1.bf16.msra.mxu0 %v5927
      %5975 = vmatprep.subr.bf16.mxu0 %v5931
      %5976 = vmatpush1.bf16.msra.mxu0 %v5930
      %5977 = vmatprep.subr.bf16.mxu0 %v5934
      %5978 = vmatpush1.bf16.msra.mxu0 %v5933
      %5979 = vmatprep.subr.bf16.mxu0 %v5937
      %5980 = vmatpush1.bf16.msra.mxu0 %v5936
      %5981 = vmatprep.subr.bf16.mxu0 %v5940
      %5982 = vmatpush1.bf16.msra.mxu0 %v5939
      %5983 = vmatprep.subr.bf16.mxu0 %v5943
      %5984 = vmatpush1.bf16.msra.mxu0 %v5942
      %5985 = vmatprep.subr.bf16.mxu0 0
      %5986 = vmatpush1.bf16.msra.mxu0 0
      %5987 = vmatprep.subr.bf16.mxu0 0
      %5988 = vmatpush1.bf16.msra.mxu0 0
      %5989 = vmatprep.subr.bf16.mxu0 0
      %5990 = vmatpush1.bf16.msra.mxu0 0
      %5991 = vmatprep.subr.bf16.mxu0 0
      %5992 = vmatpush1.bf16.msra.mxu0 0
      %5993 = vmatprep.subr.bf16.mxu0 0
      %5994 = vmatpush1.bf16.msra.mxu0 0
      %5995 = vmatprep.subr.bf16.mxu0 0
      %5996 = vmatpush1.bf16.msra.mxu0 0
      %5997 = vmatprep.subr.bf16.mxu0 0
      %5998 = vmatpush1.bf16.msra.mxu0 0
      %5999 = vmatprep.subr.bf16.mxu0 0
      %6000 = vmatpush1.bf16.msra.mxu0 0
      %6001 = vmatprep.mubr.bf16.mxu0 0
      %6002 = vmatmul.mubr.bf16.gmra.mrb[0].mxu0 %v5819
      %v6003 = vpop.f32.mrb[0].mxu0
      %v6004 = vadd.f32 %v5829, %v6003
      %v6005 = vpop.f32.mrb[0].mxu0
      %v6006 = vadd.f32 %v5833, %v6005
      %v6007 = vpop.f32.mrb[0].mxu0
      %v6008 = vadd.f32 %v5829, %v6007
      %v6009 = vpop.f32.mrb[0].mxu0
      %v6010 = vadd.f32 %v5833, %v6009
      %6011 = vmatprep.mubr.bf16.mxu0 0
      %6012 = vmatmul.mubr.bf16.gmra.mrb[0].mxu0 %v5820
      %v6013 = vpop.f32.mrb[0].mxu0
      %v6014 = vadd.f32 %v5829, %v6013
      %v6015 = vpop.f32.mrb[0].mxu0
      %v6016 = vadd.f32 %v5833, %v6015
      %v6017 = vpop.f32.mrb[0].mxu0
      %v6018 = vadd.f32 %v5829, %v6017
      %v6019 = vpop.f32.mrb[0].mxu0
      %v6020 = vadd.f32 %v5833, %v6019
      %6021 = vmatprep.mubr.bf16.mxu0 0
      %6022 = vmatmul.mubr.bf16.gmra.mrb[0].mxu0 %v5821
      %v6023 = vpop.f32.mrb[0].mxu0
      %v6024 = vadd.f32 %v5829, %v6023
      %v6025 = vpop.f32.mrb[0].mxu0
      %v6026 = vadd.f32 %v5833, %v6025
      %v6027 = vpop.f32.mrb[0].mxu0
      %v6028 = vadd.f32 %v5829, %v6027
      %v6029 = vpop.f32.mrb[0].mxu0
      %v6030 = vadd.f32 %v5833, %v6029
      %6031 = vmatprep.mubr.bf16.mxu0 0
      %6032 = vmatmul.mubr.bf16.gmra.mrb[0].mxu0 %v5822
      %v6033 = vpop.f32.mrb[0].mxu0
      %v6034 = vadd.f32 %v5829, %v6033
      %v6035 = vpop.f32.mrb[0].mxu0
      %v6036 = vadd.f32 %v5833, %v6035
      %v6037 = vpop.f32.mrb[0].mxu0
      %v6038 = vadd.f32 %v5829, %v6037
      %v6039 = vpop.f32.mrb[0].mxu0
      %v6040 = vadd.f32 %v5833, %v6039
      %6041 = vmatprep.mubr.bf16.mxu0 0
      %6042 = vmatmul.mubr.bf16.gmra.mrb[0].mxu0 %v5823
      %v6043 = vpop.f32.mrb[0].mxu0
      %v6044 = vadd.f32 %v5829, %v6043
      %v6045 = vpop.f32.mrb[0].mxu0
      %v6046 = vadd.f32 %v5833, %v6045
      %v6047 = vpop.f32.mrb[0].mxu0
      %v6048 = vadd.f32 %v5829, %v6047
      %v6049 = vpop.f32.mrb[0].mxu0
      %v6050 = vadd.f32 %v5833, %v6049
      %6051 = vmatprep.mubr.bf16.mxu0 0
      %6052 = vmatmul.mubr.bf16.gmra.mrb[0].mxu0 %v5824
      %v6053 = vpop.f32.mrb[0].mxu0
      %v6054 = vadd.f32 %v5829, %v6053
      %v6055 = vpop.f32.mrb[0].mxu0
      %v6056 = vadd.f32 %v5833, %v6055
      %v6057 = vpop.f32.mrb[0].mxu0
      %v6058 = vadd.f32 %v5829, %v6057
      %v6059 = vpop.f32.mrb[0].mxu0
      %v6060 = vadd.f32 %v5833, %v6059
      %6061 = vdwg.mxu0
      %6062 = vmatprep.subr.bf16.mxu0 0
      %6063 = vmatpush1.bf16.msra.mxu0 %v5923
      %6064 = vmatprep.subr.bf16.mxu0 0
      %6065 = vmatpush1.bf16.msra.mxu0 %v5926
      %6066 = vmatprep.subr.bf16.mxu0 0
      %6067 = vmatpush1.bf16.msra.mxu0 %v5929
      %6068 = vmatprep.subr.bf16.mxu0 0
      %6069 = vmatpush1.bf16.msra.mxu0 %v5932
      %6070 = vmatprep.subr.bf16.mxu0 0
      %6071 = vmatpush1.bf16.msra.mxu0 %v5935
      %6072 = vmatprep.subr.bf16.mxu0 0
      %6073 = vmatpush1.bf16.msra.mxu0 %v5938
      %6074 = vmatprep.subr.bf16.mxu0 0
      %6075 = vmatpush1.bf16.msra.mxu0 %v5941
      %6076 = vmatprep.subr.bf16.mxu0 0
      %6077 = vmatpush1.bf16.msra.mxu0 %v5944
      %6078 = vmatprep.subr.bf16.mxu0 0
      %6079 = vmatpush1.bf16.msra.mxu0 0
      %6080 = vmatprep.subr.bf16.mxu0 0
      %6081 = vmatpush1.bf16.msra.mxu0 0
      %6082 = vmatprep.subr.bf16.mxu0 0
      %6083 = vmatpush1.bf16.msra.mxu0 0
      %6084 = vmatprep.subr.bf16.mxu0 0
      %6085 = vmatpush1.bf16.msra.mxu0 0
      %6086 = vmatprep.subr.bf16.mxu0 0
      %6087 = vmatpush1.bf16.msra.mxu0 0
      %6088 = vmatprep.subr.bf16.mxu0 0
      %6089 = vmatpush1.bf16.msra.mxu0 0
      %6090 = vmatprep.subr.bf16.mxu0 0
      %6091 = vmatpush1.bf16.msra.mxu0 0
      %6092 = vmatprep.subr.bf16.mxu0 0
      %6093 = vmatpush1.bf16.msra.mxu0 0
      %6094 = vmatprep.mubr.bf16.mxu0 0
      %6095 = vmatmul.mubr.bf16.gmra.mrb[0].mxu0 %v5819
      %v6096 = vpop.f32.mrb[0].mxu0
      %v6097 = vadd.f32 %v5837, %v6096
      %v6098 = vpop.f32.mrb[0].mxu0
      %v6099 = vpop.f32.mrb[0].mxu0
      %v6100 = vadd.f32 %v5837, %v6099
      %v6101 = vpop.f32.mrb[0].mxu0
      %6102 = vmatprep.mubr.bf16.mxu0 0
      %6103 = vmatmul.mubr.bf16.gmra.mrb[0].mxu0 %v5820
      %v6104 = vpop.f32.mrb[0].mxu0
      %v6105 = vadd.f32 %v5837, %v6104
      %v6106 = vpop.f32.mrb[0].mxu0
      %v6107 = vpop.f32.mrb[0].mxu0
      %v6108 = vadd.f32 %v5837, %v6107
      %v6109 = vpop.f32.mrb[0].mxu0
      %6110 = vmatprep.mubr.bf16.mxu0 0
      %6111 = vmatmul.mubr.bf16.gmra.mrb[0].mxu0 %v5821
      %v6112 = vpop.f32.mrb[0].mxu0
      %v6113 = vadd.f32 %v5837, %v6112
      %v6114 = vpop.f32.mrb[0].mxu0
      %v6115 = vpop.f32.mrb[0].mxu0
      %v6116 = vadd.f32 %v5837, %v6115
      %v6117 = vpop.f32.mrb[0].mxu0
      %6118 = vmatprep.mubr.bf16.mxu0 0
      %6119 = vmatmul.mubr.bf16.gmra.mrb[0].mxu0 %v5822
      %v6120 = vpop.f32.mrb[0].mxu0
      %v6121 = vadd.f32 %v5837, %v6120
      %v6122 = vpop.f32.mrb[0].mxu0
      %v6123 = vpop.f32.mrb[0].mxu0
      %v6124 = vadd.f32 %v5837, %v6123
      %v6125 = vpop.f32.mrb[0].mxu0
      %6126 = vmatprep.mubr.bf16.mxu0 0
      %6127 = vmatmul.mubr.bf16.gmra.mrb[0].mxu0 %v5823
      %v6128 = vpop.f32.mrb[0].mxu0
      %v6129 = vadd.f32 %v5837, %v6128
      %v6130 = vpop.f32.mrb[0].mxu0
      %v6131 = vpop.f32.mrb[0].mxu0
      %v6132 = vadd.f32 %v5837, %v6131
      %v6133 = vpop.f32.mrb[0].mxu0
      %6134 = vmatprep.mubr.bf16.mxu0 0
      %6135 = vmatmul.mubr.bf16.gmra.mrb[0].mxu0 %v5824
      %v6136 = vpop.f32.mrb[0].mxu0
      %v6137 = vadd.f32 %v5837, %v6136
      %v6138 = vpop.f32.mrb[0].mxu0
      %v6139 = vpop.f32.mrb[0].mxu0
      %v6140 = vadd.f32 %v5837, %v6139
      %v6141 = vpop.f32.mrb[0].mxu0
      %6142 = vdwg.mxu0
      %v6143 = vpack.c.bf16 %v6008, %v6004
      %v6144 = vpack.c.bf16 %v6010, %v6006
      %v6145 = vpack.c.bf16 %v6100, %v6097
      %v6146 = vpack.c.bf16 %v6018, %v6014
      %v6147 = vpack.c.bf16 %v6020, %v6016
      %v6148 = vpack.c.bf16 %v6108, %v6105
      %v6149 = vpack.c.bf16 %v6028, %v6024
      %v6150 = vpack.c.bf16 %v6030, %v6026
      %v6151 = vpack.c.bf16 %v6116, %v6113
      %v6152 = vpack.c.bf16 %v6038, %v6034
      %v6153 = vpack.c.bf16 %v6040, %v6036
      %v6154 = vpack.c.bf16 %v6124, %v6121
      %v6155 = vpack.c.bf16 %v6048, %v6044
      %v6156 = vpack.c.bf16 %v6050, %v6046
      %v6157 = vpack.c.bf16 %v6132, %v6129
      %v6158 = vpack.c.bf16 %v6058, %v6054
      %v6159 = vpack.c.bf16 %v6060, %v6056
      %v6160 = vpack.c.bf16 %v6140, %v6137
      %v6167 = vunpack.c.l.b16 %v6143
      %v6168 = vunpack.c.h.b16 %v6143
      %v6169 = vunpack.c.l.b16 %v6146
      %v6170 = vunpack.c.h.b16 %v6146
      %v6171 = vunpack.c.l.b16 %v6149
      %v6172 = vunpack.c.h.b16 %v6149
      %v6173 = vunpack.c.l.b16 %v6152
      %v6174 = vunpack.c.h.b16 %v6152
      %v6175 = vunpack.c.l.b16 %v6155
      %v6176 = vunpack.c.h.b16 %v6155
      %v6177 = vunpack.c.l.b16 %v6158
      %v6178 = vunpack.c.h.b16 %v6158
      %v6185 = vunpack.c.l.b16 %v6144
      %v6186 = vunpack.c.h.b16 %v6144
      %v6187 = vunpack.c.l.b16 %v6147
      %v6188 = vunpack.c.h.b16 %v6147
      %v6189 = vunpack.c.l.b16 %v6150
      %v6190 = vunpack.c.h.b16 %v6150
      %v6191 = vunpack.c.l.b16 %v6153
      %v6192 = vunpack.c.h.b16 %v6153
      %v6193 = vunpack.c.l.b16 %v6156
      %v6194 = vunpack.c.h.b16 %v6156
      %v6195 = vunpack.c.l.b16 %v6159
      %v6196 = vunpack.c.h.b16 %v6159
      %v6203 = vunpack.c.l.b16 %v6145
      %v6204 = vunpack.c.h.b16 %v6145
      %v6205 = vunpack.c.l.b16 %v6148
      %v6206 = vunpack.c.h.b16 %v6148
      %v6207 = vunpack.c.l.b16 %v6151
      %v6208 = vunpack.c.h.b16 %v6151
      %v6209 = vunpack.c.l.b16 %v6154
      %v6210 = vunpack.c.h.b16 %v6154
      %v6211 = vunpack.c.l.b16 %v6157
      %v6212 = vunpack.c.h.b16 %v6157
      %v6213 = vunpack.c.l.b16 %v6160
      %v6214 = vunpack.c.h.b16 %v6160
      %v6215 = vpack.c.b16 %v6168, %v6167
      %v6216 = vpack.c.b16 %v6169, %v6169
      %v6217 = vpack.c.b16 %v6186, %v6185
      %v6218 = vpack.c.b16 %v6187, %v6187
      %v6220 = vsel %vm1716, %v6215, 0
      %v6223 = vsel %vm1716, %v6216, 0
      %v6226 = vsel %vm1716, %v6217, 0
      %v6229 = vsel %vm1716, %v6218, 0
      %6231 = vmatprep.subr.bf16.mxu0 0
      %6232 = vmatpush1.bf16.xpose.msra.mxu0 %v6226
      %6233 = vmatprep.subr.bf16.mxu0 0
      %6234 = vmatpush1.bf16.xpose.msra.mxu0 %v6229
      %6235 = vmatprep.subr.bf16.mxu0 0
      %6236 = vmatpush1.bf16.xpose.msra.mxu0 0
      %6237 = vmatprep.subr.bf16.mxu0 0
      %6238 = vmatpush1.bf16.xpose.msra.mxu0 0
      %6239 = vmatprep.subr.bf16.mxu0 0
      %6240 = vmatpush1.bf16.xpose.msra.mxu0 0
      %6241 = vmatprep.subr.bf16.mxu0 0
      %6242 = vmatpush1.bf16.xpose.msra.mxu0 0
      %6243 = vmatprep.subr.bf16.mxu0 0
      %6244 = vmatpush1.bf16.xpose.msra.mxu0 0
      %6245 = vmatprep.subr.bf16.mxu0 0
      %6246 = vmatpush1.bf16.xpose.msra.mxu0 0
      %6247 = vmatprep.subr.bf16.mxu0 0
      %6248 = vmatpush1.bf16.xpose.msra.mxu0 0
      %6249 = vmatprep.subr.bf16.mxu0 0
      %6250 = vmatpush1.bf16.xpose.msra.mxu0 0
      %6251 = vmatprep.subr.bf16.mxu0 0
      %6252 = vmatpush1.bf16.xpose.msra.mxu0 0
      %6253 = vmatprep.subr.bf16.mxu0 0
      %6254 = vmatpush1.bf16.xpose.msra.mxu0 0
      %6255 = vmatprep.subr.bf16.mxu0 0
      %6256 = vmatpush1.bf16.xpose.msra.mxu0 0
      %6257 = vmatprep.subr.bf16.mxu0 0
      %6258 = vmatpush1.bf16.xpose.msra.mxu0 0
      %6259 = vmatprep.subr.bf16.mxu0 0
      %6260 = vmatpush1.bf16.xpose.msra.mxu0 0
      %6261 = vmatprep.subr.bf16.mxu0 0
      %6262 = vmatpush1.bf16.xpose.msra.mxu0 0
      %6263 = vmatprep.mubr.bf16.mxu0 0
      %6264 = vmatmul.mubr.bf16.gmra.mrb[0].mxu0 %v6220
      %v6265 = vpop.f32.mrb[0].mxu0
      %v6266 = vadd.f32 0.0, %v6265
      %v6267 = vpop.f32.mrb[0].mxu0
      %v6268 = vpop.f32.mrb[0].mxu0
      %v6269 = vadd.f32 0.0, %v6268
      %v6270 = vpop.f32.mrb[0].mxu0
      %6271 = vmatprep.mubr.bf16.mxu0 0
      %6272 = vmatmul.mubr.bf16.gmra.mrb[0].mxu0 %v6223
      %v6273 = vpop.f32.mrb[0].mxu0
      %v6274 = vadd.f32 0.0, %v6273
      %v6275 = vpop.f32.mrb[0].mxu0
      %v6276 = vpop.f32.mrb[0].mxu0
      %v6277 = vpop.f32.mrb[0].mxu0
      %6278 = vdwg.mxu0
      %v6279 = vpack.c.b16 %v6171, %v6170
      %v6280 = vpack.c.b16 %v6172, %v6172
      %v6281 = vpack.c.b16 %v6189, %v6188
      %v6282 = vpack.c.b16 %v6190, %v6190
      %v6284 = vsel %vm1716, %v6279, 0
      %v6287 = vsel %vm1716, %v6280, 0
      %v6290 = vsel %vm1716, %v6281, 0
      %v6293 = vsel %vm1716, %v6282, 0
      %6295 = vmatprep.subr.bf16.mxu0 0
      %6296 = vmatpush1.bf16.xpose.msra.mxu0 %v6290
      %6297 = vmatprep.subr.bf16.mxu0 0
      %6298 = vmatpush1.bf16.xpose.msra.mxu0 %v6293
      %6299 = vmatprep.subr.bf16.mxu0 0
      %6300 = vmatpush1.bf16.xpose.msra.mxu0 0
      %6301 = vmatprep.subr.bf16.mxu0 0
      %6302 = vmatpush1.bf16.xpose.msra.mxu0 0
      %6303 = vmatprep.subr.bf16.mxu0 0
      %6304 = vmatpush1.bf16.xpose.msra.mxu0 0
      %6305 = vmatprep.subr.bf16.mxu0 0
      %6306 = vmatpush1.bf16.xpose.msra.mxu0 0
      %6307 = vmatprep.subr.bf16.mxu0 0
      %6308 = vmatpush1.bf16.xpose.msra.mxu0 0
      %6309 = vmatprep.subr.bf16.mxu0 0
      %6310 = vmatpush1.bf16.xpose.msra.mxu0 0
      %6311 = vmatprep.subr.bf16.mxu0 0
      %6312 = vmatpush1.bf16.xpose.msra.mxu0 0
      %6313 = vmatprep.subr.bf16.mxu0 0
      %6314 = vmatpush1.bf16.xpose.msra.mxu0 0
      %6315 = vmatprep.subr.bf16.mxu0 0
      %6316 = vmatpush1.bf16.xpose.msra.mxu0 0
      %6317 = vmatprep.subr.bf16.mxu0 0
      %6318 = vmatpush1.bf16.xpose.msra.mxu0 0
      %6319 = vmatprep.subr.bf16.mxu0 0
      %6320 = vmatpush1.bf16.xpose.msra.mxu0 0
      %6321 = vmatprep.subr.bf16.mxu0 0
      %6322 = vmatpush1.bf16.xpose.msra.mxu0 0
      %6323 = vmatprep.subr.bf16.mxu0 0
      %6324 = vmatpush1.bf16.xpose.msra.mxu0 0
      %6325 = vmatprep.subr.bf16.mxu0 0
      %6326 = vmatpush1.bf16.xpose.msra.mxu0 0
      %6327 = vmatprep.mubr.bf16.mxu0 0
      %6328 = vmatmul.mubr.bf16.gmra.mrb[0].mxu0 %v6284
      %v6329 = vpop.f32.mrb[0].mxu0
      %v6330 = vadd.f32 0.0, %v6329
      %v6331 = vpop.f32.mrb[0].mxu0
      %v6332 = vpop.f32.mrb[0].mxu0
      %v6333 = vadd.f32 0.0, %v6332
      %v6334 = vpop.f32.mrb[0].mxu0
      %6335 = vmatprep.mubr.bf16.mxu0 0
      %6336 = vmatmul.mubr.bf16.gmra.mrb[0].mxu0 %v6287
      %v6337 = vpop.f32.mrb[0].mxu0
      %v6338 = vadd.f32 0.0, %v6337
      %v6339 = vpop.f32.mrb[0].mxu0
      %v6340 = vpop.f32.mrb[0].mxu0
      %v6341 = vpop.f32.mrb[0].mxu0
      %6342 = vdwg.mxu0
      %v6343 = vpack.c.b16 %v6174, %v6173
      %v6344 = vpack.c.b16 %v6175, %v6175
      %v6345 = vpack.c.b16 %v6192, %v6191
      %v6346 = vpack.c.b16 %v6193, %v6193
      %v6348 = vsel %vm1716, %v6343, 0
      %v6351 = vsel %vm1716, %v6344, 0
      %v6354 = vsel %vm1716, %v6345, 0
      %v6357 = vsel %vm1716, %v6346, 0
      %6359 = vmatprep.subr.bf16.mxu0 0
      %6360 = vmatpush1.bf16.xpose.msra.mxu0 %v6354
      %6361 = vmatprep.subr.bf16.mxu0 0
      %6362 = vmatpush1.bf16.xpose.msra.mxu0 %v6357
      %6363 = vmatprep.subr.bf16.mxu0 0
      %6364 = vmatpush1.bf16.xpose.msra.mxu0 0
      %6365 = vmatprep.subr.bf16.mxu0 0
      %6366 = vmatpush1.bf16.xpose.msra.mxu0 0
      %6367 = vmatprep.subr.bf16.mxu0 0
      %6368 = vmatpush1.bf16.xpose.msra.mxu0 0
      %6369 = vmatprep.subr.bf16.mxu0 0
      %6370 = vmatpush1.bf16.xpose.msra.mxu0 0
      %6371 = vmatprep.subr.bf16.mxu0 0
      %6372 = vmatpush1.bf16.xpose.msra.mxu0 0
      %6373 = vmatprep.subr.bf16.mxu0 0
      %6374 = vmatpush1.bf16.xpose.msra.mxu0 0
      %6375 = vmatprep.subr.bf16.mxu0 0
      %6376 = vmatpush1.bf16.xpose.msra.mxu0 0
      %6377 = vmatprep.subr.bf16.mxu0 0
      %6378 = vmatpush1.bf16.xpose.msra.mxu0 0
      %6379 = vmatprep.subr.bf16.mxu0 0
      %6380 = vmatpush1.bf16.xpose.msra.mxu0 0
      %6381 = vmatprep.subr.bf16.mxu0 0
      %6382 = vmatpush1.bf16.xpose.msra.mxu0 0
      %6383 = vmatprep.subr.bf16.mxu0 0
      %6384 = vmatpush1.bf16.xpose.msra.mxu0 0
      %6385 = vmatprep.subr.bf16.mxu0 0
      %6386 = vmatpush1.bf16.xpose.msra.mxu0 0
      %6387 = vmatprep.subr.bf16.mxu0 0
      %6388 = vmatpush1.bf16.xpose.msra.mxu0 0
      %6389 = vmatprep.subr.bf16.mxu0 0
      %6390 = vmatpush1.bf16.xpose.msra.mxu0 0
      %6391 = vmatprep.mubr.bf16.mxu0 0
      %6392 = vmatmul.mubr.bf16.gmra.mrb[0].mxu0 %v6348
      %v6393 = vpop.f32.mrb[0].mxu0
      %v6394 = vadd.f32 0.0, %v6393
      %v6395 = vpop.f32.mrb[0].mxu0
      %v6396 = vpop.f32.mrb[0].mxu0
      %v6397 = vadd.f32 0.0, %v6396
      %v6398 = vpop.f32.mrb[0].mxu0
      %6399 = vmatprep.mubr.bf16.mxu0 0
      %6400 = vmatmul.mubr.bf16.gmra.mrb[0].mxu0 %v6351
      %v6401 = vpop.f32.mrb[0].mxu0
      %v6402 = vadd.f32 0.0, %v6401
      %v6403 = vpop.f32.mrb[0].mxu0
      %v6404 = vpop.f32.mrb[0].mxu0
      %v6405 = vpop.f32.mrb[0].mxu0
      %6406 = vdwg.mxu0
      %v6407 = vpack.c.b16 %v6177, %v6176
      %v6408 = vpack.c.b16 %v6178, %v6178
      %v6409 = vpack.c.b16 %v6195, %v6194
      %v6410 = vpack.c.b16 %v6196, %v6196
      %v6412 = vsel %vm1716, %v6407, 0
      %v6415 = vsel %vm1716, %v6408, 0
      %v6418 = vsel %vm1716, %v6409, 0
      %v6421 = vsel %vm1716, %v6410, 0
      %6423 = vmatprep.subr.bf16.mxu0 0
      %6424 = vmatpush1.bf16.xpose.msra.mxu0 %v6418
      %6425 = vmatprep.subr.bf16.mxu0 0
      %6426 = vmatpush1.bf16.xpose.msra.mxu0 %v6421
      %6427 = vmatprep.subr.bf16.mxu0 0
      %6428 = vmatpush1.bf16.xpose.msra.mxu0 0
      %6429 = vmatprep.subr.bf16.mxu0 0
      %6430 = vmatpush1.bf16.xpose.msra.mxu0 0
      %6431 = vmatprep.subr.bf16.mxu0 0
      %6432 = vmatpush1.bf16.xpose.msra.mxu0 0
      %6433 = vmatprep.subr.bf16.mxu0 0
      %6434 = vmatpush1.bf16.xpose.msra.mxu0 0
      %6435 = vmatprep.subr.bf16.mxu0 0
      %6436 = vmatpush1.bf16.xpose.msra.mxu0 0
      %6437 = vmatprep.subr.bf16.mxu0 0
      %6438 = vmatpush1.bf16.xpose.msra.mxu0 0
      %6439 = vmatprep.subr.bf16.mxu0 0
      %6440 = vmatpush1.bf16.xpose.msra.mxu0 0
      %6441 = vmatprep.subr.bf16.mxu0 0
      %6442 = vmatpush1.bf16.xpose.msra.mxu0 0
      %6443 = vmatprep.subr.bf16.mxu0 0
      %6444 = vmatpush1.bf16.xpose.msra.mxu0 0
      %6445 = vmatprep.subr.bf16.mxu0 0
      %6446 = vmatpush1.bf16.xpose.msra.mxu0 0
      %6447 = vmatprep.subr.bf16.mxu0 0
      %6448 = vmatpush1.bf16.xpose.msra.mxu0 0
      %6449 = vmatprep.subr.bf16.mxu0 0
      %6450 = vmatpush1.bf16.xpose.msra.mxu0 0
      %6451 = vmatprep.subr.bf16.mxu0 0
      %6452 = vmatpush1.bf16.xpose.msra.mxu0 0
      %6453 = vmatprep.subr.bf16.mxu0 0
      %6454 = vmatpush1.bf16.xpose.msra.mxu0 0
      %6455 = vmatprep.mubr.bf16.mxu0 0
      %6456 = vmatmul.mubr.bf16.gmra.mrb[0].mxu0 %v6412
      %v6457 = vpop.f32.mrb[0].mxu0
      %v6458 = vadd.f32 0.0, %v6457
      %v6459 = vpop.f32.mrb[0].mxu0
      %v6460 = vpop.f32.mrb[0].mxu0
      %v6461 = vadd.f32 0.0, %v6460
      %v6462 = vpop.f32.mrb[0].mxu0
      %6463 = vmatprep.mubr.bf16.mxu0 0
      %6464 = vmatmul.mubr.bf16.gmra.mrb[0].mxu0 %v6415
      %v6465 = vpop.f32.mrb[0].mxu0
      %v6466 = vadd.f32 0.0, %v6465
      %v6467 = vpop.f32.mrb[0].mxu0
      %v6468 = vpop.f32.mrb[0].mxu0
      %v6469 = vpop.f32.mrb[0].mxu0
      %6470 = vdwg.mxu0
      %v6471 = vmul.f32 %v6266, 0.17677669
      %v6472 = vmul.f32 %v6269, 0.17677669
      %v6473 = vmul.f32 %v6274, 0.17677669
      %v6474 = vmul.f32 %v6330, 0.17677669
      %v6475 = vmul.f32 %v6333, 0.17677669
      %v6476 = vmul.f32 %v6338, 0.17677669
      %v6477 = vmul.f32 %v6394, 0.17677669
      %v6478 = vmul.f32 %v6397, 0.17677669
      %v6479 = vmul.f32 %v6402, 0.17677669
      %v6480 = vmul.f32 %v6458, 0.17677669
      %v6481 = vmul.f32 %v6461, 0.17677669
      %v6482 = vmul.f32 %v6466, 0.17677669
      %v6483 = vadd.f32 %v6471, %v1111
      %v6484 = vadd.f32 %v6472, %v1111
      %v6485 = vadd.f32 %v6473, %v1111
      %v6486 = vadd.f32 %v6474, %v1111
      %v6487 = vadd.f32 %v6475, %v1111
      %v6488 = vadd.f32 %v6476, %v1111
      %v6489 = vadd.f32 %v6477, %v1111
      %v6490 = vadd.f32 %v6478, %v1111
      %v6491 = vadd.f32 %v6479, %v1111
      %v6492 = vadd.f32 %v6480, %v1111
      %v6493 = vadd.f32 %v6481, %v1111
      %v6494 = vadd.f32 %v6482, %v1111
      %v6495 = vsel %vm1993, %v6483, -inf
      %6496 = vmax.xlane.f32.xlu0 %v6495
      %v6497 = vpop.xlane.xlu0 %6496
      %v6498 = vsel %vm1993, %v6484, -inf
      %6499 = vmax.xlane.f32.xlu0 %v6498
      %v6500 = vpop.xlane.xlu0 %6499
      %v6501 = vsel %vm1993, %v6485, -inf
      %6502 = vmax.xlane.f32.xlu0 %v6501
      %v6503 = vpop.xlane.xlu0 %6502
      %v6504 = vsel %vm1993, %v6486, -inf
      %6505 = vmax.xlane.f32.xlu0 %v6504
      %v6506 = vpop.xlane.xlu0 %6505
      %v6507 = vsel %vm1993, %v6487, -inf
      %6508 = vmax.xlane.f32.xlu0 %v6507
      %v6509 = vpop.xlane.xlu0 %6508
      %v6510 = vsel %vm1993, %v6488, -inf
      %6511 = vmax.xlane.f32.xlu0 %v6510
      %v6512 = vpop.xlane.xlu0 %6511
      %v6513 = vsel %vm1993, %v6489, -inf
      %6514 = vmax.xlane.f32.xlu0 %v6513
      %v6515 = vpop.xlane.xlu0 %6514
      %v6516 = vsel %vm1993, %v6490, -inf
      %6517 = vmax.xlane.f32.xlu0 %v6516
      %v6518 = vpop.xlane.xlu0 %6517
      %v6519 = vsel %vm1993, %v6491, -inf
      %6520 = vmax.xlane.f32.xlu0 %v6519
      %v6521 = vpop.xlane.xlu0 %6520
      %v6522 = vsel %vm1993, %v6492, -inf
      %6523 = vmax.xlane.f32.xlu0 %v6522
      %v6524 = vpop.xlane.xlu0 %6523
      %v6525 = vsel %vm1993, %v6493, -inf
      %6526 = vmax.xlane.f32.xlu0 %v6525
      %v6527 = vpop.xlane.xlu0 %6526
      %v6528 = vsel %vm1993, %v6494, -inf
      %6529 = vmax.xlane.f32.xlu0 %v6528
      %v6530 = vpop.xlane.xlu0 %6529
      %v6531 = vsub.f32 %v6483, %v6497
      %v6532 = vsub.f32 %v6484, %v6500
      %v6533 = vsub.f32 %v6485, %v6503
      %v6534 = vsub.f32 %v6486, %v6506
      %v6535 = vsub.f32 %v6487, %v6509
      %v6536 = vsub.f32 %v6488, %v6512
      %v6537 = vsub.f32 %v6489, %v6515
      %v6538 = vsub.f32 %v6490, %v6518
      %v6539 = vsub.f32 %v6491, %v6521
      %v6540 = vsub.f32 %v6492, %v6524
      %v6541 = vsub.f32 %v6493, %v6527
      %v6542 = vsub.f32 %v6494, %v6530
      %v6543 = vmul.f32 %v6531, 1.442695
      %v6544 = vpow.pop %v6543
      %v6545 = vmul.f32 %v6532, 1.442695
      %v6546 = vpow.pop %v6545
      %v6547 = vmul.f32 %v6533, 1.442695
      %v6548 = vpow.pop %v6547
      %v6549 = vmul.f32 %v6534, 1.442695
      %v6550 = vpow.pop %v6549
      %v6551 = vmul.f32 %v6535, 1.442695
      %v6552 = vpow.pop %v6551
      %v6553 = vmul.f32 %v6536, 1.442695
      %v6554 = vpow.pop %v6553
      %v6555 = vmul.f32 %v6537, 1.442695
      %v6556 = vpow.pop %v6555
      %v6557 = vmul.f32 %v6538, 1.442695
      %v6558 = vpow.pop %v6557
      %v6559 = vmul.f32 %v6539, 1.442695
      %v6560 = vpow.pop %v6559
      %v6561 = vmul.f32 %v6540, 1.442695
      %v6562 = vpow.pop %v6561
      %v6563 = vmul.f32 %v6541, 1.442695
      %v6564 = vpow.pop %v6563
      %v6565 = vmul.f32 %v6542, 1.442695
      %v6566 = vpow.pop %v6565
      %v6567 = vsel %vm1993, %v6544, 0.0
      %6568 = vadd.xlane.f32.xlu0 %v6567
      %v6569 = vpop.xlane.xlu0 %6568
      %v6570 = vsel %vm1993, %v6546, 0.0
      %6571 = vadd.xlane.f32.xlu0 %v6570
      %v6572 = vpop.xlane.xlu0 %6571
      %v6573 = vsel %vm1993, %v6548, 0.0
      %6574 = vadd.xlane.f32.xlu0 %v6573
      %v6575 = vpop.xlane.xlu0 %6574
      %v6576 = vsel %vm1993, %v6550, 0.0
      %6577 = vadd.xlane.f32.xlu0 %v6576
      %v6578 = vpop.xlane.xlu0 %6577
      %v6579 = vsel %vm1993, %v6552, 0.0
      %6580 = vadd.xlane.f32.xlu0 %v6579
      %v6581 = vpop.xlane.xlu0 %6580
      %v6582 = vsel %vm1993, %v6554, 0.0
      %6583 = vadd.xlane.f32.xlu0 %v6582
      %v6584 = vpop.xlane.xlu0 %6583
      %v6585 = vsel %vm1993, %v6556, 0.0
      %6586 = vadd.xlane.f32.xlu0 %v6585
      %v6587 = vpop.xlane.xlu0 %6586
      %v6588 = vsel %vm1993, %v6558, 0.0
      %6589 = vadd.xlane.f32.xlu0 %v6588
      %v6590 = vpop.xlane.xlu0 %6589
      %v6591 = vsel %vm1993, %v6560, 0.0
      %6592 = vadd.xlane.f32.xlu0 %v6591
      %v6593 = vpop.xlane.xlu0 %6592
      %v6594 = vsel %vm1993, %v6562, 0.0
      %6595 = vadd.xlane.f32.xlu0 %v6594
      %v6596 = vpop.xlane.xlu0 %6595
      %v6597 = vsel %vm1993, %v6564, 0.0
      %6598 = vadd.xlane.f32.xlu0 %v6597
      %v6599 = vpop.xlane.xlu0 %6598
      %v6600 = vsel %vm1993, %v6566, 0.0
      %6601 = vadd.xlane.f32.xlu0 %v6600
      %v6602 = vpop.xlane.xlu0 %6601
      %v6603 = vrcp.pop %v6569
      %v6604 = vrcp.pop %v6572
      %v6605 = vrcp.pop %v6575
      %v6606 = vrcp.pop %v6578
      %v6607 = vrcp.pop %v6581
      %v6608 = vrcp.pop %v6584
      %v6609 = vrcp.pop %v6587
      %v6610 = vrcp.pop %v6590
      %v6611 = vrcp.pop %v6593
      %v6612 = vrcp.pop %v6596
      %v6613 = vrcp.pop %v6599
      %v6614 = vrcp.pop %v6602
      %v6615 = vmul.f32 %v6544, %v6603
      %v6616 = vmul.f32 %v6546, %v6604
      %v6617 = vmul.f32 %v6548, %v6605
      %v6618 = vmul.f32 %v6550, %v6606
      %v6619 = vmul.f32 %v6552, %v6607
      %v6620 = vmul.f32 %v6554, %v6608
      %v6621 = vmul.f32 %v6556, %v6609
      %v6622 = vmul.f32 %v6558, %v6610
      %v6623 = vmul.f32 %v6560, %v6611
      %v6624 = vmul.f32 %v6562, %v6612
      %v6625 = vmul.f32 %v6564, %v6613
      %v6626 = vmul.f32 %v6566, %v6614
      %v6627 = vpack.c.bf16 %v6616, %v6615
      %v6628 = vpack.c.bf16 %v6617, %v6617
      %v6629 = vpack.c.bf16 %v6619, %v6618
      %v6630 = vpack.c.bf16 %v6620, %v6620
      %v6631 = vpack.c.bf16 %v6622, %v6621
      %v6632 = vpack.c.bf16 %v6623, %v6623
      %v6633 = vpack.c.bf16 %v6625, %v6624
      %v6634 = vpack.c.bf16 %v6626, %v6626
      %v6635 = vpack.c.b16 %v6204, %v6203
      %v6636 = vpack.c.b16 %v6205, %v6205
      %v6639 = vsel %vm1993, %v6627, 0
      %v6642 = vsel %vm1993, %v6628, 0
      %v6645 = vsel %vm2143, %v6636, 0
      %6647 = vmatprep.subr.bf16.mxu0 0
      %6648 = vmatpush1.bf16.msra.mxu0 %v6635
      %6649 = vmatprep.subr.bf16.mxu0 0
      %6650 = vmatpush1.bf16.msra.mxu0 %v6645
      %6651 = vmatprep.subr.bf16.mxu0 0
      %6652 = vmatpush1.bf16.msra.mxu0 0
      %6653 = vmatprep.subr.bf16.mxu0 0
      %6654 = vmatpush1.bf16.msra.mxu0 0
      %6655 = vmatprep.subr.bf16.mxu0 0
      %6656 = vmatpush1.bf16.msra.mxu0 0
      %6657 = vmatprep.subr.bf16.mxu0 0
      %6658 = vmatpush1.bf16.msra.mxu0 0
      %6659 = vmatprep.subr.bf16.mxu0 0
      %6660 = vmatpush1.bf16.msra.mxu0 0
      %6661 = vmatprep.subr.bf16.mxu0 0
      %6662 = vmatpush1.bf16.msra.mxu0 0
      %6663 = vmatprep.subr.bf16.mxu0 0
      %6664 = vmatpush1.bf16.msra.mxu0 0
      %6665 = vmatprep.subr.bf16.mxu0 0
      %6666 = vmatpush1.bf16.msra.mxu0 0
      %6667 = vmatprep.subr.bf16.mxu0 0
      %6668 = vmatpush1.bf16.msra.mxu0 0
      %6669 = vmatprep.subr.bf16.mxu0 0
      %6670 = vmatpush1.bf16.msra.mxu0 0
      %6671 = vmatprep.subr.bf16.mxu0 0
      %6672 = vmatpush1.bf16.msra.mxu0 0
      %6673 = vmatprep.subr.bf16.mxu0 0
      %6674 = vmatpush1.bf16.msra.mxu0 0
      %6675 = vmatprep.subr.bf16.mxu0 0
      %6676 = vmatpush1.bf16.msra.mxu0 0
      %6677 = vmatprep.subr.bf16.mxu0 0
      %6678 = vmatpush1.bf16.msra.mxu0 0
      %6679 = vmatprep.mubr.bf16.mxu0 0
      %6680 = vmatmul.mubr.bf16.gmra.mrb[0].mxu0 %v6639
      %v6681 = vpop.f32.mrb[0].mxu0
      %v6682 = vadd.f32 0.0, %v6681
      %v6683 = vpop.f32.mrb[0].mxu0
      %v6684 = vpop.f32.mrb[0].mxu0
      %v6685 = vadd.f32 0.0, %v6684
      %v6686 = vpop.f32.mrb[0].mxu0
      %6687 = vmatprep.mubr.bf16.mxu0 0
      %6688 = vmatmul.mubr.bf16.gmra.mrb[0].mxu0 %v6642
      %v6689 = vpop.f32.mrb[0].mxu0
      %v6690 = vadd.f32 0.0, %v6689
      %v6691 = vpop.f32.mrb[0].mxu0
      %v6692 = vpop.f32.mrb[0].mxu0
      %v6693 = vpop.f32.mrb[0].mxu0
      %6694 = vdwg.mxu0
      %v6695 = vpack.c.b16 %v6207, %v6206
      %v6696 = vpack.c.b16 %v6208, %v6208
      %v6699 = vsel %vm1993, %v6629, 0
      %v6702 = vsel %vm1993, %v6630, 0
      %v6705 = vsel %vm2143, %v6696, 0
      %6707 = vmatprep.subr.bf16.mxu0 0
      %6708 = vmatpush1.bf16.msra.mxu0 %v6695
      %6709 = vmatprep.subr.bf16.mxu0 0
      %6710 = vmatpush1.bf16.msra.mxu0 %v6705
      %6711 = vmatprep.subr.bf16.mxu0 0
      %6712 = vmatpush1.bf16.msra.mxu0 0
      %6713 = vmatprep.subr.bf16.mxu0 0
      %6714 = vmatpush1.bf16.msra.mxu0 0
      %6715 = vmatprep.subr.bf16.mxu0 0
      %6716 = vmatpush1.bf16.msra.mxu0 0
      %6717 = vmatprep.subr.bf16.mxu0 0
      %6718 = vmatpush1.bf16.msra.mxu0 0
      %6719 = vmatprep.subr.bf16.mxu0 0
      %6720 = vmatpush1.bf16.msra.mxu0 0
      %6721 = vmatprep.subr.bf16.mxu0 0
      %6722 = vmatpush1.bf16.msra.mxu0 0
      %6723 = vmatprep.subr.bf16.mxu0 0
      %6724 = vmatpush1.bf16.msra.mxu0 0
      %6725 = vmatprep.subr.bf16.mxu0 0
      %6726 = vmatpush1.bf16.msra.mxu0 0
      %6727 = vmatprep.subr.bf16.mxu0 0
      %6728 = vmatpush1.bf16.msra.mxu0 0
      %6729 = vmatprep.subr.bf16.mxu0 0
      %6730 = vmatpush1.bf16.msra.mxu0 0
      %6731 = vmatprep.subr.bf16.mxu0 0
      %6732 = vmatpush1.bf16.msra.mxu0 0
      %6733 = vmatprep.subr.bf16.mxu0 0
      %6734 = vmatpush1.bf16.msra.mxu0 0
      %6735 = vmatprep.subr.bf16.mxu0 0
      %6736 = vmatpush1.bf16.msra.mxu0 0
      %6737 = vmatprep.subr.bf16.mxu0 0
      %6738 = vmatpush1.bf16.msra.mxu0 0
      %6739 = vmatprep.mubr.bf16.mxu0 0
      %6740 = vmatmul.mubr.bf16.gmra.mrb[0].mxu0 %v6699
      %v6741 = vpop.f32.mrb[0].mxu0
      %v6742 = vadd.f32 0.0, %v6741
      %v6743 = vpop.f32.mrb[0].mxu0
      %v6744 = vpop.f32.mrb[0].mxu0
      %v6745 = vadd.f32 0.0, %v6744
      %v6746 = vpop.f32.mrb[0].mxu0
      %6747 = vmatprep.mubr.bf16.mxu0 0
      %6748 = vmatmul.mubr.bf16.gmra.mrb[0].mxu0 %v6702
      %v6749 = vpop.f32.mrb[0].mxu0
      %v6750 = vadd.f32 0.0, %v6749
      %v6751 = vpop.f32.mrb[0].mxu0
      %v6752 = vpop.f32.mrb[0].mxu0
      %v6753 = vpop.f32.mrb[0].mxu0
      %6754 = vdwg.mxu0
      %v6755 = vpack.c.b16 %v6210, %v6209
      %v6756 = vpack.c.b16 %v6211, %v6211
      %v6759 = vsel %vm1993, %v6631, 0
      %v6762 = vsel %vm1993, %v6632, 0
      %v6765 = vsel %vm2143, %v6756, 0
      %6767 = vmatprep.subr.bf16.mxu0 0
      %6768 = vmatpush1.bf16.msra.mxu0 %v6755
      %6769 = vmatprep.subr.bf16.mxu0 0
      %6770 = vmatpush1.bf16.msra.mxu0 %v6765
      %6771 = vmatprep.subr.bf16.mxu0 0
      %6772 = vmatpush1.bf16.msra.mxu0 0
      %6773 = vmatprep.subr.bf16.mxu0 0
      %6774 = vmatpush1.bf16.msra.mxu0 0
      %6775 = vmatprep.subr.bf16.mxu0 0
      %6776 = vmatpush1.bf16.msra.mxu0 0
      %6777 = vmatprep.subr.bf16.mxu0 0
      %6778 = vmatpush1.bf16.msra.mxu0 0
      %6779 = vmatprep.subr.bf16.mxu0 0
      %6780 = vmatpush1.bf16.msra.mxu0 0
      %6781 = vmatprep.subr.bf16.mxu0 0
      %6782 = vmatpush1.bf16.msra.mxu0 0
      %6783 = vmatprep.subr.bf16.mxu0 0
      %6784 = vmatpush1.bf16.msra.mxu0 0
      %6785 = vmatprep.subr.bf16.mxu0 0
      %6786 = vmatpush1.bf16.msra.mxu0 0
      %6787 = vmatprep.subr.bf16.mxu0 0
      %6788 = vmatpush1.bf16.msra.mxu0 0
      %6789 = vmatprep.subr.bf16.mxu0 0
      %6790 = vmatpush1.bf16.msra.mxu0 0
      %6791 = vmatprep.subr.bf16.mxu0 0
      %6792 = vmatpush1.bf16.msra.mxu0 0
      %6793 = vmatprep.subr.bf16.mxu0 0
      %6794 = vmatpush1.bf16.msra.mxu0 0
      %6795 = vmatprep.subr.bf16.mxu0 0
      %6796 = vmatpush1.bf16.msra.mxu0 0
      %6797 = vmatprep.subr.bf16.mxu0 0
      %6798 = vmatpush1.bf16.msra.mxu0 0
      %6799 = vmatprep.mubr.bf16.mxu0 0
      %6800 = vmatmul.mubr.bf16.gmra.mrb[0].mxu0 %v6759
      %v6801 = vpop.f32.mrb[0].mxu0
      %v6802 = vadd.f32 0.0, %v6801
      %v6803 = vpop.f32.mrb[0].mxu0
      %v6804 = vpop.f32.mrb[0].mxu0
      %v6805 = vadd.f32 0.0, %v6804
      %v6806 = vpop.f32.mrb[0].mxu0
      %6807 = vmatprep.mubr.bf16.mxu0 0
      %6808 = vmatmul.mubr.bf16.gmra.mrb[0].mxu0 %v6762
      %v6809 = vpop.f32.mrb[0].mxu0
      %v6810 = vadd.f32 0.0, %v6809
      %v6811 = vpop.f32.mrb[0].mxu0
      %v6812 = vpop.f32.mrb[0].mxu0
      %v6813 = vpop.f32.mrb[0].mxu0
      %6814 = vdwg.mxu0
      %v6815 = vpack.c.b16 %v6213, %v6212
      %v6816 = vpack.c.b16 %v6214, %v6214
      %v6819 = vsel %vm1993, %v6633, 0
      %v6822 = vsel %vm1993, %v6634, 0
      %v6825 = vsel %vm2143, %v6816, 0
      %6827 = vmatprep.subr.bf16.mxu0 0
      %6828 = vmatpush1.bf16.msra.mxu0 %v6815
      %6829 = vmatprep.subr.bf16.mxu0 0
      %6830 = vmatpush1.bf16.msra.mxu0 %v6825
      %6831 = vmatprep.subr.bf16.mxu0 0
      %6832 = vmatpush1.bf16.msra.mxu0 0
      %6833 = vmatprep.subr.bf16.mxu0 0
      %6834 = vmatpush1.bf16.msra.mxu0 0
      %6835 = vmatprep.subr.bf16.mxu0 0
      %6836 = vmatpush1.bf16.msra.mxu0 0
      %6837 = vmatprep.subr.bf16.mxu0 0
      %6838 = vmatpush1.bf16.msra.mxu0 0
      %6839 = vmatprep.subr.bf16.mxu0 0
      %6840 = vmatpush1.bf16.msra.mxu0 0
      %6841 = vmatprep.subr.bf16.mxu0 0
      %6842 = vmatpush1.bf16.msra.mxu0 0
      %6843 = vmatprep.subr.bf16.mxu0 0
      %6844 = vmatpush1.bf16.msra.mxu0 0
      %6845 = vmatprep.subr.bf16.mxu0 0
      %6846 = vmatpush1.bf16.msra.mxu0 0
      %6847 = vmatprep.subr.bf16.mxu0 0
      %6848 = vmatpush1.bf16.msra.mxu0 0
      %6849 = vmatprep.subr.bf16.mxu0 0
      %6850 = vmatpush1.bf16.msra.mxu0 0
      %6851 = vmatprep.subr.bf16.mxu0 0
      %6852 = vmatpush1.bf16.msra.mxu0 0
      %6853 = vmatprep.subr.bf16.mxu0 0
      %6854 = vmatpush1.bf16.msra.mxu0 0
      %6855 = vmatprep.subr.bf16.mxu0 0
      %6856 = vmatpush1.bf16.msra.mxu0 0
      %6857 = vmatprep.subr.bf16.mxu0 0
      %6858 = vmatpush1.bf16.msra.mxu0 0
      %6859 = vmatprep.mubr.bf16.mxu0 0
      %6860 = vmatmul.mubr.bf16.gmra.mrb[0].mxu0 %v6819
      %v6861 = vpop.f32.mrb[0].mxu0
      %v6862 = vadd.f32 0.0, %v6861
      %v6863 = vpop.f32.mrb[0].mxu0
      %v6864 = vpop.f32.mrb[0].mxu0
      %v6865 = vadd.f32 0.0, %v6864
      %v6866 = vpop.f32.mrb[0].mxu0
      %6867 = vmatprep.mubr.bf16.mxu0 0
      %6868 = vmatmul.mubr.bf16.gmra.mrb[0].mxu0 %v6822
      %v6869 = vpop.f32.mrb[0].mxu0
      %v6870 = vadd.f32 0.0, %v6869
      %v6871 = vpop.f32.mrb[0].mxu0
      %v6872 = vpop.f32.mrb[0].mxu0
      %v6873 = vpop.f32.mrb[0].mxu0
      %6874 = vdwg.mxu0
      %6875 = vrot.lane.b32.xlu0 %v6215, 96
      %v6876 = vpop.permute.xlu0 %6875
      %6877 = vrot.lane.b32.xlu0 %v6216, 96
      %v6878 = vpop.permute.xlu0 %6877
      %6879 = vrot.lane.b32.xlu0 %v6217, 96
      %v6880 = vpop.permute.xlu0 %6879
      %6881 = vrot.lane.b32.xlu0 %v6218, 96
      %v6882 = vpop.permute.xlu0 %6881
      %v6884 = vsel %vm1716, %v6876, 0
      %v6887 = vsel %vm1716, %v6878, 0
      %v6890 = vsel %vm1716, %v6880, 0
      %v6893 = vsel %vm1716, %v6882, 0
      %6895 = vmatprep.subr.bf16.mxu0 0
      %6896 = vmatpush1.bf16.xpose.msra.mxu0 %v6890
      %6897 = vmatprep.subr.bf16.mxu0 0
      %6898 = vmatpush1.bf16.xpose.msra.mxu0 %v6893
      %6899 = vmatprep.subr.bf16.mxu0 0
      %6900 = vmatpush1.bf16.xpose.msra.mxu0 0
      %6901 = vmatprep.subr.bf16.mxu0 0
      %6902 = vmatpush1.bf16.xpose.msra.mxu0 0
      %6903 = vmatprep.subr.bf16.mxu0 0
      %6904 = vmatpush1.bf16.xpose.msra.mxu0 0
      %6905 = vmatprep.subr.bf16.mxu0 0
      %6906 = vmatpush1.bf16.xpose.msra.mxu0 0
      %6907 = vmatprep.subr.bf16.mxu0 0
      %6908 = vmatpush1.bf16.xpose.msra.mxu0 0
      %6909 = vmatprep.subr.bf16.mxu0 0
      %6910 = vmatpush1.bf16.xpose.msra.mxu0 0
      %6911 = vmatprep.subr.bf16.mxu0 0
      %6912 = vmatpush1.bf16.xpose.msra.mxu0 0
      %6913 = vmatprep.subr.bf16.mxu0 0
      %6914 = vmatpush1.bf16.xpose.msra.mxu0 0
      %6915 = vmatprep.subr.bf16.mxu0 0
      %6916 = vmatpush1.bf16.xpose.msra.mxu0 0
      %6917 = vmatprep.subr.bf16.mxu0 0
      %6918 = vmatpush1.bf16.xpose.msra.mxu0 0
      %6919 = vmatprep.subr.bf16.mxu0 0
      %6920 = vmatpush1.bf16.xpose.msra.mxu0 0
      %6921 = vmatprep.subr.bf16.mxu0 0
      %6922 = vmatpush1.bf16.xpose.msra.mxu0 0
      %6923 = vmatprep.subr.bf16.mxu0 0
      %6924 = vmatpush1.bf16.xpose.msra.mxu0 0
      %6925 = vmatprep.subr.bf16.mxu0 0
      %6926 = vmatpush1.bf16.xpose.msra.mxu0 0
      %6927 = vmatprep.mubr.bf16.mxu0 0
      %6928 = vmatmul.mubr.bf16.gmra.mrb[0].mxu0 %v6884
      %v6929 = vpop.f32.mrb[0].mxu0
      %v6930 = vadd.f32 0.0, %v6929
      %v6931 = vpop.f32.mrb[0].mxu0
      %v6932 = vpop.f32.mrb[0].mxu0
      %v6933 = vadd.f32 0.0, %v6932
      %v6934 = vpop.f32.mrb[0].mxu0
      %6935 = vmatprep.mubr.bf16.mxu0 0
      %6936 = vmatmul.mubr.bf16.gmra.mrb[0].mxu0 %v6887
      %v6937 = vpop.f32.mrb[0].mxu0
      %v6938 = vadd.f32 0.0, %v6937
      %v6939 = vpop.f32.mrb[0].mxu0
      %v6940 = vpop.f32.mrb[0].mxu0
      %v6941 = vpop.f32.mrb[0].mxu0
      %6942 = vdwg.mxu0
      %6943 = vrot.lane.b32.xlu0 %v6279, 96
      %v6944 = vpop.permute.xlu0 %6943
      %6945 = vrot.lane.b32.xlu0 %v6280, 96
      %v6946 = vpop.permute.xlu0 %6945
      %6947 = vrot.lane.b32.xlu0 %v6281, 96
      %v6948 = vpop.permute.xlu0 %6947
      %6949 = vrot.lane.b32.xlu0 %v6282, 96
      %v6950 = vpop.permute.xlu0 %6949
      %v6952 = vsel %vm1716, %v6944, 0
      %v6955 = vsel %vm1716, %v6946, 0
      %v6958 = vsel %vm1716, %v6948, 0
      %v6961 = vsel %vm1716, %v6950, 0
      %6963 = vmatprep.subr.bf16.mxu0 0
      %6964 = vmatpush1.bf16.xpose.msra.mxu0 %v6958
      %6965 = vmatprep.subr.bf16.mxu0 0
      %6966 = vmatpush1.bf16.xpose.msra.mxu0 %v6961
      %6967 = vmatprep.subr.bf16.mxu0 0
      %6968 = vmatpush1.bf16.xpose.msra.mxu0 0
      %6969 = vmatprep.subr.bf16.mxu0 0
      %6970 = vmatpush1.bf16.xpose.msra.mxu0 0
      %6971 = vmatprep.subr.bf16.mxu0 0
      %6972 = vmatpush1.bf16.xpose.msra.mxu0 0
      %6973 = vmatprep.subr.bf16.mxu0 0
      %6974 = vmatpush1.bf16.xpose.msra.mxu0 0
      %6975 = vmatprep.subr.bf16.mxu0 0
      %6976 = vmatpush1.bf16.xpose.msra.mxu0 0
      %6977 = vmatprep.subr.bf16.mxu0 0
      %6978 = vmatpush1.bf16.xpose.msra.mxu0 0
      %6979 = vmatprep.subr.bf16.mxu0 0
      %6980 = vmatpush1.bf16.xpose.msra.mxu0 0
      %6981 = vmatprep.subr.bf16.mxu0 0
      %6982 = vmatpush1.bf16.xpose.msra.mxu0 0
      %6983 = vmatprep.subr.bf16.mxu0 0
      %6984 = vmatpush1.bf16.xpose.msra.mxu0 0
      %6985 = vmatprep.subr.bf16.mxu0 0
      %6986 = vmatpush1.bf16.xpose.msra.mxu0 0
      %6987 = vmatprep.subr.bf16.mxu0 0
      %6988 = vmatpush1.bf16.xpose.msra.mxu0 0
      %6989 = vmatprep.subr.bf16.mxu0 0
      %6990 = vmatpush1.bf16.xpose.msra.mxu0 0
      %6991 = vmatprep.subr.bf16.mxu0 0
      %6992 = vmatpush1.bf16.xpose.msra.mxu0 0
      %6993 = vmatprep.subr.bf16.mxu0 0
      %6994 = vmatpush1.bf16.xpose.msra.mxu0 0
      %6995 = vmatprep.mubr.bf16.mxu0 0
      %6996 = vmatmul.mubr.bf16.gmra.mrb[0].mxu0 %v6952
      %v6997 = vpop.f32.mrb[0].mxu0
      %v6998 = vadd.f32 0.0, %v6997
      %v6999 = vpop.f32.mrb[0].mxu0
      %v7000 = vpop.f32.mrb[0].mxu0
      %v7001 = vadd.f32 0.0, %v7000
      %v7002 = vpop.f32.mrb[0].mxu0
      %7003 = vmatprep.mubr.bf16.mxu0 0
      %7004 = vmatmul.mubr.bf16.gmra.mrb[0].mxu0 %v6955
      %v7005 = vpop.f32.mrb[0].mxu0
      %v7006 = vadd.f32 0.0, %v7005
      %v7007 = vpop.f32.mrb[0].mxu0
      %v7008 = vpop.f32.mrb[0].mxu0
      %v7009 = vpop.f32.mrb[0].mxu0
      %7010 = vdwg.mxu0
      %7011 = vrot.lane.b32.xlu0 %v6343, 96
      %v7012 = vpop.permute.xlu0 %7011
      %7013 = vrot.lane.b32.xlu0 %v6344, 96
      %v7014 = vpop.permute.xlu0 %7013
      %7015 = vrot.lane.b32.xlu0 %v6345, 96
      %v7016 = vpop.permute.xlu0 %7015
      %7017 = vrot.lane.b32.xlu0 %v6346, 96
      %v7018 = vpop.permute.xlu0 %7017
      %v7020 = vsel %vm1716, %v7012, 0
      %v7023 = vsel %vm1716, %v7014, 0
      %v7026 = vsel %vm1716, %v7016, 0
      %v7029 = vsel %vm1716, %v7018, 0
      %7031 = vmatprep.subr.bf16.mxu0 0
      %7032 = vmatpush1.bf16.xpose.msra.mxu0 %v7026
      %7033 = vmatprep.subr.bf16.mxu0 0
      %7034 = vmatpush1.bf16.xpose.msra.mxu0 %v7029
      %7035 = vmatprep.subr.bf16.mxu0 0
      %7036 = vmatpush1.bf16.xpose.msra.mxu0 0
      %7037 = vmatprep.subr.bf16.mxu0 0
      %7038 = vmatpush1.bf16.xpose.msra.mxu0 0
      %7039 = vmatprep.subr.bf16.mxu0 0
      %7040 = vmatpush1.bf16.xpose.msra.mxu0 0
      %7041 = vmatprep.subr.bf16.mxu0 0
      %7042 = vmatpush1.bf16.xpose.msra.mxu0 0
      %7043 = vmatprep.subr.bf16.mxu0 0
      %7044 = vmatpush1.bf16.xpose.msra.mxu0 0
      %7045 = vmatprep.subr.bf16.mxu0 0
      %7046 = vmatpush1.bf16.xpose.msra.mxu0 0
      %7047 = vmatprep.subr.bf16.mxu0 0
      %7048 = vmatpush1.bf16.xpose.msra.mxu0 0
      %7049 = vmatprep.subr.bf16.mxu0 0
      %7050 = vmatpush1.bf16.xpose.msra.mxu0 0
      %7051 = vmatprep.subr.bf16.mxu0 0
      %7052 = vmatpush1.bf16.xpose.msra.mxu0 0
      %7053 = vmatprep.subr.bf16.mxu0 0
      %7054 = vmatpush1.bf16.xpose.msra.mxu0 0
      %7055 = vmatprep.subr.bf16.mxu0 0
      %7056 = vmatpush1.bf16.xpose.msra.mxu0 0
      %7057 = vmatprep.subr.bf16.mxu0 0
      %7058 = vmatpush1.bf16.xpose.msra.mxu0 0
      %7059 = vmatprep.subr.bf16.mxu0 0
      %7060 = vmatpush1.bf16.xpose.msra.mxu0 0
      %7061 = vmatprep.subr.bf16.mxu0 0
      %7062 = vmatpush1.bf16.xpose.msra.mxu0 0
      %7063 = vmatprep.mubr.bf16.mxu0 0
      %7064 = vmatmul.mubr.bf16.gmra.mrb[0].mxu0 %v7020
      %v7065 = vpop.f32.mrb[0].mxu0
      %v7066 = vadd.f32 0.0, %v7065
      %v7067 = vpop.f32.mrb[0].mxu0
      %v7068 = vpop.f32.mrb[0].mxu0
      %v7069 = vadd.f32 0.0, %v7068
      %v7070 = vpop.f32.mrb[0].mxu0
      %7071 = vmatprep.mubr.bf16.mxu0 0
      %7072 = vmatmul.mubr.bf16.gmra.mrb[0].mxu0 %v7023
      %v7073 = vpop.f32.mrb[0].mxu0
      %v7074 = vadd.f32 0.0, %v7073
      %v7075 = vpop.f32.mrb[0].mxu0
      %v7076 = vpop.f32.mrb[0].mxu0
      %v7077 = vpop.f32.mrb[0].mxu0
      %7078 = vdwg.mxu0
      %7079 = vrot.lane.b32.xlu0 %v6407, 96
      %v7080 = vpop.permute.xlu0 %7079
      %7081 = vrot.lane.b32.xlu0 %v6408, 96
      %v7082 = vpop.permute.xlu0 %7081
      %7083 = vrot.lane.b32.xlu0 %v6409, 96
      %v7084 = vpop.permute.xlu0 %7083
      %7085 = vrot.lane.b32.xlu0 %v6410, 96
      %v7086 = vpop.permute.xlu0 %7085
      %v7088 = vsel %vm1716, %v7080, 0
      %v7091 = vsel %vm1716, %v7082, 0
      %v7094 = vsel %vm1716, %v7084, 0
      %v7097 = vsel %vm1716, %v7086, 0
      %7099 = vmatprep.subr.bf16.mxu0 0
      %7100 = vmatpush1.bf16.xpose.msra.mxu0 %v7094
      %7101 = vmatprep.subr.bf16.mxu0 0
      %7102 = vmatpush1.bf16.xpose.msra.mxu0 %v7097
      %7103 = vmatprep.subr.bf16.mxu0 0
      %7104 = vmatpush1.bf16.xpose.msra.mxu0 0
      %7105 = vmatprep.subr.bf16.mxu0 0
      %7106 = vmatpush1.bf16.xpose.msra.mxu0 0
      %7107 = vmatprep.subr.bf16.mxu0 0
      %7108 = vmatpush1.bf16.xpose.msra.mxu0 0
      %7109 = vmatprep.subr.bf16.mxu0 0
      %7110 = vmatpush1.bf16.xpose.msra.mxu0 0
      %7111 = vmatprep.subr.bf16.mxu0 0
      %7112 = vmatpush1.bf16.xpose.msra.mxu0 0
      %7113 = vmatprep.subr.bf16.mxu0 0
      %7114 = vmatpush1.bf16.xpose.msra.mxu0 0
      %7115 = vmatprep.subr.bf16.mxu0 0
      %7116 = vmatpush1.bf16.xpose.msra.mxu0 0
      %7117 = vmatprep.subr.bf16.mxu0 0
      %7118 = vmatpush1.bf16.xpose.msra.mxu0 0
      %7119 = vmatprep.subr.bf16.mxu0 0
      %7120 = vmatpush1.bf16.xpose.msra.mxu0 0
      %7121 = vmatprep.subr.bf16.mxu0 0
      %7122 = vmatpush1.bf16.xpose.msra.mxu0 0
      %7123 = vmatprep.subr.bf16.mxu0 0
      %7124 = vmatpush1.bf16.xpose.msra.mxu0 0
      %7125 = vmatprep.subr.bf16.mxu0 0
      %7126 = vmatpush1.bf16.xpose.msra.mxu0 0
      %7127 = vmatprep.subr.bf16.mxu0 0
      %7128 = vmatpush1.bf16.xpose.msra.mxu0 0
      %7129 = vmatprep.subr.bf16.mxu0 0
      %7130 = vmatpush1.bf16.xpose.msra.mxu0 0
      %7131 = vmatprep.mubr.bf16.mxu0 0
      %7132 = vmatmul.mubr.bf16.gmra.mrb[0].mxu0 %v7088
      %v7133 = vpop.f32.mrb[0].mxu0
      %v7134 = vadd.f32 0.0, %v7133
      %v7135 = vpop.f32.mrb[0].mxu0
      %v7136 = vpop.f32.mrb[0].mxu0
      %v7137 = vadd.f32 0.0, %v7136
      %v7138 = vpop.f32.mrb[0].mxu0
      %7139 = vmatprep.mubr.bf16.mxu0 0
      %7140 = vmatmul.mubr.bf16.gmra.mrb[0].mxu0 %v7091
      %v7141 = vpop.f32.mrb[0].mxu0
      %v7142 = vadd.f32 0.0, %v7141
      %v7143 = vpop.f32.mrb[0].mxu0
      %v7144 = vpop.f32.mrb[0].mxu0
      %v7145 = vpop.f32.mrb[0].mxu0
      %7146 = vdwg.mxu0
      %v7147 = vmul.f32 %v6930, 0.17677669
      %v7148 = vmul.f32 %v6933, 0.17677669
      %v7149 = vmul.f32 %v6938, 0.17677669
      %v7150 = vmul.f32 %v6998, 0.17677669
      %v7151 = vmul.f32 %v7001, 0.17677669
      %v7152 = vmul.f32 %v7006, 0.17677669
      %v7153 = vmul.f32 %v7066, 0.17677669
      %v7154 = vmul.f32 %v7069, 0.17677669
      %v7155 = vmul.f32 %v7074, 0.17677669
      %v7156 = vmul.f32 %v7134, 0.17677669
      %v7157 = vmul.f32 %v7137, 0.17677669
      %v7158 = vmul.f32 %v7142, 0.17677669
      %v7159 = vadd.f32 %v7147, %v1111
      %v7160 = vadd.f32 %v7148, %v1111
      %v7161 = vadd.f32 %v7149, %v1111
      %v7162 = vadd.f32 %v7150, %v1111
      %v7163 = vadd.f32 %v7151, %v1111
      %v7164 = vadd.f32 %v7152, %v1111
      %v7165 = vadd.f32 %v7153, %v1111
      %v7166 = vadd.f32 %v7154, %v1111
      %v7167 = vadd.f32 %v7155, %v1111
      %v7168 = vadd.f32 %v7156, %v1111
      %v7169 = vadd.f32 %v7157, %v1111
      %v7170 = vadd.f32 %v7158, %v1111
      %v7171 = vsel %vm1993, %v7159, -inf
      %7172 = vmax.xlane.f32.xlu0 %v7171
      %v7173 = vpop.xlane.xlu0 %7172
      %v7174 = vsel %vm1993, %v7160, -inf
      %7175 = vmax.xlane.f32.xlu0 %v7174
      %v7176 = vpop.xlane.xlu0 %7175
      %v7177 = vsel %vm1993, %v7161, -inf
      %7178 = vmax.xlane.f32.xlu0 %v7177
      %v7179 = vpop.xlane.xlu0 %7178
      %v7180 = vsel %vm1993, %v7162, -inf
      %7181 = vmax.xlane.f32.xlu0 %v7180
      %v7182 = vpop.xlane.xlu0 %7181
      %v7183 = vsel %vm1993, %v7163, -inf
      %7184 = vmax.xlane.f32.xlu0 %v7183
      %v7185 = vpop.xlane.xlu0 %7184
      %v7186 = vsel %vm1993, %v7164, -inf
      %7187 = vmax.xlane.f32.xlu0 %v7186
      %v7188 = vpop.xlane.xlu0 %7187
      %v7189 = vsel %vm1993, %v7165, -inf
      %7190 = vmax.xlane.f32.xlu0 %v7189
      %v7191 = vpop.xlane.xlu0 %7190
      %v7192 = vsel %vm1993, %v7166, -inf
      %7193 = vmax.xlane.f32.xlu0 %v7192
      %v7194 = vpop.xlane.xlu0 %7193
      %v7195 = vsel %vm1993, %v7167, -inf
      %7196 = vmax.xlane.f32.xlu0 %v7195
      %v7197 = vpop.xlane.xlu0 %7196
      %v7198 = vsel %vm1993, %v7168, -inf
      %7199 = vmax.xlane.f32.xlu0 %v7198
      %v7200 = vpop.xlane.xlu0 %7199
      %v7201 = vsel %vm1993, %v7169, -inf
      %7202 = vmax.xlane.f32.xlu0 %v7201
      %v7203 = vpop.xlane.xlu0 %7202
      %v7204 = vsel %vm1993, %v7170, -inf
      %7205 = vmax.xlane.f32.xlu0 %v7204
      %v7206 = vpop.xlane.xlu0 %7205
      %v7207 = vsub.f32 %v7159, %v7173
      %v7208 = vsub.f32 %v7160, %v7176
      %v7209 = vsub.f32 %v7161, %v7179
      %v7210 = vsub.f32 %v7162, %v7182
      %v7211 = vsub.f32 %v7163, %v7185
      %v7212 = vsub.f32 %v7164, %v7188
      %v7213 = vsub.f32 %v7165, %v7191
      %v7214 = vsub.f32 %v7166, %v7194
      %v7215 = vsub.f32 %v7167, %v7197
      %v7216 = vsub.f32 %v7168, %v7200
      %v7217 = vsub.f32 %v7169, %v7203
      %v7218 = vsub.f32 %v7170, %v7206
      %v7219 = vmul.f32 %v7207, 1.442695
      %v7220 = vpow.pop %v7219
      %v7221 = vmul.f32 %v7208, 1.442695
      %v7222 = vpow.pop %v7221
      %v7223 = vmul.f32 %v7209, 1.442695
      %v7224 = vpow.pop %v7223
      %v7225 = vmul.f32 %v7210, 1.442695
      %v7226 = vpow.pop %v7225
      %v7227 = vmul.f32 %v7211, 1.442695
      %v7228 = vpow.pop %v7227
      %v7229 = vmul.f32 %v7212, 1.442695
      %v7230 = vpow.pop %v7229
      %v7231 = vmul.f32 %v7213, 1.442695
      %v7232 = vpow.pop %v7231
      %v7233 = vmul.f32 %v7214, 1.442695
      %v7234 = vpow.pop %v7233
      %v7235 = vmul.f32 %v7215, 1.442695
      %v7236 = vpow.pop %v7235
      %v7237 = vmul.f32 %v7216, 1.442695
      %v7238 = vpow.pop %v7237
      %v7239 = vmul.f32 %v7217, 1.442695
      %v7240 = vpow.pop %v7239
      %v7241 = vmul.f32 %v7218, 1.442695
      %v7242 = vpow.pop %v7241
      %v7243 = vsel %vm1993, %v7220, 0.0
      %7244 = vadd.xlane.f32.xlu0 %v7243
      %v7245 = vpop.xlane.xlu0 %7244
      %v7246 = vsel %vm1993, %v7222, 0.0
      %7247 = vadd.xlane.f32.xlu0 %v7246
      %v7248 = vpop.xlane.xlu0 %7247
      %v7249 = vsel %vm1993, %v7224, 0.0
      %7250 = vadd.xlane.f32.xlu0 %v7249
      %v7251 = vpop.xlane.xlu0 %7250
      %v7252 = vsel %vm1993, %v7226, 0.0
      %7253 = vadd.xlane.f32.xlu0 %v7252
      %v7254 = vpop.xlane.xlu0 %7253
      %v7255 = vsel %vm1993, %v7228, 0.0
      %7256 = vadd.xlane.f32.xlu0 %v7255
      %v7257 = vpop.xlane.xlu0 %7256
      %v7258 = vsel %vm1993, %v7230, 0.0
      %7259 = vadd.xlane.f32.xlu0 %v7258
      %v7260 = vpop.xlane.xlu0 %7259
      %v7261 = vsel %vm1993, %v7232, 0.0
      %7262 = vadd.xlane.f32.xlu0 %v7261
      %v7263 = vpop.xlane.xlu0 %7262
      %v7264 = vsel %vm1993, %v7234, 0.0
      %7265 = vadd.xlane.f32.xlu0 %v7264
      %v7266 = vpop.xlane.xlu0 %7265
      %v7267 = vsel %vm1993, %v7236, 0.0
      %7268 = vadd.xlane.f32.xlu0 %v7267
      %v7269 = vpop.xlane.xlu0 %7268
      %v7270 = vsel %vm1993, %v7238, 0.0
      %7271 = vadd.xlane.f32.xlu0 %v7270
      %v7272 = vpop.xlane.xlu0 %7271
      %v7273 = vsel %vm1993, %v7240, 0.0
      %7274 = vadd.xlane.f32.xlu0 %v7273
      %v7275 = vpop.xlane.xlu0 %7274
      %v7276 = vsel %vm1993, %v7242, 0.0
      %7277 = vadd.xlane.f32.xlu0 %v7276
      %v7278 = vpop.xlane.xlu0 %7277
      %v7279 = vrcp.pop %v7245
      %v7280 = vrcp.pop %v7248
      %v7281 = vrcp.pop %v7251
      %v7282 = vrcp.pop %v7254
      %v7283 = vrcp.pop %v7257
      %v7284 = vrcp.pop %v7260
      %v7285 = vrcp.pop %v7263
      %v7286 = vrcp.pop %v7266
      %v7287 = vrcp.pop %v7269
      %v7288 = vrcp.pop %v7272
      %v7289 = vrcp.pop %v7275
      %v7290 = vrcp.pop %v7278
      %v7291 = vmul.f32 %v7220, %v7279
      %v7292 = vmul.f32 %v7222, %v7280
      %v7293 = vmul.f32 %v7224, %v7281
      %v7294 = vmul.f32 %v7226, %v7282
      %v7295 = vmul.f32 %v7228, %v7283
      %v7296 = vmul.f32 %v7230, %v7284
      %v7297 = vmul.f32 %v7232, %v7285
      %v7298 = vmul.f32 %v7234, %v7286
      %v7299 = vmul.f32 %v7236, %v7287
      %v7300 = vmul.f32 %v7238, %v7288
      %v7301 = vmul.f32 %v7240, %v7289
      %v7302 = vmul.f32 %v7242, %v7290
      %v7303 = vpack.c.bf16 %v7292, %v7291
      %v7304 = vpack.c.bf16 %v7293, %v7293
      %v7305 = vpack.c.bf16 %v7295, %v7294
      %v7306 = vpack.c.bf16 %v7296, %v7296
      %v7307 = vpack.c.bf16 %v7298, %v7297
      %v7308 = vpack.c.bf16 %v7299, %v7299
      %v7309 = vpack.c.bf16 %v7301, %v7300
      %v7310 = vpack.c.bf16 %v7302, %v7302
      %7311 = vrot.lane.b32.xlu0 %v6635, 96
      %v7312 = vpop.permute.xlu0 %7311
      %7313 = vrot.lane.b32.xlu0 %v6636, 96
      %v7314 = vpop.permute.xlu0 %7313
      %v7317 = vsel %vm1993, %v7303, 0
      %v7320 = vsel %vm1993, %v7304, 0
      %v7323 = vsel %vm2143, %v7314, 0
      %7325 = vmatprep.subr.bf16.mxu0 0
      %7326 = vmatpush1.bf16.msra.mxu0 %v7312
      %7327 = vmatprep.subr.bf16.mxu0 0
      %7328 = vmatpush1.bf16.msra.mxu0 %v7323
      %7329 = vmatprep.subr.bf16.mxu0 0
      %7330 = vmatpush1.bf16.msra.mxu0 0
      %7331 = vmatprep.subr.bf16.mxu0 0
      %7332 = vmatpush1.bf16.msra.mxu0 0
      %7333 = vmatprep.subr.bf16.mxu0 0
      %7334 = vmatpush1.bf16.msra.mxu0 0
      %7335 = vmatprep.subr.bf16.mxu0 0
      %7336 = vmatpush1.bf16.msra.mxu0 0
      %7337 = vmatprep.subr.bf16.mxu0 0
      %7338 = vmatpush1.bf16.msra.mxu0 0
      %7339 = vmatprep.subr.bf16.mxu0 0
      %7340 = vmatpush1.bf16.msra.mxu0 0
      %7341 = vmatprep.subr.bf16.mxu0 0
      %7342 = vmatpush1.bf16.msra.mxu0 0
      %7343 = vmatprep.subr.bf16.mxu0 0
      %7344 = vmatpush1.bf16.msra.mxu0 0
      %7345 = vmatprep.subr.bf16.mxu0 0
      %7346 = vmatpush1.bf16.msra.mxu0 0
      %7347 = vmatprep.subr.bf16.mxu0 0
      %7348 = vmatpush1.bf16.msra.mxu0 0
      %7349 = vmatprep.subr.bf16.mxu0 0
      %7350 = vmatpush1.bf16.msra.mxu0 0
      %7351 = vmatprep.subr.bf16.mxu0 0
      %7352 = vmatpush1.bf16.msra.mxu0 0
      %7353 = vmatprep.subr.bf16.mxu0 0
      %7354 = vmatpush1.bf16.msra.mxu0 0
      %7355 = vmatprep.subr.bf16.mxu0 0
      %7356 = vmatpush1.bf16.msra.mxu0 0
      %7357 = vmatprep.mubr.bf16.mxu0 0
      %7358 = vmatmul.mubr.bf16.gmra.mrb[0].mxu0 %v7317
      %v7359 = vpop.f32.mrb[0].mxu0
      %v7360 = vadd.f32 0.0, %v7359
      %v7361 = vpop.f32.mrb[0].mxu0
      %v7362 = vpop.f32.mrb[0].mxu0
      %v7363 = vadd.f32 0.0, %v7362
      %v7364 = vpop.f32.mrb[0].mxu0
      %7365 = vmatprep.mubr.bf16.mxu0 0
      %7366 = vmatmul.mubr.bf16.gmra.mrb[0].mxu0 %v7320
      %v7367 = vpop.f32.mrb[0].mxu0
      %v7368 = vadd.f32 0.0, %v7367
      %v7369 = vpop.f32.mrb[0].mxu0
      %v7370 = vpop.f32.mrb[0].mxu0
      %v7371 = vpop.f32.mrb[0].mxu0
      %7372 = vdwg.mxu0
      %7373 = vrot.lane.b32.xlu0 %v6695, 96
      %v7374 = vpop.permute.xlu0 %7373
      %7375 = vrot.lane.b32.xlu0 %v6696, 96
      %v7376 = vpop.permute.xlu0 %7375
      %v7379 = vsel %vm1993, %v7305, 0
      %v7382 = vsel %vm1993, %v7306, 0
      %v7385 = vsel %vm2143, %v7376, 0
      %7387 = vmatprep.subr.bf16.mxu0 0
      %7388 = vmatpush1.bf16.msra.mxu0 %v7374
      %7389 = vmatprep.subr.bf16.mxu0 0
      %7390 = vmatpush1.bf16.msra.mxu0 %v7385
      %7391 = vmatprep.subr.bf16.mxu0 0
      %7392 = vmatpush1.bf16.msra.mxu0 0
      %7393 = vmatprep.subr.bf16.mxu0 0
      %7394 = vmatpush1.bf16.msra.mxu0 0
      %7395 = vmatprep.subr.bf16.mxu0 0
      %7396 = vmatpush1.bf16.msra.mxu0 0
      %7397 = vmatprep.subr.bf16.mxu0 0
      %7398 = vmatpush1.bf16.msra.mxu0 0
      %7399 = vmatprep.subr.bf16.mxu0 0
      %7400 = vmatpush1.bf16.msra.mxu0 0
      %7401 = vmatprep.subr.bf16.mxu0 0
      %7402 = vmatpush1.bf16.msra.mxu0 0
      %7403 = vmatprep.subr.bf16.mxu0 0
      %7404 = vmatpush1.bf16.msra.mxu0 0
      %7405 = vmatprep.subr.bf16.mxu0 0
      %7406 = vmatpush1.bf16.msra.mxu0 0
      %7407 = vmatprep.subr.bf16.mxu0 0
      %7408 = vmatpush1.bf16.msra.mxu0 0
      %7409 = vmatprep.subr.bf16.mxu0 0
      %7410 = vmatpush1.bf16.msra.mxu0 0
      %7411 = vmatprep.subr.bf16.mxu0 0
      %7412 = vmatpush1.bf16.msra.mxu0 0
      %7413 = vmatprep.subr.bf16.mxu0 0
      %7414 = vmatpush1.bf16.msra.mxu0 0
      %7415 = vmatprep.subr.bf16.mxu0 0
      %7416 = vmatpush1.bf16.msra.mxu0 0
      %7417 = vmatprep.subr.bf16.mxu0 0
      %7418 = vmatpush1.bf16.msra.mxu0 0
      %7419 = vmatprep.mubr.bf16.mxu0 0
      %7420 = vmatmul.mubr.bf16.gmra.mrb[0].mxu0 %v7379
      %v7421 = vpop.f32.mrb[0].mxu0
      %v7422 = vadd.f32 0.0, %v7421
      %v7423 = vpop.f32.mrb[0].mxu0
      %v7424 = vpop.f32.mrb[0].mxu0
      %v7425 = vadd.f32 0.0, %v7424
      %v7426 = vpop.f32.mrb[0].mxu0
      %7427 = vmatprep.mubr.bf16.mxu0 0
      %7428 = vmatmul.mubr.bf16.gmra.mrb[0].mxu0 %v7382
      %v7429 = vpop.f32.mrb[0].mxu0
      %v7430 = vadd.f32 0.0, %v7429
      %v7431 = vpop.f32.mrb[0].mxu0
      %v7432 = vpop.f32.mrb[0].mxu0
      %v7433 = vpop.f32.mrb[0].mxu0
      %7434 = vdwg.mxu0
      %7435 = vrot.lane.b32.xlu0 %v6755, 96
      %v7436 = vpop.permute.xlu0 %7435
      %7437 = vrot.lane.b32.xlu0 %v6756, 96
      %v7438 = vpop.permute.xlu0 %7437
      %v7441 = vsel %vm1993, %v7307, 0
      %v7444 = vsel %vm1993, %v7308, 0
      %v7447 = vsel %vm2143, %v7438, 0
      %7449 = vmatprep.subr.bf16.mxu0 0
      %7450 = vmatpush1.bf16.msra.mxu0 %v7436
      %7451 = vmatprep.subr.bf16.mxu0 0
      %7452 = vmatpush1.bf16.msra.mxu0 %v7447
      %7453 = vmatprep.subr.bf16.mxu0 0
      %7454 = vmatpush1.bf16.msra.mxu0 0
      %7455 = vmatprep.subr.bf16.mxu0 0
      %7456 = vmatpush1.bf16.msra.mxu0 0
      %7457 = vmatprep.subr.bf16.mxu0 0
      %7458 = vmatpush1.bf16.msra.mxu0 0
      %7459 = vmatprep.subr.bf16.mxu0 0
      %7460 = vmatpush1.bf16.msra.mxu0 0
      %7461 = vmatprep.subr.bf16.mxu0 0
      %7462 = vmatpush1.bf16.msra.mxu0 0
      %7463 = vmatprep.subr.bf16.mxu0 0
      %7464 = vmatpush1.bf16.msra.mxu0 0
      %7465 = vmatprep.subr.bf16.mxu0 0
      %7466 = vmatpush1.bf16.msra.mxu0 0
      %7467 = vmatprep.subr.bf16.mxu0 0
      %7468 = vmatpush1.bf16.msra.mxu0 0
      %7469 = vmatprep.subr.bf16.mxu0 0
      %7470 = vmatpush1.bf16.msra.mxu0 0
      %7471 = vmatprep.subr.bf16.mxu0 0
      %7472 = vmatpush1.bf16.msra.mxu0 0
      %7473 = vmatprep.subr.bf16.mxu0 0
      %7474 = vmatpush1.bf16.msra.mxu0 0
      %7475 = vmatprep.subr.bf16.mxu0 0
      %7476 = vmatpush1.bf16.msra.mxu0 0
      %7477 = vmatprep.subr.bf16.mxu0 0
      %7478 = vmatpush1.bf16.msra.mxu0 0
      %7479 = vmatprep.subr.bf16.mxu0 0
      %7480 = vmatpush1.bf16.msra.mxu0 0
      %7481 = vmatprep.mubr.bf16.mxu0 0
      %7482 = vmatmul.mubr.bf16.gmra.mrb[0].mxu0 %v7441
      %v7483 = vpop.f32.mrb[0].mxu0
      %v7484 = vadd.f32 0.0, %v7483
      %v7485 = vpop.f32.mrb[0].mxu0
      %v7486 = vpop.f32.mrb[0].mxu0
      %v7487 = vadd.f32 0.0, %v7486
      %v7488 = vpop.f32.mrb[0].mxu0
      %7489 = vmatprep.mubr.bf16.mxu0 0
      %7490 = vmatmul.mubr.bf16.gmra.mrb[0].mxu0 %v7444
      %v7491 = vpop.f32.mrb[0].mxu0
      %v7492 = vadd.f32 0.0, %v7491
      %v7493 = vpop.f32.mrb[0].mxu0
      %v7494 = vpop.f32.mrb[0].mxu0
      %v7495 = vpop.f32.mrb[0].mxu0
      %7496 = vdwg.mxu0
      %7497 = vrot.lane.b32.xlu0 %v6815, 96
      %v7498 = vpop.permute.xlu0 %7497
      %7499 = vrot.lane.b32.xlu0 %v6816, 96
      %v7500 = vpop.permute.xlu0 %7499
      %v7503 = vsel %vm1993, %v7309, 0
      %v7506 = vsel %vm1993, %v7310, 0
      %v7509 = vsel %vm2143, %v7500, 0
      %7511 = vmatprep.subr.bf16.mxu0 0
      %7512 = vmatpush1.bf16.msra.mxu0 %v7498
      %7513 = vmatprep.subr.bf16.mxu0 0
      %7514 = vmatpush1.bf16.msra.mxu0 %v7509
      %7515 = vmatprep.subr.bf16.mxu0 0
      %7516 = vmatpush1.bf16.msra.mxu0 0
      %7517 = vmatprep.subr.bf16.mxu0 0
      %7518 = vmatpush1.bf16.msra.mxu0 0
      %7519 = vmatprep.subr.bf16.mxu0 0
      %7520 = vmatpush1.bf16.msra.mxu0 0
      %7521 = vmatprep.subr.bf16.mxu0 0
      %7522 = vmatpush1.bf16.msra.mxu0 0
      %7523 = vmatprep.subr.bf16.mxu0 0
      %7524 = vmatpush1.bf16.msra.mxu0 0
      %7525 = vmatprep.subr.bf16.mxu0 0
      %7526 = vmatpush1.bf16.msra.mxu0 0
      %7527 = vmatprep.subr.bf16.mxu0 0
      %7528 = vmatpush1.bf16.msra.mxu0 0
      %7529 = vmatprep.subr.bf16.mxu0 0
      %7530 = vmatpush1.bf16.msra.mxu0 0
      %7531 = vmatprep.subr.bf16.mxu0 0
      %7532 = vmatpush1.bf16.msra.mxu0 0
      %7533 = vmatprep.subr.bf16.mxu0 0
      %7534 = vmatpush1.bf16.msra.mxu0 0
      %7535 = vmatprep.subr.bf16.mxu0 0
      %7536 = vmatpush1.bf16.msra.mxu0 0
      %7537 = vmatprep.subr.bf16.mxu0 0
      %7538 = vmatpush1.bf16.msra.mxu0 0
      %7539 = vmatprep.subr.bf16.mxu0 0
      %7540 = vmatpush1.bf16.msra.mxu0 0
      %7541 = vmatprep.subr.bf16.mxu0 0
      %7542 = vmatpush1.bf16.msra.mxu0 0
      %7543 = vmatprep.mubr.bf16.mxu0 0
      %7544 = vmatmul.mubr.bf16.gmra.mrb[0].mxu0 %v7503
      %v7545 = vpop.f32.mrb[0].mxu0
      %v7546 = vadd.f32 0.0, %v7545
      %v7547 = vpop.f32.mrb[0].mxu0
      %v7548 = vpop.f32.mrb[0].mxu0
      %v7549 = vadd.f32 0.0, %v7548
      %v7550 = vpop.f32.mrb[0].mxu0
      %7551 = vmatprep.mubr.bf16.mxu0 0
      %7552 = vmatmul.mubr.bf16.gmra.mrb[0].mxu0 %v7506
      %v7553 = vpop.f32.mrb[0].mxu0
      %v7554 = vadd.f32 0.0, %v7553
      %v7555 = vpop.f32.mrb[0].mxu0
      %v7556 = vpop.f32.mrb[0].mxu0
      %v7557 = vpop.f32.mrb[0].mxu0
      %7558 = vdwg.mxu0
      %7559 = vrot.lane.b32.xlu0 %v6215, 64
      %v7560 = vpop.permute.xlu0 %7559
      %7561 = vrot.lane.b32.xlu0 %v6216, 64
      %v7562 = vpop.permute.xlu0 %7561
      %7563 = vrot.lane.b32.xlu0 %v6217, 64
      %v7564 = vpop.permute.xlu0 %7563
      %7565 = vrot.lane.b32.xlu0 %v6218, 64
      %v7566 = vpop.permute.xlu0 %7565
      %v7568 = vsel %vm1716, %v7560, 0
      %v7571 = vsel %vm1716, %v7562, 0
      %v7574 = vsel %vm1716, %v7564, 0
      %v7577 = vsel %vm1716, %v7566, 0
      %7579 = vmatprep.subr.bf16.mxu0 0
      %7580 = vmatpush1.bf16.xpose.msra.mxu0 %v7574
      %7581 = vmatprep.subr.bf16.mxu0 0
      %7582 = vmatpush1.bf16.xpose.msra.mxu0 %v7577
      %7583 = vmatprep.subr.bf16.mxu0 0
      %7584 = vmatpush1.bf16.xpose.msra.mxu0 0
      %7585 = vmatprep.subr.bf16.mxu0 0
      %7586 = vmatpush1.bf16.xpose.msra.mxu0 0
      %7587 = vmatprep.subr.bf16.mxu0 0
      %7588 = vmatpush1.bf16.xpose.msra.mxu0 0
      %7589 = vmatprep.subr.bf16.mxu0 0
      %7590 = vmatpush1.bf16.xpose.msra.mxu0 0
      %7591 = vmatprep.subr.bf16.mxu0 0
      %7592 = vmatpush1.bf16.xpose.msra.mxu0 0
      %7593 = vmatprep.subr.bf16.mxu0 0
      %7594 = vmatpush1.bf16.xpose.msra.mxu0 0
      %7595 = vmatprep.subr.bf16.mxu0 0
      %7596 = vmatpush1.bf16.xpose.msra.mxu0 0
      %7597 = vmatprep.subr.bf16.mxu0 0
      %7598 = vmatpush1.bf16.xpose.msra.mxu0 0
      %7599 = vmatprep.subr.bf16.mxu0 0
      %7600 = vmatpush1.bf16.xpose.msra.mxu0 0
      %7601 = vmatprep.subr.bf16.mxu0 0
      %7602 = vmatpush1.bf16.xpose.msra.mxu0 0
      %7603 = vmatprep.subr.bf16.mxu0 0
      %7604 = vmatpush1.bf16.xpose.msra.mxu0 0
      %7605 = vmatprep.subr.bf16.mxu0 0
      %7606 = vmatpush1.bf16.xpose.msra.mxu0 0
      %7607 = vmatprep.subr.bf16.mxu0 0
      %7608 = vmatpush1.bf16.xpose.msra.mxu0 0
      %7609 = vmatprep.subr.bf16.mxu0 0
      %7610 = vmatpush1.bf16.xpose.msra.mxu0 0
      %7611 = vmatprep.mubr.bf16.mxu0 0
      %7612 = vmatmul.mubr.bf16.gmra.mrb[0].mxu0 %v7568
      %v7613 = vpop.f32.mrb[0].mxu0
      %v7614 = vadd.f32 0.0, %v7613
      %v7615 = vpop.f32.mrb[0].mxu0
      %v7616 = vpop.f32.mrb[0].mxu0
      %v7617 = vadd.f32 0.0, %v7616
      %v7618 = vpop.f32.mrb[0].mxu0
      %7619 = vmatprep.mubr.bf16.mxu0 0
      %7620 = vmatmul.mubr.bf16.gmra.mrb[0].mxu0 %v7571
      %v7621 = vpop.f32.mrb[0].mxu0
      %v7622 = vadd.f32 0.0, %v7621
      %v7623 = vpop.f32.mrb[0].mxu0
      %v7624 = vpop.f32.mrb[0].mxu0
      %v7625 = vpop.f32.mrb[0].mxu0
      %7626 = vdwg.mxu0
      %7627 = vrot.lane.b32.xlu0 %v6279, 64
      %v7628 = vpop.permute.xlu0 %7627
      %7629 = vrot.lane.b32.xlu0 %v6280, 64
      %v7630 = vpop.permute.xlu0 %7629
      %7631 = vrot.lane.b32.xlu0 %v6281, 64
      %v7632 = vpop.permute.xlu0 %7631
      %7633 = vrot.lane.b32.xlu0 %v6282, 64
      %v7634 = vpop.permute.xlu0 %7633
      %v7636 = vsel %vm1716, %v7628, 0
      %v7639 = vsel %vm1716, %v7630, 0
      %v7642 = vsel %vm1716, %v7632, 0
      %v7645 = vsel %vm1716, %v7634, 0
      %7647 = vmatprep.subr.bf16.mxu0 0
      %7648 = vmatpush1.bf16.xpose.msra.mxu0 %v7642
      %7649 = vmatprep.subr.bf16.mxu0 0
      %7650 = vmatpush1.bf16.xpose.msra.mxu0 %v7645
      %7651 = vmatprep.subr.bf16.mxu0 0
      %7652 = vmatpush1.bf16.xpose.msra.mxu0 0
      %7653 = vmatprep.subr.bf16.mxu0 0
      %7654 = vmatpush1.bf16.xpose.msra.mxu0 0
      %7655 = vmatprep.subr.bf16.mxu0 0
      %7656 = vmatpush1.bf16.xpose.msra.mxu0 0
      %7657 = vmatprep.subr.bf16.mxu0 0
      %7658 = vmatpush1.bf16.xpose.msra.mxu0 0
      %7659 = vmatprep.subr.bf16.mxu0 0
      %7660 = vmatpush1.bf16.xpose.msra.mxu0 0
      %7661 = vmatprep.subr.bf16.mxu0 0
      %7662 = vmatpush1.bf16.xpose.msra.mxu0 0
      %7663 = vmatprep.subr.bf16.mxu0 0
      %7664 = vmatpush1.bf16.xpose.msra.mxu0 0
      %7665 = vmatprep.subr.bf16.mxu0 0
      %7666 = vmatpush1.bf16.xpose.msra.mxu0 0
      %7667 = vmatprep.subr.bf16.mxu0 0
      %7668 = vmatpush1.bf16.xpose.msra.mxu0 0
      %7669 = vmatprep.subr.bf16.mxu0 0
      %7670 = vmatpush1.bf16.xpose.msra.mxu0 0
      %7671 = vmatprep.subr.bf16.mxu0 0
      %7672 = vmatpush1.bf16.xpose.msra.mxu0 0
      %7673 = vmatprep.subr.bf16.mxu0 0
      %7674 = vmatpush1.bf16.xpose.msra.mxu0 0
      %7675 = vmatprep.subr.bf16.mxu0 0
      %7676 = vmatpush1.bf16.xpose.msra.mxu0 0
      %7677 = vmatprep.subr.bf16.mxu0 0
      %7678 = vmatpush1.bf16.xpose.msra.mxu0 0
      %7679 = vmatprep.mubr.bf16.mxu0 0
      %7680 = vmatmul.mubr.bf16.gmra.mrb[0].mxu0 %v7636
      %v7681 = vpop.f32.mrb[0].mxu0
      %v7682 = vadd.f32 0.0, %v7681
      %v7683 = vpop.f32.mrb[0].mxu0
      %v7684 = vpop.f32.mrb[0].mxu0
      %v7685 = vadd.f32 0.0, %v7684
      %v7686 = vpop.f32.mrb[0].mxu0
      %7687 = vmatprep.mubr.bf16.mxu0 0
      %7688 = vmatmul.mubr.bf16.gmra.mrb[0].mxu0 %v7639
      %v7689 = vpop.f32.mrb[0].mxu0
      %v7690 = vadd.f32 0.0, %v7689
      %v7691 = vpop.f32.mrb[0].mxu0
      %v7692 = vpop.f32.mrb[0].mxu0
      %v7693 = vpop.f32.mrb[0].mxu0
      %7694 = vdwg.mxu0
      %7695 = vrot.lane.b32.xlu0 %v6343, 64
      %v7696 = vpop.permute.xlu0 %7695
      %7697 = vrot.lane.b32.xlu0 %v6344, 64
      %v7698 = vpop.permute.xlu0 %7697
      %7699 = vrot.lane.b32.xlu0 %v6345, 64
      %v7700 = vpop.permute.xlu0 %7699
      %7701 = vrot.lane.b32.xlu0 %v6346, 64
      %v7702 = vpop.permute.xlu0 %7701
      %v7704 = vsel %vm1716, %v7696, 0
      %v7707 = vsel %vm1716, %v7698, 0
      %v7710 = vsel %vm1716, %v7700, 0
      %v7713 = vsel %vm1716, %v7702, 0
      %7715 = vmatprep.subr.bf16.mxu0 0
      %7716 = vmatpush1.bf16.xpose.msra.mxu0 %v7710
      %7717 = vmatprep.subr.bf16.mxu0 0
      %7718 = vmatpush1.bf16.xpose.msra.mxu0 %v7713
      %7719 = vmatprep.subr.bf16.mxu0 0
      %7720 = vmatpush1.bf16.xpose.msra.mxu0 0
      %7721 = vmatprep.subr.bf16.mxu0 0
      %7722 = vmatpush1.bf16.xpose.msra.mxu0 0
      %7723 = vmatprep.subr.bf16.mxu0 0
      %7724 = vmatpush1.bf16.xpose.msra.mxu0 0
      %7725 = vmatprep.subr.bf16.mxu0 0
      %7726 = vmatpush1.bf16.xpose.msra.mxu0 0
      %7727 = vmatprep.subr.bf16.mxu0 0
      %7728 = vmatpush1.bf16.xpose.msra.mxu0 0
      %7729 = vmatprep.subr.bf16.mxu0 0
      %7730 = vmatpush1.bf16.xpose.msra.mxu0 0
      %7731 = vmatprep.subr.bf16.mxu0 0
      %7732 = vmatpush1.bf16.xpose.msra.mxu0 0
      %7733 = vmatprep.subr.bf16.mxu0 0
      %7734 = vmatpush1.bf16.xpose.msra.mxu0 0
      %7735 = vmatprep.subr.bf16.mxu0 0
      %7736 = vmatpush1.bf16.xpose.msra.mxu0 0
      %7737 = vmatprep.subr.bf16.mxu0 0
      %7738 = vmatpush1.bf16.xpose.msra.mxu0 0
      %7739 = vmatprep.subr.bf16.mxu0 0
      %7740 = vmatpush1.bf16.xpose.msra.mxu0 0
      %7741 = vmatprep.subr.bf16.mxu0 0
      %7742 = vmatpush1.bf16.xpose.msra.mxu0 0
      %7743 = vmatprep.subr.bf16.mxu0 0
      %7744 = vmatpush1.bf16.xpose.msra.mxu0 0
      %7745 = vmatprep.subr.bf16.mxu0 0
      %7746 = vmatpush1.bf16.xpose.msra.mxu0 0
      %7747 = vmatprep.mubr.bf16.mxu0 0
      %7748 = vmatmul.mubr.bf16.gmra.mrb[0].mxu0 %v7704
      %v7749 = vpop.f32.mrb[0].mxu0
      %v7750 = vadd.f32 0.0, %v7749
      %v7751 = vpop.f32.mrb[0].mxu0
      %v7752 = vpop.f32.mrb[0].mxu0
      %v7753 = vadd.f32 0.0, %v7752
      %v7754 = vpop.f32.mrb[0].mxu0
      %7755 = vmatprep.mubr.bf16.mxu0 0
      %7756 = vmatmul.mubr.bf16.gmra.mrb[0].mxu0 %v7707
      %v7757 = vpop.f32.mrb[0].mxu0
      %v7758 = vadd.f32 0.0, %v7757
      %v7759 = vpop.f32.mrb[0].mxu0
      %v7760 = vpop.f32.mrb[0].mxu0
      %v7761 = vpop.f32.mrb[0].mxu0
      %7762 = vdwg.mxu0
      %7763 = vrot.lane.b32.xlu0 %v6407, 64
      %v7764 = vpop.permute.xlu0 %7763
      %7765 = vrot.lane.b32.xlu0 %v6408, 64
      %v7766 = vpop.permute.xlu0 %7765
      %7767 = vrot.lane.b32.xlu0 %v6409, 64
      %v7768 = vpop.permute.xlu0 %7767
      %7769 = vrot.lane.b32.xlu0 %v6410, 64
      %v7770 = vpop.permute.xlu0 %7769
      %v7772 = vsel %vm1716, %v7764, 0
      %v7775 = vsel %vm1716, %v7766, 0
      %v7778 = vsel %vm1716, %v7768, 0
      %v7781 = vsel %vm1716, %v7770, 0
      %7783 = vmatprep.subr.bf16.mxu0 0
      %7784 = vmatpush1.bf16.xpose.msra.mxu0 %v7778
      %7785 = vmatprep.subr.bf16.mxu0 0
      %7786 = vmatpush1.bf16.xpose.msra.mxu0 %v7781
      %7787 = vmatprep.subr.bf16.mxu0 0
      %7788 = vmatpush1.bf16.xpose.msra.mxu0 0
      %7789 = vmatprep.subr.bf16.mxu0 0
      %7790 = vmatpush1.bf16.xpose.msra.mxu0 0
      %7791 = vmatprep.subr.bf16.mxu0 0
      %7792 = vmatpush1.bf16.xpose.msra.mxu0 0
      %7793 = vmatprep.subr.bf16.mxu0 0
      %7794 = vmatpush1.bf16.xpose.msra.mxu0 0
      %7795 = vmatprep.subr.bf16.mxu0 0
      %7796 = vmatpush1.bf16.xpose.msra.mxu0 0
      %7797 = vmatprep.subr.bf16.mxu0 0
      %7798 = vmatpush1.bf16.xpose.msra.mxu0 0
      %7799 = vmatprep.subr.bf16.mxu0 0
      %7800 = vmatpush1.bf16.xpose.msra.mxu0 0
      %7801 = vmatprep.subr.bf16.mxu0 0
      %7802 = vmatpush1.bf16.xpose.msra.mxu0 0
      %7803 = vmatprep.subr.bf16.mxu0 0
      %7804 = vmatpush1.bf16.xpose.msra.mxu0 0
      %7805 = vmatprep.subr.bf16.mxu0 0
      %7806 = vmatpush1.bf16.xpose.msra.mxu0 0
      %7807 = vmatprep.subr.bf16.mxu0 0
      %7808 = vmatpush1.bf16.xpose.msra.mxu0 0
      %7809 = vmatprep.subr.bf16.mxu0 0
      %7810 = vmatpush1.bf16.xpose.msra.mxu0 0
      %7811 = vmatprep.subr.bf16.mxu0 0
      %7812 = vmatpush1.bf16.xpose.msra.mxu0 0
      %7813 = vmatprep.subr.bf16.mxu0 0
      %7814 = vmatpush1.bf16.xpose.msra.mxu0 0
      %7815 = vmatprep.mubr.bf16.mxu0 0
      %7816 = vmatmul.mubr.bf16.gmra.mrb[0].mxu0 %v7772
      %v7817 = vpop.f32.mrb[0].mxu0
      %v7818 = vadd.f32 0.0, %v7817
      %v7819 = vpop.f32.mrb[0].mxu0
      %v7820 = vpop.f32.mrb[0].mxu0
      %v7821 = vadd.f32 0.0, %v7820
      %v7822 = vpop.f32.mrb[0].mxu0
      %7823 = vmatprep.mubr.bf16.mxu0 0
      %7824 = vmatmul.mubr.bf16.gmra.mrb[0].mxu0 %v7775
      %v7825 = vpop.f32.mrb[0].mxu0
      %v7826 = vadd.f32 0.0, %v7825
      %v7827 = vpop.f32.mrb[0].mxu0
      %v7828 = vpop.f32.mrb[0].mxu0
      %v7829 = vpop.f32.mrb[0].mxu0
      %7830 = vdwg.mxu0
      %v7831 = vmul.f32 %v7614, 0.17677669
      %v7832 = vmul.f32 %v7617, 0.17677669
      %v7833 = vmul.f32 %v7622, 0.17677669
      %v7834 = vmul.f32 %v7682, 0.17677669
      %v7835 = vmul.f32 %v7685, 0.17677669
      %v7836 = vmul.f32 %v7690, 0.17677669
      %v7837 = vmul.f32 %v7750, 0.17677669
      %v7838 = vmul.f32 %v7753, 0.17677669
      %v7839 = vmul.f32 %v7758, 0.17677669
      %v7840 = vmul.f32 %v7818, 0.17677669
      %v7841 = vmul.f32 %v7821, 0.17677669
      %v7842 = vmul.f32 %v7826, 0.17677669
      %v7843 = vadd.f32 %v7831, %v1111
      %v7844 = vadd.f32 %v7832, %v1111
      %v7845 = vadd.f32 %v7833, %v1111
      %v7846 = vadd.f32 %v7834, %v1111
      %v7847 = vadd.f32 %v7835, %v1111
      %v7848 = vadd.f32 %v7836, %v1111
      %v7849 = vadd.f32 %v7837, %v1111
      %v7850 = vadd.f32 %v7838, %v1111
      %v7851 = vadd.f32 %v7839, %v1111
      %v7852 = vadd.f32 %v7840, %v1111
      %v7853 = vadd.f32 %v7841, %v1111
      %v7854 = vadd.f32 %v7842, %v1111
      %v7855 = vsel %vm1993, %v7843, -inf
      %7856 = vmax.xlane.f32.xlu0 %v7855
      %v7857 = vpop.xlane.xlu0 %7856
      %v7858 = vsel %vm1993, %v7844, -inf
      %7859 = vmax.xlane.f32.xlu0 %v7858
      %v7860 = vpop.xlane.xlu0 %7859
      %v7861 = vsel %vm1993, %v7845, -inf
      %7862 = vmax.xlane.f32.xlu0 %v7861
      %v7863 = vpop.xlane.xlu0 %7862
      %v7864 = vsel %vm1993, %v7846, -inf
      %7865 = vmax.xlane.f32.xlu0 %v7864
      %v7866 = vpop.xlane.xlu0 %7865
      %v7867 = vsel %vm1993, %v7847, -inf
      %7868 = vmax.xlane.f32.xlu0 %v7867
      %v7869 = vpop.xlane.xlu0 %7868
      %v7870 = vsel %vm1993, %v7848, -inf
      %7871 = vmax.xlane.f32.xlu0 %v7870
      %v7872 = vpop.xlane.xlu0 %7871
      %v7873 = vsel %vm1993, %v7849, -inf
      %7874 = vmax.xlane.f32.xlu0 %v7873
      %v7875 = vpop.xlane.xlu0 %7874
      %v7876 = vsel %vm1993, %v7850, -inf
      %7877 = vmax.xlane.f32.xlu0 %v7876
      %v7878 = vpop.xlane.xlu0 %7877
      %v7879 = vsel %vm1993, %v7851, -inf
      %7880 = vmax.xlane.f32.xlu0 %v7879
      %v7881 = vpop.xlane.xlu0 %7880
      %v7882 = vsel %vm1993, %v7852, -inf
      %7883 = vmax.xlane.f32.xlu0 %v7882
      %v7884 = vpop.xlane.xlu0 %7883
      %v7885 = vsel %vm1993, %v7853, -inf
      %7886 = vmax.xlane.f32.xlu0 %v7885
      %v7887 = vpop.xlane.xlu0 %7886
      %v7888 = vsel %vm1993, %v7854, -inf
      %7889 = vmax.xlane.f32.xlu0 %v7888
      %v7890 = vpop.xlane.xlu0 %7889
      %v7891 = vsub.f32 %v7843, %v7857
      %v7892 = vsub.f32 %v7844, %v7860
      %v7893 = vsub.f32 %v7845, %v7863
      %v7894 = vsub.f32 %v7846, %v7866
      %v7895 = vsub.f32 %v7847, %v7869
      %v7896 = vsub.f32 %v7848, %v7872
      %v7897 = vsub.f32 %v7849, %v7875
      %v7898 = vsub.f32 %v7850, %v7878
      %v7899 = vsub.f32 %v7851, %v7881
      %v7900 = vsub.f32 %v7852, %v7884
      %v7901 = vsub.f32 %v7853, %v7887
      %v7902 = vsub.f32 %v7854, %v7890
      %v7903 = vmul.f32 %v7891, 1.442695
      %v7904 = vpow.pop %v7903
      %v7905 = vmul.f32 %v7892, 1.442695
      %v7906 = vpow.pop %v7905
      %v7907 = vmul.f32 %v7893, 1.442695
      %v7908 = vpow.pop %v7907
      %v7909 = vmul.f32 %v7894, 1.442695
      %v7910 = vpow.pop %v7909
      %v7911 = vmul.f32 %v7895, 1.442695
      %v7912 = vpow.pop %v7911
      %v7913 = vmul.f32 %v7896, 1.442695
      %v7914 = vpow.pop %v7913
      %v7915 = vmul.f32 %v7897, 1.442695
      %v7916 = vpow.pop %v7915
      %v7917 = vmul.f32 %v7898, 1.442695
      %v7918 = vpow.pop %v7917
      %v7919 = vmul.f32 %v7899, 1.442695
      %v7920 = vpow.pop %v7919
      %v7921 = vmul.f32 %v7900, 1.442695
      %v7922 = vpow.pop %v7921
      %v7923 = vmul.f32 %v7901, 1.442695
      %v7924 = vpow.pop %v7923
      %v7925 = vmul.f32 %v7902, 1.442695
      %v7926 = vpow.pop %v7925
      %v7927 = vsel %vm1993, %v7904, 0.0
      %7928 = vadd.xlane.f32.xlu0 %v7927
      %v7929 = vpop.xlane.xlu0 %7928
      %v7930 = vsel %vm1993, %v7906, 0.0
      %7931 = vadd.xlane.f32.xlu0 %v7930
      %v7932 = vpop.xlane.xlu0 %7931
      %v7933 = vsel %vm1993, %v7908, 0.0
      %7934 = vadd.xlane.f32.xlu0 %v7933
      %v7935 = vpop.xlane.xlu0 %7934
      %v7936 = vsel %vm1993, %v7910, 0.0
      %7937 = vadd.xlane.f32.xlu0 %v7936
      %v7938 = vpop.xlane.xlu0 %7937
      %v7939 = vsel %vm1993, %v7912, 0.0
      %7940 = vadd.xlane.f32.xlu0 %v7939
      %v7941 = vpop.xlane.xlu0 %7940
      %v7942 = vsel %vm1993, %v7914, 0.0
      %7943 = vadd.xlane.f32.xlu0 %v7942
      %v7944 = vpop.xlane.xlu0 %7943
      %v7945 = vsel %vm1993, %v7916, 0.0
      %7946 = vadd.xlane.f32.xlu0 %v7945
      %v7947 = vpop.xlane.xlu0 %7946
      %v7948 = vsel %vm1993, %v7918, 0.0
      %7949 = vadd.xlane.f32.xlu0 %v7948
      %v7950 = vpop.xlane.xlu0 %7949
      %v7951 = vsel %vm1993, %v7920, 0.0
      %7952 = vadd.xlane.f32.xlu0 %v7951
      %v7953 = vpop.xlane.xlu0 %7952
      %v7954 = vsel %vm1993, %v7922, 0.0
      %7955 = vadd.xlane.f32.xlu0 %v7954
      %v7956 = vpop.xlane.xlu0 %7955
      %v7957 = vsel %vm1993, %v7924, 0.0
      %7958 = vadd.xlane.f32.xlu0 %v7957
      %v7959 = vpop.xlane.xlu0 %7958
      %v7960 = vsel %vm1993, %v7926, 0.0
      %7961 = vadd.xlane.f32.xlu0 %v7960
      %v7962 = vpop.xlane.xlu0 %7961
      %v7963 = vrcp.pop %v7929
      %v7964 = vrcp.pop %v7932
      %v7965 = vrcp.pop %v7935
      %v7966 = vrcp.pop %v7938
      %v7967 = vrcp.pop %v7941
      %v7968 = vrcp.pop %v7944
      %v7969 = vrcp.pop %v7947
      %v7970 = vrcp.pop %v7950
      %v7971 = vrcp.pop %v7953
      %v7972 = vrcp.pop %v7956
      %v7973 = vrcp.pop %v7959
      %v7974 = vrcp.pop %v7962
      %v7975 = vmul.f32 %v7904, %v7963
      %v7976 = vmul.f32 %v7906, %v7964
      %v7977 = vmul.f32 %v7908, %v7965
      %v7978 = vmul.f32 %v7910, %v7966
      %v7979 = vmul.f32 %v7912, %v7967
      %v7980 = vmul.f32 %v7914, %v7968
      %v7981 = vmul.f32 %v7916, %v7969
      %v7982 = vmul.f32 %v7918, %v7970
      %v7983 = vmul.f32 %v7920, %v7971
      %v7984 = vmul.f32 %v7922, %v7972
      %v7985 = vmul.f32 %v7924, %v7973
      %v7986 = vmul.f32 %v7926, %v7974
      %v7987 = vpack.c.bf16 %v7976, %v7975
      %v7988 = vpack.c.bf16 %v7977, %v7977
      %v7989 = vpack.c.bf16 %v7979, %v7978
      %v7990 = vpack.c.bf16 %v7980, %v7980
      %v7991 = vpack.c.bf16 %v7982, %v7981
      %v7992 = vpack.c.bf16 %v7983, %v7983
      %v7993 = vpack.c.bf16 %v7985, %v7984
      %v7994 = vpack.c.bf16 %v7986, %v7986
      %7995 = vrot.lane.b32.xlu0 %v6635, 64
      %v7996 = vpop.permute.xlu0 %7995
      %7997 = vrot.lane.b32.xlu0 %v6636, 64
      %v7998 = vpop.permute.xlu0 %7997
      %v8001 = vsel %vm1993, %v7987, 0
      %v8004 = vsel %vm1993, %v7988, 0
      %v8007 = vsel %vm2143, %v7998, 0
      %8009 = vmatprep.subr.bf16.mxu0 0
      %8010 = vmatpush1.bf16.msra.mxu0 %v7996
      %8011 = vmatprep.subr.bf16.mxu0 0
      %8012 = vmatpush1.bf16.msra.mxu0 %v8007
      %8013 = vmatprep.subr.bf16.mxu0 0
      %8014 = vmatpush1.bf16.msra.mxu0 0
      %8015 = vmatprep.subr.bf16.mxu0 0
      %8016 = vmatpush1.bf16.msra.mxu0 0
      %8017 = vmatprep.subr.bf16.mxu0 0
      %8018 = vmatpush1.bf16.msra.mxu0 0
      %8019 = vmatprep.subr.bf16.mxu0 0
      %8020 = vmatpush1.bf16.msra.mxu0 0
      %8021 = vmatprep.subr.bf16.mxu0 0
      %8022 = vmatpush1.bf16.msra.mxu0 0
      %8023 = vmatprep.subr.bf16.mxu0 0
      %8024 = vmatpush1.bf16.msra.mxu0 0
      %8025 = vmatprep.subr.bf16.mxu0 0
      %8026 = vmatpush1.bf16.msra.mxu0 0
      %8027 = vmatprep.subr.bf16.mxu0 0
      %8028 = vmatpush1.bf16.msra.mxu0 0
      %8029 = vmatprep.subr.bf16.mxu0 0
      %8030 = vmatpush1.bf16.msra.mxu0 0
      %8031 = vmatprep.subr.bf16.mxu0 0
      %8032 = vmatpush1.bf16.msra.mxu0 0
      %8033 = vmatprep.subr.bf16.mxu0 0
      %8034 = vmatpush1.bf16.msra.mxu0 0
      %8035 = vmatprep.subr.bf16.mxu0 0
      %8036 = vmatpush1.bf16.msra.mxu0 0
      %8037 = vmatprep.subr.bf16.mxu0 0
      %8038 = vmatpush1.bf16.msra.mxu0 0
      %8039 = vmatprep.subr.bf16.mxu0 0
      %8040 = vmatpush1.bf16.msra.mxu0 0
      %8041 = vmatprep.mubr.bf16.mxu0 0
      %8042 = vmatmul.mubr.bf16.gmra.mrb[0].mxu0 %v8001
      %v8043 = vpop.f32.mrb[0].mxu0
      %v8044 = vadd.f32 0.0, %v8043
      %v8045 = vpop.f32.mrb[0].mxu0
      %v8046 = vpop.f32.mrb[0].mxu0
      %v8047 = vadd.f32 0.0, %v8046
      %v8048 = vpop.f32.mrb[0].mxu0
      %8049 = vmatprep.mubr.bf16.mxu0 0
      %8050 = vmatmul.mubr.bf16.gmra.mrb[0].mxu0 %v8004
      %v8051 = vpop.f32.mrb[0].mxu0
      %v8052 = vadd.f32 0.0, %v8051
      %v8053 = vpop.f32.mrb[0].mxu0
      %v8054 = vpop.f32.mrb[0].mxu0
      %v8055 = vpop.f32.mrb[0].mxu0
      %8056 = vdwg.mxu0
      %8057 = vrot.lane.b32.xlu0 %v6695, 64
      %v8058 = vpop.permute.xlu0 %8057
      %8059 = vrot.lane.b32.xlu0 %v6696, 64
      %v8060 = vpop.permute.xlu0 %8059
      %v8063 = vsel %vm1993, %v7989, 0
      %v8066 = vsel %vm1993, %v7990, 0
      %v8069 = vsel %vm2143, %v8060, 0
      %8071 = vmatprep.subr.bf16.mxu0 0
      %8072 = vmatpush1.bf16.msra.mxu0 %v8058
      %8073 = vmatprep.subr.bf16.mxu0 0
      %8074 = vmatpush1.bf16.msra.mxu0 %v8069
      %8075 = vmatprep.subr.bf16.mxu0 0
      %8076 = vmatpush1.bf16.msra.mxu0 0
      %8077 = vmatprep.subr.bf16.mxu0 0
      %8078 = vmatpush1.bf16.msra.mxu0 0
      %8079 = vmatprep.subr.bf16.mxu0 0
      %8080 = vmatpush1.bf16.msra.mxu0 0
      %8081 = vmatprep.subr.bf16.mxu0 0
      %8082 = vmatpush1.bf16.msra.mxu0 0
      %8083 = vmatprep.subr.bf16.mxu0 0
      %8084 = vmatpush1.bf16.msra.mxu0 0
      %8085 = vmatprep.subr.bf16.mxu0 0
      %8086 = vmatpush1.bf16.msra.mxu0 0
      %8087 = vmatprep.subr.bf16.mxu0 0
      %8088 = vmatpush1.bf16.msra.mxu0 0
      %8089 = vmatprep.subr.bf16.mxu0 0
      %8090 = vmatpush1.bf16.msra.mxu0 0
      %8091 = vmatprep.subr.bf16.mxu0 0
      %8092 = vmatpush1.bf16.msra.mxu0 0
      %8093 = vmatprep.subr.bf16.mxu0 0
      %8094 = vmatpush1.bf16.msra.mxu0 0
      %8095 = vmatprep.subr.bf16.mxu0 0
      %8096 = vmatpush1.bf16.msra.mxu0 0
      %8097 = vmatprep.subr.bf16.mxu0 0
      %8098 = vmatpush1.bf16.msra.mxu0 0
      %8099 = vmatprep.subr.bf16.mxu0 0
      %8100 = vmatpush1.bf16.msra.mxu0 0
      %8101 = vmatprep.subr.bf16.mxu0 0
      %8102 = vmatpush1.bf16.msra.mxu0 0
      %8103 = vmatprep.mubr.bf16.mxu0 0
      %8104 = vmatmul.mubr.bf16.gmra.mrb[0].mxu0 %v8063
      %v8105 = vpop.f32.mrb[0].mxu0
      %v8106 = vadd.f32 0.0, %v8105
      %v8107 = vpop.f32.mrb[0].mxu0
      %v8108 = vpop.f32.mrb[0].mxu0
      %v8109 = vadd.f32 0.0, %v8108
      %v8110 = vpop.f32.mrb[0].mxu0
      %8111 = vmatprep.mubr.bf16.mxu0 0
      %8112 = vmatmul.mubr.bf16.gmra.mrb[0].mxu0 %v8066
      %v8113 = vpop.f32.mrb[0].mxu0
      %v8114 = vadd.f32 0.0, %v8113
      %v8115 = vpop.f32.mrb[0].mxu0
      %v8116 = vpop.f32.mrb[0].mxu0
      %v8117 = vpop.f32.mrb[0].mxu0
      %8118 = vdwg.mxu0
      %8119 = vrot.lane.b32.xlu0 %v6755, 64
      %v8120 = vpop.permute.xlu0 %8119
      %8121 = vrot.lane.b32.xlu0 %v6756, 64
      %v8122 = vpop.permute.xlu0 %8121
      %v8125 = vsel %vm1993, %v7991, 0
      %v8128 = vsel %vm1993, %v7992, 0
      %v8131 = vsel %vm2143, %v8122, 0
      %8133 = vmatprep.subr.bf16.mxu0 0
      %8134 = vmatpush1.bf16.msra.mxu0 %v8120
      %8135 = vmatprep.subr.bf16.mxu0 0
      %8136 = vmatpush1.bf16.msra.mxu0 %v8131
      %8137 = vmatprep.subr.bf16.mxu0 0
      %8138 = vmatpush1.bf16.msra.mxu0 0
      %8139 = vmatprep.subr.bf16.mxu0 0
      %8140 = vmatpush1.bf16.msra.mxu0 0
      %8141 = vmatprep.subr.bf16.mxu0 0
      %8142 = vmatpush1.bf16.msra.mxu0 0
      %8143 = vmatprep.subr.bf16.mxu0 0
      %8144 = vmatpush1.bf16.msra.mxu0 0
      %8145 = vmatprep.subr.bf16.mxu0 0
      %8146 = vmatpush1.bf16.msra.mxu0 0
      %8147 = vmatprep.subr.bf16.mxu0 0
      %8148 = vmatpush1.bf16.msra.mxu0 0
      %8149 = vmatprep.subr.bf16.mxu0 0
      %8150 = vmatpush1.bf16.msra.mxu0 0
      %8151 = vmatprep.subr.bf16.mxu0 0
      %8152 = vmatpush1.bf16.msra.mxu0 0
      %8153 = vmatprep.subr.bf16.mxu0 0
      %8154 = vmatpush1.bf16.msra.mxu0 0
      %8155 = vmatprep.subr.bf16.mxu0 0
      %8156 = vmatpush1.bf16.msra.mxu0 0
      %8157 = vmatprep.subr.bf16.mxu0 0
      %8158 = vmatpush1.bf16.msra.mxu0 0
      %8159 = vmatprep.subr.bf16.mxu0 0
      %8160 = vmatpush1.bf16.msra.mxu0 0
      %8161 = vmatprep.subr.bf16.mxu0 0
      %8162 = vmatpush1.bf16.msra.mxu0 0
      %8163 = vmatprep.subr.bf16.mxu0 0
      %8164 = vmatpush1.bf16.msra.mxu0 0
      %8165 = vmatprep.mubr.bf16.mxu0 0
      %8166 = vmatmul.mubr.bf16.gmra.mrb[0].mxu0 %v8125
      %v8167 = vpop.f32.mrb[0].mxu0
      %v8168 = vadd.f32 0.0, %v8167
      %v8169 = vpop.f32.mrb[0].mxu0
      %v8170 = vpop.f32.mrb[0].mxu0
      %v8171 = vadd.f32 0.0, %v8170
      %v8172 = vpop.f32.mrb[0].mxu0
      %8173 = vmatprep.mubr.bf16.mxu0 0
      %8174 = vmatmul.mubr.bf16.gmra.mrb[0].mxu0 %v8128
      %v8175 = vpop.f32.mrb[0].mxu0
      %v8176 = vadd.f32 0.0, %v8175
      %v8177 = vpop.f32.mrb[0].mxu0
      %v8178 = vpop.f32.mrb[0].mxu0
      %v8179 = vpop.f32.mrb[0].mxu0
      %8180 = vdwg.mxu0
      %8181 = vrot.lane.b32.xlu0 %v6815, 64
      %v8182 = vpop.permute.xlu0 %8181
      %8183 = vrot.lane.b32.xlu0 %v6816, 64
      %v8184 = vpop.permute.xlu0 %8183
      %v8187 = vsel %vm1993, %v7993, 0
      %v8190 = vsel %vm1993, %v7994, 0
      %v8193 = vsel %vm2143, %v8184, 0
      %8195 = vmatprep.subr.bf16.mxu0 0
      %8196 = vmatpush1.bf16.msra.mxu0 %v8182
      %8197 = vmatprep.subr.bf16.mxu0 0
      %8198 = vmatpush1.bf16.msra.mxu0 %v8193
      %8199 = vmatprep.subr.bf16.mxu0 0
      %8200 = vmatpush1.bf16.msra.mxu0 0
      %8201 = vmatprep.subr.bf16.mxu0 0
      %8202 = vmatpush1.bf16.msra.mxu0 0
      %8203 = vmatprep.subr.bf16.mxu0 0
      %8204 = vmatpush1.bf16.msra.mxu0 0
      %8205 = vmatprep.subr.bf16.mxu0 0
      %8206 = vmatpush1.bf16.msra.mxu0 0
      %8207 = vmatprep.subr.bf16.mxu0 0
      %8208 = vmatpush1.bf16.msra.mxu0 0
      %8209 = vmatprep.subr.bf16.mxu0 0
      %8210 = vmatpush1.bf16.msra.mxu0 0
      %8211 = vmatprep.subr.bf16.mxu0 0
      %8212 = vmatpush1.bf16.msra.mxu0 0
      %8213 = vmatprep.subr.bf16.mxu0 0
      %8214 = vmatpush1.bf16.msra.mxu0 0
      %8215 = vmatprep.subr.bf16.mxu0 0
      %8216 = vmatpush1.bf16.msra.mxu0 0
      %8217 = vmatprep.subr.bf16.mxu0 0
      %8218 = vmatpush1.bf16.msra.mxu0 0
      %8219 = vmatprep.subr.bf16.mxu0 0
      %8220 = vmatpush1.bf16.msra.mxu0 0
      %8221 = vmatprep.subr.bf16.mxu0 0
      %8222 = vmatpush1.bf16.msra.mxu0 0
      %8223 = vmatprep.subr.bf16.mxu0 0
      %8224 = vmatpush1.bf16.msra.mxu0 0
      %8225 = vmatprep.subr.bf16.mxu0 0
      %8226 = vmatpush1.bf16.msra.mxu0 0
      %8227 = vmatprep.mubr.bf16.mxu0 0
      %8228 = vmatmul.mubr.bf16.gmra.mrb[0].mxu0 %v8187
      %v8229 = vpop.f32.mrb[0].mxu0
      %v8230 = vadd.f32 0.0, %v8229
      %v8231 = vpop.f32.mrb[0].mxu0
      %v8232 = vpop.f32.mrb[0].mxu0
      %v8233 = vadd.f32 0.0, %v8232
      %v8234 = vpop.f32.mrb[0].mxu0
      %8235 = vmatprep.mubr.bf16.mxu0 0
      %8236 = vmatmul.mubr.bf16.gmra.mrb[0].mxu0 %v8190
      %v8237 = vpop.f32.mrb[0].mxu0
      %v8238 = vadd.f32 0.0, %v8237
      %v8239 = vpop.f32.mrb[0].mxu0
      %v8240 = vpop.f32.mrb[0].mxu0
      %v8241 = vpop.f32.mrb[0].mxu0
      %8242 = vdwg.mxu0
      %8243 = vrot.lane.b32.xlu0 %v6215, 32
      %v8244 = vpop.permute.xlu0 %8243
      %8245 = vrot.lane.b32.xlu0 %v6216, 32
      %v8246 = vpop.permute.xlu0 %8245
      %8247 = vrot.lane.b32.xlu0 %v6217, 32
      %v8248 = vpop.permute.xlu0 %8247
      %8249 = vrot.lane.b32.xlu0 %v6218, 32
      %v8250 = vpop.permute.xlu0 %8249
      %v8252 = vsel %vm1716, %v8244, 0
      %v8255 = vsel %vm1716, %v8246, 0
      %v8258 = vsel %vm1716, %v8248, 0
      %v8261 = vsel %vm1716, %v8250, 0
      %8263 = vmatprep.subr.bf16.mxu0 0
      %8264 = vmatpush1.bf16.xpose.msra.mxu0 %v8258
      %8265 = vmatprep.subr.bf16.mxu0 0
      %8266 = vmatpush1.bf16.xpose.msra.mxu0 %v8261
      %8267 = vmatprep.subr.bf16.mxu0 0
      %8268 = vmatpush1.bf16.xpose.msra.mxu0 0
      %8269 = vmatprep.subr.bf16.mxu0 0
      %8270 = vmatpush1.bf16.xpose.msra.mxu0 0
      %8271 = vmatprep.subr.bf16.mxu0 0
      %8272 = vmatpush1.bf16.xpose.msra.mxu0 0
      %8273 = vmatprep.subr.bf16.mxu0 0
      %8274 = vmatpush1.bf16.xpose.msra.mxu0 0
      %8275 = vmatprep.subr.bf16.mxu0 0
      %8276 = vmatpush1.bf16.xpose.msra.mxu0 0
      %8277 = vmatprep.subr.bf16.mxu0 0
      %8278 = vmatpush1.bf16.xpose.msra.mxu0 0
      %8279 = vmatprep.subr.bf16.mxu0 0
      %8280 = vmatpush1.bf16.xpose.msra.mxu0 0
      %8281 = vmatprep.subr.bf16.mxu0 0
      %8282 = vmatpush1.bf16.xpose.msra.mxu0 0
      %8283 = vmatprep.subr.bf16.mxu0 0
      %8284 = vmatpush1.bf16.xpose.msra.mxu0 0
      %8285 = vmatprep.subr.bf16.mxu0 0
      %8286 = vmatpush1.bf16.xpose.msra.mxu0 0
      %8287 = vmatprep.subr.bf16.mxu0 0
      %8288 = vmatpush1.bf16.xpose.msra.mxu0 0
      %8289 = vmatprep.subr.bf16.mxu0 0
      %8290 = vmatpush1.bf16.xpose.msra.mxu0 0
      %8291 = vmatprep.subr.bf16.mxu0 0
      %8292 = vmatpush1.bf16.xpose.msra.mxu0 0
      %8293 = vmatprep.subr.bf16.mxu0 0
      %8294 = vmatpush1.bf16.xpose.msra.mxu0 0
      %8295 = vmatprep.mubr.bf16.mxu0 0
      %8296 = vmatmul.mubr.bf16.gmra.mrb[0].mxu0 %v8252
      %v8297 = vpop.f32.mrb[0].mxu0
      %v8298 = vadd.f32 0.0, %v8297
      %v8299 = vpop.f32.mrb[0].mxu0
      %v8300 = vpop.f32.mrb[0].mxu0
      %v8301 = vadd.f32 0.0, %v8300
      %v8302 = vpop.f32.mrb[0].mxu0
      %8303 = vmatprep.mubr.bf16.mxu0 0
      %8304 = vmatmul.mubr.bf16.gmra.mrb[0].mxu0 %v8255
      %v8305 = vpop.f32.mrb[0].mxu0
      %v8306 = vadd.f32 0.0, %v8305
      %v8307 = vpop.f32.mrb[0].mxu0
      %v8308 = vpop.f32.mrb[0].mxu0
      %v8309 = vpop.f32.mrb[0].mxu0
      %8310 = vdwg.mxu0
      %8311 = vrot.lane.b32.xlu0 %v6279, 32
      %v8312 = vpop.permute.xlu0 %8311
      %8313 = vrot.lane.b32.xlu0 %v6280, 32
      %v8314 = vpop.permute.xlu0 %8313
      %8315 = vrot.lane.b32.xlu0 %v6281, 32
      %v8316 = vpop.permute.xlu0 %8315
      %8317 = vrot.lane.b32.xlu0 %v6282, 32
      %v8318 = vpop.permute.xlu0 %8317
      %v8320 = vsel %vm1716, %v8312, 0
      %v8323 = vsel %vm1716, %v8314, 0
      %v8326 = vsel %vm1716, %v8316, 0
      %v8329 = vsel %vm1716, %v8318, 0
      %8331 = vmatprep.subr.bf16.mxu0 0
      %8332 = vmatpush1.bf16.xpose.msra.mxu0 %v8326
      %8333 = vmatprep.subr.bf16.mxu0 0
      %8334 = vmatpush1.bf16.xpose.msra.mxu0 %v8329
      %8335 = vmatprep.subr.bf16.mxu0 0
      %8336 = vmatpush1.bf16.xpose.msra.mxu0 0
      %8337 = vmatprep.subr.bf16.mxu0 0
      %8338 = vmatpush1.bf16.xpose.msra.mxu0 0
      %8339 = vmatprep.subr.bf16.mxu0 0
      %8340 = vmatpush1.bf16.xpose.msra.mxu0 0
      %8341 = vmatprep.subr.bf16.mxu0 0
      %8342 = vmatpush1.bf16.xpose.msra.mxu0 0
      %8343 = vmatprep.subr.bf16.mxu0 0
      %8344 = vmatpush1.bf16.xpose.msra.mxu0 0
      %8345 = vmatprep.subr.bf16.mxu0 0
      %8346 = vmatpush1.bf16.xpose.msra.mxu0 0
      %8347 = vmatprep.subr.bf16.mxu0 0
      %8348 = vmatpush1.bf16.xpose.msra.mxu0 0
      %8349 = vmatprep.subr.bf16.mxu0 0
      %8350 = vmatpush1.bf16.xpose.msra.mxu0 0
      %8351 = vmatprep.subr.bf16.mxu0 0
      %8352 = vmatpush1.bf16.xpose.msra.mxu0 0
      %8353 = vmatprep.subr.bf16.mxu0 0
      %8354 = vmatpush1.bf16.xpose.msra.mxu0 0
      %8355 = vmatprep.subr.bf16.mxu0 0
      %8356 = vmatpush1.bf16.xpose.msra.mxu0 0
      %8357 = vmatprep.subr.bf16.mxu0 0
      %8358 = vmatpush1.bf16.xpose.msra.mxu0 0
      %8359 = vmatprep.subr.bf16.mxu0 0
      %8360 = vmatpush1.bf16.xpose.msra.mxu0 0
      %8361 = vmatprep.subr.bf16.mxu0 0
      %8362 = vmatpush1.bf16.xpose.msra.mxu0 0
      %8363 = vmatprep.mubr.bf16.mxu0 0
      %8364 = vmatmul.mubr.bf16.gmra.mrb[0].mxu0 %v8320
      %v8365 = vpop.f32.mrb[0].mxu0
      %v8366 = vadd.f32 0.0, %v8365
      %v8367 = vpop.f32.mrb[0].mxu0
      %v8368 = vpop.f32.mrb[0].mxu0
      %v8369 = vadd.f32 0.0, %v8368
      %v8370 = vpop.f32.mrb[0].mxu0
      %8371 = vmatprep.mubr.bf16.mxu0 0
      %8372 = vmatmul.mubr.bf16.gmra.mrb[0].mxu0 %v8323
      %v8373 = vpop.f32.mrb[0].mxu0
      %v8374 = vadd.f32 0.0, %v8373
      %v8375 = vpop.f32.mrb[0].mxu0
      %v8376 = vpop.f32.mrb[0].mxu0
      %v8377 = vpop.f32.mrb[0].mxu0
      %8378 = vdwg.mxu0
      %8379 = vrot.lane.b32.xlu0 %v6343, 32
      %v8380 = vpop.permute.xlu0 %8379
      %8381 = vrot.lane.b32.xlu0 %v6344, 32
      %v8382 = vpop.permute.xlu0 %8381
      %8383 = vrot.lane.b32.xlu0 %v6345, 32
      %v8384 = vpop.permute.xlu0 %8383
      %8385 = vrot.lane.b32.xlu0 %v6346, 32
      %v8386 = vpop.permute.xlu0 %8385
      %v8388 = vsel %vm1716, %v8380, 0
      %v8391 = vsel %vm1716, %v8382, 0
      %v8394 = vsel %vm1716, %v8384, 0
      %v8397 = vsel %vm1716, %v8386, 0
      %8399 = vmatprep.subr.bf16.mxu0 0
      %8400 = vmatpush1.bf16.xpose.msra.mxu0 %v8394
      %8401 = vmatprep.subr.bf16.mxu0 0
      %8402 = vmatpush1.bf16.xpose.msra.mxu0 %v8397
      %8403 = vmatprep.subr.bf16.mxu0 0
      %8404 = vmatpush1.bf16.xpose.msra.mxu0 0
      %8405 = vmatprep.subr.bf16.mxu0 0
      %8406 = vmatpush1.bf16.xpose.msra.mxu0 0
      %8407 = vmatprep.subr.bf16.mxu0 0
      %8408 = vmatpush1.bf16.xpose.msra.mxu0 0
      %8409 = vmatprep.subr.bf16.mxu0 0
      %8410 = vmatpush1.bf16.xpose.msra.mxu0 0
      %8411 = vmatprep.subr.bf16.mxu0 0
      %8412 = vmatpush1.bf16.xpose.msra.mxu0 0
      %8413 = vmatprep.subr.bf16.mxu0 0
      %8414 = vmatpush1.bf16.xpose.msra.mxu0 0
      %8415 = vmatprep.subr.bf16.mxu0 0
      %8416 = vmatpush1.bf16.xpose.msra.mxu0 0
      %8417 = vmatprep.subr.bf16.mxu0 0
      %8418 = vmatpush1.bf16.xpose.msra.mxu0 0
      %8419 = vmatprep.subr.bf16.mxu0 0
      %8420 = vmatpush1.bf16.xpose.msra.mxu0 0
      %8421 = vmatprep.subr.bf16.mxu0 0
      %8422 = vmatpush1.bf16.xpose.msra.mxu0 0
      %8423 = vmatprep.subr.bf16.mxu0 0
      %8424 = vmatpush1.bf16.xpose.msra.mxu0 0
      %8425 = vmatprep.subr.bf16.mxu0 0
      %8426 = vmatpush1.bf16.xpose.msra.mxu0 0
      %8427 = vmatprep.subr.bf16.mxu0 0
      %8428 = vmatpush1.bf16.xpose.msra.mxu0 0
      %8429 = vmatprep.subr.bf16.mxu0 0
      %8430 = vmatpush1.bf16.xpose.msra.mxu0 0
      %8431 = vmatprep.mubr.bf16.mxu0 0
      %8432 = vmatmul.mubr.bf16.gmra.mrb[0].mxu0 %v8388
      %v8433 = vpop.f32.mrb[0].mxu0
      %v8434 = vadd.f32 0.0, %v8433
      %v8435 = vpop.f32.mrb[0].mxu0
      %v8436 = vpop.f32.mrb[0].mxu0
      %v8437 = vadd.f32 0.0, %v8436
      %v8438 = vpop.f32.mrb[0].mxu0
      %8439 = vmatprep.mubr.bf16.mxu0 0
      %8440 = vmatmul.mubr.bf16.gmra.mrb[0].mxu0 %v8391
      %v8441 = vpop.f32.mrb[0].mxu0
      %v8442 = vadd.f32 0.0, %v8441
      %v8443 = vpop.f32.mrb[0].mxu0
      %v8444 = vpop.f32.mrb[0].mxu0
      %v8445 = vpop.f32.mrb[0].mxu0
      %8446 = vdwg.mxu0
      %8447 = vrot.lane.b32.xlu0 %v6407, 32
      %v8448 = vpop.permute.xlu0 %8447
      %8449 = vrot.lane.b32.xlu0 %v6408, 32
      %v8450 = vpop.permute.xlu0 %8449
      %8451 = vrot.lane.b32.xlu0 %v6409, 32
      %v8452 = vpop.permute.xlu0 %8451
      %8453 = vrot.lane.b32.xlu0 %v6410, 32
      %v8454 = vpop.permute.xlu0 %8453
      %v8456 = vsel %vm1716, %v8448, 0
      %v8459 = vsel %vm1716, %v8450, 0
      %v8462 = vsel %vm1716, %v8452, 0
      %v8465 = vsel %vm1716, %v8454, 0
      %8467 = vmatprep.subr.bf16.mxu0 0
      %8468 = vmatpush1.bf16.xpose.msra.mxu0 %v8462
      %8469 = vmatprep.subr.bf16.mxu0 0
      %8470 = vmatpush1.bf16.xpose.msra.mxu0 %v8465
      %8471 = vmatprep.subr.bf16.mxu0 0
      %8472 = vmatpush1.bf16.xpose.msra.mxu0 0
      %8473 = vmatprep.subr.bf16.mxu0 0
      %8474 = vmatpush1.bf16.xpose.msra.mxu0 0
      %8475 = vmatprep.subr.bf16.mxu0 0
      %8476 = vmatpush1.bf16.xpose.msra.mxu0 0
      %8477 = vmatprep.subr.bf16.mxu0 0
      %8478 = vmatpush1.bf16.xpose.msra.mxu0 0
      %8479 = vmatprep.subr.bf16.mxu0 0
      %8480 = vmatpush1.bf16.xpose.msra.mxu0 0
      %8481 = vmatprep.subr.bf16.mxu0 0
      %8482 = vmatpush1.bf16.xpose.msra.mxu0 0
      %8483 = vmatprep.subr.bf16.mxu0 0
      %8484 = vmatpush1.bf16.xpose.msra.mxu0 0
      %8485 = vmatprep.subr.bf16.mxu0 0
      %8486 = vmatpush1.bf16.xpose.msra.mxu0 0
      %8487 = vmatprep.subr.bf16.mxu0 0
      %8488 = vmatpush1.bf16.xpose.msra.mxu0 0
      %8489 = vmatprep.subr.bf16.mxu0 0
      %8490 = vmatpush1.bf16.xpose.msra.mxu0 0
      %8491 = vmatprep.subr.bf16.mxu0 0
      %8492 = vmatpush1.bf16.xpose.msra.mxu0 0
      %8493 = vmatprep.subr.bf16.mxu0 0
      %8494 = vmatpush1.bf16.xpose.msra.mxu0 0
      %8495 = vmatprep.subr.bf16.mxu0 0
      %8496 = vmatpush1.bf16.xpose.msra.mxu0 0
      %8497 = vmatprep.subr.bf16.mxu0 0
      %8498 = vmatpush1.bf16.xpose.msra.mxu0 0
      %8499 = vmatprep.mubr.bf16.mxu0 0
      %8500 = vmatmul.mubr.bf16.gmra.mrb[0].mxu0 %v8456
      %v8501 = vpop.f32.mrb[0].mxu0
      %v8502 = vadd.f32 0.0, %v8501
      %v8503 = vpop.f32.mrb[0].mxu0
      %v8504 = vpop.f32.mrb[0].mxu0
      %v8505 = vadd.f32 0.0, %v8504
      %v8506 = vpop.f32.mrb[0].mxu0
      %8507 = vmatprep.mubr.bf16.mxu0 0
      %8508 = vmatmul.mubr.bf16.gmra.mrb[0].mxu0 %v8459
      %v8509 = vpop.f32.mrb[0].mxu0
      %v8510 = vadd.f32 0.0, %v8509
      %v8511 = vpop.f32.mrb[0].mxu0
      %v8512 = vpop.f32.mrb[0].mxu0
      %v8513 = vpop.f32.mrb[0].mxu0
      %8514 = vdwg.mxu0
      %v8515 = vmul.f32 %v8298, 0.17677669
      %v8516 = vmul.f32 %v8301, 0.17677669
      %v8517 = vmul.f32 %v8306, 0.17677669
      %v8518 = vmul.f32 %v8366, 0.17677669
      %v8519 = vmul.f32 %v8369, 0.17677669
      %v8520 = vmul.f32 %v8374, 0.17677669
      %v8521 = vmul.f32 %v8434, 0.17677669
      %v8522 = vmul.f32 %v8437, 0.17677669
      %v8523 = vmul.f32 %v8442, 0.17677669
      %v8524 = vmul.f32 %v8502, 0.17677669
      %v8525 = vmul.f32 %v8505, 0.17677669
      %v8526 = vmul.f32 %v8510, 0.17677669
      %v8527 = vadd.f32 %v8515, %v1111
      %v8528 = vadd.f32 %v8516, %v1111
      %v8529 = vadd.f32 %v8517, %v1111
      %v8530 = vadd.f32 %v8518, %v1111
      %v8531 = vadd.f32 %v8519, %v1111
      %v8532 = vadd.f32 %v8520, %v1111
      %v8533 = vadd.f32 %v8521, %v1111
      %v8534 = vadd.f32 %v8522, %v1111
      %v8535 = vadd.f32 %v8523, %v1111
      %v8536 = vadd.f32 %v8524, %v1111
      %v8537 = vadd.f32 %v8525, %v1111
      %v8538 = vadd.f32 %v8526, %v1111
      %v8539 = vsel %vm1993, %v8527, -inf
      %8540 = vmax.xlane.f32.xlu0 %v8539
      %v8541 = vpop.xlane.xlu0 %8540
      %v8542 = vsel %vm1993, %v8528, -inf
      %8543 = vmax.xlane.f32.xlu0 %v8542
      %v8544 = vpop.xlane.xlu0 %8543
      %v8545 = vsel %vm1993, %v8529, -inf
      %8546 = vmax.xlane.f32.xlu0 %v8545
      %v8547 = vpop.xlane.xlu0 %8546
      %v8548 = vsel %vm1993, %v8530, -inf
      %8549 = vmax.xlane.f32.xlu0 %v8548
      %v8550 = vpop.xlane.xlu0 %8549
      %v8551 = vsel %vm1993, %v8531, -inf
      %8552 = vmax.xlane.f32.xlu0 %v8551
      %v8553 = vpop.xlane.xlu0 %8552
      %v8554 = vsel %vm1993, %v8532, -inf
      %8555 = vmax.xlane.f32.xlu0 %v8554
      %v8556 = vpop.xlane.xlu0 %8555
      %v8557 = vsel %vm1993, %v8533, -inf
      %8558 = vmax.xlane.f32.xlu0 %v8557
      %v8559 = vpop.xlane.xlu0 %8558
      %v8560 = vsel %vm1993, %v8534, -inf
      %8561 = vmax.xlane.f32.xlu0 %v8560
      %v8562 = vpop.xlane.xlu0 %8561
      %v8563 = vsel %vm1993, %v8535, -inf
      %8564 = vmax.xlane.f32.xlu0 %v8563
      %v8565 = vpop.xlane.xlu0 %8564
      %v8566 = vsel %vm1993, %v8536, -inf
      %8567 = vmax.xlane.f32.xlu0 %v8566
      %v8568 = vpop.xlane.xlu0 %8567
      %v8569 = vsel %vm1993, %v8537, -inf
      %8570 = vmax.xlane.f32.xlu0 %v8569
      %v8571 = vpop.xlane.xlu0 %8570
      %v8572 = vsel %vm1993, %v8538, -inf
      %8573 = vmax.xlane.f32.xlu0 %v8572
      %v8574 = vpop.xlane.xlu0 %8573
      %v8575 = vsub.f32 %v8527, %v8541
      %v8576 = vsub.f32 %v8528, %v8544
      %v8577 = vsub.f32 %v8529, %v8547
      %v8578 = vsub.f32 %v8530, %v8550
      %v8579 = vsub.f32 %v8531, %v8553
      %v8580 = vsub.f32 %v8532, %v8556
      %v8581 = vsub.f32 %v8533, %v8559
      %v8582 = vsub.f32 %v8534, %v8562
      %v8583 = vsub.f32 %v8535, %v8565
      %v8584 = vsub.f32 %v8536, %v8568
      %v8585 = vsub.f32 %v8537, %v8571
      %v8586 = vsub.f32 %v8538, %v8574
      %v8587 = vmul.f32 %v8575, 1.442695
      %v8588 = vpow.pop %v8587
      %v8589 = vmul.f32 %v8576, 1.442695
      %v8590 = vpow.pop %v8589
      %v8591 = vmul.f32 %v8577, 1.442695
      %v8592 = vpow.pop %v8591
      %v8593 = vmul.f32 %v8578, 1.442695
      %v8594 = vpow.pop %v8593
      %v8595 = vmul.f32 %v8579, 1.442695
      %v8596 = vpow.pop %v8595
      %v8597 = vmul.f32 %v8580, 1.442695
      %v8598 = vpow.pop %v8597
      %v8599 = vmul.f32 %v8581, 1.442695
      %v8600 = vpow.pop %v8599
      %v8601 = vmul.f32 %v8582, 1.442695
      %v8602 = vpow.pop %v8601
      %v8603 = vmul.f32 %v8583, 1.442695
      %v8604 = vpow.pop %v8603
      %v8605 = vmul.f32 %v8584, 1.442695
      %v8606 = vpow.pop %v8605
      %v8607 = vmul.f32 %v8585, 1.442695
      %v8608 = vpow.pop %v8607
      %v8609 = vmul.f32 %v8586, 1.442695
      %v8610 = vpow.pop %v8609
      %v8611 = vsel %vm1993, %v8588, 0.0
      %8612 = vadd.xlane.f32.xlu0 %v8611
      %v8613 = vpop.xlane.xlu0 %8612
      %v8614 = vsel %vm1993, %v8590, 0.0
      %8615 = vadd.xlane.f32.xlu0 %v8614
      %v8616 = vpop.xlane.xlu0 %8615
      %v8617 = vsel %vm1993, %v8592, 0.0
      %8618 = vadd.xlane.f32.xlu0 %v8617
      %v8619 = vpop.xlane.xlu0 %8618
      %v8620 = vsel %vm1993, %v8594, 0.0
      %8621 = vadd.xlane.f32.xlu0 %v8620
      %v8622 = vpop.xlane.xlu0 %8621
      %v8623 = vsel %vm1993, %v8596, 0.0
      %8624 = vadd.xlane.f32.xlu0 %v8623
      %v8625 = vpop.xlane.xlu0 %8624
      %v8626 = vsel %vm1993, %v8598, 0.0
      %8627 = vadd.xlane.f32.xlu0 %v8626
      %v8628 = vpop.xlane.xlu0 %8627
      %v8629 = vsel %vm1993, %v8600, 0.0
      %8630 = vadd.xlane.f32.xlu0 %v8629
      %v8631 = vpop.xlane.xlu0 %8630
      %v8632 = vsel %vm1993, %v8602, 0.0
      %8633 = vadd.xlane.f32.xlu0 %v8632
      %v8634 = vpop.xlane.xlu0 %8633
      %v8635 = vsel %vm1993, %v8604, 0.0
      %8636 = vadd.xlane.f32.xlu0 %v8635
      %v8637 = vpop.xlane.xlu0 %8636
      %v8638 = vsel %vm1993, %v8606, 0.0
      %8639 = vadd.xlane.f32.xlu0 %v8638
      %v8640 = vpop.xlane.xlu0 %8639
      %v8641 = vsel %vm1993, %v8608, 0.0
      %8642 = vadd.xlane.f32.xlu0 %v8641
      %v8643 = vpop.xlane.xlu0 %8642
      %v8644 = vsel %vm1993, %v8610, 0.0
      %8645 = vadd.xlane.f32.xlu0 %v8644
      %v8646 = vpop.xlane.xlu0 %8645
      %v8647 = vrcp.pop %v8613
      %v8648 = vrcp.pop %v8616
      %v8649 = vrcp.pop %v8619
      %v8650 = vrcp.pop %v8622
      %v8651 = vrcp.pop %v8625
      %v8652 = vrcp.pop %v8628
      %v8653 = vrcp.pop %v8631
      %v8654 = vrcp.pop %v8634
      %v8655 = vrcp.pop %v8637
      %v8656 = vrcp.pop %v8640
      %v8657 = vrcp.pop %v8643
      %v8658 = vrcp.pop %v8646
      %v8659 = vmul.f32 %v8588, %v8647
      %v8660 = vmul.f32 %v8590, %v8648
      %v8661 = vmul.f32 %v8592, %v8649
      %v8662 = vmul.f32 %v8594, %v8650
      %v8663 = vmul.f32 %v8596, %v8651
      %v8664 = vmul.f32 %v8598, %v8652
      %v8665 = vmul.f32 %v8600, %v8653
      %v8666 = vmul.f32 %v8602, %v8654
      %v8667 = vmul.f32 %v8604, %v8655
      %v8668 = vmul.f32 %v8606, %v8656
      %v8669 = vmul.f32 %v8608, %v8657
      %v8670 = vmul.f32 %v8610, %v8658
      %v8671 = vpack.c.bf16 %v8660, %v8659
      %v8672 = vpack.c.bf16 %v8661, %v8661
      %v8673 = vpack.c.bf16 %v8663, %v8662
      %v8674 = vpack.c.bf16 %v8664, %v8664
      %v8675 = vpack.c.bf16 %v8666, %v8665
      %v8676 = vpack.c.bf16 %v8667, %v8667
      %v8677 = vpack.c.bf16 %v8669, %v8668
      %v8678 = vpack.c.bf16 %v8670, %v8670
      %8679 = vrot.lane.b32.xlu0 %v6635, 32
      %v8680 = vpop.permute.xlu0 %8679
      %8681 = vrot.lane.b32.xlu0 %v6636, 32
      %v8682 = vpop.permute.xlu0 %8681
      %v8685 = vsel %vm1993, %v8671, 0
      %v8688 = vsel %vm1993, %v8672, 0
      %v8691 = vsel %vm2143, %v8682, 0
      %8693 = vmatprep.subr.bf16.mxu0 0
      %8694 = vmatpush1.bf16.msra.mxu0 %v8680
      %8695 = vmatprep.subr.bf16.mxu0 0
      %8696 = vmatpush1.bf16.msra.mxu0 %v8691
      %8697 = vmatprep.subr.bf16.mxu0 0
      %8698 = vmatpush1.bf16.msra.mxu0 0
      %8699 = vmatprep.subr.bf16.mxu0 0
      %8700 = vmatpush1.bf16.msra.mxu0 0
      %8701 = vmatprep.subr.bf16.mxu0 0
      %8702 = vmatpush1.bf16.msra.mxu0 0
      %8703 = vmatprep.subr.bf16.mxu0 0
      %8704 = vmatpush1.bf16.msra.mxu0 0
      %8705 = vmatprep.subr.bf16.mxu0 0
      %8706 = vmatpush1.bf16.msra.mxu0 0
      %8707 = vmatprep.subr.bf16.mxu0 0
      %8708 = vmatpush1.bf16.msra.mxu0 0
      %8709 = vmatprep.subr.bf16.mxu0 0
      %8710 = vmatpush1.bf16.msra.mxu0 0
      %8711 = vmatprep.subr.bf16.mxu0 0
      %8712 = vmatpush1.bf16.msra.mxu0 0
      %8713 = vmatprep.subr.bf16.mxu0 0
      %8714 = vmatpush1.bf16.msra.mxu0 0
      %8715 = vmatprep.subr.bf16.mxu0 0
      %8716 = vmatpush1.bf16.msra.mxu0 0
      %8717 = vmatprep.subr.bf16.mxu0 0
      %8718 = vmatpush1.bf16.msra.mxu0 0
      %8719 = vmatprep.subr.bf16.mxu0 0
      %8720 = vmatpush1.bf16.msra.mxu0 0
      %8721 = vmatprep.subr.bf16.mxu0 0
      %8722 = vmatpush1.bf16.msra.mxu0 0
      %8723 = vmatprep.subr.bf16.mxu0 0
      %8724 = vmatpush1.bf16.msra.mxu0 0
      %8725 = vmatprep.mubr.bf16.mxu0 0
      %8726 = vmatmul.mubr.bf16.gmra.mrb[0].mxu0 %v8685
      %v8727 = vpop.f32.mrb[0].mxu0
      %v8728 = vadd.f32 0.0, %v8727
      %v8729 = vpop.f32.mrb[0].mxu0
      %v8730 = vpop.f32.mrb[0].mxu0
      %v8731 = vadd.f32 0.0, %v8730
      %v8732 = vpop.f32.mrb[0].mxu0
      %8733 = vmatprep.mubr.bf16.mxu0 0
      %8734 = vmatmul.mubr.bf16.gmra.mrb[0].mxu0 %v8688
      %v8735 = vpop.f32.mrb[0].mxu0
      %v8736 = vadd.f32 0.0, %v8735
      %v8737 = vpop.f32.mrb[0].mxu0
      %v8738 = vpop.f32.mrb[0].mxu0
      %v8739 = vpop.f32.mrb[0].mxu0
      %8740 = vdwg.mxu0
      %8741 = vrot.lane.b32.xlu0 %v6695, 32
      %v8742 = vpop.permute.xlu0 %8741
      %8743 = vrot.lane.b32.xlu0 %v6696, 32
      %v8744 = vpop.permute.xlu0 %8743
      %v8747 = vsel %vm1993, %v8673, 0
      %v8750 = vsel %vm1993, %v8674, 0
      %v8753 = vsel %vm2143, %v8744, 0
      %8755 = vmatprep.subr.bf16.mxu0 0
      %8756 = vmatpush1.bf16.msra.mxu0 %v8742
      %8757 = vmatprep.subr.bf16.mxu0 0
      %8758 = vmatpush1.bf16.msra.mxu0 %v8753
      %8759 = vmatprep.subr.bf16.mxu0 0
      %8760 = vmatpush1.bf16.msra.mxu0 0
      %8761 = vmatprep.subr.bf16.mxu0 0
      %8762 = vmatpush1.bf16.msra.mxu0 0
      %8763 = vmatprep.subr.bf16.mxu0 0
      %8764 = vmatpush1.bf16.msra.mxu0 0
      %8765 = vmatprep.subr.bf16.mxu0 0
      %8766 = vmatpush1.bf16.msra.mxu0 0
      %8767 = vmatprep.subr.bf16.mxu0 0
      %8768 = vmatpush1.bf16.msra.mxu0 0
      %8769 = vmatprep.subr.bf16.mxu0 0
      %8770 = vmatpush1.bf16.msra.mxu0 0
      %8771 = vmatprep.subr.bf16.mxu0 0
      %8772 = vmatpush1.bf16.msra.mxu0 0
      %8773 = vmatprep.subr.bf16.mxu0 0
      %8774 = vmatpush1.bf16.msra.mxu0 0
      %8775 = vmatprep.subr.bf16.mxu0 0
      %8776 = vmatpush1.bf16.msra.mxu0 0
      %8777 = vmatprep.subr.bf16.mxu0 0
      %8778 = vmatpush1.bf16.msra.mxu0 0
      %8779 = vmatprep.subr.bf16.mxu0 0
      %8780 = vmatpush1.bf16.msra.mxu0 0
      %8781 = vmatprep.subr.bf16.mxu0 0
      %8782 = vmatpush1.bf16.msra.mxu0 0
      %8783 = vmatprep.subr.bf16.mxu0 0
      %8784 = vmatpush1.bf16.msra.mxu0 0
      %8785 = vmatprep.subr.bf16.mxu0 0
      %8786 = vmatpush1.bf16.msra.mxu0 0
      %8787 = vmatprep.mubr.bf16.mxu0 0
      %8788 = vmatmul.mubr.bf16.gmra.mrb[0].mxu0 %v8747
      %v8789 = vpop.f32.mrb[0].mxu0
      %v8790 = vadd.f32 0.0, %v8789
      %v8791 = vpop.f32.mrb[0].mxu0
      %v8792 = vpop.f32.mrb[0].mxu0
      %v8793 = vadd.f32 0.0, %v8792
      %v8794 = vpop.f32.mrb[0].mxu0
      %8795 = vmatprep.mubr.bf16.mxu0 0
      %8796 = vmatmul.mubr.bf16.gmra.mrb[0].mxu0 %v8750
      %v8797 = vpop.f32.mrb[0].mxu0
      %v8798 = vadd.f32 0.0, %v8797
      %v8799 = vpop.f32.mrb[0].mxu0
      %v8800 = vpop.f32.mrb[0].mxu0
      %v8801 = vpop.f32.mrb[0].mxu0
      %8802 = vdwg.mxu0
      %8803 = vrot.lane.b32.xlu0 %v6755, 32
      %v8804 = vpop.permute.xlu0 %8803
      %8805 = vrot.lane.b32.xlu0 %v6756, 32
      %v8806 = vpop.permute.xlu0 %8805
      %v8809 = vsel %vm1993, %v8675, 0
      %v8812 = vsel %vm1993, %v8676, 0
      %v8815 = vsel %vm2143, %v8806, 0
      %8817 = vmatprep.subr.bf16.mxu0 0
      %8818 = vmatpush1.bf16.msra.mxu0 %v8804
      %8819 = vmatprep.subr.bf16.mxu0 0
      %8820 = vmatpush1.bf16.msra.mxu0 %v8815
      %8821 = vmatprep.subr.bf16.mxu0 0
      %8822 = vmatpush1.bf16.msra.mxu0 0
      %8823 = vmatprep.subr.bf16.mxu0 0
      %8824 = vmatpush1.bf16.msra.mxu0 0
      %8825 = vmatprep.subr.bf16.mxu0 0
      %8826 = vmatpush1.bf16.msra.mxu0 0
      %8827 = vmatprep.subr.bf16.mxu0 0
      %8828 = vmatpush1.bf16.msra.mxu0 0
      %8829 = vmatprep.subr.bf16.mxu0 0
      %8830 = vmatpush1.bf16.msra.mxu0 0
      %8831 = vmatprep.subr.bf16.mxu0 0
      %8832 = vmatpush1.bf16.msra.mxu0 0
      %8833 = vmatprep.subr.bf16.mxu0 0
      %8834 = vmatpush1.bf16.msra.mxu0 0
      %8835 = vmatprep.subr.bf16.mxu0 0
      %8836 = vmatpush1.bf16.msra.mxu0 0
      %8837 = vmatprep.subr.bf16.mxu0 0
      %8838 = vmatpush1.bf16.msra.mxu0 0
      %8839 = vmatprep.subr.bf16.mxu0 0
      %8840 = vmatpush1.bf16.msra.mxu0 0
      %8841 = vmatprep.subr.bf16.mxu0 0
      %8842 = vmatpush1.bf16.msra.mxu0 0
      %8843 = vmatprep.subr.bf16.mxu0 0
      %8844 = vmatpush1.bf16.msra.mxu0 0
      %8845 = vmatprep.subr.bf16.mxu0 0
      %8846 = vmatpush1.bf16.msra.mxu0 0
      %8847 = vmatprep.subr.bf16.mxu0 0
      %8848 = vmatpush1.bf16.msra.mxu0 0
      %8849 = vmatprep.mubr.bf16.mxu0 0
      %8850 = vmatmul.mubr.bf16.gmra.mrb[0].mxu0 %v8809
      %v8851 = vpop.f32.mrb[0].mxu0
      %v8852 = vadd.f32 0.0, %v8851
      %v8853 = vpop.f32.mrb[0].mxu0
      %v8854 = vpop.f32.mrb[0].mxu0
      %v8855 = vadd.f32 0.0, %v8854
      %v8856 = vpop.f32.mrb[0].mxu0
      %8857 = vmatprep.mubr.bf16.mxu0 0
      %8858 = vmatmul.mubr.bf16.gmra.mrb[0].mxu0 %v8812
      %v8859 = vpop.f32.mrb[0].mxu0
      %v8860 = vadd.f32 0.0, %v8859
      %v8861 = vpop.f32.mrb[0].mxu0
      %v8862 = vpop.f32.mrb[0].mxu0
      %v8863 = vpop.f32.mrb[0].mxu0
      %8864 = vdwg.mxu0
      %8865 = vrot.lane.b32.xlu0 %v6815, 32
      %v8866 = vpop.permute.xlu0 %8865
      %8867 = vrot.lane.b32.xlu0 %v6816, 32
      %v8868 = vpop.permute.xlu0 %8867
      %v8871 = vsel %vm1993, %v8677, 0
      %v8874 = vsel %vm1993, %v8678, 0
      %v8877 = vsel %vm2143, %v8868, 0
      %8879 = vmatprep.subr.bf16.mxu0 0
      %8880 = vmatpush1.bf16.msra.mxu0 %v8866
      %8881 = vmatprep.subr.bf16.mxu0 0
      %8882 = vmatpush1.bf16.msra.mxu0 %v8877
      %8883 = vmatprep.subr.bf16.mxu0 0
      %8884 = vmatpush1.bf16.msra.mxu0 0
      %8885 = vmatprep.subr.bf16.mxu0 0
      %8886 = vmatpush1.bf16.msra.mxu0 0
      %8887 = vmatprep.subr.bf16.mxu0 0
      %8888 = vmatpush1.bf16.msra.mxu0 0
      %8889 = vmatprep.subr.bf16.mxu0 0
      %8890 = vmatpush1.bf16.msra.mxu0 0
      %8891 = vmatprep.subr.bf16.mxu0 0
      %8892 = vmatpush1.bf16.msra.mxu0 0
      %8893 = vmatprep.subr.bf16.mxu0 0
      %8894 = vmatpush1.bf16.msra.mxu0 0
      %8895 = vmatprep.subr.bf16.mxu0 0
      %8896 = vmatpush1.bf16.msra.mxu0 0
      %8897 = vmatprep.subr.bf16.mxu0 0
      %8898 = vmatpush1.bf16.msra.mxu0 0
      %8899 = vmatprep.subr.bf16.mxu0 0
      %8900 = vmatpush1.bf16.msra.mxu0 0
      %8901 = vmatprep.subr.bf16.mxu0 0
      %8902 = vmatpush1.bf16.msra.mxu0 0
      %8903 = vmatprep.subr.bf16.mxu0 0
      %8904 = vmatpush1.bf16.msra.mxu0 0
      %8905 = vmatprep.subr.bf16.mxu0 0
      %8906 = vmatpush1.bf16.msra.mxu0 0
      %8907 = vmatprep.subr.bf16.mxu0 0
      %8908 = vmatpush1.bf16.msra.mxu0 0
      %8909 = vmatprep.subr.bf16.mxu0 0
      %8910 = vmatpush1.bf16.msra.mxu0 0
      %8911 = vmatprep.mubr.bf16.mxu0 0
      %8912 = vmatmul.mubr.bf16.gmra.mrb[0].mxu0 %v8871
      %v8913 = vpop.f32.mrb[0].mxu0
      %v8914 = vadd.f32 0.0, %v8913
      %v8915 = vpop.f32.mrb[0].mxu0
      %v8916 = vpop.f32.mrb[0].mxu0
      %v8917 = vadd.f32 0.0, %v8916
      %v8918 = vpop.f32.mrb[0].mxu0
      %8919 = vmatprep.mubr.bf16.mxu0 0
      %8920 = vmatmul.mubr.bf16.gmra.mrb[0].mxu0 %v8874
      %v8921 = vpop.f32.mrb[0].mxu0
      %v8922 = vadd.f32 0.0, %v8921
      %v8923 = vpop.f32.mrb[0].mxu0
      %v8924 = vpop.f32.mrb[0].mxu0
      %v8925 = vpop.f32.mrb[0].mxu0
      %8926 = vdwg.mxu0
      %8939 = vrot.lane.b32.xlu0 %v7360, 32
      %v8940 = vpop.permute.xlu0 %8939
      %8941 = vrot.lane.b32.xlu0 %v7363, 32
      %v8942 = vpop.permute.xlu0 %8941
      %8943 = vrot.lane.b32.xlu0 %v7368, 32
      %v8944 = vpop.permute.xlu0 %8943
      %8945 = vrot.lane.b32.xlu0 %v7422, 32
      %v8946 = vpop.permute.xlu0 %8945
      %8947 = vrot.lane.b32.xlu0 %v7425, 32
      %v8948 = vpop.permute.xlu0 %8947
      %8949 = vrot.lane.b32.xlu0 %v7430, 32
      %v8950 = vpop.permute.xlu0 %8949
      %8951 = vrot.lane.b32.xlu0 %v7484, 32
      %v8952 = vpop.permute.xlu0 %8951
      %8953 = vrot.lane.b32.xlu0 %v7487, 32
      %v8954 = vpop.permute.xlu0 %8953
      %8955 = vrot.lane.b32.xlu0 %v7492, 32
      %v8956 = vpop.permute.xlu0 %8955
      %8957 = vrot.lane.b32.xlu0 %v7546, 32
      %v8958 = vpop.permute.xlu0 %8957
      %8959 = vrot.lane.b32.xlu0 %v7549, 32
      %v8960 = vpop.permute.xlu0 %8959
      %8961 = vrot.lane.b32.xlu0 %v7554, 32
      %v8962 = vpop.permute.xlu0 %8961
      %8987 = vrot.lane.b32.xlu0 %v8044, 64
      %v8988 = vpop.permute.xlu0 %8987
      %8989 = vrot.lane.b32.xlu0 %v8047, 64
      %v8990 = vpop.permute.xlu0 %8989
      %8991 = vrot.lane.b32.xlu0 %v8052, 64
      %v8992 = vpop.permute.xlu0 %8991
      %8993 = vrot.lane.b32.xlu0 %v8106, 64
      %v8994 = vpop.permute.xlu0 %8993
      %8995 = vrot.lane.b32.xlu0 %v8109, 64
      %v8996 = vpop.permute.xlu0 %8995
      %8997 = vrot.lane.b32.xlu0 %v8114, 64
      %v8998 = vpop.permute.xlu0 %8997
      %8999 = vrot.lane.b32.xlu0 %v8168, 64
      %v9000 = vpop.permute.xlu0 %8999
      %9001 = vrot.lane.b32.xlu0 %v8171, 64
      %v9002 = vpop.permute.xlu0 %9001
      %9003 = vrot.lane.b32.xlu0 %v8176, 64
      %v9004 = vpop.permute.xlu0 %9003
      %9005 = vrot.lane.b32.xlu0 %v8230, 64
      %v9006 = vpop.permute.xlu0 %9005
      %9007 = vrot.lane.b32.xlu0 %v8233, 64
      %v9008 = vpop.permute.xlu0 %9007
      %9009 = vrot.lane.b32.xlu0 %v8238, 64
      %v9010 = vpop.permute.xlu0 %9009
      %9035 = vrot.lane.b32.xlu0 %v8728, 96
      %v9036 = vpop.permute.xlu0 %9035
      %9037 = vrot.lane.b32.xlu0 %v8731, 96
      %v9038 = vpop.permute.xlu0 %9037
      %9039 = vrot.lane.b32.xlu0 %v8736, 96
      %v9040 = vpop.permute.xlu0 %9039
      %9041 = vrot.lane.b32.xlu0 %v8790, 96
      %v9042 = vpop.permute.xlu0 %9041
      %9043 = vrot.lane.b32.xlu0 %v8793, 96
      %v9044 = vpop.permute.xlu0 %9043
      %9045 = vrot.lane.b32.xlu0 %v8798, 96
      %v9046 = vpop.permute.xlu0 %9045
      %9047 = vrot.lane.b32.xlu0 %v8852, 96
      %v9048 = vpop.permute.xlu0 %9047
      %9049 = vrot.lane.b32.xlu0 %v8855, 96
      %v9050 = vpop.permute.xlu0 %9049
      %9051 = vrot.lane.b32.xlu0 %v8860, 96
      %v9052 = vpop.permute.xlu0 %9051
      %9053 = vrot.lane.b32.xlu0 %v8914, 96
      %v9054 = vpop.permute.xlu0 %9053
      %9055 = vrot.lane.b32.xlu0 %v8917, 96
      %v9056 = vpop.permute.xlu0 %9055
      %9057 = vrot.lane.b32.xlu0 %v8922, 96
      %v9058 = vpop.permute.xlu0 %9057
      %v9071 = vsel %vm1716, %v6682, %v8940
      %v9072 = vsel %vm1716, %v6685, %v8942
      %v9073 = vsel %vm1716, %v6690, %v8944
      %v9074 = vsel %vm1716, %v6742, %v8946
      %v9075 = vsel %vm1716, %v6745, %v8948
      %v9076 = vsel %vm1716, %v6750, %v8950
      %v9077 = vsel %vm1716, %v6802, %v8952
      %v9078 = vsel %vm1716, %v6805, %v8954
      %v9079 = vsel %vm1716, %v6810, %v8956
      %v9080 = vsel %vm1716, %v6862, %v8958
      %v9081 = vsel %vm1716, %v6865, %v8960
      %v9082 = vsel %vm1716, %v6870, %v8962
      %v9083 = vsel %vm4583, %v9071, %v8988
      %v9084 = vsel %vm4583, %v9072, %v8990
      %v9085 = vsel %vm4583, %v9073, %v8992
      %v9086 = vsel %vm4583, %v9074, %v8994
      %v9087 = vsel %vm4583, %v9075, %v8996
      %v9088 = vsel %vm4583, %v9076, %v8998
      %v9089 = vsel %vm4583, %v9077, %v9000
      %v9090 = vsel %vm4583, %v9078, %v9002
      %v9091 = vsel %vm4583, %v9079, %v9004
      %v9092 = vsel %vm4583, %v9080, %v9006
      %v9093 = vsel %vm4583, %v9081, %v9008
      %v9094 = vsel %vm4583, %v9082, %v9010
      %v9095 = vsel %vm4596, %v9083, %v9036
      %v9096 = vsel %vm4596, %v9084, %v9038
      %v9097 = vsel %vm4596, %v9085, %v9040
      %v9098 = vsel %vm4596, %v9086, %v9042
      %v9099 = vsel %vm4596, %v9087, %v9044
      %v9100 = vsel %vm4596, %v9088, %v9046
      %v9101 = vsel %vm4596, %v9089, %v9048
      %v9102 = vsel %vm4596, %v9090, %v9050
      %v9103 = vsel %vm4596, %v9091, %v9052
      %v9104 = vsel %vm4596, %v9092, %v9054
      %v9105 = vsel %vm4596, %v9093, %v9056
      %v9106 = vsel %vm4596, %v9094, %v9058
      %s9107 = scalar_lea.vmem %s850, 64
      %v9108 = vld [vmem:[%s9107] sm:$0xf]
      %v9109 = vld [vmem:[%s9107 + $0x4] sm:$0xf]
      %v9110 = vld [vmem:[%s9107 + $0x8] sm:$0xf]
      %v9111 = vld [vmem:[%s9107 + $0xc] sm:$0xf]
      %v9112 = vld [vmem:[%s9107 + $0x10] sm:$0xf]
      %v9113 = vld [vmem:[%s9107 + $0x14] sm:$0xf]
      %v9114 = vld [vmem:[%s9107 + $0x18] sm:$0xf]
      %v9115 = vld [vmem:[%s9107 + $0x1c] sm:$0xf]
      %v9116 = vld [vmem:[%s9107 + $0x20] sm:$0xf]
      %v9117 = vld [vmem:[%s9107 + $0x24] sm:$0xf]
      %v9118 = vld [vmem:[%s9107 + $0x28] sm:$0xf]
      %v9119 = vld [vmem:[%s9107 + $0x2c] sm:$0xf]
      %v9120 = vld [vmem:[%s9107 + $0x30] sm:$0xf]
      %v9121 = vld [vmem:[%s9107 + $0x34] sm:$0xf]
      %v9122 = vld [vmem:[%s9107 + $0x38] sm:$0xf]
      %v9123 = vld [vmem:[%s9107 + $0x3c] sm:$0xf]
      %s9124 = scalar_lea.vmem %s854, 1
      %v9125 = vld [vmem:[%s9124] sm:$0x1]
      %v9126 = vpack.c.bf16 %v9096, %v9095
      %v9127 = vpack.c.bf16 %v9098, %v9097
      %v9128 = vpack.c.bf16 %v9100, %v9099
      %v9129 = vpack.c.bf16 %v9102, %v9101
      %v9130 = vpack.c.bf16 %v9104, %v9103
      %v9131 = vpack.c.bf16 %v9106, %v9105
      %v9133 = vlaneseq
      %v9134 = vshrl.u32 %v9133, 7
      %v9135 = vsub.s32 0, %v9134
      %v9136 = vrot.slane %v9125, %v9135
      %v9154 = vunpack.c.l.b16 %v9108
      %v9155 = vunpack.c.l.b16 %v9109
      %v9156 = vunpack.c.l.b16 %v9110
      %v9157 = vunpack.c.l.b16 %v9111
      %v9158 = vunpack.c.l.b16 %v9112
      %v9159 = vunpack.c.l.b16 %v9113
      %v9160 = vunpack.c.l.b16 %v9114
      %v9161 = vunpack.c.l.b16 %v9115
      %v9162 = vunpack.c.l.b16 %v9116
      %v9163 = vunpack.c.l.b16 %v9117
      %v9164 = vunpack.c.l.b16 %v9118
      %v9165 = vunpack.c.l.b16 %v9119
      %v9166 = vunpack.c.l.b16 %v9120
      %v9167 = vunpack.c.l.b16 %v9121
      %v9168 = vunpack.c.l.b16 %v9122
      %v9169 = vunpack.c.l.b16 %v9123
      %v9170 = vpack.c.b16 %v9155, %v9154
      %v9171 = vpack.c.b16 %v9157, %v9156
      %v9172 = vpack.c.b16 %v9159, %v9158
      %v9173 = vpack.c.b16 %v9161, %v9160
      %v9174 = vpack.c.b16 %v9163, %v9162
      %v9175 = vpack.c.b16 %v9165, %v9164
      %v9176 = vpack.c.b16 %v9167, %v9166
      %v9177 = vpack.c.b16 %v9169, %v9168
      %9186 = vmatprep.subr.bf16.mxu0 0
      %9187 = vmatpush1.bf16.msra.mxu0 %v9170
      %9188 = vmatprep.subr.bf16.mxu0 0
      %9189 = vmatpush1.bf16.msra.mxu0 %v9171
      %9190 = vmatprep.subr.bf16.mxu0 0
      %9191 = vmatpush1.bf16.msra.mxu0 %v9172
      %9192 = vmatprep.subr.bf16.mxu0 0
      %9193 = vmatpush1.bf16.msra.mxu0 %v9173
      %9194 = vmatprep.subr.bf16.mxu0 0
      %9195 = vmatpush1.bf16.msra.mxu0 %v9174
      %9196 = vmatprep.subr.bf16.mxu0 0
      %9197 = vmatpush1.bf16.msra.mxu0 %v9175
      %9198 = vmatprep.subr.bf16.mxu0 0
      %9199 = vmatpush1.bf16.msra.mxu0 %v9176
      %9200 = vmatprep.subr.bf16.mxu0 0
      %9201 = vmatpush1.bf16.msra.mxu0 %v9177
      %9202 = vmatprep.subr.bf16.mxu0 0
      %9203 = vmatpush1.bf16.msra.mxu0 0
      %9204 = vmatprep.subr.bf16.mxu0 0
      %9205 = vmatpush1.bf16.msra.mxu0 0
      %9206 = vmatprep.subr.bf16.mxu0 0
      %9207 = vmatpush1.bf16.msra.mxu0 0
      %9208 = vmatprep.subr.bf16.mxu0 0
      %9209 = vmatpush1.bf16.msra.mxu0 0
      %9210 = vmatprep.subr.bf16.mxu0 0
      %9211 = vmatpush1.bf16.msra.mxu0 0
      %9212 = vmatprep.subr.bf16.mxu0 0
      %9213 = vmatpush1.bf16.msra.mxu0 0
      %9214 = vmatprep.subr.bf16.mxu0 0
      %9215 = vmatpush1.bf16.msra.mxu0 0
      %9216 = vmatprep.subr.bf16.mxu0 0
      %9217 = vmatpush1.bf16.msra.mxu0 0
      %9218 = vmatprep.mubr.bf16.mxu0 0
      %9219 = vmatmul.mubr.bf16.gmra.mrb[0].mxu0 %v9126
      %v9220 = vpop.f32.mrb[0].mxu0
      %v9221 = vadd.f32 %v9136, %v9220
      %v9222 = vpop.f32.mrb[0].mxu0
      %v9223 = vpop.f32.mrb[0].mxu0
      %v9224 = vadd.f32 %v9136, %v9223
      %v9225 = vpop.f32.mrb[0].mxu0
      %9226 = vmatprep.mubr.bf16.mxu0 0
      %9227 = vmatmul.mubr.bf16.gmra.mrb[0].mxu0 %v9127
      %v9228 = vpop.f32.mrb[0].mxu0
      %v9229 = vadd.f32 %v9136, %v9228
      %v9230 = vpop.f32.mrb[0].mxu0
      %v9231 = vpop.f32.mrb[0].mxu0
      %v9232 = vadd.f32 %v9136, %v9231
      %v9233 = vpop.f32.mrb[0].mxu0
      %9234 = vmatprep.mubr.bf16.mxu0 0
      %9235 = vmatmul.mubr.bf16.gmra.mrb[0].mxu0 %v9128
      %v9236 = vpop.f32.mrb[0].mxu0
      %v9237 = vadd.f32 %v9136, %v9236
      %v9238 = vpop.f32.mrb[0].mxu0
      %v9239 = vpop.f32.mrb[0].mxu0
      %v9240 = vadd.f32 %v9136, %v9239
      %v9241 = vpop.f32.mrb[0].mxu0
      %9242 = vmatprep.mubr.bf16.mxu0 0
      %9243 = vmatmul.mubr.bf16.gmra.mrb[0].mxu0 %v9129
      %v9244 = vpop.f32.mrb[0].mxu0
      %v9245 = vadd.f32 %v9136, %v9244
      %v9246 = vpop.f32.mrb[0].mxu0
      %v9247 = vpop.f32.mrb[0].mxu0
      %v9248 = vadd.f32 %v9136, %v9247
      %v9249 = vpop.f32.mrb[0].mxu0
      %9250 = vmatprep.mubr.bf16.mxu0 0
      %9251 = vmatmul.mubr.bf16.gmra.mrb[0].mxu0 %v9130
      %v9252 = vpop.f32.mrb[0].mxu0
      %v9253 = vadd.f32 %v9136, %v9252
      %v9254 = vpop.f32.mrb[0].mxu0
      %v9255 = vpop.f32.mrb[0].mxu0
      %v9256 = vadd.f32 %v9136, %v9255
      %v9257 = vpop.f32.mrb[0].mxu0
      %9258 = vmatprep.mubr.bf16.mxu0 0
      %9259 = vmatmul.mubr.bf16.gmra.mrb[0].mxu0 %v9131
      %v9260 = vpop.f32.mrb[0].mxu0
      %v9261 = vadd.f32 %v9136, %v9260
      %v9262 = vpop.f32.mrb[0].mxu0
      %v9263 = vpop.f32.mrb[0].mxu0
      %v9264 = vadd.f32 %v9136, %v9263
      %v9265 = vpop.f32.mrb[0].mxu0
      %9266 = vdwg.mxu0
      %v9267 = vadd.f32 %v5600, %v9221
      %v9268 = vadd.f32 %v5601, %v9224
      %v9269 = vadd.f32 %v5602, %v9229
      %v9270 = vadd.f32 %v5603, %v9232
      %v9271 = vadd.f32 %v5604, %v9237
      %v9272 = vadd.f32 %v5605, %v9240
      %v9273 = vadd.f32 %v5606, %v9245
      %v9274 = vadd.f32 %v5607, %v9248
      %v9275 = vadd.f32 %v5608, %v9253
      %v9276 = vadd.f32 %v5609, %v9256
      %v9277 = vadd.f32 %v5610, %v9261
      %v9278 = vadd.f32 %v5611, %v9264
      %s9279 = scalar_lea.vmem %s858, 1
      %v9280 = vld [vmem:[%s9279] sm:$0x1]
      %s9281 = scalar_lea.vmem %s862, 1
      %v9282 = vld [vmem:[%s9281] sm:$0x1]
      %9283 = vadd.xlane.f32.xlu0 %v9267
      %v9284 = vpop.xlane.xlu0 %9283
      %9285 = vadd.xlane.f32.xlu0 %v9268
      %v9286 = vpop.xlane.xlu0 %9285
      %9287 = vadd.xlane.f32.xlu0 %v9269
      %v9288 = vpop.xlane.xlu0 %9287
      %9289 = vadd.xlane.f32.xlu0 %v9270
      %v9290 = vpop.xlane.xlu0 %9289
      %9291 = vadd.xlane.f32.xlu0 %v9271
      %v9292 = vpop.xlane.xlu0 %9291
      %9293 = vadd.xlane.f32.xlu0 %v9272
      %v9294 = vpop.xlane.xlu0 %9293
      %9295 = vadd.xlane.f32.xlu0 %v9273
      %v9296 = vpop.xlane.xlu0 %9295
      %9297 = vadd.xlane.f32.xlu0 %v9274
      %v9298 = vpop.xlane.xlu0 %9297
      %9299 = vadd.xlane.f32.xlu0 %v9275
      %v9300 = vpop.xlane.xlu0 %9299
      %9301 = vadd.xlane.f32.xlu0 %v9276
      %v9302 = vpop.xlane.xlu0 %9301
      %9303 = vadd.xlane.f32.xlu0 %v9277
      %v9304 = vpop.xlane.xlu0 %9303
      %9305 = vadd.xlane.f32.xlu0 %v9278
      %v9306 = vpop.xlane.xlu0 %9305
      %v9307 = vmul.f32 %v9284, %v1138
      %v9308 = vmul.f32 %v9286, %v1138
      %v9309 = vmul.f32 %v9288, %v1138
      %v9310 = vmul.f32 %v9290, %v1138
      %v9311 = vmul.f32 %v9292, %v1138
      %v9312 = vmul.f32 %v9294, %v1138
      %v9313 = vmul.f32 %v9296, %v1138
      %v9314 = vmul.f32 %v9298, %v1138
      %v9315 = vmul.f32 %v9300, %v1138
      %v9316 = vmul.f32 %v9302, %v1138
      %v9317 = vmul.f32 %v9304, %v1138
      %v9318 = vmul.f32 %v9306, %v1138
      %v9319 = vsub.f32 %v9267, %v9307
      %v9320 = vsub.f32 %v9268, %v9308
      %v9321 = vsub.f32 %v9269, %v9309
      %v9322 = vsub.f32 %v9270, %v9310
      %v9323 = vsub.f32 %v9271, %v9311
      %v9324 = vsub.f32 %v9272, %v9312
      %v9325 = vsub.f32 %v9273, %v9313
      %v9326 = vsub.f32 %v9274, %v9314
      %v9327 = vsub.f32 %v9275, %v9315
      %v9328 = vsub.f32 %v9276, %v9316
      %v9329 = vsub.f32 %v9277, %v9317
      %v9330 = vsub.f32 %v9278, %v9318
      %v9331 = vmul.f32 %v9319, %v9319
      %v9332 = vmul.f32 %v9320, %v9320
      %v9333 = vmul.f32 %v9321, %v9321
      %v9334 = vmul.f32 %v9322, %v9322
      %v9335 = vmul.f32 %v9323, %v9323
      %v9336 = vmul.f32 %v9324, %v9324
      %v9337 = vmul.f32 %v9325, %v9325
      %v9338 = vmul.f32 %v9326, %v9326
      %v9339 = vmul.f32 %v9327, %v9327
      %v9340 = vmul.f32 %v9328, %v9328
      %v9341 = vmul.f32 %v9329, %v9329
      %v9342 = vmul.f32 %v9330, %v9330
      %9343 = vadd.xlane.f32.xlu0 %v9331
      %v9344 = vpop.xlane.xlu0 %9343
      %9345 = vadd.xlane.f32.xlu0 %v9332
      %v9346 = vpop.xlane.xlu0 %9345
      %9347 = vadd.xlane.f32.xlu0 %v9333
      %v9348 = vpop.xlane.xlu0 %9347
      %9349 = vadd.xlane.f32.xlu0 %v9334
      %v9350 = vpop.xlane.xlu0 %9349
      %9351 = vadd.xlane.f32.xlu0 %v9335
      %v9352 = vpop.xlane.xlu0 %9351
      %9353 = vadd.xlane.f32.xlu0 %v9336
      %v9354 = vpop.xlane.xlu0 %9353
      %9355 = vadd.xlane.f32.xlu0 %v9337
      %v9356 = vpop.xlane.xlu0 %9355
      %9357 = vadd.xlane.f32.xlu0 %v9338
      %v9358 = vpop.xlane.xlu0 %9357
      %9359 = vadd.xlane.f32.xlu0 %v9339
      %v9360 = vpop.xlane.xlu0 %9359
      %9361 = vadd.xlane.f32.xlu0 %v9340
      %v9362 = vpop.xlane.xlu0 %9361
      %9363 = vadd.xlane.f32.xlu0 %v9341
      %v9364 = vpop.xlane.xlu0 %9363
      %9365 = vadd.xlane.f32.xlu0 %v9342
      %v9366 = vpop.xlane.xlu0 %9365
      %v9367 = vmul.f32 %v9344, %v1138
      %v9368 = vmul.f32 %v9346, %v1138
      %v9369 = vmul.f32 %v9348, %v1138
      %v9370 = vmul.f32 %v9350, %v1138
      %v9371 = vmul.f32 %v9352, %v1138
      %v9372 = vmul.f32 %v9354, %v1138
      %v9373 = vmul.f32 %v9356, %v1138
      %v9374 = vmul.f32 %v9358, %v1138
      %v9375 = vmul.f32 %v9360, %v1138
      %v9376 = vmul.f32 %v9362, %v1138
      %v9377 = vmul.f32 %v9364, %v1138
      %v9378 = vmul.f32 %v9366, %v1138
      %v9379 = vadd.f32 %v9367, 1e-06
      %v9380 = vadd.f32 %v9368, 1e-06
      %v9381 = vadd.f32 %v9369, 1e-06
      %v9382 = vadd.f32 %v9370, 1e-06
      %v9383 = vadd.f32 %v9371, 1e-06
      %v9384 = vadd.f32 %v9372, 1e-06
      %v9385 = vadd.f32 %v9373, 1e-06
      %v9386 = vadd.f32 %v9374, 1e-06
      %v9387 = vadd.f32 %v9375, 1e-06
      %v9388 = vadd.f32 %v9376, 1e-06
      %v9389 = vadd.f32 %v9377, 1e-06
      %v9390 = vadd.f32 %v9378, 1e-06
      %v9391 = vrsqrt.pop %v9379
      %v9392 = vrsqrt.pop %v9380
      %v9393 = vrsqrt.pop %v9381
      %v9394 = vrsqrt.pop %v9382
      %v9395 = vrsqrt.pop %v9383
      %v9396 = vrsqrt.pop %v9384
      %v9397 = vrsqrt.pop %v9385
      %v9398 = vrsqrt.pop %v9386
      %v9399 = vrsqrt.pop %v9387
      %v9400 = vrsqrt.pop %v9388
      %v9401 = vrsqrt.pop %v9389
      %v9402 = vrsqrt.pop %v9390
      %v9403 = vmul.f32 %v9319, %v9391
      %v9404 = vmul.f32 %v9320, %v9392
      %v9405 = vmul.f32 %v9321, %v9393
      %v9406 = vmul.f32 %v9322, %v9394
      %v9407 = vmul.f32 %v9323, %v9395
      %v9408 = vmul.f32 %v9324, %v9396
      %v9409 = vmul.f32 %v9325, %v9397
      %v9410 = vmul.f32 %v9326, %v9398
      %v9411 = vmul.f32 %v9327, %v9399
      %v9412 = vmul.f32 %v9328, %v9400
      %v9413 = vmul.f32 %v9329, %v9401
      %v9414 = vmul.f32 %v9330, %v9402
      %v9416 = vlaneseq
      %v9417 = vshrl.u32 %v9416, 7
      %v9418 = vsub.s32 0, %v9417
      %v9419 = vrot.slane %v9280, %v9418
      %v9421 = vmul.f32 %v9403, %v9419
      %v9422 = vmul.f32 %v9404, %v9419
      %v9423 = vmul.f32 %v9405, %v9419
      %v9424 = vmul.f32 %v9406, %v9419
      %v9425 = vmul.f32 %v9407, %v9419
      %v9426 = vmul.f32 %v9408, %v9419
      %v9427 = vmul.f32 %v9409, %v9419
      %v9428 = vmul.f32 %v9410, %v9419
      %v9429 = vmul.f32 %v9411, %v9419
      %v9430 = vmul.f32 %v9412, %v9419
      %v9431 = vmul.f32 %v9413, %v9419
      %v9432 = vmul.f32 %v9414, %v9419
      %v9434 = vlaneseq
      %v9435 = vshrl.u32 %v9434, 7
      %v9436 = vsub.s32 0, %v9435
      %v9437 = vrot.slane %v9282, %v9436
      %v9439 = vadd.f32 %v9421, %v9437
      %v9440 = vadd.f32 %v9422, %v9437
      %v9441 = vadd.f32 %v9423, %v9437
      %v9442 = vadd.f32 %v9424, %v9437
      %v9443 = vadd.f32 %v9425, %v9437
      %v9444 = vadd.f32 %v9426, %v9437
      %v9445 = vadd.f32 %v9427, %v9437
      %v9446 = vadd.f32 %v9428, %v9437
      %v9447 = vadd.f32 %v9429, %v9437
      %v9448 = vadd.f32 %v9430, %v9437
      %v9449 = vadd.f32 %v9431, %v9437
      %v9450 = vadd.f32 %v9432, %v9437
      %s9451 = scalar_lea.vmem %s867, 128
      %v9452 = vld [vmem:[%s9451] sm:$0xff]
      %v9453 = vld [vmem:[%s9451 + $0x8] sm:$0xff]
      %v9454 = vld [vmem:[%s9451 + $0x10] sm:$0xff]
      %v9455 = vld [vmem:[%s9451 + $0x18] sm:$0xff]
      %v9456 = vld [vmem:[%s9451 + $0x20] sm:$0xff]
      %v9457 = vld [vmem:[%s9451 + $0x28] sm:$0xff]
      %v9458 = vld [vmem:[%s9451 + $0x30] sm:$0xff]
      %v9459 = vld [vmem:[%s9451 + $0x38] sm:$0xff]
      %v9460 = vld [vmem:[%s9451 + $0x40] sm:$0xff]
      %v9461 = vld [vmem:[%s9451 + $0x48] sm:$0xff]
      %v9462 = vld [vmem:[%s9451 + $0x50] sm:$0xff]
      %v9463 = vld [vmem:[%s9451 + $0x58] sm:$0xff]
      %v9464 = vld [vmem:[%s9451 + $0x60] sm:$0xff]
      %v9465 = vld [vmem:[%s9451 + $0x68] sm:$0xff]
      %v9466 = vld [vmem:[%s9451 + $0x70] sm:$0xff]
      %v9467 = vld [vmem:[%s9451 + $0x78] sm:$0xff]
      %s9468 = scalar_lea.vmem %s871, 2
      %v9469 = vld [vmem:[%s9468] sm:$0x3]
      %v9470 = vpack.c.bf16 %v9440, %v9439
      %v9471 = vpack.c.bf16 %v9442, %v9441
      %v9472 = vpack.c.bf16 %v9444, %v9443
      %v9473 = vpack.c.bf16 %v9446, %v9445
      %v9474 = vpack.c.bf16 %v9448, %v9447
      %v9475 = vpack.c.bf16 %v9450, %v9449
      %v9477 = vlaneseq
      %v9478 = vshrl.u32 %v9477, 7
      %v9479 = vsub.s32 0, %v9478
      %v9480 = vrot.slane %v9469, %v9479
      %v9481 = vlaneseq
      %v9482 = vshrl.u32 %v9481, 7
      %v9483 = vsub.s32 1, %v9482
      %v9484 = vrot.slane %v9469, %v9483
      %v9503 = vunpack.c.l.b16 %v9452
      %v9504 = vunpack.c.h.b16 %v9452
      %v9505 = vunpack.c.l.b16 %v9453
      %v9506 = vunpack.c.h.b16 %v9453
      %v9507 = vunpack.c.l.b16 %v9454
      %v9508 = vunpack.c.h.b16 %v9454
      %v9509 = vunpack.c.l.b16 %v9455
      %v9510 = vunpack.c.h.b16 %v9455
      %v9511 = vunpack.c.l.b16 %v9456
      %v9512 = vunpack.c.h.b16 %v9456
      %v9513 = vunpack.c.l.b16 %v9457
      %v9514 = vunpack.c.h.b16 %v9457
      %v9515 = vunpack.c.l.b16 %v9458
      %v9516 = vunpack.c.h.b16 %v9458
      %v9517 = vunpack.c.l.b16 %v9459
      %v9518 = vunpack.c.h.b16 %v9459
      %v9519 = vunpack.c.l.b16 %v9460
      %v9520 = vunpack.c.h.b16 %v9460
      %v9521 = vunpack.c.l.b16 %v9461
      %v9522 = vunpack.c.h.b16 %v9461
      %v9523 = vunpack.c.l.b16 %v9462
      %v9524 = vunpack.c.h.b16 %v9462
      %v9525 = vunpack.c.l.b16 %v9463
      %v9526 = vunpack.c.h.b16 %v9463
      %v9527 = vunpack.c.l.b16 %v9464
      %v9528 = vunpack.c.h.b16 %v9464
      %v9529 = vunpack.c.l.b16 %v9465
      %v9530 = vunpack.c.h.b16 %v9465
      %v9531 = vunpack.c.l.b16 %v9466
      %v9532 = vunpack.c.h.b16 %v9466
      %v9533 = vunpack.c.l.b16 %v9467
      %v9534 = vunpack.c.h.b16 %v9467
      %v9535 = vpack.c.b16 %v9505, %v9503
      %v9536 = vpack.c.b16 %v9506, %v9504
      %v9537 = vpack.c.b16 %v9509, %v9507
      %v9538 = vpack.c.b16 %v9510, %v9508
      %v9539 = vpack.c.b16 %v9513, %v9511
      %v9540 = vpack.c.b16 %v9514, %v9512
      %v9541 = vpack.c.b16 %v9517, %v9515
      %v9542 = vpack.c.b16 %v9518, %v9516
      %v9543 = vpack.c.b16 %v9521, %v9519
      %v9544 = vpack.c.b16 %v9522, %v9520
      %v9545 = vpack.c.b16 %v9525, %v9523
      %v9546 = vpack.c.b16 %v9526, %v9524
      %v9547 = vpack.c.b16 %v9529, %v9527
      %v9548 = vpack.c.b16 %v9530, %v9528
      %v9549 = vpack.c.b16 %v9533, %v9531
      %v9550 = vpack.c.b16 %v9534, %v9532
      %9567 = vmatprep.subr.bf16.mxu0 %v9536
      %9568 = vmatpush1.bf16.msra.mxu0 %v9535
      %9569 = vmatprep.subr.bf16.mxu0 %v9538
      %9570 = vmatpush1.bf16.msra.mxu0 %v9537
      %9571 = vmatprep.subr.bf16.mxu0 %v9540
      %9572 = vmatpush1.bf16.msra.mxu0 %v9539
      %9573 = vmatprep.subr.bf16.mxu0 %v9542
      %9574 = vmatpush1.bf16.msra.mxu0 %v9541
      %9575 = vmatprep.subr.bf16.mxu0 %v9544
      %9576 = vmatpush1.bf16.msra.mxu0 %v9543
      %9577 = vmatprep.subr.bf16.mxu0 %v9546
      %9578 = vmatpush1.bf16.msra.mxu0 %v9545
      %9579 = vmatprep.subr.bf16.mxu0 %v9548
      %9580 = vmatpush1.bf16.msra.mxu0 %v9547
      %9581 = vmatprep.subr.bf16.mxu0 %v9550
      %9582 = vmatpush1.bf16.msra.mxu0 %v9549
      %9583 = vmatprep.subr.bf16.mxu0 0
      %9584 = vmatpush1.bf16.msra.mxu0 0
      %9585 = vmatprep.subr.bf16.mxu0 0
      %9586 = vmatpush1.bf16.msra.mxu0 0
      %9587 = vmatprep.subr.bf16.mxu0 0
      %9588 = vmatpush1.bf16.msra.mxu0 0
      %9589 = vmatprep.subr.bf16.mxu0 0
      %9590 = vmatpush1.bf16.msra.mxu0 0
      %9591 = vmatprep.subr.bf16.mxu0 0
      %9592 = vmatpush1.bf16.msra.mxu0 0
      %9593 = vmatprep.subr.bf16.mxu0 0
      %9594 = vmatpush1.bf16.msra.mxu0 0
      %9595 = vmatprep.subr.bf16.mxu0 0
      %9596 = vmatpush1.bf16.msra.mxu0 0
      %9597 = vmatprep.subr.bf16.mxu0 0
      %9598 = vmatpush1.bf16.msra.mxu0 0
      %9599 = vmatprep.mubr.bf16.mxu0 0
      %9600 = vmatmul.mubr.bf16.gmra.mrb[0].mxu0 %v9470
      %v9601 = vpop.f32.mrb[0].mxu0
      %v9602 = vadd.f32 %v9480, %v9601
      %v9603 = vpop.f32.mrb[0].mxu0
      %v9604 = vadd.f32 %v9484, %v9603
      %v9605 = vpop.f32.mrb[0].mxu0
      %v9606 = vadd.f32 %v9480, %v9605
      %v9607 = vpop.f32.mrb[0].mxu0
      %v9608 = vadd.f32 %v9484, %v9607
      %9609 = vmatprep.mubr.bf16.mxu0 0
      %9610 = vmatmul.mubr.bf16.gmra.mrb[0].mxu0 %v9471
      %v9611 = vpop.f32.mrb[0].mxu0
      %v9612 = vadd.f32 %v9480, %v9611
      %v9613 = vpop.f32.mrb[0].mxu0
      %v9614 = vadd.f32 %v9484, %v9613
      %v9615 = vpop.f32.mrb[0].mxu0
      %v9616 = vadd.f32 %v9480, %v9615
      %v9617 = vpop.f32.mrb[0].mxu0
      %v9618 = vadd.f32 %v9484, %v9617
      %9619 = vmatprep.mubr.bf16.mxu0 0
      %9620 = vmatmul.mubr.bf16.gmra.mrb[0].mxu0 %v9472
      %v9621 = vpop.f32.mrb[0].mxu0
      %v9622 = vadd.f32 %v9480, %v9621
      %v9623 = vpop.f32.mrb[0].mxu0
      %v9624 = vadd.f32 %v9484, %v9623
      %v9625 = vpop.f32.mrb[0].mxu0
      %v9626 = vadd.f32 %v9480, %v9625
      %v9627 = vpop.f32.mrb[0].mxu0
      %v9628 = vadd.f32 %v9484, %v9627
      %9629 = vmatprep.mubr.bf16.mxu0 0
      %9630 = vmatmul.mubr.bf16.gmra.mrb[0].mxu0 %v9473
      %v9631 = vpop.f32.mrb[0].mxu0
      %v9632 = vadd.f32 %v9480, %v9631
      %v9633 = vpop.f32.mrb[0].mxu0
      %v9634 = vadd.f32 %v9484, %v9633
      %v9635 = vpop.f32.mrb[0].mxu0
      %v9636 = vadd.f32 %v9480, %v9635
      %v9637 = vpop.f32.mrb[0].mxu0
      %v9638 = vadd.f32 %v9484, %v9637
      %9639 = vmatprep.mubr.bf16.mxu0 0
      %9640 = vmatmul.mubr.bf16.gmra.mrb[0].mxu0 %v9474
      %v9641 = vpop.f32.mrb[0].mxu0
      %v9642 = vadd.f32 %v9480, %v9641
      %v9643 = vpop.f32.mrb[0].mxu0
      %v9644 = vadd.f32 %v9484, %v9643
      %v9645 = vpop.f32.mrb[0].mxu0
      %v9646 = vadd.f32 %v9480, %v9645
      %v9647 = vpop.f32.mrb[0].mxu0
      %v9648 = vadd.f32 %v9484, %v9647
      %9649 = vmatprep.mubr.bf16.mxu0 0
      %9650 = vmatmul.mubr.bf16.gmra.mrb[0].mxu0 %v9475
      %v9651 = vpop.f32.mrb[0].mxu0
      %v9652 = vadd.f32 %v9480, %v9651
      %v9653 = vpop.f32.mrb[0].mxu0
      %v9654 = vadd.f32 %v9484, %v9653
      %v9655 = vpop.f32.mrb[0].mxu0
      %v9656 = vadd.f32 %v9480, %v9655
      %v9657 = vpop.f32.mrb[0].mxu0
      %v9658 = vadd.f32 %v9484, %v9657
      %9659 = vdwg.mxu0
      %v9660 = vmul.f32 %v9602, %v9602
      %v9661 = vmul.f32 %v9604, %v9604
      %v9662 = vmul.f32 %v9606, %v9606
      %v9663 = vmul.f32 %v9608, %v9608
      %v9664 = vmul.f32 %v9612, %v9612
      %v9665 = vmul.f32 %v9614, %v9614
      %v9666 = vmul.f32 %v9616, %v9616
      %v9667 = vmul.f32 %v9618, %v9618
      %v9668 = vmul.f32 %v9622, %v9622
      %v9669 = vmul.f32 %v9624, %v9624
      %v9670 = vmul.f32 %v9626, %v9626
      %v9671 = vmul.f32 %v9628, %v9628
      %v9672 = vmul.f32 %v9632, %v9632
      %v9673 = vmul.f32 %v9634, %v9634
      %v9674 = vmul.f32 %v9636, %v9636
      %v9675 = vmul.f32 %v9638, %v9638
      %v9676 = vmul.f32 %v9642, %v9642
      %v9677 = vmul.f32 %v9644, %v9644
      %v9678 = vmul.f32 %v9646, %v9646
      %v9679 = vmul.f32 %v9648, %v9648
      %v9680 = vmul.f32 %v9652, %v9652
      %v9681 = vmul.f32 %v9654, %v9654
      %v9682 = vmul.f32 %v9656, %v9656
      %v9683 = vmul.f32 %v9658, %v9658
      %v9684 = vmul.f32 %v9602, %v9660
      %v9685 = vmul.f32 %v9604, %v9661
      %v9686 = vmul.f32 %v9606, %v9662
      %v9687 = vmul.f32 %v9608, %v9663
      %v9688 = vmul.f32 %v9612, %v9664
      %v9689 = vmul.f32 %v9614, %v9665
      %v9690 = vmul.f32 %v9616, %v9666
      %v9691 = vmul.f32 %v9618, %v9667
      %v9692 = vmul.f32 %v9622, %v9668
      %v9693 = vmul.f32 %v9624, %v9669
      %v9694 = vmul.f32 %v9626, %v9670
      %v9695 = vmul.f32 %v9628, %v9671
      %v9696 = vmul.f32 %v9632, %v9672
      %v9697 = vmul.f32 %v9634, %v9673
      %v9698 = vmul.f32 %v9636, %v9674
      %v9699 = vmul.f32 %v9638, %v9675
      %v9700 = vmul.f32 %v9642, %v9676
      %v9701 = vmul.f32 %v9644, %v9677
      %v9702 = vmul.f32 %v9646, %v9678
      %v9703 = vmul.f32 %v9648, %v9679
      %v9704 = vmul.f32 %v9652, %v9680
      %v9705 = vmul.f32 %v9654, %v9681
      %v9706 = vmul.f32 %v9656, %v9682
      %v9707 = vmul.f32 %v9658, %v9683
      %v9708 = vmul.f32 %v9684, 0.044715
      %v9709 = vmul.f32 %v9685, 0.044715
      %v9710 = vmul.f32 %v9686, 0.044715
      %v9711 = vmul.f32 %v9687, 0.044715
      %v9712 = vmul.f32 %v9688, 0.044715
      %v9713 = vmul.f32 %v9689, 0.044715
      %v9714 = vmul.f32 %v9690, 0.044715
      %v9715 = vmul.f32 %v9691, 0.044715
      %v9716 = vmul.f32 %v9692, 0.044715
      %v9717 = vmul.f32 %v9693, 0.044715
      %v9718 = vmul.f32 %v9694, 0.044715
      %v9719 = vmul.f32 %v9695, 0.044715
      %v9720 = vmul.f32 %v9696, 0.044715
      %v9721 = vmul.f32 %v9697, 0.044715
      %v9722 = vmul.f32 %v9698, 0.044715
      %v9723 = vmul.f32 %v9699, 0.044715
      %v9724 = vmul.f32 %v9700, 0.044715
      %v9725 = vmul.f32 %v9701, 0.044715
      %v9726 = vmul.f32 %v9702, 0.044715
      %v9727 = vmul.f32 %v9703, 0.044715
      %v9728 = vmul.f32 %v9704, 0.044715
      %v9729 = vmul.f32 %v9705, 0.044715
      %v9730 = vmul.f32 %v9706, 0.044715
      %v9731 = vmul.f32 %v9707, 0.044715
      %v9732 = vadd.f32 %v9602, %v9708
      %v9733 = vadd.f32 %v9604, %v9709
      %v9734 = vadd.f32 %v9606, %v9710
      %v9735 = vadd.f32 %v9608, %v9711
      %v9736 = vadd.f32 %v9612, %v9712
      %v9737 = vadd.f32 %v9614, %v9713
      %v9738 = vadd.f32 %v9616, %v9714
      %v9739 = vadd.f32 %v9618, %v9715
      %v9740 = vadd.f32 %v9622, %v9716
      %v9741 = vadd.f32 %v9624, %v9717
      %v9742 = vadd.f32 %v9626, %v9718
      %v9743 = vadd.f32 %v9628, %v9719
      %v9744 = vadd.f32 %v9632, %v9720
      %v9745 = vadd.f32 %v9634, %v9721
      %v9746 = vadd.f32 %v9636, %v9722
      %v9747 = vadd.f32 %v9638, %v9723
      %v9748 = vadd.f32 %v9642, %v9724
      %v9749 = vadd.f32 %v9644, %v9725
      %v9750 = vadd.f32 %v9646, %v9726
      %v9751 = vadd.f32 %v9648, %v9727
      %v9752 = vadd.f32 %v9652, %v9728
      %v9753 = vadd.f32 %v9654, %v9729
      %v9754 = vadd.f32 %v9656, %v9730
      %v9755 = vadd.f32 %v9658, %v9731
      %v9756 = vmul.f32 %v9732, 0.7978846
      %v9757 = vmul.f32 %v9733, 0.7978846
      %v9758 = vmul.f32 %v9734, 0.7978846
      %v9759 = vmul.f32 %v9735, 0.7978846
      %v9760 = vmul.f32 %v9736, 0.7978846
      %v9761 = vmul.f32 %v9737, 0.7978846
      %v9762 = vmul.f32 %v9738, 0.7978846
      %v9763 = vmul.f32 %v9739, 0.7978846
      %v9764 = vmul.f32 %v9740, 0.7978846
      %v9765 = vmul.f32 %v9741, 0.7978846
      %v9766 = vmul.f32 %v9742, 0.7978846
      %v9767 = vmul.f32 %v9743, 0.7978846
      %v9768 = vmul.f32 %v9744, 0.7978846
      %v9769 = vmul.f32 %v9745, 0.7978846
      %v9770 = vmul.f32 %v9746, 0.7978846
      %v9771 = vmul.f32 %v9747, 0.7978846
      %v9772 = vmul.f32 %v9748, 0.7978846
      %v9773 = vmul.f32 %v9749, 0.7978846
      %v9774 = vmul.f32 %v9750, 0.7978846
      %v9775 = vmul.f32 %v9751, 0.7978846
      %v9776 = vmul.f32 %v9752, 0.7978846
      %v9777 = vmul.f32 %v9753, 0.7978846
      %v9778 = vmul.f32 %v9754, 0.7978846
      %v9779 = vmul.f32 %v9755, 0.7978846
      %v9780 = vtanh.pop %v9756
      %v9781 = vtanh.pop %v9757
      %v9782 = vtanh.pop %v9758
      %v9783 = vtanh.pop %v9759
      %v9784 = vtanh.pop %v9760
      %v9785 = vtanh.pop %v9761
      %v9786 = vtanh.pop %v9762
      %v9787 = vtanh.pop %v9763
      %v9788 = vtanh.pop %v9764
      %v9789 = vtanh.pop %v9765
      %v9790 = vtanh.pop %v9766
      %v9791 = vtanh.pop %v9767
      %v9792 = vtanh.pop %v9768
      %v9793 = vtanh.pop %v9769
      %v9794 = vtanh.pop %v9770
      %v9795 = vtanh.pop %v9771
      %v9796 = vtanh.pop %v9772
      %v9797 = vtanh.pop %v9773
      %v9798 = vtanh.pop %v9774
      %v9799 = vtanh.pop %v9775
      %v9800 = vtanh.pop %v9776
      %v9801 = vtanh.pop %v9777
      %v9802 = vtanh.pop %v9778
      %v9803 = vtanh.pop %v9779
      %v9804 = vadd.f32 %v9780, 1.0
      %v9805 = vadd.f32 %v9781, 1.0
      %v9806 = vadd.f32 %v9782, 1.0
      %v9807 = vadd.f32 %v9783, 1.0
      %v9808 = vadd.f32 %v9784, 1.0
      %v9809 = vadd.f32 %v9785, 1.0
      %v9810 = vadd.f32 %v9786, 1.0
      %v9811 = vadd.f32 %v9787, 1.0
      %v9812 = vadd.f32 %v9788, 1.0
      %v9813 = vadd.f32 %v9789, 1.0
      %v9814 = vadd.f32 %v9790, 1.0
      %v9815 = vadd.f32 %v9791, 1.0
      %v9816 = vadd.f32 %v9792, 1.0
      %v9817 = vadd.f32 %v9793, 1.0
      %v9818 = vadd.f32 %v9794, 1.0
      %v9819 = vadd.f32 %v9795, 1.0
      %v9820 = vadd.f32 %v9796, 1.0
      %v9821 = vadd.f32 %v9797, 1.0
      %v9822 = vadd.f32 %v9798, 1.0
      %v9823 = vadd.f32 %v9799, 1.0
      %v9824 = vadd.f32 %v9800, 1.0
      %v9825 = vadd.f32 %v9801, 1.0
      %v9826 = vadd.f32 %v9802, 1.0
      %v9827 = vadd.f32 %v9803, 1.0
      %v9828 = vmul.f32 %v9804, 0.5
      %v9829 = vmul.f32 %v9805, 0.5
      %v9830 = vmul.f32 %v9806, 0.5
      %v9831 = vmul.f32 %v9807, 0.5
      %v9832 = vmul.f32 %v9808, 0.5
      %v9833 = vmul.f32 %v9809, 0.5
      %v9834 = vmul.f32 %v9810, 0.5
      %v9835 = vmul.f32 %v9811, 0.5
      %v9836 = vmul.f32 %v9812, 0.5
      %v9837 = vmul.f32 %v9813, 0.5
      %v9838 = vmul.f32 %v9814, 0.5
      %v9839 = vmul.f32 %v9815, 0.5
      %v9840 = vmul.f32 %v9816, 0.5
      %v9841 = vmul.f32 %v9817, 0.5
      %v9842 = vmul.f32 %v9818, 0.5
      %v9843 = vmul.f32 %v9819, 0.5
      %v9844 = vmul.f32 %v9820, 0.5
      %v9845 = vmul.f32 %v9821, 0.5
      %v9846 = vmul.f32 %v9822, 0.5
      %v9847 = vmul.f32 %v9823, 0.5
      %v9848 = vmul.f32 %v9824, 0.5
      %v9849 = vmul.f32 %v9825, 0.5
      %v9850 = vmul.f32 %v9826, 0.5
      %v9851 = vmul.f32 %v9827, 0.5
      %v9852 = vmul.f32 %v9602, %v9828
      %v9853 = vmul.f32 %v9604, %v9829
      %v9854 = vmul.f32 %v9606, %v9830
      %v9855 = vmul.f32 %v9608, %v9831
      %v9856 = vmul.f32 %v9612, %v9832
      %v9857 = vmul.f32 %v9614, %v9833
      %v9858 = vmul.f32 %v9616, %v9834
      %v9859 = vmul.f32 %v9618, %v9835
      %v9860 = vmul.f32 %v9622, %v9836
      %v9861 = vmul.f32 %v9624, %v9837
      %v9862 = vmul.f32 %v9626, %v9838
      %v9863 = vmul.f32 %v9628, %v9839
      %v9864 = vmul.f32 %v9632, %v9840
      %v9865 = vmul.f32 %v9634, %v9841
      %v9866 = vmul.f32 %v9636, %v9842
      %v9867 = vmul.f32 %v9638, %v9843
      %v9868 = vmul.f32 %v9642, %v9844
      %v9869 = vmul.f32 %v9644, %v9845
      %v9870 = vmul.f32 %v9646, %v9846
      %v9871 = vmul.f32 %v9648, %v9847
      %v9872 = vmul.f32 %v9652, %v9848
      %v9873 = vmul.f32 %v9654, %v9849
      %v9874 = vmul.f32 %v9656, %v9850
      %v9875 = vmul.f32 %v9658, %v9851
      %s9876 = scalar_lea.vmem %s876, 128
      %v9877 = vld [vmem:[%s9876] sm:$0xf]
      %v9878 = vld [vmem:[%s9876 + $0x4] sm:$0xf]
      %v9879 = vld [vmem:[%s9876 + $0x8] sm:$0xf]
      %v9880 = vld [vmem:[%s9876 + $0xc] sm:$0xf]
      %v9881 = vld [vmem:[%s9876 + $0x10] sm:$0xf]
      %v9882 = vld [vmem:[%s9876 + $0x14] sm:$0xf]
      %v9883 = vld [vmem:[%s9876 + $0x18] sm:$0xf]
      %v9884 = vld [vmem:[%s9876 + $0x1c] sm:$0xf]
      %v9885 = vld [vmem:[%s9876 + $0x20] sm:$0xf]
      %v9886 = vld [vmem:[%s9876 + $0x24] sm:$0xf]
      %v9887 = vld [vmem:[%s9876 + $0x28] sm:$0xf]
      %v9888 = vld [vmem:[%s9876 + $0x2c] sm:$0xf]
      %v9889 = vld [vmem:[%s9876 + $0x30] sm:$0xf]
      %v9890 = vld [vmem:[%s9876 + $0x34] sm:$0xf]
      %v9891 = vld [vmem:[%s9876 + $0x38] sm:$0xf]
      %v9892 = vld [vmem:[%s9876 + $0x3c] sm:$0xf]
      %v9893 = vld [vmem:[%s9876 + $0x40] sm:$0xf]
      %v9894 = vld [vmem:[%s9876 + $0x44] sm:$0xf]
      %v9895 = vld [vmem:[%s9876 + $0x48] sm:$0xf]
      %v9896 = vld [vmem:[%s9876 + $0x4c] sm:$0xf]
      %v9897 = vld [vmem:[%s9876 + $0x50] sm:$0xf]
      %v9898 = vld [vmem:[%s9876 + $0x54] sm:$0xf]
      %v9899 = vld [vmem:[%s9876 + $0x58] sm:$0xf]
      %v9900 = vld [vmem:[%s9876 + $0x5c] sm:$0xf]
      %v9901 = vld [vmem:[%s9876 + $0x60] sm:$0xf]
      %v9902 = vld [vmem:[%s9876 + $0x64] sm:$0xf]
      %v9903 = vld [vmem:[%s9876 + $0x68] sm:$0xf]
      %v9904 = vld [vmem:[%s9876 + $0x6c] sm:$0xf]
      %v9905 = vld [vmem:[%s9876 + $0x70] sm:$0xf]
      %v9906 = vld [vmem:[%s9876 + $0x74] sm:$0xf]
      %v9907 = vld [vmem:[%s9876 + $0x78] sm:$0xf]
      %v9908 = vld [vmem:[%s9876 + $0x7c] sm:$0xf]
      %s9909 = scalar_lea.vmem %s880, 1
      %v9910 = vld [vmem:[%s9909] sm:$0x1]
      %v9911 = vpack.c.bf16 %v9854, %v9852
      %v9912 = vpack.c.bf16 %v9855, %v9853
      %v9913 = vpack.c.bf16 %v9858, %v9856
      %v9914 = vpack.c.bf16 %v9859, %v9857
      %v9915 = vpack.c.bf16 %v9862, %v9860
      %v9916 = vpack.c.bf16 %v9863, %v9861
      %v9917 = vpack.c.bf16 %v9866, %v9864
      %v9918 = vpack.c.bf16 %v9867, %v9865
      %v9919 = vpack.c.bf16 %v9870, %v9868
      %v9920 = vpack.c.bf16 %v9871, %v9869
      %v9921 = vpack.c.bf16 %v9874, %v9872
      %v9922 = vpack.c.bf16 %v9875, %v9873
      %v9924 = vlaneseq
      %v9925 = vshrl.u32 %v9924, 7
      %v9926 = vsub.s32 0, %v9925
      %v9927 = vrot.slane %v9910, %v9926
      %v9961 = vunpack.c.l.b16 %v9877
      %v9962 = vunpack.c.l.b16 %v9878
      %v9963 = vunpack.c.l.b16 %v9879
      %v9964 = vunpack.c.l.b16 %v9880
      %v9965 = vunpack.c.l.b16 %v9881
      %v9966 = vunpack.c.l.b16 %v9882
      %v9967 = vunpack.c.l.b16 %v9883
      %v9968 = vunpack.c.l.b16 %v9884
      %v9969 = vunpack.c.l.b16 %v9885
      %v9970 = vunpack.c.l.b16 %v9886
      %v9971 = vunpack.c.l.b16 %v9887
      %v9972 = vunpack.c.l.b16 %v9888
      %v9973 = vunpack.c.l.b16 %v9889
      %v9974 = vunpack.c.l.b16 %v9890
      %v9975 = vunpack.c.l.b16 %v9891
      %v9976 = vunpack.c.l.b16 %v9892
      %v9977 = vunpack.c.l.b16 %v9893
      %v9978 = vunpack.c.l.b16 %v9894
      %v9979 = vunpack.c.l.b16 %v9895
      %v9980 = vunpack.c.l.b16 %v9896
      %v9981 = vunpack.c.l.b16 %v9897
      %v9982 = vunpack.c.l.b16 %v9898
      %v9983 = vunpack.c.l.b16 %v9899
      %v9984 = vunpack.c.l.b16 %v9900
      %v9985 = vunpack.c.l.b16 %v9901
      %v9986 = vunpack.c.l.b16 %v9902
      %v9987 = vunpack.c.l.b16 %v9903
      %v9988 = vunpack.c.l.b16 %v9904
      %v9989 = vunpack.c.l.b16 %v9905
      %v9990 = vunpack.c.l.b16 %v9906
      %v9991 = vunpack.c.l.b16 %v9907
      %v9992 = vunpack.c.l.b16 %v9908
      %v9993 = vpack.c.b16 %v9962, %v9961
      %v9994 = vpack.c.b16 %v9964, %v9963
      %v9995 = vpack.c.b16 %v9966, %v9965
      %v9996 = vpack.c.b16 %v9968, %v9967
      %v9997 = vpack.c.b16 %v9970, %v9969
      %v9998 = vpack.c.b16 %v9972, %v9971
      %v9999 = vpack.c.b16 %v9974, %v9973
      %v10000 = vpack.c.b16 %v9976, %v9975
      %v10001 = vpack.c.b16 %v9978, %v9977
      %v10002 = vpack.c.b16 %v9980, %v9979
      %v10003 = vpack.c.b16 %v9982, %v9981
      %v10004 = vpack.c.b16 %v9984, %v9983
      %v10005 = vpack.c.b16 %v9986, %v9985
      %v10006 = vpack.c.b16 %v9988, %v9987
      %v10007 = vpack.c.b16 %v9990, %v9989
      %v10008 = vpack.c.b16 %v9992, %v9991
      %10025 = vmatprep.subr.bf16.mxu0 0
      %10026 = vmatpush1.bf16.msra.mxu0 %v9993
      %10027 = vmatprep.subr.bf16.mxu0 0
      %10028 = vmatpush1.bf16.msra.mxu0 %v9994
      %10029 = vmatprep.subr.bf16.mxu0 0
      %10030 = vmatpush1.bf16.msra.mxu0 %v9995
      %10031 = vmatprep.subr.bf16.mxu0 0
      %10032 = vmatpush1.bf16.msra.mxu0 %v9996
      %10033 = vmatprep.subr.bf16.mxu0 0
      %10034 = vmatpush1.bf16.msra.mxu0 %v9997
      %10035 = vmatprep.subr.bf16.mxu0 0
      %10036 = vmatpush1.bf16.msra.mxu0 %v9998
      %10037 = vmatprep.subr.bf16.mxu0 0
      %10038 = vmatpush1.bf16.msra.mxu0 %v9999
      %10039 = vmatprep.subr.bf16.mxu0 0
      %10040 = vmatpush1.bf16.msra.mxu0 %v10000
      %10041 = vmatprep.subr.bf16.mxu0 0
      %10042 = vmatpush1.bf16.msra.mxu0 %v10001
      %10043 = vmatprep.subr.bf16.mxu0 0
      %10044 = vmatpush1.bf16.msra.mxu0 %v10002
      %10045 = vmatprep.subr.bf16.mxu0 0
      %10046 = vmatpush1.bf16.msra.mxu0 %v10003
      %10047 = vmatprep.subr.bf16.mxu0 0
      %10048 = vmatpush1.bf16.msra.mxu0 %v10004
      %10049 = vmatprep.subr.bf16.mxu0 0
      %10050 = vmatpush1.bf16.msra.mxu0 %v10005
      %10051 = vmatprep.subr.bf16.mxu0 0
      %10052 = vmatpush1.bf16.msra.mxu0 %v10006
      %10053 = vmatprep.subr.bf16.mxu0 0
      %10054 = vmatpush1.bf16.msra.mxu0 %v10007
      %10055 = vmatprep.subr.bf16.mxu0 0
      %10056 = vmatpush1.bf16.msra.mxu0 %v10008
      %10057 = vmatprep.mubr.bf16.mxu0 %v9912
      %10058 = vmatmul.mubr.bf16.gmra.mrb[0].mxu0 %v9911
      %v10059 = vpop.f32.mrb[0].mxu0
      %v10060 = vadd.f32 %v9927, %v10059
      %v10061 = vpop.f32.mrb[0].mxu0
      %v10062 = vpop.f32.mrb[0].mxu0
      %v10063 = vpop.f32.mrb[0].mxu0
      %10064 = vmatprep.mubr.bf16.mxu0 %v9914
      %10065 = vmatmul.mubr.bf16.gmra.mrb[0].mxu0 %v9913
      %v10066 = vpop.f32.mrb[0].mxu0
      %v10067 = vpop.f32.mrb[0].mxu0
      %v10068 = vpop.f32.mrb[0].mxu0
      %v10069 = vadd.f32 %v9927, %v10068
      %v10070 = vpop.f32.mrb[0].mxu0
      %10071 = vmatprep.mubr.bf16.mxu0 %v9916
      %10072 = vmatmul.mubr.bf16.gmra.mrb[0].mxu0 %v9915
      %v10073 = vpop.f32.mrb[0].mxu0
      %v10074 = vpop.f32.mrb[0].mxu0
      %v10075 = vpop.f32.mrb[0].mxu0
      %v10076 = vpop.f32.mrb[0].mxu0
      %10077 = vmatprep.mubr.bf16.mxu0 %v9918
      %10078 = vmatmul.mubr.bf16.gmra.mrb[0].mxu0 %v9917
      %v10079 = vpop.f32.mrb[0].mxu0
      %v10080 = vadd.f32 %v9927, %v10079
      %v10081 = vpop.f32.mrb[0].mxu0
      %v10082 = vpop.f32.mrb[0].mxu0
      %v10083 = vpop.f32.mrb[0].mxu0
      %10084 = vmatprep.mubr.bf16.mxu0 %v9920
      %10085 = vmatmul.mubr.bf16.gmra.mrb[0].mxu0 %v9919
      %v10086 = vpop.f32.mrb[0].mxu0
      %v10087 = vpop.f32.mrb[0].mxu0
      %v10088 = vpop.f32.mrb[0].mxu0
      %v10089 = vadd.f32 %v9927, %v10088
      %v10090 = vpop.f32.mrb[0].mxu0
      %10091 = vmatprep.mubr.bf16.mxu0 %v9922
      %10092 = vmatmul.mubr.bf16.gmra.mrb[0].mxu0 %v9921
      %v10093 = vpop.f32.mrb[0].mxu0
      %v10094 = vpop.f32.mrb[0].mxu0
      %v10095 = vpop.f32.mrb[0].mxu0
      %v10096 = vpop.f32.mrb[0].mxu0
      %10097 = vdwg.mxu0
      %v10098 = vadd.f32 %v9267, %v10060
      %v10099 = vadd.f32 %v9270, %v10069
      %v10100 = vadd.f32 %v9273, %v10080
      %v10101 = vadd.f32 %v9276, %v10089
      %v10102 = vld [vmem:[%s883] sm:$0x1]
      %v10103 = vld [vmem:[%s886] sm:$0x1]
      %v10108 = vrot.slane %v10099, 7
      %vm10109 = vcmask 1041409
      %v10110 = vsel %vm10109, %v10108, %v10098
      %v10111 = vrot.slane %v10100, 6
      %vm10112 = vcmask 1042434
      %v10113 = vsel %vm10112, %v10111, %v10110
      %v10114 = vrot.slane %v10101, 5
      %vm10115 = vcmask 1043459
      %v10116 = vsel %vm10115, %v10114, %v10113
      %v10118 = vsel %vm2143, %v10116, 0.0
      %10119 = vadd.xlane.f32.xlu0 %v10118
      %v10120 = vpop.xlane.xlu0 %10119
      %v10121 = vmul.f32 %v10120, %v1138
      %v10123 = vrot.slane %v10121, 1
      %v10124 = vrot.slane %v10121, 2
      %v10125 = vrot.slane %v10121, 3
      %v10130 = vsub.f32 %v10098, %v10121
      %v10131 = vsub.f32 %v10099, %v10123
      %v10132 = vsub.f32 %v10100, %v10124
      %v10133 = vsub.f32 %v10101, %v10125
      %v10134 = vmul.f32 %v10130, %v10130
      %v10135 = vmul.f32 %v10131, %v10131
      %v10136 = vmul.f32 %v10132, %v10132
      %v10137 = vmul.f32 %v10133, %v10133
      %v10142 = vrot.slane %v10135, 7
      %v10143 = vsel %vm10109, %v10142, %v10134
      %v10144 = vrot.slane %v10136, 6
      %v10145 = vsel %vm10112, %v10144, %v10143
      %v10146 = vrot.slane %v10137, 5
      %v10147 = vsel %vm10115, %v10146, %v10145
      %v10149 = vsel %vm2143, %v10147, 0.0
      %10150 = vadd.xlane.f32.xlu0 %v10149
      %v10151 = vpop.xlane.xlu0 %10150
      %v10152 = vmul.f32 %v10151, %v1138
      %v10153 = vadd.f32 %v10152, 1e-06
      %v10154 = vrsqrt.pop %v10153
      %v10156 = vrot.slane %v10154, 1
      %v10157 = vrot.slane %v10154, 2
      %v10158 = vrot.slane %v10154, 3
      %v10163 = vmul.f32 %v10130, %v10154
      %v10164 = vmul.f32 %v10131, %v10156
      %v10165 = vmul.f32 %v10132, %v10157
      %v10166 = vmul.f32 %v10133, %v10158
      %v10168 = vlaneseq
      %v10169 = vshrl.u32 %v10168, 7
      %v10170 = vsub.s32 0, %v10169
      %v10171 = vrot.slane %v10102, %v10170
      %v10173 = vmul.f32 %v10163, %v10171
      %v10174 = vmul.f32 %v10164, %v10171
      %v10175 = vmul.f32 %v10165, %v10171
      %v10176 = vmul.f32 %v10166, %v10171
      %v10178 = vlaneseq
      %v10179 = vshrl.u32 %v10178, 7
      %v10180 = vsub.s32 0, %v10179
      %v10181 = vrot.slane %v10103, %v10180
      %v10183 = vadd.f32 %v10173, %v10181
      %v10184 = vadd.f32 %v10174, %v10181
      %v10185 = vadd.f32 %v10175, %v10181
      %v10186 = vadd.f32 %v10176, %v10181
      %v10191 = vrot.slane %v10184, 7
      %v10192 = vsel %vm10109, %v10191, %v10183
      %v10193 = vrot.slane %v10185, 6
      %v10194 = vsel %vm10112, %v10193, %v10192
      %v10195 = vrot.slane %v10186, 5
      %v10196 = vsel %vm10115, %v10195, %v10194
      %v10198 = vsel %vm2143, %v10196, 0.0
      %v10199 = vld [vmem:[%s891] sm:$0xf]
      %v10200 = vld [vmem:[%s891 + $0x4] sm:$0xf]
      %v10201 = vld [vmem:[%s891 + $0x8] sm:$0xf]
      %v10202 = vld [vmem:[%s891 + $0xc] sm:$0xf]
      %v10203 = vld [vmem:[%s891 + $0x10] sm:$0xf]
      %v10204 = vld [vmem:[%s891 + $0x14] sm:$0xf]
      %v10205 = vld [vmem:[%s891 + $0x18] sm:$0xf]
      %v10206 = vld [vmem:[%s891 + $0x1c] sm:$0xf]
      %v10207 = vld [vmem:[%s891 + $0x20] sm:$0xf]
      %v10208 = vld [vmem:[%s891 + $0x24] sm:$0xf]
      %v10209 = vld [vmem:[%s891 + $0x28] sm:$0xf]
      %v10210 = vld [vmem:[%s891 + $0x2c] sm:$0xf]
      %v10211 = vld [vmem:[%s891 + $0x30] sm:$0xf]
      %v10212 = vld [vmem:[%s891 + $0x34] sm:$0xf]
      %v10213 = vld [vmem:[%s891 + $0x38] sm:$0xf]
      %v10214 = vld [vmem:[%s891 + $0x3c] sm:$0xf]
      %v10215 = vld [vmem:[%s894] sm:$0x1]
      %v10216 = vpack.c.bf16 %v10198, %v10198
      %v10218 = vlaneseq
      %v10219 = vshrl.u32 %v10218, 7
      %v10220 = vsub.s32 0, %v10219
      %v10221 = vrot.slane %v10215, %v10220
      %v10239 = vunpack.c.l.b16 %v10199
      %v10240 = vunpack.c.l.b16 %v10200
      %v10241 = vunpack.c.l.b16 %v10201
      %v10242 = vunpack.c.l.b16 %v10202
      %v10243 = vunpack.c.l.b16 %v10203
      %v10244 = vunpack.c.l.b16 %v10204
      %v10245 = vunpack.c.l.b16 %v10205
      %v10246 = vunpack.c.l.b16 %v10206
      %v10247 = vunpack.c.l.b16 %v10207
      %v10248 = vunpack.c.l.b16 %v10208
      %v10249 = vunpack.c.l.b16 %v10209
      %v10250 = vunpack.c.l.b16 %v10210
      %v10251 = vunpack.c.l.b16 %v10211
      %v10252 = vunpack.c.l.b16 %v10212
      %v10253 = vunpack.c.l.b16 %v10213
      %v10254 = vunpack.c.l.b16 %v10214
      %v10255 = vpack.c.b16 %v10240, %v10239
      %v10256 = vpack.c.b16 %v10242, %v10241
      %v10257 = vpack.c.b16 %v10244, %v10243
      %v10258 = vpack.c.b16 %v10246, %v10245
      %v10259 = vpack.c.b16 %v10248, %v10247
      %v10260 = vpack.c.b16 %v10250, %v10249
      %v10261 = vpack.c.b16 %v10252, %v10251
      %v10262 = vpack.c.b16 %v10254, %v10253
      %10271 = vmatprep.subr.bf16.mxu0 0
      %10272 = vmatpush1.bf16.msra.mxu0 %v10255
      %10273 = vmatprep.subr.bf16.mxu0 0
      %10274 = vmatpush1.bf16.msra.mxu0 %v10256
      %10275 = vmatprep.subr.bf16.mxu0 0
      %10276 = vmatpush1.bf16.msra.mxu0 %v10257
      %10277 = vmatprep.subr.bf16.mxu0 0
      %10278 = vmatpush1.bf16.msra.mxu0 %v10258
      %10279 = vmatprep.subr.bf16.mxu0 0
      %10280 = vmatpush1.bf16.msra.mxu0 %v10259
      %10281 = vmatprep.subr.bf16.mxu0 0
      %10282 = vmatpush1.bf16.msra.mxu0 %v10260
      %10283 = vmatprep.subr.bf16.mxu0 0
      %10284 = vmatpush1.bf16.msra.mxu0 %v10261
      %10285 = vmatprep.subr.bf16.mxu0 0
      %10286 = vmatpush1.bf16.msra.mxu0 %v10262
      %10287 = vmatprep.subr.bf16.mxu0 0
      %10288 = vmatpush1.bf16.msra.mxu0 0
      %10289 = vmatprep.subr.bf16.mxu0 0
      %10290 = vmatpush1.bf16.msra.mxu0 0
      %10291 = vmatprep.subr.bf16.mxu0 0
      %10292 = vmatpush1.bf16.msra.mxu0 0
      %10293 = vmatprep.subr.bf16.mxu0 0
      %10294 = vmatpush1.bf16.msra.mxu0 0
      %10295 = vmatprep.subr.bf16.mxu0 0
      %10296 = vmatpush1.bf16.msra.mxu0 0
      %10297 = vmatprep.subr.bf16.mxu0 0
      %10298 = vmatpush1.bf16.msra.mxu0 0
      %10299 = vmatprep.subr.bf16.mxu0 0
      %10300 = vmatpush1.bf16.msra.mxu0 0
      %10301 = vmatprep.subr.bf16.mxu0 0
      %10302 = vmatpush1.bf16.msra.mxu0 0
      %10303 = vmatprep.mubr.bf16.mxu0 0
      %10304 = vmatmul.mubr.bf16.gmra.mrb[0].mxu0 %v10216
      %v10305 = vpop.f32.mrb[0].mxu0
      %v10306 = vadd.f32 %v10221, %v10305
      %v10307 = vpop.f32.mrb[0].mxu0
      %v10308 = vpop.f32.mrb[0].mxu0
      %v10309 = vpop.f32.mrb[0].mxu0
      %10310 = vdwg.mxu0
      %10311 = vst [vmem:[%s898] sm:$0xff] %v10306
      %p10312 = scmp.lt.s32.totalorder %s30, 1
      %s10313 = scalar_select %p10312, %s30, 1
      %s10314 = smul.addr %s10313, 8
      %s10315 = scalar_lea.vmem %s19, %s10314
      // Predicated region
      $region97: #{dino_forward.1} parent=95 // pred_check
        %p10316 = pneg %p537
      $region98: #{dino_forward.1} parent=95 // pred_check_branch
        %10318 = sbr.rel (%p10316) target = $region100
      $region99: #{dino_forward.1} parent=95 // pred_region
        _
      $region100: #{dino_forward.1} parent=95 // pred_fallthru
        _
    $region96: #{dino_forward.1} parent=5 // pred_fallthru
      _
    %p10319 = scmp.le.s32.totalorder 2, %s25
    // Predicated region
    $region101: #{dino_forward.1} parent=5 // pred_check
      %p10320 = pneg %p10319
    $region102: #{dino_forward.1} parent=5 // pred_check_branch
      %10322 = sbr.rel (%p10320) target = $region104
    $region103: #{dino_forward.1} parent=5 // pred_region
      %s10323 = ssub.s32 %s25, 2
      // Predicated region
      $region105: #{dino_forward.1} parent=103 // pred_check
        %p10324 = pneg %p543
      $region106: #{dino_forward.1} parent=103 // pred_check_branch
        %10326 = sbr.rel (%p10324) target = $region108
      $region107: #{dino_forward.1} parent=103 // pred_region
        %p10327 = scmp.lt.s32.totalorder %s31, 1
        %s10328 = scalar_select %p10327, %s31, 1
        %s10329 = smul.addr %s10328, 8
        %s10330 = scalar_lea.vmem %s19, %s10329
      $region108: #{dino_forward.1} parent=103 // pred_fallthru
        _
    $region104: #{dino_forward.1} parent=5 // pred_fallthru
      _
  $region6: #{dino_forward.1} parent=0 // loop_footer
    %s29 = sadd.s32 1, %s25
  $region7: #{dino_forward.1} parent=0 // loop_footer_branch
    %24 = sbr.rel target = $region3
  $region8: #{dino_forward.1} parent=0 // loop_exit
    _

</llo_original>
